<compile_context>
chip_gen: v7x
topology: tpu7x:2x2x1
jax: 0.10.0
libtpu: 0.0.40
codegen_flags: <defaults>
</compile_context>

<pallas_src>
import functools

import numpy as np
import jax
import jax.numpy as jnp
from jax.experimental import pallas as pl
from jax.experimental.pallas import tpu as pltpu


# --------------------------------- fused kernel ----------------------------- #

def _net_kernel(x_ref, w1_ref, b1_ref, w2_ref, b2_ref, wf1_ref, bf1_ref,
                wf2_ref, bf2_ref, o_ref, *, tb):
    # ---------------- stage 1: conv1 + bias + ReLU + 2x2 maxpool --------------
    # x_ref: [7, tb, 112] bf16, lane = s*28 + col, row group g = image rows 4g..4g+3
    xv = x_ref[...]
    acc1 = None
    for t in range(2):                                    # 2 contiguous row-group taps
        xt = xv[t:t + 6].reshape(6 * tb, 112)             # row = Q*tb + b (free reshape)
        d = jnp.dot(xt, w1_ref[t], preferred_element_type=jnp.float32)
        acc1 = d if acc1 is None else acc1 + d            # [6*tb, 2048]
    hs = []
    for pr in range(2):                                   # pooled-row-within-pair block
        base = pr * 1024
        m = acc1[:, base:base + 256]
        for par in range(1, 4):                           # max over the 4 pool parities
            m = jnp.maximum(m, acc1[:, base + par * 256:base + (par + 1) * 256])
        hs.append(jnp.maximum(m + b1_ref[...], 0.0))      # bias + ReLU (f32)
    # h1[Q*tb + b, pr*256 + p*20 + c] = pool1[b, c, 2Q+pr, p]
    h1 = jnp.concatenate(hs, axis=1).astype(jnp.bfloat16)     # [6*tb, 512]

    # ---------------- stage 2: conv2 + bias + ReLU + 2x2 maxpool --------------
    acc2 = None
    for t in range(3):                                    # 3 contiguous super-row taps
        xt = h1[t * tb:(t + 4) * tb, :]                   # rows (q+t)*tb + b
        d = jnp.dot(xt, w2_ref[t], preferred_element_type=jnp.float32)
        acc2 = d if acc2 is None else acc2 + d            # [4*tb, 1024]
    m2 = acc2[:, 0:256]
    for par in range(1, 4):
        m2 = jnp.maximum(m2, acc2[:, par * 256:(par + 1) * 256])
    # h2[q*tb + b, p*50 + o] = pool2[b, o, q, p]
    h2 = jnp.maximum(m2 + b2_ref[...], 0.0).astype(jnp.bfloat16)   # [4*tb, 256]

    # ---------------- fc1 + ReLU ----------------------------------------------
    accf = None
    for q in range(4):
        d = jnp.dot(h2[q * tb:(q + 1) * tb, :], wf1_ref[q],
                    preferred_element_type=jnp.float32)
        accf = d if accf is None else accf + d            # [tb, 512]
    hf = jnp.maximum(accf + bf1_ref[...], 0.0)

    # ---------------- fc2 + log_softmax (output padded to 128 lanes) ----------
    # pad lanes of bf2 are -1e30 -> exp() contributes exactly 0, sliced off outside.
    logits = jnp.dot(hf.astype(jnp.bfloat16), wf2_ref[...],
                     preferred_element_type=jnp.float32) + bf2_ref[...]
    mx = jnp.max(logits, axis=1, keepdims=True)
    z = logits - mx
    lse = jnp.log(jnp.sum(jnp.exp(z), axis=1, keepdims=True))
    o_ref[...] = (z - lse).astype(o_ref.dtype)


# ------------------------------ pallas_call wrapper -------------------------- #

def _net_call(x4, prep, *, tb):
    bp = x4.shape[1]
    kernel = functools.partial(_net_kernel, tb=tb)
    # NOTE: the constant-index weight blocks are double-buffered by default
    # (~5 MB extra); total VMEM stays well under the 48 MiB limit, so we skip
    # pl.Buffered(1) for maximum portability.
    return pl.pallas_call(
        kernel,
        out_shape=jax.ShapeDtypeStruct((bp, 128), jnp.float32),
        grid=(bp // tb,),
        in_specs=[
            pl.BlockSpec((7, tb, 112), lambda i: (0, i, 0)),     # input (batch-tiled)
            pl.BlockSpec((2, 112, 2048), lambda i: (0, 0, 0)),   # conv1 band matrices
            pl.BlockSpec((1, 256), lambda i: (0, 0)),            # conv1 bias (tiled)
            pl.BlockSpec((3, 512, 1024), lambda i: (0, 0, 0)),   # conv2 band matrices
            pl.BlockSpec((1, 256), lambda i: (0, 0)),            # conv2 bias (tiled)
            pl.BlockSpec((4, 256, 512), lambda i: (0, 0, 0)),    # fc1 (permuted, padded)
            pl.BlockSpec((1, 512), lambda i: (0, 0)),            # fc1 bias (padded)
            pl.BlockSpec((512, 128), lambda i: (0, 0)),          # fc2 (transposed, padded)
            pl.BlockSpec((1, 128), lambda i: (0, 0)),            # fc2 bias (-1e30 pad)
        ],
        out_specs=pl.BlockSpec((tb, 128), lambda i: (i, 0)),
        compiler_params=pltpu.CompilerParams(
            dimension_semantics=("parallel",),
            vmem_limit_bytes=48 * 1024 * 1024,
        ),
    )(x4, prep["w1"], prep["b1"], prep["w2"], prep["b2"],
      prep["wf1"], prep["bf1"], prep["wf2"], prep["bf2"])


# ------------------------ weight preparation (init-time) --------------------- #

def _conv1_band_mats(conv1_w):
    """[2, 112, 2048] row-group band matrices for conv1 + 2x2 maxpool.

    Input tap t covers image rows 4*(Q+t)..4*(Q+t)+3 (input lane = s*28 + col).
    Output lane = pr*1024 + (2*dr+dc)*256 + p*20 + co holds (bias-less)
    conv1[co, 2*(2Q+pr)+dr, 2p+dc]; the kernel max-reduces over (dr,dc).
    """
    w = np.asarray(jax.device_get(conv1_w), np.float32)          # [20, 1, 5, 5]
    cout = w.shape[0]
    mats = np.zeros((2, 112, 2048), np.float32)
    for pr in range(2):
        for dr in range(2):
            for dc in range(2):
                base = pr * 1024 + (2 * dr + dc) * 256
                for p in range(12):
                    col = base + p * 20
                    for i in range(5):
                        rr = 2 * pr + dr + i          # row offset inside the 8-row window
                        t, s = rr // 4, rr % 4
                        for j in range(5):
                            mats[t, s * 28 + 2 * p + dc + j, col:col + cout] = w[:, 0, i, j]
    return mats


def _conv2_band_mats(conv2_w):
    """[3, 512, 1024] super-row band matrices for conv2 + 2x2 maxpool.

    Input tap t covers pooled1 rows 2*(q+t)/2*(q+t)+1 (lane = pr*256 + p*20 + ci).
    Output lane = (2*dr+dc)*256 + p2*50 + o holds (bias-less) conv2[o, 2q+dr, 2p2+dc].
    """
    w = np.asarray(jax.device_get(conv2_w), np.float32)          # [50, 20, 5, 5]
    cout, cin = w.shape[0], w.shape[1]
    mats = np.zeros((3, 512, 1024), np.float32)
    for dr in range(2):
        for dc in range(2):
            base = (2 * dr + dc) * 256
            for p2 in range(4):
                col = base + p2 * 50
                for i in range(5):
                    t, pr = (dr + i) // 2, (dr + i) % 2
                    for j in range(5):
                        p = 2 * p2 + dc + j          # pooled1 column
                        for ci in range(cin):
                            mats[t, pr * 256 + p * 20 + ci, col:col + cout] = w[:, ci, i, j]
    return mats


def _fc1_mats(fc1_w):
    """[4, 256, 512] fc1 weights: rows permuted from PyTorch's NCHW flatten order
    (k = o*16 + q*4 + p) to the kernel's per-pooled-row (p*50 + o) lane layout."""
    w = np.asarray(jax.device_get(fc1_w), np.float32)            # [500, 800]
    mats = np.zeros((4, 256, 512), np.float32)
    for q in range(4):
        for p in range(4):
            for o in range(50):
                mats[q, p * 50 + o, :500] = w[:, o * 16 + q * 4 + p]
    return mats


def prepare_params(params):
    w1 = _conv1_band_mats(params["conv1_w"])
    w2 = _conv2_band_mats(params["conv2_w"])
    wf1 = _fc1_mats(params["fc1_w"])

    b1 = np.zeros((1, 256), np.float32)
    b1[0, :240] = np.tile(np.asarray(jax.device_get(params["conv1_b"]), np.float32), 12)
    b2 = np.zeros((1, 256), np.float32)
    b2[0, :200] = np.tile(np.asarray(jax.device_get(params["conv2_b"]), np.float32), 4)
    bf1 = np.zeros((1, 512), np.float32)
    bf1[0, :500] = np.asarray(jax.device_get(params["fc1_b"]), np.float32)

    wf2 = np.zeros((512, 128), np.float32)
    wf2[:500, :10] = np.asarray(jax.device_get(params["fc2_w"]), np.float32).T
    bf2 = np.full((1, 128), -1e30, np.float32)        # pad logits -> exp() == 0
    bf2[0, :10] = np.asarray(jax.device_get(params["fc2_b"]), np.float32)

    return {
        "w1": jnp.asarray(w1, jnp.bfloat16),
        "b1": jnp.asarray(b1),
        "w2": jnp.asarray(w2, jnp.bfloat16),
        "b2": jnp.asarray(b2),
        "wf1": jnp.asarray(wf1, jnp.bfloat16),
        "bf1": jnp.asarray(bf1),
        "wf2": jnp.asarray(wf2, jnp.bfloat16),
        "bf2": jnp.asarray(bf2),
    }


# --------------------------------- forward pass ------------------------------ #

def _batch_tile(batch):
    bp = max(8, ((batch + 7) // 8) * 8)
    tb = min(128, bp)
    if bp >= 16 and bp // tb < 2:
        # v7x has 2 TensorCores: make sure the "parallel" grid has >= 2 steps.
        tb = ((bp // 2 + 7) // 8) * 8
    return tb


def net_forward(prep, x_nchw):
    b = x_nchw.shape[0]
    tb = _batch_tile(b)
    bp = ((b + tb - 1) // tb) * tb
    x = x_nchw.reshape(b, 28, 28).astype(jnp.bfloat16)   # drop Cin=1; bf16 halves HBM read
    if bp != b:
        x = jnp.pad(x, ((0, bp - b), (0, 0), (0, 0)))
    # 4 image rows per matmul row, batch on the second axis -> contiguous in-kernel
    # row-tap slices (no strided reads).  Free reshape + tiny HBM transpose.
    x4 = x.reshape(bp, 7, 112).transpose(1, 0, 2)        # [7, Bp, 112]
    out = _net_call(x4, prep, tb=tb)                     # [Bp, 128]
    return out[:b, :10]


def init_params(key):
    ks = jax.random.split(key, 8)

    def norm(k, shape, fan_in):
        return jax.random.normal(k, shape, jnp.float32) / jnp.sqrt(fan_in)

    # TODO(synk): PyTorch default init is kaiming-uniform; fan-in normal used here.
    return {
        "conv1_w": norm(ks[0], (20, 1, 5, 5), 25),
        "conv1_b": norm(ks[1], (20,), 25),
        "conv2_w": norm(ks[2], (50, 20, 5, 5), 500),
        "conv2_b": norm(ks[3], (50,), 500),
        "fc1_w": norm(ks[4], (500, 800), 800),           # PyTorch Linear: [out, in]
        "fc1_b": norm(ks[5], (500,), 800),
        "fc2_w": norm(ks[6], (10, 500), 500),
        "fc2_b": norm(ks[7], (10,), 500),
    }


def _reference_forward(params, x):
    """Pure-JAX f32 reference of the PyTorch forward (for a loose-tolerance check)."""
    c1 = jax.lax.conv_general_dilated(x, params["conv1_w"], (1, 1), "VALID",
                                      dimension_numbers=("NCHW", "OIHW", "NCHW"))
    a1 = jax.nn.relu(c1 + params["conv1_b"][None, :, None, None])
    a1 = jax.lax.reduce_window(a1, -jnp.inf, jax.lax.max, (1, 1, 2, 2), (1, 1, 2, 2), "VALID")
    c2 = jax.lax.conv_general_dilated(a1, params["conv2_w"], (1, 1), "VALID",
                                      dimension_numbers=("NCHW", "OIHW", "NCHW"))
    a2 = jax.nn.relu(c2 + params["conv2_b"][None, :, None, None])
    a2 = jax.lax.reduce_window(a2, -jnp.inf, jax.lax.max, (1, 1, 2, 2), (1, 1, 2, 2), "VALID")
    v = a2.reshape(a2.shape[0], -1)
    h = jax.nn.relu(v @ params["fc1_w"].T + params["fc1_b"])
    logits = h @ params["fc2_w"].T + params["fc2_b"]
    return jax.nn.log_softmax(logits, axis=1)


if __name__ == "__main__":
    key = jax.random.PRNGKey(0)
    pkey, xkey = jax.random.split(key)
    params = init_params(pkey)
    prep = prepare_params(params)

    # MNIST-shaped input (28x28 is required by the hard-coded 4*4*50 flatten).
    x = jax.random.normal(xkey, (2, 1, 28, 28), jnp.float32)

    fwd = jax.jit(net_forward)
    out = jax.block_until_ready(fwd(prep, x))

    assert out.shape == (2, 10), out.shape
    # log_softmax sanity: rows of exp(out) sum to 1
    row_sums = jnp.sum(jnp.exp(out), axis=1)
    assert bool(jnp.all(jnp.abs(row_sums - 1.0) < 1e-3)), row_sums

    # loose-tolerance check vs. pure-JAX f32 reference (kernel path is bf16 on MXU)
    ref = _reference_forward(params, x)
    err = float(jnp.max(jnp.abs(out - ref)))
    assert err < 0.25, f"max |kernel - reference| = {err}"

    print("KERNEL_OK")
</pallas_src>

<mosaic_0001>
module attributes {stable_mosaic.version = 11 : i64} {
  func.func @_net_kernel(%arg0: i32, %arg1: memref<7x8x112xbf16, #tpu.memory_space<vmem>>, %arg2: memref<2x112x2048xbf16, #tpu.memory_space<vmem>>, %arg3: memref<1x256xf32, #tpu.memory_space<vmem>>, %arg4: memref<3x512x1024xbf16, #tpu.memory_space<vmem>>, %arg5: memref<1x256xf32, #tpu.memory_space<vmem>>, %arg6: memref<4x256x512xbf16, #tpu.memory_space<vmem>>, %arg7: memref<1x512xf32, #tpu.memory_space<vmem>>, %arg8: memref<512x128xbf16, #tpu.memory_space<vmem>>, %arg9: memref<1x128xf32, #tpu.memory_space<vmem>>, %arg10: memref<8x128xf32, #tpu.memory_space<vmem>>) attributes {dimension_semantics = [#tpu.dimension_semantics<parallel>], iteration_bounds = array<i64: 1>, scalar_prefetch = 0 : i64, scratch_operands = 0 : i64, tpu.core_type = #tpu.core_type<tc>, window_params = [{transform_indices = @transform_0, window_bounds = array<i64: 7, 8, 112>}, {pipeline_mode = #tpu.pipeline_mode<synchronous>, transform_indices = @transform_1, window_bounds = array<i64: 2, 112, 2048>}, {pipeline_mode = #tpu.pipeline_mode<synchronous>, transform_indices = @transform_2, window_bounds = array<i64: 1, 256>}, {pipeline_mode = #tpu.pipeline_mode<synchronous>, transform_indices = @transform_3, window_bounds = array<i64: 3, 512, 1024>}, {pipeline_mode = #tpu.pipeline_mode<synchronous>, transform_indices = @transform_4, window_bounds = array<i64: 1, 256>}, {pipeline_mode = #tpu.pipeline_mode<synchronous>, transform_indices = @transform_5, window_bounds = array<i64: 4, 256, 512>}, {pipeline_mode = #tpu.pipeline_mode<synchronous>, transform_indices = @transform_6, window_bounds = array<i64: 1, 512>}, {pipeline_mode = #tpu.pipeline_mode<synchronous>, transform_indices = @transform_7, window_bounds = array<i64: 512, 128>}, {pipeline_mode = #tpu.pipeline_mode<synchronous>, transform_indices = @transform_8, window_bounds = array<i64: 1, 128>}, {transform_indices = @transform_9, window_bounds = array<i64: 8, 128>}]} {
    %c0 = arith.constant 0 : index
    %c0_0 = arith.constant 0 : index
    %c0_1 = arith.constant 0 : index
    %0 = vector.load %arg1[%c0, %c0_0, %c0_1] : memref<7x8x112xbf16, #tpu.memory_space<vmem>>, vector<7x8x112xbf16>
    %1 = vector.extract_strided_slice %0 {offsets = [0, 0, 0], sizes = [6, 8, 112], strides = [1, 1, 1]} : vector<7x8x112xbf16> to vector<6x8x112xbf16>
    %2 = vector.shape_cast %1 : vector<6x8x112xbf16> to vector<48x112xbf16>
    %c0_2 = arith.constant 0 : index
    %c0_3 = arith.constant 0 : index
    %c0_4 = arith.constant 0 : index
    %3 = vector.load %arg2[%c0_2, %c0_3, %c0_4] : memref<2x112x2048xbf16, #tpu.memory_space<vmem>>, vector<1x112x2048xbf16>
    %4 = vector.shape_cast %3 : vector<1x112x2048xbf16> to vector<112x2048xbf16>
    %cst = arith.constant dense<0.000000e+00> : vector<48x2048xf32>
    %5 = tpu.matmul %2, %4, %cst {dimension_numbers = #tpu.dot_dimension_numbers<[1], [0], [0], [1], [0, 0, 1, 1], [], []>} : vector<48x112xbf16>, vector<112x2048xbf16>, vector<48x2048xf32> -> vector<48x2048xf32>
    %6 = vector.extract_strided_slice %0 {offsets = [1, 0, 0], sizes = [6, 8, 112], strides = [1, 1, 1]} : vector<7x8x112xbf16> to vector<6x8x112xbf16>
    %7 = vector.shape_cast %6 : vector<6x8x112xbf16> to vector<48x112xbf16>
    %c1 = arith.constant 1 : index
    %c0_5 = arith.constant 0 : index
    %c0_6 = arith.constant 0 : index
    %8 = vector.load %arg2[%c1, %c0_5, %c0_6] : memref<2x112x2048xbf16, #tpu.memory_space<vmem>>, vector<1x112x2048xbf16>
    %9 = vector.shape_cast %8 : vector<1x112x2048xbf16> to vector<112x2048xbf16>
    %cst_7 = arith.constant dense<0.000000e+00> : vector<48x2048xf32>
    %10 = tpu.matmul %7, %9, %cst_7 {dimension_numbers = #tpu.dot_dimension_numbers<[1], [0], [0], [1], [0, 0, 1, 1], [], []>} : vector<48x112xbf16>, vector<112x2048xbf16>, vector<48x2048xf32> -> vector<48x2048xf32>
    %11 = arith.addf %5, %10 : vector<48x2048xf32>
    %12 = vector.extract_strided_slice %11 {offsets = [0, 0], sizes = [48, 256], strides = [1, 1]} : vector<48x2048xf32> to vector<48x256xf32>
    %13 = vector.extract_strided_slice %11 {offsets = [0, 256], sizes = [48, 256], strides = [1, 1]} : vector<48x2048xf32> to vector<48x256xf32>
    %14 = arith.maximumf %12, %13 : vector<48x256xf32>
    %15 = vector.extract_strided_slice %11 {offsets = [0, 512], sizes = [48, 256], strides = [1, 1]} : vector<48x2048xf32> to vector<48x256xf32>
    %16 = arith.maximumf %14, %15 : vector<48x256xf32>
    %17 = vector.extract_strided_slice %11 {offsets = [0, 768], sizes = [48, 256], strides = [1, 1]} : vector<48x2048xf32> to vector<48x256xf32>
    %18 = arith.maximumf %16, %17 : vector<48x256xf32>
    %c0_8 = arith.constant 0 : index
    %c0_9 = arith.constant 0 : index
    %19 = vector.load %arg3[%c0_8, %c0_9] : memref<1x256xf32, #tpu.memory_space<vmem>>, vector<1x256xf32>
    %20 = vector.broadcast %19 : vector<1x256xf32> to vector<48x256xf32>
    %21 = arith.addf %18, %20 : vector<48x256xf32>
    %cst_10 = arith.constant 0.000000e+00 : f32
    %22 = vector.broadcast %cst_10 : f32 to vector<48x256xf32>
    %23 = arith.maximumf %21, %22 : vector<48x256xf32>
    %24 = vector.extract_strided_slice %11 {offsets = [0, 1024], sizes = [48, 256], strides = [1, 1]} : vector<48x2048xf32> to vector<48x256xf32>
    %25 = vector.extract_strided_slice %11 {offsets = [0, 1280], sizes = [48, 256], strides = [1, 1]} : vector<48x2048xf32> to vector<48x256xf32>
    %26 = arith.maximumf %24, %25 : vector<48x256xf32>
    %27 = vector.extract_strided_slice %11 {offsets = [0, 1536], sizes = [48, 256], strides = [1, 1]} : vector<48x2048xf32> to vector<48x256xf32>
    %28 = arith.maximumf %26, %27 : vector<48x256xf32>
    %29 = vector.extract_strided_slice %11 {offsets = [0, 1792], sizes = [48, 256], strides = [1, 1]} : vector<48x2048xf32> to vector<48x256xf32>
    %30 = arith.maximumf %28, %29 : vector<48x256xf32>
    %c0_11 = arith.constant 0 : index
    %c0_12 = arith.constant 0 : index
    %31 = vector.load %arg3[%c0_11, %c0_12] : memref<1x256xf32, #tpu.memory_space<vmem>>, vector<1x256xf32>
    %32 = vector.broadcast %31 : vector<1x256xf32> to vector<48x256xf32>
    %33 = arith.addf %30, %32 : vector<48x256xf32>
    %cst_13 = arith.constant 0.000000e+00 : f32
    %34 = vector.broadcast %cst_13 : f32 to vector<48x256xf32>
    %35 = arith.maximumf %33, %34 : vector<48x256xf32>
    %36 = tpu.concatenate %23, %35 in 1 : vector<48x256xf32>, vector<48x256xf32> -> vector<48x512xf32>
    %37 = arith.truncf %36 : vector<48x512xf32> to vector<48x512xbf16>
    %38 = vector.extract_strided_slice %37 {offsets = [0, 0], sizes = [32, 512], strides = [1, 1]} : vector<48x512xbf16> to vector<32x512xbf16>
    %c0_14 = arith.constant 0 : index
    %c0_15 = arith.constant 0 : index
    %c0_16 = arith.constant 0 : index
    %39 = vector.load %arg4[%c0_14, %c0_15, %c0_16] : memref<3x512x1024xbf16, #tpu.memory_space<vmem>>, vector<1x512x1024xbf16>
    %40 = vector.shape_cast %39 : vector<1x512x1024xbf16> to vector<512x1024xbf16>
    %cst_17 = arith.constant dense<0.000000e+00> : vector<32x1024xf32>
    %41 = tpu.matmul %38, %40, %cst_17 {dimension_numbers = #tpu.dot_dimension_numbers<[1], [0], [0], [1], [0, 0, 1, 1], [], []>} : vector<32x512xbf16>, vector<512x1024xbf16>, vector<32x1024xf32> -> vector<32x1024xf32>
    %42 = vector.extract_strided_slice %37 {offsets = [8, 0], sizes = [32, 512], strides = [1, 1]} : vector<48x512xbf16> to vector<32x512xbf16>
    %c1_18 = arith.constant 1 : index
    %c0_19 = arith.constant 0 : index
    %c0_20 = arith.constant 0 : index
    %43 = vector.load %arg4[%c1_18, %c0_19, %c0_20] : memref<3x512x1024xbf16, #tpu.memory_space<vmem>>, vector<1x512x1024xbf16>
    %44 = vector.shape_cast %43 : vector<1x512x1024xbf16> to vector<512x1024xbf16>
    %cst_21 = arith.constant dense<0.000000e+00> : vector<32x1024xf32>
    %45 = tpu.matmul %42, %44, %cst_21 {dimension_numbers = #tpu.dot_dimension_numbers<[1], [0], [0], [1], [0, 0, 1, 1], [], []>} : vector<32x512xbf16>, vector<512x1024xbf16>, vector<32x1024xf32> -> vector<32x1024xf32>
    %46 = arith.addf %41, %45 : vector<32x1024xf32>
    %47 = vector.extract_strided_slice %37 {offsets = [16, 0], sizes = [32, 512], strides = [1, 1]} : vector<48x512xbf16> to vector<32x512xbf16>
    %c2 = arith.constant 2 : index
    %c0_22 = arith.constant 0 : index
    %c0_23 = arith.constant 0 : index
    %48 = vector.load %arg4[%c2, %c0_22, %c0_23] : memref<3x512x1024xbf16, #tpu.memory_space<vmem>>, vector<1x512x1024xbf16>
    %49 = vector.shape_cast %48 : vector<1x512x1024xbf16> to vector<512x1024xbf16>
    %cst_24 = arith.constant dense<0.000000e+00> : vector<32x1024xf32>
    %50 = tpu.matmul %47, %49, %cst_24 {dimension_numbers = #tpu.dot_dimension_numbers<[1], [0], [0], [1], [0, 0, 1, 1], [], []>} : vector<32x512xbf16>, vector<512x1024xbf16>, vector<32x1024xf32> -> vector<32x1024xf32>
    %51 = arith.addf %46, %50 : vector<32x1024xf32>
    %52 = vector.extract_strided_slice %51 {offsets = [0, 0], sizes = [32, 256], strides = [1, 1]} : vector<32x1024xf32> to vector<32x256xf32>
    %53 = vector.extract_strided_slice %51 {offsets = [0, 256], sizes = [32, 256], strides = [1, 1]} : vector<32x1024xf32> to vector<32x256xf32>
    %54 = arith.maximumf %52, %53 : vector<32x256xf32>
    %55 = vector.extract_strided_slice %51 {offsets = [0, 512], sizes = [32, 256], strides = [1, 1]} : vector<32x1024xf32> to vector<32x256xf32>
    %56 = arith.maximumf %54, %55 : vector<32x256xf32>
    %57 = vector.extract_strided_slice %51 {offsets = [0, 768], sizes = [32, 256], strides = [1, 1]} : vector<32x1024xf32> to vector<32x256xf32>
    %58 = arith.maximumf %56, %57 : vector<32x256xf32>
    %c0_25 = arith.constant 0 : index
    %c0_26 = arith.constant 0 : index
    %59 = vector.load %arg5[%c0_25, %c0_26] : memref<1x256xf32, #tpu.memory_space<vmem>>, vector<1x256xf32>
    %60 = vector.broadcast %59 : vector<1x256xf32> to vector<32x256xf32>
    %61 = arith.addf %58, %60 : vector<32x256xf32>
    %cst_27 = arith.constant 0.000000e+00 : f32
    %62 = vector.broadcast %cst_27 : f32 to vector<32x256xf32>
    %63 = arith.maximumf %61, %62 : vector<32x256xf32>
    %64 = arith.truncf %63 : vector<32x256xf32> to vector<32x256xbf16>
    %65 = vector.extract_strided_slice %64 {offsets = [0, 0], sizes = [8, 256], strides = [1, 1]} : vector<32x256xbf16> to vector<8x256xbf16>
    %c0_28 = arith.constant 0 : index
    %c0_29 = arith.constant 0 : index
    %c0_30 = arith.constant 0 : index
    %66 = vector.load %arg6[%c0_28, %c0_29, %c0_30] : memref<4x256x512xbf16, #tpu.memory_space<vmem>>, vector<1x256x512xbf16>
    %67 = vector.shape_cast %66 : vector<1x256x512xbf16> to vector<256x512xbf16>
    %cst_31 = arith.constant dense<0.000000e+00> : vector<8x512xf32>
    %68 = tpu.matmul %65, %67, %cst_31 {dimension_numbers = #tpu.dot_dimension_numbers<[1], [0], [0], [1], [0, 0, 1, 1], [], []>} : vector<8x256xbf16>, vector<256x512xbf16>, vector<8x512xf32> -> vector<8x512xf32>
    %69 = vector.extract_strided_slice %64 {offsets = [8, 0], sizes = [8, 256], strides = [1, 1]} : vector<32x256xbf16> to vector<8x256xbf16>
    %c1_32 = arith.constant 1 : index
    %c0_33 = arith.constant 0 : index
    %c0_34 = arith.constant 0 : index
    %70 = vector.load %arg6[%c1_32, %c0_33, %c0_34] : memref<4x256x512xbf16, #tpu.memory_space<vmem>>, vector<1x256x512xbf16>
    %71 = vector.shape_cast %70 : vector<1x256x512xbf16> to vector<256x512xbf16>
    %cst_35 = arith.constant dense<0.000000e+00> : vector<8x512xf32>
    %72 = tpu.matmul %69, %71, %cst_35 {dimension_numbers = #tpu.dot_dimension_numbers<[1], [0], [0], [1], [0, 0, 1, 1], [], []>} : vector<8x256xbf16>, vector<256x512xbf16>, vector<8x512xf32> -> vector<8x512xf32>
    %73 = arith.addf %68, %72 : vector<8x512xf32>
    %74 = vector.extract_strided_slice %64 {offsets = [16, 0], sizes = [8, 256], strides = [1, 1]} : vector<32x256xbf16> to vector<8x256xbf16>
    %c2_36 = arith.constant 2 : index
    %c0_37 = arith.constant 0 : index
    %c0_38 = arith.constant 0 : index
    %75 = vector.load %arg6[%c2_36, %c0_37, %c0_38] : memref<4x256x512xbf16, #tpu.memory_space<vmem>>, vector<1x256x512xbf16>
    %76 = vector.shape_cast %75 : vector<1x256x512xbf16> to vector<256x512xbf16>
    %cst_39 = arith.constant dense<0.000000e+00> : vector<8x512xf32>
    %77 = tpu.matmul %74, %76, %cst_39 {dimension_numbers = #tpu.dot_dimension_numbers<[1], [0], [0], [1], [0, 0, 1, 1], [], []>} : vector<8x256xbf16>, vector<256x512xbf16>, vector<8x512xf32> -> vector<8x512xf32>
    %78 = arith.addf %73, %77 : vector<8x512xf32>
    %79 = vector.extract_strided_slice %64 {offsets = [24, 0], sizes = [8, 256], strides = [1, 1]} : vector<32x256xbf16> to vector<8x256xbf16>
    %c3 = arith.constant 3 : index
    %c0_40 = arith.constant 0 : index
    %c0_41 = arith.constant 0 : index
    %80 = vector.load %arg6[%c3, %c0_40, %c0_41] : memref<4x256x512xbf16, #tpu.memory_space<vmem>>, vector<1x256x512xbf16>
    %81 = vector.shape_cast %80 : vector<1x256x512xbf16> to vector<256x512xbf16>
    %cst_42 = arith.constant dense<0.000000e+00> : vector<8x512xf32>
    %82 = tpu.matmul %79, %81, %cst_42 {dimension_numbers = #tpu.dot_dimension_numbers<[1], [0], [0], [1], [0, 0, 1, 1], [], []>} : vector<8x256xbf16>, vector<256x512xbf16>, vector<8x512xf32> -> vector<8x512xf32>
    %83 = arith.addf %78, %82 : vector<8x512xf32>
    %c0_43 = arith.constant 0 : index
    %c0_44 = arith.constant 0 : index
    %84 = vector.load %arg7[%c0_43, %c0_44] : memref<1x512xf32, #tpu.memory_space<vmem>>, vector<1x512xf32>
    %85 = vector.broadcast %84 : vector<1x512xf32> to vector<8x512xf32>
    %86 = arith.addf %83, %85 : vector<8x512xf32>
    %cst_45 = arith.constant 0.000000e+00 : f32
    %87 = vector.broadcast %cst_45 : f32 to vector<8x512xf32>
    %88 = arith.maximumf %86, %87 : vector<8x512xf32>
    %89 = arith.truncf %88 : vector<8x512xf32> to vector<8x512xbf16>
    %c0_46 = arith.constant 0 : index
    %c0_47 = arith.constant 0 : index
    %90 = vector.load %arg8[%c0_46, %c0_47] : memref<512x128xbf16, #tpu.memory_space<vmem>>, vector<512x128xbf16>
    %cst_48 = arith.constant dense<0.000000e+00> : vector<8x128xf32>
    %91 = tpu.matmul %89, %90, %cst_48 {dimension_numbers = #tpu.dot_dimension_numbers<[1], [0], [0], [1], [0, 0, 1, 1], [], []>} : vector<8x512xbf16>, vector<512x128xbf16>, vector<8x128xf32> -> vector<8x128xf32>
    %c0_49 = arith.constant 0 : index
    %c0_50 = arith.constant 0 : index
    %92 = vector.load %arg9[%c0_49, %c0_50] : memref<1x128xf32, #tpu.memory_space<vmem>>, vector<1x128xf32>
    %93 = vector.broadcast %92 : vector<1x128xf32> to vector<8x128xf32>
    %94 = arith.addf %91, %93 : vector<8x128xf32>
    %cst_51 = arith.constant dense<0xFF800000> : vector<8xf32>
    %95 = vector.multi_reduction <maximumf>, %94, %cst_51 [1] : vector<8x128xf32> to vector<8xf32>
    %96 = vector.shape_cast %95 : vector<8xf32> to vector<8x1xf32>
    %97 = vector.broadcast %96 : vector<8x1xf32> to vector<8x128xf32>
    %98 = arith.subf %94, %97 : vector<8x128xf32>
    %99 = math.exp %98 : vector<8x128xf32>
    %cst_52 = arith.constant dense<0.000000e+00> : vector<8xf32>
    %100 = vector.multi_reduction <add>, %99, %cst_52 [1] : vector<8x128xf32> to vector<8xf32>
    %101 = vector.shape_cast %100 : vector<8xf32> to vector<8x1xf32>
    %102 = math.log %101 : vector<8x1xf32>
    %103 = vector.broadcast %102 : vector<8x1xf32> to vector<8x128xf32>
    %104 = arith.subf %98, %103 : vector<8x128xf32>
    %c0_53 = arith.constant 0 : index
    %c0_54 = arith.constant 0 : index
    %105 = vector.load %arg10[%c0_53, %c0_54] : memref<8x128xf32, #tpu.memory_space<vmem>>, vector<8x128xf32>
    tpu.vector_store %arg10[%c0_53, %c0_54], %104 {strides = array<i32>} : memref<8x128xf32, #tpu.memory_space<vmem>>, vector<8x128xf32>,
    return
  }
  func.func @transform_0(%arg0: i32) -> (i32, i32, i32) {
    %c0_i32 = arith.constant 0 : i32
    %c0_i32_0 = arith.constant 0 : i32
    %c0_i32_1 = arith.constant 0 : i32
    return %c0_i32, %arg0, %c0_i32_0 : i32, i32, i32
  }
  func.func @transform_1(%arg0: i32) -> (i32, i32, i32) {
    %c0_i32 = arith.constant 0 : i32
    %c0_i32_0 = arith.constant 0 : i32
    %c0_i32_1 = arith.constant 0 : i32
    %c0_i32_2 = arith.constant 0 : i32
    return %c0_i32, %c0_i32_0, %c0_i32_1 : i32, i32, i32
  }
  func.func @transform_2(%arg0: i32) -> (i32, i32) {
    %c0_i32 = arith.constant 0 : i32
    %c0_i32_0 = arith.constant 0 : i32
    %c0_i32_1 = arith.constant 0 : i32
    return %c0_i32, %c0_i32_0 : i32, i32
  }
  func.func @transform_3(%arg0: i32) -> (i32, i32, i32) {
    %c0_i32 = arith.constant 0 : i32
    %c0_i32_0 = arith.constant 0 : i32
    %c0_i32_1 = arith.constant 0 : i32
    %c0_i32_2 = arith.constant 0 : i32
    return %c0_i32, %c0_i32_0, %c0_i32_1 : i32, i32, i32
  }
  func.func @transform_4(%arg0: i32) -> (i32, i32) {
    %c0_i32 = arith.constant 0 : i32
    %c0_i32_0 = arith.constant 0 : i32
    %c0_i32_1 = arith.constant 0 : i32
    return %c0_i32, %c0_i32_0 : i32, i32
  }
  func.func @transform_5(%arg0: i32) -> (i32, i32, i32) {
    %c0_i32 = arith.constant 0 : i32
    %c0_i32_0 = arith.constant 0 : i32
    %c0_i32_1 = arith.constant 0 : i32
    %c0_i32_2 = arith.constant 0 : i32
    return %c0_i32, %c0_i32_0, %c0_i32_1 : i32, i32, i32
  }
  func.func @transform_6(%arg0: i32) -> (i32, i32) {
    %c0_i32 = arith.constant 0 : i32
    %c0_i32_0 = arith.constant 0 : i32
    %c0_i32_1 = arith.constant 0 : i32
    return %c0_i32, %c0_i32_0 : i32, i32
  }
  func.func @transform_7(%arg0: i32) -> (i32, i32) {
    %c0_i32 = arith.constant 0 : i32
    %c0_i32_0 = arith.constant 0 : i32
    %c0_i32_1 = arith.constant 0 : i32
    return %c0_i32, %c0_i32_0 : i32, i32
  }
  func.func @transform_8(%arg0: i32) -> (i32, i32) {
    %c0_i32 = arith.constant 0 : i32
    %c0_i32_0 = arith.constant 0 : i32
    %c0_i32_1 = arith.constant 0 : i32
    return %c0_i32, %c0_i32_0 : i32, i32
  }
  func.func @transform_9(%arg0: i32) -> (i32, i32) {
    %c0_i32 = arith.constant 0 : i32
    %c0_i32_0 = arith.constant 0 : i32
    return %arg0, %c0_i32 : i32, i32
  }
}

</mosaic_0001>

<llo_original>
// kernel: net_forward.1
$region0: #{net_forward.1}
  #allocation0 [shape = 'u32[]', space=smem, size = 0x4, offset = 0x4, fixed_abs, tag = 'smem constant byte address 0x4 - core index']
  #allocation1 [shape = 'u32[144,128]{1,0:T(1,128)}', space=vmem, size = 0x12000, scoped, tag = 'internal scratch']
  %s0 = inlined_call_operand.vmem [shape: bf16[7,8,112], index: 0, kind: input, shape index: {}]
  %s1 = inlined_call_operand.hbm [shape: bf16[2,112,2048], index: 1, kind: input, shape index: {}]
  %s2 = inlined_call_operand.hbm [shape: f32[1,256], index: 2, kind: input, shape index: {}]
  %s3 = inlined_call_operand.hbm [shape: bf16[3,512,1024], index: 3, kind: input, shape index: {}]
  %s4 = inlined_call_operand.hbm [shape: f32[1,256], index: 4, kind: input, shape index: {}]
  %s5 = inlined_call_operand.hbm [shape: bf16[4,256,512], index: 5, kind: input, shape index: {}]
  %s6 = inlined_call_operand.hbm [shape: f32[1,512], index: 6, kind: input, shape index: {}]
  %s7 = inlined_call_operand.hbm [shape: bf16[512,128], index: 7, kind: input, shape index: {}]
  %s8 = inlined_call_operand.hbm [shape: f32[1,128], index: 8, kind: input, shape index: {}]
  %s9 = inlined_call_operand.vmem [shape: f32[8,128], index: 9, kind: output, shape index: {}]
  %s10 = sld [smem:[#allocation0]]
  $region78: #{net_forward.1} parent=0
    _
  %s12 = ssub.s32 1, %s10
  %s13 = scalar_select 0, %s12, %s10
  $region1: #{net_forward.1} parent=0
    #allocation2 [shape = 'u8[917504]{0}', space=vmem, size = 0xe0000, scoped, tag = 'input window, operand 1, single buffered']
    #allocation3 [shape = 's32[1]{0}', space=sflag, size = 0x4, scoped, tag = 'scoped memory for net_forward.1']
    #allocation4 [shape = 'u8[1024]{0}', space=vmem, size = 0x400, scoped, tag = 'input window, operand 2, single buffered']
    #allocation5 [shape = 's32[1]{0}', space=sflag, size = 0x4, scoped, tag = 'scoped memory for net_forward.1']
    #allocation6 [shape = 'u8[3145728]{0}', space=vmem, size = 0x300000, scoped, tag = 'input window, operand 3, single buffered']
    #allocation7 [shape = 'u8[1024]{0}', space=vmem, size = 0x400, scoped, tag = 'input window, operand 4, single buffered']
    #allocation8 [shape = 's32[1]{0}', space=sflag, size = 0x4, scoped, tag = 'scoped memory for net_forward.1']
    #allocation9 [shape = 'u8[1048576]{0}', space=vmem, size = 0x100000, scoped, tag = 'input window, operand 5, single buffered']
    #allocation10 [shape = 'u8[2048]{0}', space=vmem, size = 0x800, scoped, tag = 'input window, operand 6, single buffered']
    #allocation11 [shape = 's32[1]{0}', space=sflag, size = 0x4, scoped, tag = 'scoped memory for net_forward.1']
    #allocation12 [shape = 'u8[131072]{0}', space=vmem, size = 0x20000, scoped, tag = 'input window, operand 7, single buffered']
    #allocation13 [shape = 'u8[512]{0}', space=vmem, size = 0x400, scoped, tag = 'input window, operand 8, single buffered']
    #allocation14 [shape = 's32[1]{0}', space=sflag, size = 0x4, scoped, tag = 'scoped memory for net_forward.1']
    %14 = vsyncpa [#allocation3], 0
    %15 = vsyncpa [#allocation5], 0
    %16 = vsyncpa [#allocation8], 0
    %17 = vsyncpa [#allocation11], 0
    %18 = vsyncpa [#allocation14], 0
    // Predicated region
    $region2: #{net_forward.1} parent=1 // pred_check
      _
    $region3: #{net_forward.1} parent=1 // pred_check_branch
      %20 = sbr.rel (0) target = $region5
    $region4: #{net_forward.1} parent=1 // pred_region
      _
    $region5: #{net_forward.1} parent=1 // pred_fallthru
      _
    // Predicated region
    $region6: #{net_forward.1} parent=1 // pred_check
      _
    $region7: #{net_forward.1} parent=1 // pred_check_branch
      %22 = sbr.rel (0) target = $region9
    $region8: #{net_forward.1} parent=1 // pred_region
      %s24 = ssub.s32 28672, 28672
      %25 = vsyncadd [#allocation3], %s24
      %s26 = sshll.u32 [#allocation2], 4
      %s27 = int_to_ptr.vmem [resolvable:$true] %s26
      %32 = dma.hbm_to_vmem [thread:$0]  %s1, 28672, %s27, [#allocation3], 1024, 1024, 64
    $region9: #{net_forward.1} parent=1 // pred_fallthru
      _
    // Predicated region
    $region10: #{net_forward.1} parent=1 // pred_check
      _
    $region11: #{net_forward.1} parent=1 // pred_check_branch
      %34 = sbr.rel (0) target = $region13
    $region12: #{net_forward.1} parent=1 // pred_region
      %s36 = ssub.s32 32, 32
      %37 = vsyncadd [#allocation5], %s36
      %s39 = sshll.u32 [#allocation4], 4
      %s40 = int_to_ptr.vmem [resolvable:$true] %s39
      %42 = dma.hbm_to_vmem [thread:$0]  %s2, 32, %s40, [#allocation5]
    $region13: #{net_forward.1} parent=1 // pred_fallthru
      _
    // Predicated region
    $region14: #{net_forward.1} parent=1 // pred_check
      _
    $region15: #{net_forward.1} parent=1 // pred_check_branch
      %44 = sbr.rel (0) target = $region17
    $region16: #{net_forward.1} parent=1 // pred_region
      %s46 = ssub.s32 98304, 98304
      %47 = vsyncadd [#allocation5], %s46
      %s48 = sshll.u32 [#allocation6], 4
      %s49 = int_to_ptr.vmem [resolvable:$true] %s48
      %54 = dma.hbm_to_vmem [thread:$0]  %s3, 98304, %s49, [#allocation5], 512, 512, 32
    $region17: #{net_forward.1} parent=1 // pred_fallthru
      _
    // Predicated region
    $region18: #{net_forward.1} parent=1 // pred_check
      _
    $region19: #{net_forward.1} parent=1 // pred_check_branch
      %56 = sbr.rel (0) target = $region21
    $region20: #{net_forward.1} parent=1 // pred_region
      %s58 = ssub.s32 32, 32
      %59 = vsyncadd [#allocation8], %s58
      %s61 = sshll.u32 [#allocation7], 4
      %s62 = int_to_ptr.vmem [resolvable:$true] %s61
      %64 = dma.hbm_to_vmem [thread:$0]  %s4, 32, %s62, [#allocation8]
    $region21: #{net_forward.1} parent=1 // pred_fallthru
      _
    // Predicated region
    $region22: #{net_forward.1} parent=1 // pred_check
      _
    $region23: #{net_forward.1} parent=1 // pred_check_branch
      %66 = sbr.rel (0) target = $region25
    $region24: #{net_forward.1} parent=1 // pred_region
      %s68 = ssub.s32 32768, 32768
      %69 = vsyncadd [#allocation8], %s68
      %s70 = sshll.u32 [#allocation9], 4
      %s71 = int_to_ptr.vmem [resolvable:$true] %s70
      %76 = dma.hbm_to_vmem [thread:$0]  %s5, 32768, %s71, [#allocation8], 256, 256, 16
    $region25: #{net_forward.1} parent=1 // pred_fallthru
      _
    // Predicated region
    $region26: #{net_forward.1} parent=1 // pred_check
      _
    $region27: #{net_forward.1} parent=1 // pred_check_branch
      %78 = sbr.rel (0) target = $region29
    $region28: #{net_forward.1} parent=1 // pred_region
      %s80 = ssub.s32 64, 64
      %81 = vsyncadd [#allocation11], %s80
      %s83 = sshll.u32 [#allocation10], 4
      %s84 = int_to_ptr.vmem [resolvable:$true] %s83
      %86 = dma.hbm_to_vmem [thread:$0]  %s6, 64, %s84, [#allocation11]
    $region29: #{net_forward.1} parent=1 // pred_fallthru
      _
    // Predicated region
    $region30: #{net_forward.1} parent=1 // pred_check
      _
    $region31: #{net_forward.1} parent=1 // pred_check_branch
      %88 = sbr.rel (0) target = $region33
    $region32: #{net_forward.1} parent=1 // pred_region
      %s90 = ssub.s32 4096, 4096
      %91 = vsyncadd [#allocation11], %s90
      %s92 = sshll.u32 [#allocation12], 4
      %s93 = int_to_ptr.vmem [resolvable:$true] %s92
      %98 = dma.hbm_to_vmem [thread:$0]  %s7, 4096, %s93, [#allocation11], 64, 64, 4
    $region33: #{net_forward.1} parent=1 // pred_fallthru
      _
    // Predicated region
    $region34: #{net_forward.1} parent=1 // pred_check
      _
    $region35: #{net_forward.1} parent=1 // pred_check_branch
      %100 = sbr.rel (0) target = $region37
    $region36: #{net_forward.1} parent=1 // pred_region
      %s102 = ssub.s32 16, 16
      %103 = vsyncadd [#allocation14], %s102
      %s105 = sshll.u32 [#allocation13], 4
      %s106 = int_to_ptr.vmem [resolvable:$true] %s105
      %108 = dma.hbm_to_vmem [thread:$0]  %s8, 16, %s106, [#allocation14]
    $region37: #{net_forward.1} parent=1 // pred_fallthru
      _
    // Predicated region
    $region38: #{net_forward.1} parent=1 // pred_check
      _
    $region39: #{net_forward.1} parent=1 // pred_check_branch
      %110 = sbr.rel (0) target = $region41
    $region40: #{net_forward.1} parent=1 // pred_region
      %111 = dma.done [#allocation3], 28672
    $region41: #{net_forward.1} parent=1 // pred_fallthru
      _
    // Predicated region
    $region42: #{net_forward.1} parent=1 // pred_check
      _
    $region43: #{net_forward.1} parent=1 // pred_check_branch
      %113 = sbr.rel (0) target = $region45
    $region44: #{net_forward.1} parent=1 // pred_region
      %114 = dma.done [#allocation5], 32
    $region45: #{net_forward.1} parent=1 // pred_fallthru
      _
    // Predicated region
    $region46: #{net_forward.1} parent=1 // pred_check
      _
    $region47: #{net_forward.1} parent=1 // pred_check_branch
      %116 = sbr.rel (0) target = $region49
    $region48: #{net_forward.1} parent=1 // pred_region
      %117 = dma.done [#allocation5], 98304
    $region49: #{net_forward.1} parent=1 // pred_fallthru
      _
    // Predicated region
    $region50: #{net_forward.1} parent=1 // pred_check
      _
    $region51: #{net_forward.1} parent=1 // pred_check_branch
      %119 = sbr.rel (0) target = $region53
    $region52: #{net_forward.1} parent=1 // pred_region
      %120 = dma.done [#allocation8], 32
    $region53: #{net_forward.1} parent=1 // pred_fallthru
      _
    // Predicated region
    $region54: #{net_forward.1} parent=1 // pred_check
      _
    $region55: #{net_forward.1} parent=1 // pred_check_branch
      %122 = sbr.rel (0) target = $region57
    $region56: #{net_forward.1} parent=1 // pred_region
      %123 = dma.done [#allocation8], 32768
    $region57: #{net_forward.1} parent=1 // pred_fallthru
      _
    // Predicated region
    $region58: #{net_forward.1} parent=1 // pred_check
      _
    $region59: #{net_forward.1} parent=1 // pred_check_branch
      %125 = sbr.rel (0) target = $region61
    $region60: #{net_forward.1} parent=1 // pred_region
      %126 = dma.done [#allocation11], 64
    $region61: #{net_forward.1} parent=1 // pred_fallthru
      _
    // Predicated region
    $region62: #{net_forward.1} parent=1 // pred_check
      _
    $region63: #{net_forward.1} parent=1 // pred_check_branch
      %128 = sbr.rel (0) target = $region65
    $region64: #{net_forward.1} parent=1 // pred_region
      %129 = dma.done [#allocation11], 4096
    $region65: #{net_forward.1} parent=1 // pred_fallthru
      _
    // Predicated region
    $region66: #{net_forward.1} parent=1 // pred_check
      _
    $region67: #{net_forward.1} parent=1 // pred_check_branch
      %131 = sbr.rel (0) target = $region69
    $region68: #{net_forward.1} parent=1 // pred_region
      %132 = dma.done [#allocation14], 16
    $region69: #{net_forward.1} parent=1 // pred_fallthru
      _
    %v134 = vld [vmem:[%s0] sm:$0xf]
    %v135 = vld [vmem:[%s0 + $0x4] sm:$0xf]
    %v136 = vld [vmem:[%s0 + $0x8] sm:$0xf]
    %v137 = vld [vmem:[%s0 + $0xc] sm:$0xf]
    %v138 = vld [vmem:[%s0 + $0x10] sm:$0xf]
    %v139 = vld [vmem:[%s0 + $0x14] sm:$0xf]
    %v140 = vld [vmem:[%s0 + $0x18] sm:$0xf]
    %v141 = vld [vmem:[#allocation2] sm:$0xff]
    %v142 = vld [vmem:[#allocation2 + $0x8] sm:$0xff]
    %v143 = vld [vmem:[#allocation2 + $0x10] sm:$0xff]
    %v144 = vld [vmem:[#allocation2 + $0x18] sm:$0xff]
    %v145 = vld [vmem:[#allocation2 + $0x20] sm:$0xff]
    %v146 = vld [vmem:[#allocation2 + $0x28] sm:$0xff]
    %v147 = vld [vmem:[#allocation2 + $0x30] sm:$0xff]
    %v148 = vld [vmem:[#allocation2 + $0x38] sm:$0xff]
    %v149 = vld [vmem:[#allocation2 + $0x40] sm:$0xff]
    %v150 = vld [vmem:[#allocation2 + $0x48] sm:$0xff]
    %v151 = vld [vmem:[#allocation2 + $0x50] sm:$0xff]
    %v152 = vld [vmem:[#allocation2 + $0x58] sm:$0xff]
    %v153 = vld [vmem:[#allocation2 + $0x60] sm:$0xff]
    %v154 = vld [vmem:[#allocation2 + $0x68] sm:$0xff]
    %v155 = vld [vmem:[#allocation2 + $0x70] sm:$0xff]
    %v156 = vld [vmem:[#allocation2 + $0x78] sm:$0xff]
    %v157 = vld [vmem:[#allocation2 + $0x80] sm:$0xff]
    %v158 = vld [vmem:[#allocation2 + $0x88] sm:$0xff]
    %v159 = vld [vmem:[#allocation2 + $0x90] sm:$0xff]
    %v160 = vld [vmem:[#allocation2 + $0x98] sm:$0xff]
    %v161 = vld [vmem:[#allocation2 + $0xa0] sm:$0xff]
    %v162 = vld [vmem:[#allocation2 + $0xa8] sm:$0xff]
    %v163 = vld [vmem:[#allocation2 + $0xb0] sm:$0xff]
    %v164 = vld [vmem:[#allocation2 + $0xb8] sm:$0xff]
    %v165 = vld [vmem:[#allocation2 + $0xc0] sm:$0xff]
    %v166 = vld [vmem:[#allocation2 + $0xc8] sm:$0xff]
    %v167 = vld [vmem:[#allocation2 + $0xd0] sm:$0xff]
    %v168 = vld [vmem:[#allocation2 + $0xd8] sm:$0xff]
    %v169 = vld [vmem:[#allocation2 + $0xe0] sm:$0xff]
    %v170 = vld [vmem:[#allocation2 + $0xe8] sm:$0xff]
    %v171 = vld [vmem:[#allocation2 + $0xf0] sm:$0xff]
    %v172 = vld [vmem:[#allocation2 + $0xf8] sm:$0xff]
    %v173 = vld [vmem:[#allocation2 + $0x100] sm:$0xff]
    %v174 = vld [vmem:[#allocation2 + $0x108] sm:$0xff]
    %v175 = vld [vmem:[#allocation2 + $0x110] sm:$0xff]
    %v176 = vld [vmem:[#allocation2 + $0x118] sm:$0xff]
    %v177 = vld [vmem:[#allocation2 + $0x120] sm:$0xff]
    %v178 = vld [vmem:[#allocation2 + $0x128] sm:$0xff]
    %v179 = vld [vmem:[#allocation2 + $0x130] sm:$0xff]
    %v180 = vld [vmem:[#allocation2 + $0x138] sm:$0xff]
    %v181 = vld [vmem:[#allocation2 + $0x140] sm:$0xff]
    %v182 = vld [vmem:[#allocation2 + $0x148] sm:$0xff]
    %v183 = vld [vmem:[#allocation2 + $0x150] sm:$0xff]
    %v184 = vld [vmem:[#allocation2 + $0x158] sm:$0xff]
    %v185 = vld [vmem:[#allocation2 + $0x160] sm:$0xff]
    %v186 = vld [vmem:[#allocation2 + $0x168] sm:$0xff]
    %v187 = vld [vmem:[#allocation2 + $0x170] sm:$0xff]
    %v188 = vld [vmem:[#allocation2 + $0x178] sm:$0xff]
    %v189 = vld [vmem:[#allocation2 + $0x180] sm:$0xff]
    %v190 = vld [vmem:[#allocation2 + $0x188] sm:$0xff]
    %v191 = vld [vmem:[#allocation2 + $0x190] sm:$0xff]
    %v192 = vld [vmem:[#allocation2 + $0x198] sm:$0xff]
    %v193 = vld [vmem:[#allocation2 + $0x1a0] sm:$0xff]
    %v194 = vld [vmem:[#allocation2 + $0x1a8] sm:$0xff]
    %v195 = vld [vmem:[#allocation2 + $0x1b0] sm:$0xff]
    %v196 = vld [vmem:[#allocation2 + $0x1b8] sm:$0xff]
    %v197 = vld [vmem:[#allocation2 + $0x1c0] sm:$0xff]
    %v198 = vld [vmem:[#allocation2 + $0x1c8] sm:$0xff]
    %v199 = vld [vmem:[#allocation2 + $0x1d0] sm:$0xff]
    %v200 = vld [vmem:[#allocation2 + $0x1d8] sm:$0xff]
    %v201 = vld [vmem:[#allocation2 + $0x1e0] sm:$0xff]
    %v202 = vld [vmem:[#allocation2 + $0x1e8] sm:$0xff]
    %v203 = vld [vmem:[#allocation2 + $0x1f0] sm:$0xff]
    %v204 = vld [vmem:[#allocation2 + $0x1f8] sm:$0xff]
    %v205 = vld [vmem:[#allocation2 + $0x200] sm:$0xff]
    %v206 = vld [vmem:[#allocation2 + $0x208] sm:$0xff]
    %v207 = vld [vmem:[#allocation2 + $0x210] sm:$0xff]
    %v208 = vld [vmem:[#allocation2 + $0x218] sm:$0xff]
    %v209 = vld [vmem:[#allocation2 + $0x220] sm:$0xff]
    %v210 = vld [vmem:[#allocation2 + $0x228] sm:$0xff]
    %v211 = vld [vmem:[#allocation2 + $0x230] sm:$0xff]
    %v212 = vld [vmem:[#allocation2 + $0x238] sm:$0xff]
    %v213 = vld [vmem:[#allocation2 + $0x240] sm:$0xff]
    %v214 = vld [vmem:[#allocation2 + $0x248] sm:$0xff]
    %v215 = vld [vmem:[#allocation2 + $0x250] sm:$0xff]
    %v216 = vld [vmem:[#allocation2 + $0x258] sm:$0xff]
    %v217 = vld [vmem:[#allocation2 + $0x260] sm:$0xff]
    %v218 = vld [vmem:[#allocation2 + $0x268] sm:$0xff]
    %v219 = vld [vmem:[#allocation2 + $0x270] sm:$0xff]
    %v220 = vld [vmem:[#allocation2 + $0x278] sm:$0xff]
    %v221 = vld [vmem:[#allocation2 + $0x280] sm:$0xff]
    %v222 = vld [vmem:[#allocation2 + $0x288] sm:$0xff]
    %v223 = vld [vmem:[#allocation2 + $0x290] sm:$0xff]
    %v224 = vld [vmem:[#allocation2 + $0x298] sm:$0xff]
    %v225 = vld [vmem:[#allocation2 + $0x2a0] sm:$0xff]
    %v226 = vld [vmem:[#allocation2 + $0x2a8] sm:$0xff]
    %v227 = vld [vmem:[#allocation2 + $0x2b0] sm:$0xff]
    %v228 = vld [vmem:[#allocation2 + $0x2b8] sm:$0xff]
    %v229 = vld [vmem:[#allocation2 + $0x2c0] sm:$0xff]
    %v230 = vld [vmem:[#allocation2 + $0x2c8] sm:$0xff]
    %v231 = vld [vmem:[#allocation2 + $0x2d0] sm:$0xff]
    %v232 = vld [vmem:[#allocation2 + $0x2d8] sm:$0xff]
    %v233 = vld [vmem:[#allocation2 + $0x2e0] sm:$0xff]
    %v234 = vld [vmem:[#allocation2 + $0x2e8] sm:$0xff]
    %v235 = vld [vmem:[#allocation2 + $0x2f0] sm:$0xff]
    %v236 = vld [vmem:[#allocation2 + $0x2f8] sm:$0xff]
    %v237 = vld [vmem:[#allocation2 + $0x300] sm:$0xff]
    %v238 = vld [vmem:[#allocation2 + $0x308] sm:$0xff]
    %v239 = vld [vmem:[#allocation2 + $0x310] sm:$0xff]
    %v240 = vld [vmem:[#allocation2 + $0x318] sm:$0xff]
    %v241 = vld [vmem:[#allocation2 + $0x320] sm:$0xff]
    %v242 = vld [vmem:[#allocation2 + $0x328] sm:$0xff]
    %v243 = vld [vmem:[#allocation2 + $0x330] sm:$0xff]
    %v244 = vld [vmem:[#allocation2 + $0x338] sm:$0xff]
    %v245 = vld [vmem:[#allocation2 + $0x340] sm:$0xff]
    %v246 = vld [vmem:[#allocation2 + $0x348] sm:$0xff]
    %v247 = vld [vmem:[#allocation2 + $0x350] sm:$0xff]
    %v248 = vld [vmem:[#allocation2 + $0x358] sm:$0xff]
    %v249 = vld [vmem:[#allocation2 + $0x360] sm:$0xff]
    %v250 = vld [vmem:[#allocation2 + $0x368] sm:$0xff]
    %v251 = vld [vmem:[#allocation2 + $0x370] sm:$0xff]
    %v252 = vld [vmem:[#allocation2 + $0x378] sm:$0xff]
    %s253 = scalar_lea.vmem [#allocation2], 896
    %v254 = vld [vmem:[%s253] sm:$0xff]
    %v255 = vld [vmem:[%s253 + $0x8] sm:$0xff]
    %v256 = vld [vmem:[%s253 + $0x10] sm:$0xff]
    %v257 = vld [vmem:[%s253 + $0x18] sm:$0xff]
    %v258 = vld [vmem:[%s253 + $0x20] sm:$0xff]
    %v259 = vld [vmem:[%s253 + $0x28] sm:$0xff]
    %v260 = vld [vmem:[%s253 + $0x30] sm:$0xff]
    %v261 = vld [vmem:[%s253 + $0x38] sm:$0xff]
    %v262 = vld [vmem:[%s253 + $0x40] sm:$0xff]
    %v263 = vld [vmem:[%s253 + $0x48] sm:$0xff]
    %v264 = vld [vmem:[%s253 + $0x50] sm:$0xff]
    %v265 = vld [vmem:[%s253 + $0x58] sm:$0xff]
    %v266 = vld [vmem:[%s253 + $0x60] sm:$0xff]
    %v267 = vld [vmem:[%s253 + $0x68] sm:$0xff]
    %v268 = vld [vmem:[%s253 + $0x70] sm:$0xff]
    %v269 = vld [vmem:[%s253 + $0x78] sm:$0xff]
    %v270 = vld [vmem:[%s253 + $0x80] sm:$0xff]
    %v271 = vld [vmem:[%s253 + $0x88] sm:$0xff]
    %v272 = vld [vmem:[%s253 + $0x90] sm:$0xff]
    %v273 = vld [vmem:[%s253 + $0x98] sm:$0xff]
    %v274 = vld [vmem:[%s253 + $0xa0] sm:$0xff]
    %v275 = vld [vmem:[%s253 + $0xa8] sm:$0xff]
    %v276 = vld [vmem:[%s253 + $0xb0] sm:$0xff]
    %v277 = vld [vmem:[%s253 + $0xb8] sm:$0xff]
    %v278 = vld [vmem:[%s253 + $0xc0] sm:$0xff]
    %v279 = vld [vmem:[%s253 + $0xc8] sm:$0xff]
    %v280 = vld [vmem:[%s253 + $0xd0] sm:$0xff]
    %v281 = vld [vmem:[%s253 + $0xd8] sm:$0xff]
    %v282 = vld [vmem:[%s253 + $0xe0] sm:$0xff]
    %v283 = vld [vmem:[%s253 + $0xe8] sm:$0xff]
    %v284 = vld [vmem:[%s253 + $0xf0] sm:$0xff]
    %v285 = vld [vmem:[%s253 + $0xf8] sm:$0xff]
    %v286 = vld [vmem:[%s253 + $0x100] sm:$0xff]
    %v287 = vld [vmem:[%s253 + $0x108] sm:$0xff]
    %v288 = vld [vmem:[%s253 + $0x110] sm:$0xff]
    %v289 = vld [vmem:[%s253 + $0x118] sm:$0xff]
    %v290 = vld [vmem:[%s253 + $0x120] sm:$0xff]
    %v291 = vld [vmem:[%s253 + $0x128] sm:$0xff]
    %v292 = vld [vmem:[%s253 + $0x130] sm:$0xff]
    %v293 = vld [vmem:[%s253 + $0x138] sm:$0xff]
    %v294 = vld [vmem:[%s253 + $0x140] sm:$0xff]
    %v295 = vld [vmem:[%s253 + $0x148] sm:$0xff]
    %v296 = vld [vmem:[%s253 + $0x150] sm:$0xff]
    %v297 = vld [vmem:[%s253 + $0x158] sm:$0xff]
    %v298 = vld [vmem:[%s253 + $0x160] sm:$0xff]
    %v299 = vld [vmem:[%s253 + $0x168] sm:$0xff]
    %v300 = vld [vmem:[%s253 + $0x170] sm:$0xff]
    %v301 = vld [vmem:[%s253 + $0x178] sm:$0xff]
    %v302 = vld [vmem:[%s253 + $0x180] sm:$0xff]
    %v303 = vld [vmem:[%s253 + $0x188] sm:$0xff]
    %v304 = vld [vmem:[%s253 + $0x190] sm:$0xff]
    %v305 = vld [vmem:[%s253 + $0x198] sm:$0xff]
    %v306 = vld [vmem:[%s253 + $0x1a0] sm:$0xff]
    %v307 = vld [vmem:[%s253 + $0x1a8] sm:$0xff]
    %v308 = vld [vmem:[%s253 + $0x1b0] sm:$0xff]
    %v309 = vld [vmem:[%s253 + $0x1b8] sm:$0xff]
    %v310 = vld [vmem:[%s253 + $0x1c0] sm:$0xff]
    %v311 = vld [vmem:[%s253 + $0x1c8] sm:$0xff]
    %v312 = vld [vmem:[%s253 + $0x1d0] sm:$0xff]
    %v313 = vld [vmem:[%s253 + $0x1d8] sm:$0xff]
    %v314 = vld [vmem:[%s253 + $0x1e0] sm:$0xff]
    %v315 = vld [vmem:[%s253 + $0x1e8] sm:$0xff]
    %v316 = vld [vmem:[%s253 + $0x1f0] sm:$0xff]
    %v317 = vld [vmem:[%s253 + $0x1f8] sm:$0xff]
    %v318 = vld [vmem:[%s253 + $0x200] sm:$0xff]
    %v319 = vld [vmem:[%s253 + $0x208] sm:$0xff]
    %v320 = vld [vmem:[%s253 + $0x210] sm:$0xff]
    %v321 = vld [vmem:[%s253 + $0x218] sm:$0xff]
    %v322 = vld [vmem:[%s253 + $0x220] sm:$0xff]
    %v323 = vld [vmem:[%s253 + $0x228] sm:$0xff]
    %v324 = vld [vmem:[%s253 + $0x230] sm:$0xff]
    %v325 = vld [vmem:[%s253 + $0x238] sm:$0xff]
    %v326 = vld [vmem:[%s253 + $0x240] sm:$0xff]
    %v327 = vld [vmem:[%s253 + $0x248] sm:$0xff]
    %v328 = vld [vmem:[%s253 + $0x250] sm:$0xff]
    %v329 = vld [vmem:[%s253 + $0x258] sm:$0xff]
    %v330 = vld [vmem:[%s253 + $0x260] sm:$0xff]
    %v331 = vld [vmem:[%s253 + $0x268] sm:$0xff]
    %v332 = vld [vmem:[%s253 + $0x270] sm:$0xff]
    %v333 = vld [vmem:[%s253 + $0x278] sm:$0xff]
    %v334 = vld [vmem:[%s253 + $0x280] sm:$0xff]
    %v335 = vld [vmem:[%s253 + $0x288] sm:$0xff]
    %v336 = vld [vmem:[%s253 + $0x290] sm:$0xff]
    %v337 = vld [vmem:[%s253 + $0x298] sm:$0xff]
    %v338 = vld [vmem:[%s253 + $0x2a0] sm:$0xff]
    %v339 = vld [vmem:[%s253 + $0x2a8] sm:$0xff]
    %v340 = vld [vmem:[%s253 + $0x2b0] sm:$0xff]
    %v341 = vld [vmem:[%s253 + $0x2b8] sm:$0xff]
    %v342 = vld [vmem:[%s253 + $0x2c0] sm:$0xff]
    %v343 = vld [vmem:[%s253 + $0x2c8] sm:$0xff]
    %v344 = vld [vmem:[%s253 + $0x2d0] sm:$0xff]
    %v345 = vld [vmem:[%s253 + $0x2d8] sm:$0xff]
    %v346 = vld [vmem:[%s253 + $0x2e0] sm:$0xff]
    %v347 = vld [vmem:[%s253 + $0x2e8] sm:$0xff]
    %v348 = vld [vmem:[%s253 + $0x2f0] sm:$0xff]
    %v349 = vld [vmem:[%s253 + $0x2f8] sm:$0xff]
    %v350 = vld [vmem:[%s253 + $0x300] sm:$0xff]
    %v351 = vld [vmem:[%s253 + $0x308] sm:$0xff]
    %v352 = vld [vmem:[%s253 + $0x310] sm:$0xff]
    %v353 = vld [vmem:[%s253 + $0x318] sm:$0xff]
    %v354 = vld [vmem:[%s253 + $0x320] sm:$0xff]
    %v355 = vld [vmem:[%s253 + $0x328] sm:$0xff]
    %v356 = vld [vmem:[%s253 + $0x330] sm:$0xff]
    %v357 = vld [vmem:[%s253 + $0x338] sm:$0xff]
    %v358 = vld [vmem:[%s253 + $0x340] sm:$0xff]
    %v359 = vld [vmem:[%s253 + $0x348] sm:$0xff]
    %v360 = vld [vmem:[%s253 + $0x350] sm:$0xff]
    %v361 = vld [vmem:[%s253 + $0x358] sm:$0xff]
    %v362 = vld [vmem:[%s253 + $0x360] sm:$0xff]
    %v363 = vld [vmem:[%s253 + $0x368] sm:$0xff]
    %v364 = vld [vmem:[%s253 + $0x370] sm:$0xff]
    %v365 = vld [vmem:[%s253 + $0x378] sm:$0xff]
    %v372 = vunpack.c.l.b16 %v135
    %v373 = vunpack.c.l.b16 %v136
    %v374 = vunpack.c.l.b16 %v137
    %v375 = vunpack.c.l.b16 %v138
    %v376 = vunpack.c.l.b16 %v139
    %v377 = vunpack.c.l.b16 %v140
    %v378 = vpack.c.b16 %v373, %v372
    %v379 = vpack.c.b16 %v375, %v374
    %v380 = vpack.c.b16 %v377, %v376
    %v493 = vunpack.c.l.b16 %v254
    %v494 = vunpack.c.h.b16 %v254
    %v495 = vunpack.c.l.b16 %v255
    %v496 = vunpack.c.h.b16 %v255
    %v497 = vunpack.c.l.b16 %v256
    %v498 = vunpack.c.h.b16 %v256
    %v499 = vunpack.c.l.b16 %v257
    %v500 = vunpack.c.h.b16 %v257
    %v501 = vunpack.c.l.b16 %v258
    %v502 = vunpack.c.h.b16 %v258
    %v503 = vunpack.c.l.b16 %v259
    %v504 = vunpack.c.h.b16 %v259
    %v505 = vunpack.c.l.b16 %v260
    %v506 = vunpack.c.h.b16 %v260
    %v507 = vunpack.c.l.b16 %v261
    %v508 = vunpack.c.h.b16 %v261
    %v509 = vunpack.c.l.b16 %v262
    %v510 = vunpack.c.h.b16 %v262
    %v511 = vunpack.c.l.b16 %v263
    %v512 = vunpack.c.h.b16 %v263
    %v513 = vunpack.c.l.b16 %v264
    %v514 = vunpack.c.h.b16 %v264
    %v515 = vunpack.c.l.b16 %v265
    %v516 = vunpack.c.h.b16 %v265
    %v517 = vunpack.c.l.b16 %v266
    %v518 = vunpack.c.h.b16 %v266
    %v519 = vunpack.c.l.b16 %v267
    %v520 = vunpack.c.h.b16 %v267
    %v521 = vunpack.c.l.b16 %v268
    %v522 = vunpack.c.h.b16 %v268
    %v523 = vunpack.c.l.b16 %v269
    %v524 = vunpack.c.h.b16 %v269
    %v525 = vunpack.c.l.b16 %v270
    %v526 = vunpack.c.h.b16 %v270
    %v527 = vunpack.c.l.b16 %v271
    %v528 = vunpack.c.h.b16 %v271
    %v529 = vunpack.c.l.b16 %v272
    %v530 = vunpack.c.h.b16 %v272
    %v531 = vunpack.c.l.b16 %v273
    %v532 = vunpack.c.h.b16 %v273
    %v533 = vunpack.c.l.b16 %v274
    %v534 = vunpack.c.h.b16 %v274
    %v535 = vunpack.c.l.b16 %v275
    %v536 = vunpack.c.h.b16 %v275
    %v537 = vunpack.c.l.b16 %v276
    %v538 = vunpack.c.h.b16 %v276
    %v539 = vunpack.c.l.b16 %v277
    %v540 = vunpack.c.h.b16 %v277
    %v541 = vunpack.c.l.b16 %v278
    %v542 = vunpack.c.h.b16 %v278
    %v543 = vunpack.c.l.b16 %v279
    %v544 = vunpack.c.h.b16 %v279
    %v545 = vunpack.c.l.b16 %v280
    %v546 = vunpack.c.h.b16 %v280
    %v547 = vunpack.c.l.b16 %v281
    %v548 = vunpack.c.h.b16 %v281
    %v549 = vunpack.c.l.b16 %v282
    %v550 = vunpack.c.h.b16 %v282
    %v551 = vunpack.c.l.b16 %v283
    %v552 = vunpack.c.h.b16 %v283
    %v553 = vunpack.c.l.b16 %v284
    %v554 = vunpack.c.h.b16 %v284
    %v555 = vunpack.c.l.b16 %v285
    %v556 = vunpack.c.h.b16 %v285
    %v557 = vunpack.c.l.b16 %v286
    %v558 = vunpack.c.h.b16 %v286
    %v559 = vunpack.c.l.b16 %v287
    %v560 = vunpack.c.h.b16 %v287
    %v561 = vunpack.c.l.b16 %v288
    %v562 = vunpack.c.h.b16 %v288
    %v563 = vunpack.c.l.b16 %v289
    %v564 = vunpack.c.h.b16 %v289
    %v565 = vunpack.c.l.b16 %v290
    %v566 = vunpack.c.h.b16 %v290
    %v567 = vunpack.c.l.b16 %v291
    %v568 = vunpack.c.h.b16 %v291
    %v569 = vunpack.c.l.b16 %v292
    %v570 = vunpack.c.h.b16 %v292
    %v571 = vunpack.c.l.b16 %v293
    %v572 = vunpack.c.h.b16 %v293
    %v573 = vunpack.c.l.b16 %v294
    %v574 = vunpack.c.h.b16 %v294
    %v575 = vunpack.c.l.b16 %v295
    %v576 = vunpack.c.h.b16 %v295
    %v577 = vunpack.c.l.b16 %v296
    %v578 = vunpack.c.h.b16 %v296
    %v579 = vunpack.c.l.b16 %v297
    %v580 = vunpack.c.h.b16 %v297
    %v581 = vunpack.c.l.b16 %v298
    %v582 = vunpack.c.h.b16 %v298
    %v583 = vunpack.c.l.b16 %v299
    %v584 = vunpack.c.h.b16 %v299
    %v585 = vunpack.c.l.b16 %v300
    %v586 = vunpack.c.h.b16 %v300
    %v587 = vunpack.c.l.b16 %v301
    %v588 = vunpack.c.h.b16 %v301
    %v589 = vunpack.c.l.b16 %v302
    %v590 = vunpack.c.h.b16 %v302
    %v591 = vunpack.c.l.b16 %v303
    %v592 = vunpack.c.h.b16 %v303
    %v593 = vunpack.c.l.b16 %v304
    %v594 = vunpack.c.h.b16 %v304
    %v595 = vunpack.c.l.b16 %v305
    %v596 = vunpack.c.h.b16 %v305
    %v597 = vunpack.c.l.b16 %v306
    %v598 = vunpack.c.h.b16 %v306
    %v599 = vunpack.c.l.b16 %v307
    %v600 = vunpack.c.h.b16 %v307
    %v601 = vunpack.c.l.b16 %v308
    %v602 = vunpack.c.h.b16 %v308
    %v603 = vunpack.c.l.b16 %v309
    %v604 = vunpack.c.h.b16 %v309
    %v605 = vunpack.c.l.b16 %v310
    %v606 = vunpack.c.h.b16 %v310
    %v607 = vunpack.c.l.b16 %v311
    %v608 = vunpack.c.h.b16 %v311
    %v609 = vunpack.c.l.b16 %v312
    %v610 = vunpack.c.h.b16 %v312
    %v611 = vunpack.c.l.b16 %v313
    %v612 = vunpack.c.h.b16 %v313
    %v613 = vunpack.c.l.b16 %v314
    %v614 = vunpack.c.h.b16 %v314
    %v615 = vunpack.c.l.b16 %v315
    %v616 = vunpack.c.h.b16 %v315
    %v617 = vunpack.c.l.b16 %v316
    %v618 = vunpack.c.h.b16 %v316
    %v619 = vunpack.c.l.b16 %v317
    %v620 = vunpack.c.h.b16 %v317
    %v621 = vunpack.c.l.b16 %v318
    %v622 = vunpack.c.h.b16 %v318
    %v623 = vunpack.c.l.b16 %v319
    %v624 = vunpack.c.h.b16 %v319
    %v625 = vunpack.c.l.b16 %v320
    %v626 = vunpack.c.h.b16 %v320
    %v627 = vunpack.c.l.b16 %v321
    %v628 = vunpack.c.h.b16 %v321
    %v629 = vunpack.c.l.b16 %v322
    %v630 = vunpack.c.h.b16 %v322
    %v631 = vunpack.c.l.b16 %v323
    %v632 = vunpack.c.h.b16 %v323
    %v633 = vunpack.c.l.b16 %v324
    %v634 = vunpack.c.h.b16 %v324
    %v635 = vunpack.c.l.b16 %v325
    %v636 = vunpack.c.h.b16 %v325
    %v637 = vunpack.c.l.b16 %v326
    %v638 = vunpack.c.h.b16 %v326
    %v639 = vunpack.c.l.b16 %v327
    %v640 = vunpack.c.h.b16 %v327
    %v641 = vunpack.c.l.b16 %v328
    %v642 = vunpack.c.h.b16 %v328
    %v643 = vunpack.c.l.b16 %v329
    %v644 = vunpack.c.h.b16 %v329
    %v645 = vunpack.c.l.b16 %v330
    %v646 = vunpack.c.h.b16 %v330
    %v647 = vunpack.c.l.b16 %v331
    %v648 = vunpack.c.h.b16 %v331
    %v649 = vunpack.c.l.b16 %v332
    %v650 = vunpack.c.h.b16 %v332
    %v651 = vunpack.c.l.b16 %v333
    %v652 = vunpack.c.h.b16 %v333
    %v653 = vunpack.c.l.b16 %v334
    %v654 = vunpack.c.h.b16 %v334
    %v655 = vunpack.c.l.b16 %v335
    %v656 = vunpack.c.h.b16 %v335
    %v657 = vunpack.c.l.b16 %v336
    %v658 = vunpack.c.h.b16 %v336
    %v659 = vunpack.c.l.b16 %v337
    %v660 = vunpack.c.h.b16 %v337
    %v661 = vunpack.c.l.b16 %v338
    %v662 = vunpack.c.h.b16 %v338
    %v663 = vunpack.c.l.b16 %v339
    %v664 = vunpack.c.h.b16 %v339
    %v665 = vunpack.c.l.b16 %v340
    %v666 = vunpack.c.h.b16 %v340
    %v667 = vunpack.c.l.b16 %v341
    %v668 = vunpack.c.h.b16 %v341
    %v669 = vunpack.c.l.b16 %v342
    %v670 = vunpack.c.h.b16 %v342
    %v671 = vunpack.c.l.b16 %v343
    %v672 = vunpack.c.h.b16 %v343
    %v673 = vunpack.c.l.b16 %v344
    %v674 = vunpack.c.h.b16 %v344
    %v675 = vunpack.c.l.b16 %v345
    %v676 = vunpack.c.h.b16 %v345
    %v677 = vunpack.c.l.b16 %v346
    %v678 = vunpack.c.h.b16 %v346
    %v679 = vunpack.c.l.b16 %v347
    %v680 = vunpack.c.h.b16 %v347
    %v681 = vunpack.c.l.b16 %v348
    %v682 = vunpack.c.h.b16 %v348
    %v683 = vunpack.c.l.b16 %v349
    %v684 = vunpack.c.h.b16 %v349
    %v685 = vunpack.c.l.b16 %v350
    %v686 = vunpack.c.h.b16 %v350
    %v687 = vunpack.c.l.b16 %v351
    %v688 = vunpack.c.h.b16 %v351
    %v689 = vunpack.c.l.b16 %v352
    %v690 = vunpack.c.h.b16 %v352
    %v691 = vunpack.c.l.b16 %v353
    %v692 = vunpack.c.h.b16 %v353
    %v693 = vunpack.c.l.b16 %v354
    %v694 = vunpack.c.h.b16 %v354
    %v695 = vunpack.c.l.b16 %v355
    %v696 = vunpack.c.h.b16 %v355
    %v697 = vunpack.c.l.b16 %v356
    %v698 = vunpack.c.h.b16 %v356
    %v699 = vunpack.c.l.b16 %v357
    %v700 = vunpack.c.h.b16 %v357
    %v701 = vunpack.c.l.b16 %v358
    %v702 = vunpack.c.h.b16 %v358
    %v703 = vunpack.c.l.b16 %v359
    %v704 = vunpack.c.h.b16 %v359
    %v705 = vunpack.c.l.b16 %v360
    %v706 = vunpack.c.h.b16 %v360
    %v707 = vunpack.c.l.b16 %v361
    %v708 = vunpack.c.h.b16 %v361
    %v709 = vunpack.c.l.b16 %v362
    %v710 = vunpack.c.h.b16 %v362
    %v711 = vunpack.c.l.b16 %v363
    %v712 = vunpack.c.h.b16 %v363
    %v713 = vunpack.c.l.b16 %v364
    %v714 = vunpack.c.h.b16 %v364
    %v715 = vunpack.c.l.b16 %v365
    %v716 = vunpack.c.h.b16 %v365
    %v717 = vpack.c.b16 %v509, %v493
    %v718 = vpack.c.b16 %v510, %v494
    %v719 = vpack.c.b16 %v511, %v495
    %v720 = vpack.c.b16 %v512, %v496
    %v721 = vpack.c.b16 %v513, %v497
    %v722 = vpack.c.b16 %v514, %v498
    %v723 = vpack.c.b16 %v515, %v499
    %v724 = vpack.c.b16 %v516, %v500
    %v725 = vpack.c.b16 %v517, %v501
    %v726 = vpack.c.b16 %v518, %v502
    %v727 = vpack.c.b16 %v519, %v503
    %v728 = vpack.c.b16 %v520, %v504
    %v729 = vpack.c.b16 %v521, %v505
    %v730 = vpack.c.b16 %v522, %v506
    %v731 = vpack.c.b16 %v523, %v507
    %v732 = vpack.c.b16 %v524, %v508
    %v733 = vpack.c.b16 %v541, %v525
    %v734 = vpack.c.b16 %v542, %v526
    %v735 = vpack.c.b16 %v543, %v527
    %v736 = vpack.c.b16 %v544, %v528
    %v737 = vpack.c.b16 %v545, %v529
    %v738 = vpack.c.b16 %v546, %v530
    %v739 = vpack.c.b16 %v547, %v531
    %v740 = vpack.c.b16 %v548, %v532
    %v741 = vpack.c.b16 %v549, %v533
    %v742 = vpack.c.b16 %v550, %v534
    %v743 = vpack.c.b16 %v551, %v535
    %v744 = vpack.c.b16 %v552, %v536
    %v745 = vpack.c.b16 %v553, %v537
    %v746 = vpack.c.b16 %v554, %v538
    %v747 = vpack.c.b16 %v555, %v539
    %v748 = vpack.c.b16 %v556, %v540
    %v749 = vpack.c.b16 %v573, %v557
    %v750 = vpack.c.b16 %v574, %v558
    %v751 = vpack.c.b16 %v575, %v559
    %v752 = vpack.c.b16 %v576, %v560
    %v753 = vpack.c.b16 %v577, %v561
    %v754 = vpack.c.b16 %v578, %v562
    %v755 = vpack.c.b16 %v579, %v563
    %v756 = vpack.c.b16 %v580, %v564
    %v757 = vpack.c.b16 %v581, %v565
    %v758 = vpack.c.b16 %v582, %v566
    %v759 = vpack.c.b16 %v583, %v567
    %v760 = vpack.c.b16 %v584, %v568
    %v761 = vpack.c.b16 %v585, %v569
    %v762 = vpack.c.b16 %v586, %v570
    %v763 = vpack.c.b16 %v587, %v571
    %v764 = vpack.c.b16 %v588, %v572
    %v765 = vpack.c.b16 %v605, %v589
    %v766 = vpack.c.b16 %v606, %v590
    %v767 = vpack.c.b16 %v607, %v591
    %v768 = vpack.c.b16 %v608, %v592
    %v769 = vpack.c.b16 %v609, %v593
    %v770 = vpack.c.b16 %v610, %v594
    %v771 = vpack.c.b16 %v611, %v595
    %v772 = vpack.c.b16 %v612, %v596
    %v773 = vpack.c.b16 %v613, %v597
    %v774 = vpack.c.b16 %v614, %v598
    %v775 = vpack.c.b16 %v615, %v599
    %v776 = vpack.c.b16 %v616, %v600
    %v777 = vpack.c.b16 %v617, %v601
    %v778 = vpack.c.b16 %v618, %v602
    %v779 = vpack.c.b16 %v619, %v603
    %v780 = vpack.c.b16 %v620, %v604
    %v781 = vpack.c.b16 %v637, %v621
    %v782 = vpack.c.b16 %v638, %v622
    %v783 = vpack.c.b16 %v639, %v623
    %v784 = vpack.c.b16 %v640, %v624
    %v785 = vpack.c.b16 %v641, %v625
    %v786 = vpack.c.b16 %v642, %v626
    %v787 = vpack.c.b16 %v643, %v627
    %v788 = vpack.c.b16 %v644, %v628
    %v789 = vpack.c.b16 %v645, %v629
    %v790 = vpack.c.b16 %v646, %v630
    %v791 = vpack.c.b16 %v647, %v631
    %v792 = vpack.c.b16 %v648, %v632
    %v793 = vpack.c.b16 %v649, %v633
    %v794 = vpack.c.b16 %v650, %v634
    %v795 = vpack.c.b16 %v651, %v635
    %v796 = vpack.c.b16 %v652, %v636
    %v797 = vpack.c.b16 %v669, %v653
    %v798 = vpack.c.b16 %v670, %v654
    %v799 = vpack.c.b16 %v671, %v655
    %v800 = vpack.c.b16 %v672, %v656
    %v801 = vpack.c.b16 %v673, %v657
    %v802 = vpack.c.b16 %v674, %v658
    %v803 = vpack.c.b16 %v675, %v659
    %v804 = vpack.c.b16 %v676, %v660
    %v805 = vpack.c.b16 %v677, %v661
    %v806 = vpack.c.b16 %v678, %v662
    %v807 = vpack.c.b16 %v679, %v663
    %v808 = vpack.c.b16 %v680, %v664
    %v809 = vpack.c.b16 %v681, %v665
    %v810 = vpack.c.b16 %v682, %v666
    %v811 = vpack.c.b16 %v683, %v667
    %v812 = vpack.c.b16 %v684, %v668
    %v813 = vpack.c.b16 %v701, %v685
    %v814 = vpack.c.b16 %v702, %v686
    %v815 = vpack.c.b16 %v703, %v687
    %v816 = vpack.c.b16 %v704, %v688
    %v817 = vpack.c.b16 %v705, %v689
    %v818 = vpack.c.b16 %v706, %v690
    %v819 = vpack.c.b16 %v707, %v691
    %v820 = vpack.c.b16 %v708, %v692
    %v821 = vpack.c.b16 %v709, %v693
    %v822 = vpack.c.b16 %v710, %v694
    %v823 = vpack.c.b16 %v711, %v695
    %v824 = vpack.c.b16 %v712, %v696
    %v825 = vpack.c.b16 %v713, %v697
    %v826 = vpack.c.b16 %v714, %v698
    %v827 = vpack.c.b16 %v715, %v699
    %v828 = vpack.c.b16 %v716, %v700
    %vm941 = vcmask 916480
    %v943 = vsel %vm941, %v378, 0
    %v946 = vsel %vm941, %v379, 0
    %v949 = vsel %vm941, %v380, 0
    %951 = vmatprep.subr.bf16.mxu0 %v718
    %952 = vmatpush1.bf16.msra.mxu0 %v717
    %953 = vmatprep.subr.bf16.mxu0 %v734
    %954 = vmatpush1.bf16.msra.mxu0 %v733
    %955 = vmatprep.subr.bf16.mxu0 %v750
    %956 = vmatpush1.bf16.msra.mxu0 %v749
    %957 = vmatprep.subr.bf16.mxu0 %v766
    %958 = vmatpush1.bf16.msra.mxu0 %v765
    %959 = vmatprep.subr.bf16.mxu0 %v782
    %960 = vmatpush1.bf16.msra.mxu0 %v781
    %961 = vmatprep.subr.bf16.mxu0 %v798
    %962 = vmatpush1.bf16.msra.mxu0 %v797
    %963 = vmatprep.subr.bf16.mxu0 %v814
    %964 = vmatpush1.bf16.msra.mxu0 %v813
    %965 = vmatprep.subr.bf16.mxu0 0
    %966 = vmatpush1.bf16.msra.mxu0 0
    %967 = vmatprep.subr.bf16.mxu0 0
    %968 = vmatpush1.bf16.msra.mxu0 0
    %969 = vmatprep.subr.bf16.mxu0 0
    %970 = vmatpush1.bf16.msra.mxu0 0
    %971 = vmatprep.subr.bf16.mxu0 0
    %972 = vmatpush1.bf16.msra.mxu0 0
    %973 = vmatprep.subr.bf16.mxu0 0
    %974 = vmatpush1.bf16.msra.mxu0 0
    %975 = vmatprep.subr.bf16.mxu0 0
    %976 = vmatpush1.bf16.msra.mxu0 0
    %977 = vmatprep.subr.bf16.mxu0 0
    %978 = vmatpush1.bf16.msra.mxu0 0
    %979 = vmatprep.subr.bf16.mxu0 0
    %980 = vmatpush1.bf16.msra.mxu0 0
    %981 = vmatprep.subr.bf16.mxu0 0
    %982 = vmatpush1.bf16.msra.mxu0 0
    %983 = vmatprep.mubr.bf16.mxu0 0
    %984 = vmatmul.mubr.bf16.gmra.mrb[0].mxu0 %v943
    %v985 = vpop.f32.mrb[0].mxu0
    %v986 = vadd.f32 0.0, %v985
    %v987 = vpop.f32.mrb[0].mxu0
    %v988 = vadd.f32 0.0, %v987
    %v989 = vpop.f32.mrb[0].mxu0
    %v990 = vadd.f32 0.0, %v989
    %v991 = vpop.f32.mrb[0].mxu0
    %v992 = vadd.f32 0.0, %v991
    %993 = vmatprep.mubr.bf16.mxu0 0
    %994 = vmatmul.mubr.bf16.gmra.mrb[0].mxu0 %v946
    %v995 = vpop.f32.mrb[0].mxu0
    %v996 = vadd.f32 0.0, %v995
    %v997 = vpop.f32.mrb[0].mxu0
    %v998 = vadd.f32 0.0, %v997
    %v999 = vpop.f32.mrb[0].mxu0
    %v1000 = vadd.f32 0.0, %v999
    %v1001 = vpop.f32.mrb[0].mxu0
    %v1002 = vadd.f32 0.0, %v1001
    %1003 = vmatprep.mubr.bf16.mxu0 0
    %1004 = vmatmul.mubr.bf16.gmra.mrb[0].mxu0 %v949
    %v1005 = vpop.f32.mrb[0].mxu0
    %v1006 = vadd.f32 0.0, %v1005
    %v1007 = vpop.f32.mrb[0].mxu0
    %v1008 = vadd.f32 0.0, %v1007
    %v1009 = vpop.f32.mrb[0].mxu0
    %v1010 = vadd.f32 0.0, %v1009
    %v1011 = vpop.f32.mrb[0].mxu0
    %v1012 = vadd.f32 0.0, %v1011
    %1013 = vdwg.mxu0
    %1014 = vmatprep.subr.bf16.mxu0 %v720
    %1015 = vmatpush1.bf16.msra.mxu0 %v719
    %1016 = vmatprep.subr.bf16.mxu0 %v736
    %1017 = vmatpush1.bf16.msra.mxu0 %v735
    %1018 = vmatprep.subr.bf16.mxu0 %v752
    %1019 = vmatpush1.bf16.msra.mxu0 %v751
    %1020 = vmatprep.subr.bf16.mxu0 %v768
    %1021 = vmatpush1.bf16.msra.mxu0 %v767
    %1022 = vmatprep.subr.bf16.mxu0 %v784
    %1023 = vmatpush1.bf16.msra.mxu0 %v783
    %1024 = vmatprep.subr.bf16.mxu0 %v800
    %1025 = vmatpush1.bf16.msra.mxu0 %v799
    %1026 = vmatprep.subr.bf16.mxu0 %v816
    %1027 = vmatpush1.bf16.msra.mxu0 %v815
    %1028 = vmatprep.subr.bf16.mxu0 0
    %1029 = vmatpush1.bf16.msra.mxu0 0
    %1030 = vmatprep.subr.bf16.mxu0 0
    %1031 = vmatpush1.bf16.msra.mxu0 0
    %1032 = vmatprep.subr.bf16.mxu0 0
    %1033 = vmatpush1.bf16.msra.mxu0 0
    %1034 = vmatprep.subr.bf16.mxu0 0
    %1035 = vmatpush1.bf16.msra.mxu0 0
    %1036 = vmatprep.subr.bf16.mxu0 0
    %1037 = vmatpush1.bf16.msra.mxu0 0
    %1038 = vmatprep.subr.bf16.mxu0 0
    %1039 = vmatpush1.bf16.msra.mxu0 0
    %1040 = vmatprep.subr.bf16.mxu0 0
    %1041 = vmatpush1.bf16.msra.mxu0 0
    %1042 = vmatprep.subr.bf16.mxu0 0
    %1043 = vmatpush1.bf16.msra.mxu0 0
    %1044 = vmatprep.subr.bf16.mxu0 0
    %1045 = vmatpush1.bf16.msra.mxu0 0
    %1046 = vmatprep.mubr.bf16.mxu0 0
    %1047 = vmatmul.mubr.bf16.gmra.mrb[0].mxu0 %v943
    %v1048 = vpop.f32.mrb[0].mxu0
    %v1049 = vadd.f32 0.0, %v1048
    %v1050 = vpop.f32.mrb[0].mxu0
    %v1051 = vadd.f32 0.0, %v1050
    %v1052 = vpop.f32.mrb[0].mxu0
    %v1053 = vadd.f32 0.0, %v1052
    %v1054 = vpop.f32.mrb[0].mxu0
    %v1055 = vadd.f32 0.0, %v1054
    %1056 = vmatprep.mubr.bf16.mxu0 0
    %1057 = vmatmul.mubr.bf16.gmra.mrb[0].mxu0 %v946
    %v1058 = vpop.f32.mrb[0].mxu0
    %v1059 = vadd.f32 0.0, %v1058
    %v1060 = vpop.f32.mrb[0].mxu0
    %v1061 = vadd.f32 0.0, %v1060
    %v1062 = vpop.f32.mrb[0].mxu0
    %v1063 = vadd.f32 0.0, %v1062
    %v1064 = vpop.f32.mrb[0].mxu0
    %v1065 = vadd.f32 0.0, %v1064
    %1066 = vmatprep.mubr.bf16.mxu0 0
    %1067 = vmatmul.mubr.bf16.gmra.mrb[0].mxu0 %v949
    %v1068 = vpop.f32.mrb[0].mxu0
    %v1069 = vadd.f32 0.0, %v1068
    %v1070 = vpop.f32.mrb[0].mxu0
    %v1071 = vadd.f32 0.0, %v1070
    %v1072 = vpop.f32.mrb[0].mxu0
    %v1073 = vadd.f32 0.0, %v1072
    %v1074 = vpop.f32.mrb[0].mxu0
    %v1075 = vadd.f32 0.0, %v1074
    %1076 = vdwg.mxu0
    %1077 = vmatprep.subr.bf16.mxu0 %v722
    %1078 = vmatpush1.bf16.msra.mxu0 %v721
    %1079 = vmatprep.subr.bf16.mxu0 %v738
    %1080 = vmatpush1.bf16.msra.mxu0 %v737
    %1081 = vmatprep.subr.bf16.mxu0 %v754
    %1082 = vmatpush1.bf16.msra.mxu0 %v753
    %1083 = vmatprep.subr.bf16.mxu0 %v770
    %1084 = vmatpush1.bf16.msra.mxu0 %v769
    %1085 = vmatprep.subr.bf16.mxu0 %v786
    %1086 = vmatpush1.bf16.msra.mxu0 %v785
    %1087 = vmatprep.subr.bf16.mxu0 %v802
    %1088 = vmatpush1.bf16.msra.mxu0 %v801
    %1089 = vmatprep.subr.bf16.mxu0 %v818
    %1090 = vmatpush1.bf16.msra.mxu0 %v817
    %1091 = vmatprep.subr.bf16.mxu0 0
    %1092 = vmatpush1.bf16.msra.mxu0 0
    %1093 = vmatprep.subr.bf16.mxu0 0
    %1094 = vmatpush1.bf16.msra.mxu0 0
    %1095 = vmatprep.subr.bf16.mxu0 0
    %1096 = vmatpush1.bf16.msra.mxu0 0
    %1097 = vmatprep.subr.bf16.mxu0 0
    %1098 = vmatpush1.bf16.msra.mxu0 0
    %1099 = vmatprep.subr.bf16.mxu0 0
    %1100 = vmatpush1.bf16.msra.mxu0 0
    %1101 = vmatprep.subr.bf16.mxu0 0
    %1102 = vmatpush1.bf16.msra.mxu0 0
    %1103 = vmatprep.subr.bf16.mxu0 0
    %1104 = vmatpush1.bf16.msra.mxu0 0
    %1105 = vmatprep.subr.bf16.mxu0 0
    %1106 = vmatpush1.bf16.msra.mxu0 0
    %1107 = vmatprep.subr.bf16.mxu0 0
    %1108 = vmatpush1.bf16.msra.mxu0 0
    %1109 = vmatprep.mubr.bf16.mxu0 0
    %1110 = vmatmul.mubr.bf16.gmra.mrb[0].mxu0 %v943
    %v1111 = vpop.f32.mrb[0].mxu0
    %v1112 = vadd.f32 0.0, %v1111
    %v1113 = vpop.f32.mrb[0].mxu0
    %v1114 = vadd.f32 0.0, %v1113
    %v1115 = vpop.f32.mrb[0].mxu0
    %v1116 = vadd.f32 0.0, %v1115
    %v1117 = vpop.f32.mrb[0].mxu0
    %v1118 = vadd.f32 0.0, %v1117
    %1119 = vmatprep.mubr.bf16.mxu0 0
    %1120 = vmatmul.mubr.bf16.gmra.mrb[0].mxu0 %v946
    %v1121 = vpop.f32.mrb[0].mxu0
    %v1122 = vadd.f32 0.0, %v1121
    %v1123 = vpop.f32.mrb[0].mxu0
    %v1124 = vadd.f32 0.0, %v1123
    %v1125 = vpop.f32.mrb[0].mxu0
    %v1126 = vadd.f32 0.0, %v1125
    %v1127 = vpop.f32.mrb[0].mxu0
    %v1128 = vadd.f32 0.0, %v1127
    %1129 = vmatprep.mubr.bf16.mxu0 0
    %1130 = vmatmul.mubr.bf16.gmra.mrb[0].mxu0 %v949
    %v1131 = vpop.f32.mrb[0].mxu0
    %v1132 = vadd.f32 0.0, %v1131
    %v1133 = vpop.f32.mrb[0].mxu0
    %v1134 = vadd.f32 0.0, %v1133
    %v1135 = vpop.f32.mrb[0].mxu0
    %v1136 = vadd.f32 0.0, %v1135
    %v1137 = vpop.f32.mrb[0].mxu0
    %v1138 = vadd.f32 0.0, %v1137
    %1139 = vdwg.mxu0
    %1140 = vmatprep.subr.bf16.mxu0 %v724
    %1141 = vmatpush1.bf16.msra.mxu0 %v723
    %1142 = vmatprep.subr.bf16.mxu0 %v740
    %1143 = vmatpush1.bf16.msra.mxu0 %v739
    %1144 = vmatprep.subr.bf16.mxu0 %v756
    %1145 = vmatpush1.bf16.msra.mxu0 %v755
    %1146 = vmatprep.subr.bf16.mxu0 %v772
    %1147 = vmatpush1.bf16.msra.mxu0 %v771
    %1148 = vmatprep.subr.bf16.mxu0 %v788
    %1149 = vmatpush1.bf16.msra.mxu0 %v787
    %1150 = vmatprep.subr.bf16.mxu0 %v804
    %1151 = vmatpush1.bf16.msra.mxu0 %v803
    %1152 = vmatprep.subr.bf16.mxu0 %v820
    %1153 = vmatpush1.bf16.msra.mxu0 %v819
    %1154 = vmatprep.subr.bf16.mxu0 0
    %1155 = vmatpush1.bf16.msra.mxu0 0
    %1156 = vmatprep.subr.bf16.mxu0 0
    %1157 = vmatpush1.bf16.msra.mxu0 0
    %1158 = vmatprep.subr.bf16.mxu0 0
    %1159 = vmatpush1.bf16.msra.mxu0 0
    %1160 = vmatprep.subr.bf16.mxu0 0
    %1161 = vmatpush1.bf16.msra.mxu0 0
    %1162 = vmatprep.subr.bf16.mxu0 0
    %1163 = vmatpush1.bf16.msra.mxu0 0
    %1164 = vmatprep.subr.bf16.mxu0 0
    %1165 = vmatpush1.bf16.msra.mxu0 0
    %1166 = vmatprep.subr.bf16.mxu0 0
    %1167 = vmatpush1.bf16.msra.mxu0 0
    %1168 = vmatprep.subr.bf16.mxu0 0
    %1169 = vmatpush1.bf16.msra.mxu0 0
    %1170 = vmatprep.subr.bf16.mxu0 0
    %1171 = vmatpush1.bf16.msra.mxu0 0
    %1172 = vmatprep.mubr.bf16.mxu0 0
    %1173 = vmatmul.mubr.bf16.gmra.mrb[0].mxu0 %v943
    %v1174 = vpop.f32.mrb[0].mxu0
    %v1175 = vadd.f32 0.0, %v1174
    %v1176 = vpop.f32.mrb[0].mxu0
    %v1177 = vadd.f32 0.0, %v1176
    %v1178 = vpop.f32.mrb[0].mxu0
    %v1179 = vadd.f32 0.0, %v1178
    %v1180 = vpop.f32.mrb[0].mxu0
    %v1181 = vadd.f32 0.0, %v1180
    %1182 = vmatprep.mubr.bf16.mxu0 0
    %1183 = vmatmul.mubr.bf16.gmra.mrb[0].mxu0 %v946
    %v1184 = vpop.f32.mrb[0].mxu0
    %v1185 = vadd.f32 0.0, %v1184
    %v1186 = vpop.f32.mrb[0].mxu0
    %v1187 = vadd.f32 0.0, %v1186
    %v1188 = vpop.f32.mrb[0].mxu0
    %v1189 = vadd.f32 0.0, %v1188
    %v1190 = vpop.f32.mrb[0].mxu0
    %v1191 = vadd.f32 0.0, %v1190
    %1192 = vmatprep.mubr.bf16.mxu0 0
    %1193 = vmatmul.mubr.bf16.gmra.mrb[0].mxu0 %v949
    %v1194 = vpop.f32.mrb[0].mxu0
    %v1195 = vadd.f32 0.0, %v1194
    %v1196 = vpop.f32.mrb[0].mxu0
    %v1197 = vadd.f32 0.0, %v1196
    %v1198 = vpop.f32.mrb[0].mxu0
    %v1199 = vadd.f32 0.0, %v1198
    %v1200 = vpop.f32.mrb[0].mxu0
    %v1201 = vadd.f32 0.0, %v1200
    %1202 = vdwg.mxu0
    %1203 = vmatprep.subr.bf16.mxu0 %v726
    %1204 = vmatpush1.bf16.msra.mxu0 %v725
    %1205 = vmatprep.subr.bf16.mxu0 %v742
    %1206 = vmatpush1.bf16.msra.mxu0 %v741
    %1207 = vmatprep.subr.bf16.mxu0 %v758
    %1208 = vmatpush1.bf16.msra.mxu0 %v757
    %1209 = vmatprep.subr.bf16.mxu0 %v774
    %1210 = vmatpush1.bf16.msra.mxu0 %v773
    %1211 = vmatprep.subr.bf16.mxu0 %v790
    %1212 = vmatpush1.bf16.msra.mxu0 %v789
    %1213 = vmatprep.subr.bf16.mxu0 %v806
    %1214 = vmatpush1.bf16.msra.mxu0 %v805
    %1215 = vmatprep.subr.bf16.mxu0 %v822
    %1216 = vmatpush1.bf16.msra.mxu0 %v821
    %1217 = vmatprep.subr.bf16.mxu0 0
    %1218 = vmatpush1.bf16.msra.mxu0 0
    %1219 = vmatprep.subr.bf16.mxu0 0
    %1220 = vmatpush1.bf16.msra.mxu0 0
    %1221 = vmatprep.subr.bf16.mxu0 0
    %1222 = vmatpush1.bf16.msra.mxu0 0
    %1223 = vmatprep.subr.bf16.mxu0 0
    %1224 = vmatpush1.bf16.msra.mxu0 0
    %1225 = vmatprep.subr.bf16.mxu0 0
    %1226 = vmatpush1.bf16.msra.mxu0 0
    %1227 = vmatprep.subr.bf16.mxu0 0
    %1228 = vmatpush1.bf16.msra.mxu0 0
    %1229 = vmatprep.subr.bf16.mxu0 0
    %1230 = vmatpush1.bf16.msra.mxu0 0
    %1231 = vmatprep.subr.bf16.mxu0 0
    %1232 = vmatpush1.bf16.msra.mxu0 0
    %1233 = vmatprep.subr.bf16.mxu0 0
    %1234 = vmatpush1.bf16.msra.mxu0 0
    %1235 = vmatprep.mubr.bf16.mxu0 0
    %1236 = vmatmul.mubr.bf16.gmra.mrb[0].mxu0 %v943
    %v1237 = vpop.f32.mrb[0].mxu0
    %v1238 = vadd.f32 0.0, %v1237
    %v1239 = vpop.f32.mrb[0].mxu0
    %v1240 = vadd.f32 0.0, %v1239
    %v1241 = vpop.f32.mrb[0].mxu0
    %v1242 = vadd.f32 0.0, %v1241
    %v1243 = vpop.f32.mrb[0].mxu0
    %v1244 = vadd.f32 0.0, %v1243
    %1245 = vmatprep.mubr.bf16.mxu0 0
    %1246 = vmatmul.mubr.bf16.gmra.mrb[0].mxu0 %v946
    %v1247 = vpop.f32.mrb[0].mxu0
    %v1248 = vadd.f32 0.0, %v1247
    %v1249 = vpop.f32.mrb[0].mxu0
    %v1250 = vadd.f32 0.0, %v1249
    %v1251 = vpop.f32.mrb[0].mxu0
    %v1252 = vadd.f32 0.0, %v1251
    %v1253 = vpop.f32.mrb[0].mxu0
    %v1254 = vadd.f32 0.0, %v1253
    %1255 = vmatprep.mubr.bf16.mxu0 0
    %1256 = vmatmul.mubr.bf16.gmra.mrb[0].mxu0 %v949
    %v1257 = vpop.f32.mrb[0].mxu0
    %v1258 = vadd.f32 0.0, %v1257
    %v1259 = vpop.f32.mrb[0].mxu0
    %v1260 = vadd.f32 0.0, %v1259
    %v1261 = vpop.f32.mrb[0].mxu0
    %v1262 = vadd.f32 0.0, %v1261
    %v1263 = vpop.f32.mrb[0].mxu0
    %v1264 = vadd.f32 0.0, %v1263
    %1265 = vdwg.mxu0
    %1266 = vmatprep.subr.bf16.mxu0 %v728
    %1267 = vmatpush1.bf16.msra.mxu0 %v727
    %1268 = vmatprep.subr.bf16.mxu0 %v744
    %1269 = vmatpush1.bf16.msra.mxu0 %v743
    %1270 = vmatprep.subr.bf16.mxu0 %v760
    %1271 = vmatpush1.bf16.msra.mxu0 %v759
    %1272 = vmatprep.subr.bf16.mxu0 %v776
    %1273 = vmatpush1.bf16.msra.mxu0 %v775
    %1274 = vmatprep.subr.bf16.mxu0 %v792
    %1275 = vmatpush1.bf16.msra.mxu0 %v791
    %1276 = vmatprep.subr.bf16.mxu0 %v808
    %1277 = vmatpush1.bf16.msra.mxu0 %v807
    %1278 = vmatprep.subr.bf16.mxu0 %v824
    %1279 = vmatpush1.bf16.msra.mxu0 %v823
    %1280 = vmatprep.subr.bf16.mxu0 0
    %1281 = vmatpush1.bf16.msra.mxu0 0
    %1282 = vmatprep.subr.bf16.mxu0 0
    %1283 = vmatpush1.bf16.msra.mxu0 0
    %1284 = vmatprep.subr.bf16.mxu0 0
    %1285 = vmatpush1.bf16.msra.mxu0 0
    %1286 = vmatprep.subr.bf16.mxu0 0
    %1287 = vmatpush1.bf16.msra.mxu0 0
    %1288 = vmatprep.subr.bf16.mxu0 0
    %1289 = vmatpush1.bf16.msra.mxu0 0
    %1290 = vmatprep.subr.bf16.mxu0 0
    %1291 = vmatpush1.bf16.msra.mxu0 0
    %1292 = vmatprep.subr.bf16.mxu0 0
    %1293 = vmatpush1.bf16.msra.mxu0 0
    %1294 = vmatprep.subr.bf16.mxu0 0
    %1295 = vmatpush1.bf16.msra.mxu0 0
    %1296 = vmatprep.subr.bf16.mxu0 0
    %1297 = vmatpush1.bf16.msra.mxu0 0
    %1298 = vmatprep.mubr.bf16.mxu0 0
    %1299 = vmatmul.mubr.bf16.gmra.mrb[0].mxu0 %v943
    %v1300 = vpop.f32.mrb[0].mxu0
    %v1301 = vadd.f32 0.0, %v1300
    %v1302 = vpop.f32.mrb[0].mxu0
    %v1303 = vadd.f32 0.0, %v1302
    %v1304 = vpop.f32.mrb[0].mxu0
    %v1305 = vadd.f32 0.0, %v1304
    %v1306 = vpop.f32.mrb[0].mxu0
    %v1307 = vadd.f32 0.0, %v1306
    %1308 = vmatprep.mubr.bf16.mxu0 0
    %1309 = vmatmul.mubr.bf16.gmra.mrb[0].mxu0 %v946
    %v1310 = vpop.f32.mrb[0].mxu0
    %v1311 = vadd.f32 0.0, %v1310
    %v1312 = vpop.f32.mrb[0].mxu0
    %v1313 = vadd.f32 0.0, %v1312
    %v1314 = vpop.f32.mrb[0].mxu0
    %v1315 = vadd.f32 0.0, %v1314
    %v1316 = vpop.f32.mrb[0].mxu0
    %v1317 = vadd.f32 0.0, %v1316
    %1318 = vmatprep.mubr.bf16.mxu0 0
    %1319 = vmatmul.mubr.bf16.gmra.mrb[0].mxu0 %v949
    %v1320 = vpop.f32.mrb[0].mxu0
    %v1321 = vadd.f32 0.0, %v1320
    %v1322 = vpop.f32.mrb[0].mxu0
    %v1323 = vadd.f32 0.0, %v1322
    %v1324 = vpop.f32.mrb[0].mxu0
    %v1325 = vadd.f32 0.0, %v1324
    %v1326 = vpop.f32.mrb[0].mxu0
    %v1327 = vadd.f32 0.0, %v1326
    %1328 = vdwg.mxu0
    %1329 = vmatprep.subr.bf16.mxu0 %v730
    %1330 = vmatpush1.bf16.msra.mxu0 %v729
    %1331 = vmatprep.subr.bf16.mxu0 %v746
    %1332 = vmatpush1.bf16.msra.mxu0 %v745
    %1333 = vmatprep.subr.bf16.mxu0 %v762
    %1334 = vmatpush1.bf16.msra.mxu0 %v761
    %1335 = vmatprep.subr.bf16.mxu0 %v778
    %1336 = vmatpush1.bf16.msra.mxu0 %v777
    %1337 = vmatprep.subr.bf16.mxu0 %v794
    %1338 = vmatpush1.bf16.msra.mxu0 %v793
    %1339 = vmatprep.subr.bf16.mxu0 %v810
    %1340 = vmatpush1.bf16.msra.mxu0 %v809
    %1341 = vmatprep.subr.bf16.mxu0 %v826
    %1342 = vmatpush1.bf16.msra.mxu0 %v825
    %1343 = vmatprep.subr.bf16.mxu0 0
    %1344 = vmatpush1.bf16.msra.mxu0 0
    %1345 = vmatprep.subr.bf16.mxu0 0
    %1346 = vmatpush1.bf16.msra.mxu0 0
    %1347 = vmatprep.subr.bf16.mxu0 0
    %1348 = vmatpush1.bf16.msra.mxu0 0
    %1349 = vmatprep.subr.bf16.mxu0 0
    %1350 = vmatpush1.bf16.msra.mxu0 0
    %1351 = vmatprep.subr.bf16.mxu0 0
    %1352 = vmatpush1.bf16.msra.mxu0 0
    %1353 = vmatprep.subr.bf16.mxu0 0
    %1354 = vmatpush1.bf16.msra.mxu0 0
    %1355 = vmatprep.subr.bf16.mxu0 0
    %1356 = vmatpush1.bf16.msra.mxu0 0
    %1357 = vmatprep.subr.bf16.mxu0 0
    %1358 = vmatpush1.bf16.msra.mxu0 0
    %1359 = vmatprep.subr.bf16.mxu0 0
    %1360 = vmatpush1.bf16.msra.mxu0 0
    %1361 = vmatprep.mubr.bf16.mxu0 0
    %1362 = vmatmul.mubr.bf16.gmra.mrb[0].mxu0 %v943
    %v1363 = vpop.f32.mrb[0].mxu0
    %v1364 = vadd.f32 0.0, %v1363
    %v1365 = vpop.f32.mrb[0].mxu0
    %v1366 = vadd.f32 0.0, %v1365
    %v1367 = vpop.f32.mrb[0].mxu0
    %v1368 = vadd.f32 0.0, %v1367
    %v1369 = vpop.f32.mrb[0].mxu0
    %v1370 = vadd.f32 0.0, %v1369
    %1371 = vmatprep.mubr.bf16.mxu0 0
    %1372 = vmatmul.mubr.bf16.gmra.mrb[0].mxu0 %v946
    %v1373 = vpop.f32.mrb[0].mxu0
    %v1374 = vadd.f32 0.0, %v1373
    %v1375 = vpop.f32.mrb[0].mxu0
    %v1376 = vadd.f32 0.0, %v1375
    %v1377 = vpop.f32.mrb[0].mxu0
    %v1378 = vadd.f32 0.0, %v1377
    %v1379 = vpop.f32.mrb[0].mxu0
    %v1380 = vadd.f32 0.0, %v1379
    %1381 = vmatprep.mubr.bf16.mxu0 0
    %1382 = vmatmul.mubr.bf16.gmra.mrb[0].mxu0 %v949
    %v1383 = vpop.f32.mrb[0].mxu0
    %v1384 = vadd.f32 0.0, %v1383
    %v1385 = vpop.f32.mrb[0].mxu0
    %v1386 = vadd.f32 0.0, %v1385
    %v1387 = vpop.f32.mrb[0].mxu0
    %v1388 = vadd.f32 0.0, %v1387
    %v1389 = vpop.f32.mrb[0].mxu0
    %v1390 = vadd.f32 0.0, %v1389
    %1391 = vdwg.mxu0
    %1392 = vmatprep.subr.bf16.mxu0 %v732
    %1393 = vmatpush1.bf16.msra.mxu0 %v731
    %1394 = vmatprep.subr.bf16.mxu0 %v748
    %1395 = vmatpush1.bf16.msra.mxu0 %v747
    %1396 = vmatprep.subr.bf16.mxu0 %v764
    %1397 = vmatpush1.bf16.msra.mxu0 %v763
    %1398 = vmatprep.subr.bf16.mxu0 %v780
    %1399 = vmatpush1.bf16.msra.mxu0 %v779
    %1400 = vmatprep.subr.bf16.mxu0 %v796
    %1401 = vmatpush1.bf16.msra.mxu0 %v795
    %1402 = vmatprep.subr.bf16.mxu0 %v812
    %1403 = vmatpush1.bf16.msra.mxu0 %v811
    %1404 = vmatprep.subr.bf16.mxu0 %v828
    %1405 = vmatpush1.bf16.msra.mxu0 %v827
    %1406 = vmatprep.subr.bf16.mxu0 0
    %1407 = vmatpush1.bf16.msra.mxu0 0
    %1408 = vmatprep.subr.bf16.mxu0 0
    %1409 = vmatpush1.bf16.msra.mxu0 0
    %1410 = vmatprep.subr.bf16.mxu0 0
    %1411 = vmatpush1.bf16.msra.mxu0 0
    %1412 = vmatprep.subr.bf16.mxu0 0
    %1413 = vmatpush1.bf16.msra.mxu0 0
    %1414 = vmatprep.subr.bf16.mxu0 0
    %1415 = vmatpush1.bf16.msra.mxu0 0
    %1416 = vmatprep.subr.bf16.mxu0 0
    %1417 = vmatpush1.bf16.msra.mxu0 0
    %1418 = vmatprep.subr.bf16.mxu0 0
    %1419 = vmatpush1.bf16.msra.mxu0 0
    %1420 = vmatprep.subr.bf16.mxu0 0
    %1421 = vmatpush1.bf16.msra.mxu0 0
    %1422 = vmatprep.subr.bf16.mxu0 0
    %1423 = vmatpush1.bf16.msra.mxu0 0
    %1424 = vmatprep.mubr.bf16.mxu0 0
    %1425 = vmatmul.mubr.bf16.gmra.mrb[0].mxu0 %v943
    %v1426 = vpop.f32.mrb[0].mxu0
    %v1427 = vadd.f32 0.0, %v1426
    %v1428 = vpop.f32.mrb[0].mxu0
    %v1429 = vadd.f32 0.0, %v1428
    %v1430 = vpop.f32.mrb[0].mxu0
    %v1431 = vadd.f32 0.0, %v1430
    %v1432 = vpop.f32.mrb[0].mxu0
    %v1433 = vadd.f32 0.0, %v1432
    %1434 = vmatprep.mubr.bf16.mxu0 0
    %1435 = vmatmul.mubr.bf16.gmra.mrb[0].mxu0 %v946
    %v1436 = vpop.f32.mrb[0].mxu0
    %v1437 = vadd.f32 0.0, %v1436
    %v1438 = vpop.f32.mrb[0].mxu0
    %v1439 = vadd.f32 0.0, %v1438
    %v1440 = vpop.f32.mrb[0].mxu0
    %v1441 = vadd.f32 0.0, %v1440
    %v1442 = vpop.f32.mrb[0].mxu0
    %v1443 = vadd.f32 0.0, %v1442
    %1444 = vmatprep.mubr.bf16.mxu0 0
    %1445 = vmatmul.mubr.bf16.gmra.mrb[0].mxu0 %v949
    %v1446 = vpop.f32.mrb[0].mxu0
    %v1447 = vadd.f32 0.0, %v1446
    %v1448 = vpop.f32.mrb[0].mxu0
    %v1449 = vadd.f32 0.0, %v1448
    %v1450 = vpop.f32.mrb[0].mxu0
    %v1451 = vadd.f32 0.0, %v1450
    %v1452 = vpop.f32.mrb[0].mxu0
    %v1453 = vadd.f32 0.0, %v1452
    %1454 = vdwg.mxu0
    %v1456 = vunpack.c.l.b16 %v134
    %v1457 = vpack.c.b16 %v372, %v1456
    %v1458 = vpack.c.b16 %v374, %v373
    %v1459 = vpack.c.b16 %v376, %v375
    %v1572 = vunpack.c.l.b16 %v141
    %v1573 = vunpack.c.h.b16 %v141
    %v1574 = vunpack.c.l.b16 %v142
    %v1575 = vunpack.c.h.b16 %v142
    %v1576 = vunpack.c.l.b16 %v143
    %v1577 = vunpack.c.h.b16 %v143
    %v1578 = vunpack.c.l.b16 %v144
    %v1579 = vunpack.c.h.b16 %v144
    %v1580 = vunpack.c.l.b16 %v145
    %v1581 = vunpack.c.h.b16 %v145
    %v1582 = vunpack.c.l.b16 %v146
    %v1583 = vunpack.c.h.b16 %v146
    %v1584 = vunpack.c.l.b16 %v147
    %v1585 = vunpack.c.h.b16 %v147
    %v1586 = vunpack.c.l.b16 %v148
    %v1587 = vunpack.c.h.b16 %v148
    %v1588 = vunpack.c.l.b16 %v149
    %v1589 = vunpack.c.h.b16 %v149
    %v1590 = vunpack.c.l.b16 %v150
    %v1591 = vunpack.c.h.b16 %v150
    %v1592 = vunpack.c.l.b16 %v151
    %v1593 = vunpack.c.h.b16 %v151
    %v1594 = vunpack.c.l.b16 %v152
    %v1595 = vunpack.c.h.b16 %v152
    %v1596 = vunpack.c.l.b16 %v153
    %v1597 = vunpack.c.h.b16 %v153
    %v1598 = vunpack.c.l.b16 %v154
    %v1599 = vunpack.c.h.b16 %v154
    %v1600 = vunpack.c.l.b16 %v155
    %v1601 = vunpack.c.h.b16 %v155
    %v1602 = vunpack.c.l.b16 %v156
    %v1603 = vunpack.c.h.b16 %v156
    %v1604 = vunpack.c.l.b16 %v157
    %v1605 = vunpack.c.h.b16 %v157
    %v1606 = vunpack.c.l.b16 %v158
    %v1607 = vunpack.c.h.b16 %v158
    %v1608 = vunpack.c.l.b16 %v159
    %v1609 = vunpack.c.h.b16 %v159
    %v1610 = vunpack.c.l.b16 %v160
    %v1611 = vunpack.c.h.b16 %v160
    %v1612 = vunpack.c.l.b16 %v161
    %v1613 = vunpack.c.h.b16 %v161
    %v1614 = vunpack.c.l.b16 %v162
    %v1615 = vunpack.c.h.b16 %v162
    %v1616 = vunpack.c.l.b16 %v163
    %v1617 = vunpack.c.h.b16 %v163
    %v1618 = vunpack.c.l.b16 %v164
    %v1619 = vunpack.c.h.b16 %v164
    %v1620 = vunpack.c.l.b16 %v165
    %v1621 = vunpack.c.h.b16 %v165
    %v1622 = vunpack.c.l.b16 %v166
    %v1623 = vunpack.c.h.b16 %v166
    %v1624 = vunpack.c.l.b16 %v167
    %v1625 = vunpack.c.h.b16 %v167
    %v1626 = vunpack.c.l.b16 %v168
    %v1627 = vunpack.c.h.b16 %v168
    %v1628 = vunpack.c.l.b16 %v169
    %v1629 = vunpack.c.h.b16 %v169
    %v1630 = vunpack.c.l.b16 %v170
    %v1631 = vunpack.c.h.b16 %v170
    %v1632 = vunpack.c.l.b16 %v171
    %v1633 = vunpack.c.h.b16 %v171
    %v1634 = vunpack.c.l.b16 %v172
    %v1635 = vunpack.c.h.b16 %v172
    %v1636 = vunpack.c.l.b16 %v173
    %v1637 = vunpack.c.h.b16 %v173
    %v1638 = vunpack.c.l.b16 %v174
    %v1639 = vunpack.c.h.b16 %v174
    %v1640 = vunpack.c.l.b16 %v175
    %v1641 = vunpack.c.h.b16 %v175
    %v1642 = vunpack.c.l.b16 %v176
    %v1643 = vunpack.c.h.b16 %v176
    %v1644 = vunpack.c.l.b16 %v177
    %v1645 = vunpack.c.h.b16 %v177
    %v1646 = vunpack.c.l.b16 %v178
    %v1647 = vunpack.c.h.b16 %v178
    %v1648 = vunpack.c.l.b16 %v179
    %v1649 = vunpack.c.h.b16 %v179
    %v1650 = vunpack.c.l.b16 %v180
    %v1651 = vunpack.c.h.b16 %v180
    %v1652 = vunpack.c.l.b16 %v181
    %v1653 = vunpack.c.h.b16 %v181
    %v1654 = vunpack.c.l.b16 %v182
    %v1655 = vunpack.c.h.b16 %v182
    %v1656 = vunpack.c.l.b16 %v183
    %v1657 = vunpack.c.h.b16 %v183
    %v1658 = vunpack.c.l.b16 %v184
    %v1659 = vunpack.c.h.b16 %v184
    %v1660 = vunpack.c.l.b16 %v185
    %v1661 = vunpack.c.h.b16 %v185
    %v1662 = vunpack.c.l.b16 %v186
    %v1663 = vunpack.c.h.b16 %v186
    %v1664 = vunpack.c.l.b16 %v187
    %v1665 = vunpack.c.h.b16 %v187
    %v1666 = vunpack.c.l.b16 %v188
    %v1667 = vunpack.c.h.b16 %v188
    %v1668 = vunpack.c.l.b16 %v189
    %v1669 = vunpack.c.h.b16 %v189
    %v1670 = vunpack.c.l.b16 %v190
    %v1671 = vunpack.c.h.b16 %v190
    %v1672 = vunpack.c.l.b16 %v191
    %v1673 = vunpack.c.h.b16 %v191
    %v1674 = vunpack.c.l.b16 %v192
    %v1675 = vunpack.c.h.b16 %v192
    %v1676 = vunpack.c.l.b16 %v193
    %v1677 = vunpack.c.h.b16 %v193
    %v1678 = vunpack.c.l.b16 %v194
    %v1679 = vunpack.c.h.b16 %v194
    %v1680 = vunpack.c.l.b16 %v195
    %v1681 = vunpack.c.h.b16 %v195
    %v1682 = vunpack.c.l.b16 %v196
    %v1683 = vunpack.c.h.b16 %v196
    %v1684 = vunpack.c.l.b16 %v197
    %v1685 = vunpack.c.h.b16 %v197
    %v1686 = vunpack.c.l.b16 %v198
    %v1687 = vunpack.c.h.b16 %v198
    %v1688 = vunpack.c.l.b16 %v199
    %v1689 = vunpack.c.h.b16 %v199
    %v1690 = vunpack.c.l.b16 %v200
    %v1691 = vunpack.c.h.b16 %v200
    %v1692 = vunpack.c.l.b16 %v201
    %v1693 = vunpack.c.h.b16 %v201
    %v1694 = vunpack.c.l.b16 %v202
    %v1695 = vunpack.c.h.b16 %v202
    %v1696 = vunpack.c.l.b16 %v203
    %v1697 = vunpack.c.h.b16 %v203
    %v1698 = vunpack.c.l.b16 %v204
    %v1699 = vunpack.c.h.b16 %v204
    %v1700 = vunpack.c.l.b16 %v205
    %v1701 = vunpack.c.h.b16 %v205
    %v1702 = vunpack.c.l.b16 %v206
    %v1703 = vunpack.c.h.b16 %v206
    %v1704 = vunpack.c.l.b16 %v207
    %v1705 = vunpack.c.h.b16 %v207
    %v1706 = vunpack.c.l.b16 %v208
    %v1707 = vunpack.c.h.b16 %v208
    %v1708 = vunpack.c.l.b16 %v209
    %v1709 = vunpack.c.h.b16 %v209
    %v1710 = vunpack.c.l.b16 %v210
    %v1711 = vunpack.c.h.b16 %v210
    %v1712 = vunpack.c.l.b16 %v211
    %v1713 = vunpack.c.h.b16 %v211
    %v1714 = vunpack.c.l.b16 %v212
    %v1715 = vunpack.c.h.b16 %v212
    %v1716 = vunpack.c.l.b16 %v213
    %v1717 = vunpack.c.h.b16 %v213
    %v1718 = vunpack.c.l.b16 %v214
    %v1719 = vunpack.c.h.b16 %v214
    %v1720 = vunpack.c.l.b16 %v215
    %v1721 = vunpack.c.h.b16 %v215
    %v1722 = vunpack.c.l.b16 %v216
    %v1723 = vunpack.c.h.b16 %v216
    %v1724 = vunpack.c.l.b16 %v217
    %v1725 = vunpack.c.h.b16 %v217
    %v1726 = vunpack.c.l.b16 %v218
    %v1727 = vunpack.c.h.b16 %v218
    %v1728 = vunpack.c.l.b16 %v219
    %v1729 = vunpack.c.h.b16 %v219
    %v1730 = vunpack.c.l.b16 %v220
    %v1731 = vunpack.c.h.b16 %v220
    %v1732 = vunpack.c.l.b16 %v221
    %v1733 = vunpack.c.h.b16 %v221
    %v1734 = vunpack.c.l.b16 %v222
    %v1735 = vunpack.c.h.b16 %v222
    %v1736 = vunpack.c.l.b16 %v223
    %v1737 = vunpack.c.h.b16 %v223
    %v1738 = vunpack.c.l.b16 %v224
    %v1739 = vunpack.c.h.b16 %v224
    %v1740 = vunpack.c.l.b16 %v225
    %v1741 = vunpack.c.h.b16 %v225
    %v1742 = vunpack.c.l.b16 %v226
    %v1743 = vunpack.c.h.b16 %v226
    %v1744 = vunpack.c.l.b16 %v227
    %v1745 = vunpack.c.h.b16 %v227
    %v1746 = vunpack.c.l.b16 %v228
    %v1747 = vunpack.c.h.b16 %v228
    %v1748 = vunpack.c.l.b16 %v229
    %v1749 = vunpack.c.h.b16 %v229
    %v1750 = vunpack.c.l.b16 %v230
    %v1751 = vunpack.c.h.b16 %v230
    %v1752 = vunpack.c.l.b16 %v231
    %v1753 = vunpack.c.h.b16 %v231
    %v1754 = vunpack.c.l.b16 %v232
    %v1755 = vunpack.c.h.b16 %v232
    %v1756 = vunpack.c.l.b16 %v233
    %v1757 = vunpack.c.h.b16 %v233
    %v1758 = vunpack.c.l.b16 %v234
    %v1759 = vunpack.c.h.b16 %v234
    %v1760 = vunpack.c.l.b16 %v235
    %v1761 = vunpack.c.h.b16 %v235
    %v1762 = vunpack.c.l.b16 %v236
    %v1763 = vunpack.c.h.b16 %v236
    %v1764 = vunpack.c.l.b16 %v237
    %v1765 = vunpack.c.h.b16 %v237
    %v1766 = vunpack.c.l.b16 %v238
    %v1767 = vunpack.c.h.b16 %v238
    %v1768 = vunpack.c.l.b16 %v239
    %v1769 = vunpack.c.h.b16 %v239
    %v1770 = vunpack.c.l.b16 %v240
    %v1771 = vunpack.c.h.b16 %v240
    %v1772 = vunpack.c.l.b16 %v241
    %v1773 = vunpack.c.h.b16 %v241
    %v1774 = vunpack.c.l.b16 %v242
    %v1775 = vunpack.c.h.b16 %v242
    %v1776 = vunpack.c.l.b16 %v243
    %v1777 = vunpack.c.h.b16 %v243
    %v1778 = vunpack.c.l.b16 %v244
    %v1779 = vunpack.c.h.b16 %v244
    %v1780 = vunpack.c.l.b16 %v245
    %v1781 = vunpack.c.h.b16 %v245
    %v1782 = vunpack.c.l.b16 %v246
    %v1783 = vunpack.c.h.b16 %v246
    %v1784 = vunpack.c.l.b16 %v247
    %v1785 = vunpack.c.h.b16 %v247
    %v1786 = vunpack.c.l.b16 %v248
    %v1787 = vunpack.c.h.b16 %v248
    %v1788 = vunpack.c.l.b16 %v249
    %v1789 = vunpack.c.h.b16 %v249
    %v1790 = vunpack.c.l.b16 %v250
    %v1791 = vunpack.c.h.b16 %v250
    %v1792 = vunpack.c.l.b16 %v251
    %v1793 = vunpack.c.h.b16 %v251
    %v1794 = vunpack.c.l.b16 %v252
    %v1795 = vunpack.c.h.b16 %v252
    %v1796 = vpack.c.b16 %v1588, %v1572
    %v1797 = vpack.c.b16 %v1589, %v1573
    %v1798 = vpack.c.b16 %v1590, %v1574
    %v1799 = vpack.c.b16 %v1591, %v1575
    %v1800 = vpack.c.b16 %v1592, %v1576
    %v1801 = vpack.c.b16 %v1593, %v1577
    %v1802 = vpack.c.b16 %v1594, %v1578
    %v1803 = vpack.c.b16 %v1595, %v1579
    %v1804 = vpack.c.b16 %v1596, %v1580
    %v1805 = vpack.c.b16 %v1597, %v1581
    %v1806 = vpack.c.b16 %v1598, %v1582
    %v1807 = vpack.c.b16 %v1599, %v1583
    %v1808 = vpack.c.b16 %v1600, %v1584
    %v1809 = vpack.c.b16 %v1601, %v1585
    %v1810 = vpack.c.b16 %v1602, %v1586
    %v1811 = vpack.c.b16 %v1603, %v1587
    %v1812 = vpack.c.b16 %v1620, %v1604
    %v1813 = vpack.c.b16 %v1621, %v1605
    %v1814 = vpack.c.b16 %v1622, %v1606
    %v1815 = vpack.c.b16 %v1623, %v1607
    %v1816 = vpack.c.b16 %v1624, %v1608
    %v1817 = vpack.c.b16 %v1625, %v1609
    %v1818 = vpack.c.b16 %v1626, %v1610
    %v1819 = vpack.c.b16 %v1627, %v1611
    %v1820 = vpack.c.b16 %v1628, %v1612
    %v1821 = vpack.c.b16 %v1629, %v1613
    %v1822 = vpack.c.b16 %v1630, %v1614
    %v1823 = vpack.c.b16 %v1631, %v1615
    %v1824 = vpack.c.b16 %v1632, %v1616
    %v1825 = vpack.c.b16 %v1633, %v1617
    %v1826 = vpack.c.b16 %v1634, %v1618
    %v1827 = vpack.c.b16 %v1635, %v1619
    %v1828 = vpack.c.b16 %v1652, %v1636
    %v1829 = vpack.c.b16 %v1653, %v1637
    %v1830 = vpack.c.b16 %v1654, %v1638
    %v1831 = vpack.c.b16 %v1655, %v1639
    %v1832 = vpack.c.b16 %v1656, %v1640
    %v1833 = vpack.c.b16 %v1657, %v1641
    %v1834 = vpack.c.b16 %v1658, %v1642
    %v1835 = vpack.c.b16 %v1659, %v1643
    %v1836 = vpack.c.b16 %v1660, %v1644
    %v1837 = vpack.c.b16 %v1661, %v1645
    %v1838 = vpack.c.b16 %v1662, %v1646
    %v1839 = vpack.c.b16 %v1663, %v1647
    %v1840 = vpack.c.b16 %v1664, %v1648
    %v1841 = vpack.c.b16 %v1665, %v1649
    %v1842 = vpack.c.b16 %v1666, %v1650
    %v1843 = vpack.c.b16 %v1667, %v1651
    %v1844 = vpack.c.b16 %v1684, %v1668
    %v1845 = vpack.c.b16 %v1685, %v1669
    %v1846 = vpack.c.b16 %v1686, %v1670
    %v1847 = vpack.c.b16 %v1687, %v1671
    %v1848 = vpack.c.b16 %v1688, %v1672
    %v1849 = vpack.c.b16 %v1689, %v1673
    %v1850 = vpack.c.b16 %v1690, %v1674
    %v1851 = vpack.c.b16 %v1691, %v1675
    %v1852 = vpack.c.b16 %v1692, %v1676
    %v1853 = vpack.c.b16 %v1693, %v1677
    %v1854 = vpack.c.b16 %v1694, %v1678
    %v1855 = vpack.c.b16 %v1695, %v1679
    %v1856 = vpack.c.b16 %v1696, %v1680
    %v1857 = vpack.c.b16 %v1697, %v1681
    %v1858 = vpack.c.b16 %v1698, %v1682
    %v1859 = vpack.c.b16 %v1699, %v1683
    %v1860 = vpack.c.b16 %v1716, %v1700
    %v1861 = vpack.c.b16 %v1717, %v1701
    %v1862 = vpack.c.b16 %v1718, %v1702
    %v1863 = vpack.c.b16 %v1719, %v1703
    %v1864 = vpack.c.b16 %v1720, %v1704
    %v1865 = vpack.c.b16 %v1721, %v1705
    %v1866 = vpack.c.b16 %v1722, %v1706
    %v1867 = vpack.c.b16 %v1723, %v1707
    %v1868 = vpack.c.b16 %v1724, %v1708
    %v1869 = vpack.c.b16 %v1725, %v1709
    %v1870 = vpack.c.b16 %v1726, %v1710
    %v1871 = vpack.c.b16 %v1727, %v1711
    %v1872 = vpack.c.b16 %v1728, %v1712
    %v1873 = vpack.c.b16 %v1729, %v1713
    %v1874 = vpack.c.b16 %v1730, %v1714
    %v1875 = vpack.c.b16 %v1731, %v1715
    %v1876 = vpack.c.b16 %v1748, %v1732
    %v1877 = vpack.c.b16 %v1749, %v1733
    %v1878 = vpack.c.b16 %v1750, %v1734
    %v1879 = vpack.c.b16 %v1751, %v1735
    %v1880 = vpack.c.b16 %v1752, %v1736
    %v1881 = vpack.c.b16 %v1753, %v1737
    %v1882 = vpack.c.b16 %v1754, %v1738
    %v1883 = vpack.c.b16 %v1755, %v1739
    %v1884 = vpack.c.b16 %v1756, %v1740
    %v1885 = vpack.c.b16 %v1757, %v1741
    %v1886 = vpack.c.b16 %v1758, %v1742
    %v1887 = vpack.c.b16 %v1759, %v1743
    %v1888 = vpack.c.b16 %v1760, %v1744
    %v1889 = vpack.c.b16 %v1761, %v1745
    %v1890 = vpack.c.b16 %v1762, %v1746
    %v1891 = vpack.c.b16 %v1763, %v1747
    %v1892 = vpack.c.b16 %v1780, %v1764
    %v1893 = vpack.c.b16 %v1781, %v1765
    %v1894 = vpack.c.b16 %v1782, %v1766
    %v1895 = vpack.c.b16 %v1783, %v1767
    %v1896 = vpack.c.b16 %v1784, %v1768
    %v1897 = vpack.c.b16 %v1785, %v1769
    %v1898 = vpack.c.b16 %v1786, %v1770
    %v1899 = vpack.c.b16 %v1787, %v1771
    %v1900 = vpack.c.b16 %v1788, %v1772
    %v1901 = vpack.c.b16 %v1789, %v1773
    %v1902 = vpack.c.b16 %v1790, %v1774
    %v1903 = vpack.c.b16 %v1791, %v1775
    %v1904 = vpack.c.b16 %v1792, %v1776
    %v1905 = vpack.c.b16 %v1793, %v1777
    %v1906 = vpack.c.b16 %v1794, %v1778
    %v1907 = vpack.c.b16 %v1795, %v1779
    %v2021 = vsel %vm941, %v1457, 0
    %v2024 = vsel %vm941, %v1458, 0
    %v2027 = vsel %vm941, %v1459, 0
    %2029 = vmatprep.subr.bf16.mxu0 %v1797
    %2030 = vmatpush1.bf16.msra.mxu0 %v1796
    %2031 = vmatprep.subr.bf16.mxu0 %v1813
    %2032 = vmatpush1.bf16.msra.mxu0 %v1812
    %2033 = vmatprep.subr.bf16.mxu0 %v1829
    %2034 = vmatpush1.bf16.msra.mxu0 %v1828
    %2035 = vmatprep.subr.bf16.mxu0 %v1845
    %2036 = vmatpush1.bf16.msra.mxu0 %v1844
    %2037 = vmatprep.subr.bf16.mxu0 %v1861
    %2038 = vmatpush1.bf16.msra.mxu0 %v1860
    %2039 = vmatprep.subr.bf16.mxu0 %v1877
    %2040 = vmatpush1.bf16.msra.mxu0 %v1876
    %2041 = vmatprep.subr.bf16.mxu0 %v1893
    %2042 = vmatpush1.bf16.msra.mxu0 %v1892
    %2043 = vmatprep.subr.bf16.mxu0 0
    %2044 = vmatpush1.bf16.msra.mxu0 0
    %2045 = vmatprep.subr.bf16.mxu0 0
    %2046 = vmatpush1.bf16.msra.mxu0 0
    %2047 = vmatprep.subr.bf16.mxu0 0
    %2048 = vmatpush1.bf16.msra.mxu0 0
    %2049 = vmatprep.subr.bf16.mxu0 0
    %2050 = vmatpush1.bf16.msra.mxu0 0
    %2051 = vmatprep.subr.bf16.mxu0 0
    %2052 = vmatpush1.bf16.msra.mxu0 0
    %2053 = vmatprep.subr.bf16.mxu0 0
    %2054 = vmatpush1.bf16.msra.mxu0 0
    %2055 = vmatprep.subr.bf16.mxu0 0
    %2056 = vmatpush1.bf16.msra.mxu0 0
    %2057 = vmatprep.subr.bf16.mxu0 0
    %2058 = vmatpush1.bf16.msra.mxu0 0
    %2059 = vmatprep.subr.bf16.mxu0 0
    %2060 = vmatpush1.bf16.msra.mxu0 0
    %2061 = vmatprep.mubr.bf16.mxu0 0
    %2062 = vmatmul.mubr.bf16.gmra.mrb[0].mxu0 %v2021
    %v2063 = vpop.f32.mrb[0].mxu0
    %v2064 = vadd.f32 %v986, %v2063
    %v2065 = vpop.f32.mrb[0].mxu0
    %v2066 = vadd.f32 %v988, %v2065
    %v2067 = vpop.f32.mrb[0].mxu0
    %v2068 = vadd.f32 %v990, %v2067
    %v2069 = vpop.f32.mrb[0].mxu0
    %v2070 = vadd.f32 %v992, %v2069
    %2071 = vmatprep.mubr.bf16.mxu0 0
    %2072 = vmatmul.mubr.bf16.gmra.mrb[0].mxu0 %v2024
    %v2073 = vpop.f32.mrb[0].mxu0
    %v2074 = vadd.f32 %v996, %v2073
    %v2075 = vpop.f32.mrb[0].mxu0
    %v2076 = vadd.f32 %v998, %v2075
    %v2077 = vpop.f32.mrb[0].mxu0
    %v2078 = vadd.f32 %v1000, %v2077
    %v2079 = vpop.f32.mrb[0].mxu0
    %v2080 = vadd.f32 %v1002, %v2079
    %2081 = vmatprep.mubr.bf16.mxu0 0
    %2082 = vmatmul.mubr.bf16.gmra.mrb[0].mxu0 %v2027
    %v2083 = vpop.f32.mrb[0].mxu0
    %v2084 = vadd.f32 %v1006, %v2083
    %v2085 = vpop.f32.mrb[0].mxu0
    %v2086 = vadd.f32 %v1008, %v2085
    %v2087 = vpop.f32.mrb[0].mxu0
    %v2088 = vadd.f32 %v1010, %v2087
    %v2089 = vpop.f32.mrb[0].mxu0
    %v2090 = vadd.f32 %v1012, %v2089
    %2091 = vdwg.mxu0
    %2092 = vmatprep.subr.bf16.mxu0 %v1799
    %2093 = vmatpush1.bf16.msra.mxu0 %v1798
    %2094 = vmatprep.subr.bf16.mxu0 %v1815
    %2095 = vmatpush1.bf16.msra.mxu0 %v1814
    %2096 = vmatprep.subr.bf16.mxu0 %v1831
    %2097 = vmatpush1.bf16.msra.mxu0 %v1830
    %2098 = vmatprep.subr.bf16.mxu0 %v1847
    %2099 = vmatpush1.bf16.msra.mxu0 %v1846
    %2100 = vmatprep.subr.bf16.mxu0 %v1863
    %2101 = vmatpush1.bf16.msra.mxu0 %v1862
    %2102 = vmatprep.subr.bf16.mxu0 %v1879
    %2103 = vmatpush1.bf16.msra.mxu0 %v1878
    %2104 = vmatprep.subr.bf16.mxu0 %v1895
    %2105 = vmatpush1.bf16.msra.mxu0 %v1894
    %2106 = vmatprep.subr.bf16.mxu0 0
    %2107 = vmatpush1.bf16.msra.mxu0 0
    %2108 = vmatprep.subr.bf16.mxu0 0
    %2109 = vmatpush1.bf16.msra.mxu0 0
    %2110 = vmatprep.subr.bf16.mxu0 0
    %2111 = vmatpush1.bf16.msra.mxu0 0
    %2112 = vmatprep.subr.bf16.mxu0 0
    %2113 = vmatpush1.bf16.msra.mxu0 0
    %2114 = vmatprep.subr.bf16.mxu0 0
    %2115 = vmatpush1.bf16.msra.mxu0 0
    %2116 = vmatprep.subr.bf16.mxu0 0
    %2117 = vmatpush1.bf16.msra.mxu0 0
    %2118 = vmatprep.subr.bf16.mxu0 0
    %2119 = vmatpush1.bf16.msra.mxu0 0
    %2120 = vmatprep.subr.bf16.mxu0 0
    %2121 = vmatpush1.bf16.msra.mxu0 0
    %2122 = vmatprep.subr.bf16.mxu0 0
    %2123 = vmatpush1.bf16.msra.mxu0 0
    %2124 = vmatprep.mubr.bf16.mxu0 0
    %2125 = vmatmul.mubr.bf16.gmra.mrb[0].mxu0 %v2021
    %v2126 = vpop.f32.mrb[0].mxu0
    %v2127 = vadd.f32 %v1049, %v2126
    %v2128 = vpop.f32.mrb[0].mxu0
    %v2129 = vadd.f32 %v1051, %v2128
    %v2130 = vpop.f32.mrb[0].mxu0
    %v2131 = vadd.f32 %v1053, %v2130
    %v2132 = vpop.f32.mrb[0].mxu0
    %v2133 = vadd.f32 %v1055, %v2132
    %2134 = vmatprep.mubr.bf16.mxu0 0
    %2135 = vmatmul.mubr.bf16.gmra.mrb[0].mxu0 %v2024
    %v2136 = vpop.f32.mrb[0].mxu0
    %v2137 = vadd.f32 %v1059, %v2136
    %v2138 = vpop.f32.mrb[0].mxu0
    %v2139 = vadd.f32 %v1061, %v2138
    %v2140 = vpop.f32.mrb[0].mxu0
    %v2141 = vadd.f32 %v1063, %v2140
    %v2142 = vpop.f32.mrb[0].mxu0
    %v2143 = vadd.f32 %v1065, %v2142
    %2144 = vmatprep.mubr.bf16.mxu0 0
    %2145 = vmatmul.mubr.bf16.gmra.mrb[0].mxu0 %v2027
    %v2146 = vpop.f32.mrb[0].mxu0
    %v2147 = vadd.f32 %v1069, %v2146
    %v2148 = vpop.f32.mrb[0].mxu0
    %v2149 = vadd.f32 %v1071, %v2148
    %v2150 = vpop.f32.mrb[0].mxu0
    %v2151 = vadd.f32 %v1073, %v2150
    %v2152 = vpop.f32.mrb[0].mxu0
    %v2153 = vadd.f32 %v1075, %v2152
    %2154 = vdwg.mxu0
    %2155 = vmatprep.subr.bf16.mxu0 %v1801
    %2156 = vmatpush1.bf16.msra.mxu0 %v1800
    %2157 = vmatprep.subr.bf16.mxu0 %v1817
    %2158 = vmatpush1.bf16.msra.mxu0 %v1816
    %2159 = vmatprep.subr.bf16.mxu0 %v1833
    %2160 = vmatpush1.bf16.msra.mxu0 %v1832
    %2161 = vmatprep.subr.bf16.mxu0 %v1849
    %2162 = vmatpush1.bf16.msra.mxu0 %v1848
    %2163 = vmatprep.subr.bf16.mxu0 %v1865
    %2164 = vmatpush1.bf16.msra.mxu0 %v1864
    %2165 = vmatprep.subr.bf16.mxu0 %v1881
    %2166 = vmatpush1.bf16.msra.mxu0 %v1880
    %2167 = vmatprep.subr.bf16.mxu0 %v1897
    %2168 = vmatpush1.bf16.msra.mxu0 %v1896
    %2169 = vmatprep.subr.bf16.mxu0 0
    %2170 = vmatpush1.bf16.msra.mxu0 0
    %2171 = vmatprep.subr.bf16.mxu0 0
    %2172 = vmatpush1.bf16.msra.mxu0 0
    %2173 = vmatprep.subr.bf16.mxu0 0
    %2174 = vmatpush1.bf16.msra.mxu0 0
    %2175 = vmatprep.subr.bf16.mxu0 0
    %2176 = vmatpush1.bf16.msra.mxu0 0
    %2177 = vmatprep.subr.bf16.mxu0 0
    %2178 = vmatpush1.bf16.msra.mxu0 0
    %2179 = vmatprep.subr.bf16.mxu0 0
    %2180 = vmatpush1.bf16.msra.mxu0 0
    %2181 = vmatprep.subr.bf16.mxu0 0
    %2182 = vmatpush1.bf16.msra.mxu0 0
    %2183 = vmatprep.subr.bf16.mxu0 0
    %2184 = vmatpush1.bf16.msra.mxu0 0
    %2185 = vmatprep.subr.bf16.mxu0 0
    %2186 = vmatpush1.bf16.msra.mxu0 0
    %2187 = vmatprep.mubr.bf16.mxu0 0
    %2188 = vmatmul.mubr.bf16.gmra.mrb[0].mxu0 %v2021
    %v2189 = vpop.f32.mrb[0].mxu0
    %v2190 = vadd.f32 %v1112, %v2189
    %v2191 = vpop.f32.mrb[0].mxu0
    %v2192 = vadd.f32 %v1114, %v2191
    %v2193 = vpop.f32.mrb[0].mxu0
    %v2194 = vadd.f32 %v1116, %v2193
    %v2195 = vpop.f32.mrb[0].mxu0
    %v2196 = vadd.f32 %v1118, %v2195
    %2197 = vmatprep.mubr.bf16.mxu0 0
    %2198 = vmatmul.mubr.bf16.gmra.mrb[0].mxu0 %v2024
    %v2199 = vpop.f32.mrb[0].mxu0
    %v2200 = vadd.f32 %v1122, %v2199
    %v2201 = vpop.f32.mrb[0].mxu0
    %v2202 = vadd.f32 %v1124, %v2201
    %v2203 = vpop.f32.mrb[0].mxu0
    %v2204 = vadd.f32 %v1126, %v2203
    %v2205 = vpop.f32.mrb[0].mxu0
    %v2206 = vadd.f32 %v1128, %v2205
    %2207 = vmatprep.mubr.bf16.mxu0 0
    %2208 = vmatmul.mubr.bf16.gmra.mrb[0].mxu0 %v2027
    %v2209 = vpop.f32.mrb[0].mxu0
    %v2210 = vadd.f32 %v1132, %v2209
    %v2211 = vpop.f32.mrb[0].mxu0
    %v2212 = vadd.f32 %v1134, %v2211
    %v2213 = vpop.f32.mrb[0].mxu0
    %v2214 = vadd.f32 %v1136, %v2213
    %v2215 = vpop.f32.mrb[0].mxu0
    %v2216 = vadd.f32 %v1138, %v2215
    %2217 = vdwg.mxu0
    %2218 = vmatprep.subr.bf16.mxu0 %v1803
    %2219 = vmatpush1.bf16.msra.mxu0 %v1802
    %2220 = vmatprep.subr.bf16.mxu0 %v1819
    %2221 = vmatpush1.bf16.msra.mxu0 %v1818
    %2222 = vmatprep.subr.bf16.mxu0 %v1835
    %2223 = vmatpush1.bf16.msra.mxu0 %v1834
    %2224 = vmatprep.subr.bf16.mxu0 %v1851
    %2225 = vmatpush1.bf16.msra.mxu0 %v1850
    %2226 = vmatprep.subr.bf16.mxu0 %v1867
    %2227 = vmatpush1.bf16.msra.mxu0 %v1866
    %2228 = vmatprep.subr.bf16.mxu0 %v1883
    %2229 = vmatpush1.bf16.msra.mxu0 %v1882
    %2230 = vmatprep.subr.bf16.mxu0 %v1899
    %2231 = vmatpush1.bf16.msra.mxu0 %v1898
    %2232 = vmatprep.subr.bf16.mxu0 0
    %2233 = vmatpush1.bf16.msra.mxu0 0
    %2234 = vmatprep.subr.bf16.mxu0 0
    %2235 = vmatpush1.bf16.msra.mxu0 0
    %2236 = vmatprep.subr.bf16.mxu0 0
    %2237 = vmatpush1.bf16.msra.mxu0 0
    %2238 = vmatprep.subr.bf16.mxu0 0
    %2239 = vmatpush1.bf16.msra.mxu0 0
    %2240 = vmatprep.subr.bf16.mxu0 0
    %2241 = vmatpush1.bf16.msra.mxu0 0
    %2242 = vmatprep.subr.bf16.mxu0 0
    %2243 = vmatpush1.bf16.msra.mxu0 0
    %2244 = vmatprep.subr.bf16.mxu0 0
    %2245 = vmatpush1.bf16.msra.mxu0 0
    %2246 = vmatprep.subr.bf16.mxu0 0
    %2247 = vmatpush1.bf16.msra.mxu0 0
    %2248 = vmatprep.subr.bf16.mxu0 0
    %2249 = vmatpush1.bf16.msra.mxu0 0
    %2250 = vmatprep.mubr.bf16.mxu0 0
    %2251 = vmatmul.mubr.bf16.gmra.mrb[0].mxu0 %v2021
    %v2252 = vpop.f32.mrb[0].mxu0
    %v2253 = vadd.f32 %v1175, %v2252
    %v2254 = vpop.f32.mrb[0].mxu0
    %v2255 = vadd.f32 %v1177, %v2254
    %v2256 = vpop.f32.mrb[0].mxu0
    %v2257 = vadd.f32 %v1179, %v2256
    %v2258 = vpop.f32.mrb[0].mxu0
    %v2259 = vadd.f32 %v1181, %v2258
    %2260 = vmatprep.mubr.bf16.mxu0 0
    %2261 = vmatmul.mubr.bf16.gmra.mrb[0].mxu0 %v2024
    %v2262 = vpop.f32.mrb[0].mxu0
    %v2263 = vadd.f32 %v1185, %v2262
    %v2264 = vpop.f32.mrb[0].mxu0
    %v2265 = vadd.f32 %v1187, %v2264
    %v2266 = vpop.f32.mrb[0].mxu0
    %v2267 = vadd.f32 %v1189, %v2266
    %v2268 = vpop.f32.mrb[0].mxu0
    %v2269 = vadd.f32 %v1191, %v2268
    %2270 = vmatprep.mubr.bf16.mxu0 0
    %2271 = vmatmul.mubr.bf16.gmra.mrb[0].mxu0 %v2027
    %v2272 = vpop.f32.mrb[0].mxu0
    %v2273 = vadd.f32 %v1195, %v2272
    %v2274 = vpop.f32.mrb[0].mxu0
    %v2275 = vadd.f32 %v1197, %v2274
    %v2276 = vpop.f32.mrb[0].mxu0
    %v2277 = vadd.f32 %v1199, %v2276
    %v2278 = vpop.f32.mrb[0].mxu0
    %v2279 = vadd.f32 %v1201, %v2278
    %2280 = vdwg.mxu0
    %2281 = vmatprep.subr.bf16.mxu0 %v1805
    %2282 = vmatpush1.bf16.msra.mxu0 %v1804
    %2283 = vmatprep.subr.bf16.mxu0 %v1821
    %2284 = vmatpush1.bf16.msra.mxu0 %v1820
    %2285 = vmatprep.subr.bf16.mxu0 %v1837
    %2286 = vmatpush1.bf16.msra.mxu0 %v1836
    %2287 = vmatprep.subr.bf16.mxu0 %v1853
    %2288 = vmatpush1.bf16.msra.mxu0 %v1852
    %2289 = vmatprep.subr.bf16.mxu0 %v1869
    %2290 = vmatpush1.bf16.msra.mxu0 %v1868
    %2291 = vmatprep.subr.bf16.mxu0 %v1885
    %2292 = vmatpush1.bf16.msra.mxu0 %v1884
    %2293 = vmatprep.subr.bf16.mxu0 %v1901
    %2294 = vmatpush1.bf16.msra.mxu0 %v1900
    %2295 = vmatprep.subr.bf16.mxu0 0
    %2296 = vmatpush1.bf16.msra.mxu0 0
    %2297 = vmatprep.subr.bf16.mxu0 0
    %2298 = vmatpush1.bf16.msra.mxu0 0
    %2299 = vmatprep.subr.bf16.mxu0 0
    %2300 = vmatpush1.bf16.msra.mxu0 0
    %2301 = vmatprep.subr.bf16.mxu0 0
    %2302 = vmatpush1.bf16.msra.mxu0 0
    %2303 = vmatprep.subr.bf16.mxu0 0
    %2304 = vmatpush1.bf16.msra.mxu0 0
    %2305 = vmatprep.subr.bf16.mxu0 0
    %2306 = vmatpush1.bf16.msra.mxu0 0
    %2307 = vmatprep.subr.bf16.mxu0 0
    %2308 = vmatpush1.bf16.msra.mxu0 0
    %2309 = vmatprep.subr.bf16.mxu0 0
    %2310 = vmatpush1.bf16.msra.mxu0 0
    %2311 = vmatprep.subr.bf16.mxu0 0
    %2312 = vmatpush1.bf16.msra.mxu0 0
    %2313 = vmatprep.mubr.bf16.mxu0 0
    %2314 = vmatmul.mubr.bf16.gmra.mrb[0].mxu0 %v2021
    %v2315 = vpop.f32.mrb[0].mxu0
    %v2316 = vadd.f32 %v1238, %v2315
    %v2317 = vpop.f32.mrb[0].mxu0
    %v2318 = vadd.f32 %v1240, %v2317
    %v2319 = vpop.f32.mrb[0].mxu0
    %v2320 = vadd.f32 %v1242, %v2319
    %v2321 = vpop.f32.mrb[0].mxu0
    %v2322 = vadd.f32 %v1244, %v2321
    %2323 = vmatprep.mubr.bf16.mxu0 0
    %2324 = vmatmul.mubr.bf16.gmra.mrb[0].mxu0 %v2024
    %v2325 = vpop.f32.mrb[0].mxu0
    %v2326 = vadd.f32 %v1248, %v2325
    %v2327 = vpop.f32.mrb[0].mxu0
    %v2328 = vadd.f32 %v1250, %v2327
    %v2329 = vpop.f32.mrb[0].mxu0
    %v2330 = vadd.f32 %v1252, %v2329
    %v2331 = vpop.f32.mrb[0].mxu0
    %v2332 = vadd.f32 %v1254, %v2331
    %2333 = vmatprep.mubr.bf16.mxu0 0
    %2334 = vmatmul.mubr.bf16.gmra.mrb[0].mxu0 %v2027
    %v2335 = vpop.f32.mrb[0].mxu0
    %v2336 = vadd.f32 %v1258, %v2335
    %v2337 = vpop.f32.mrb[0].mxu0
    %v2338 = vadd.f32 %v1260, %v2337
    %v2339 = vpop.f32.mrb[0].mxu0
    %v2340 = vadd.f32 %v1262, %v2339
    %v2341 = vpop.f32.mrb[0].mxu0
    %v2342 = vadd.f32 %v1264, %v2341
    %2343 = vdwg.mxu0
    %2344 = vmatprep.subr.bf16.mxu0 %v1807
    %2345 = vmatpush1.bf16.msra.mxu0 %v1806
    %2346 = vmatprep.subr.bf16.mxu0 %v1823
    %2347 = vmatpush1.bf16.msra.mxu0 %v1822
    %2348 = vmatprep.subr.bf16.mxu0 %v1839
    %2349 = vmatpush1.bf16.msra.mxu0 %v1838
    %2350 = vmatprep.subr.bf16.mxu0 %v1855
    %2351 = vmatpush1.bf16.msra.mxu0 %v1854
    %2352 = vmatprep.subr.bf16.mxu0 %v1871
    %2353 = vmatpush1.bf16.msra.mxu0 %v1870
    %2354 = vmatprep.subr.bf16.mxu0 %v1887
    %2355 = vmatpush1.bf16.msra.mxu0 %v1886
    %2356 = vmatprep.subr.bf16.mxu0 %v1903
    %2357 = vmatpush1.bf16.msra.mxu0 %v1902
    %2358 = vmatprep.subr.bf16.mxu0 0
    %2359 = vmatpush1.bf16.msra.mxu0 0
    %2360 = vmatprep.subr.bf16.mxu0 0
    %2361 = vmatpush1.bf16.msra.mxu0 0
    %2362 = vmatprep.subr.bf16.mxu0 0
    %2363 = vmatpush1.bf16.msra.mxu0 0
    %2364 = vmatprep.subr.bf16.mxu0 0
    %2365 = vmatpush1.bf16.msra.mxu0 0
    %2366 = vmatprep.subr.bf16.mxu0 0
    %2367 = vmatpush1.bf16.msra.mxu0 0
    %2368 = vmatprep.subr.bf16.mxu0 0
    %2369 = vmatpush1.bf16.msra.mxu0 0
    %2370 = vmatprep.subr.bf16.mxu0 0
    %2371 = vmatpush1.bf16.msra.mxu0 0
    %2372 = vmatprep.subr.bf16.mxu0 0
    %2373 = vmatpush1.bf16.msra.mxu0 0
    %2374 = vmatprep.subr.bf16.mxu0 0
    %2375 = vmatpush1.bf16.msra.mxu0 0
    %2376 = vmatprep.mubr.bf16.mxu0 0
    %2377 = vmatmul.mubr.bf16.gmra.mrb[0].mxu0 %v2021
    %v2378 = vpop.f32.mrb[0].mxu0
    %v2379 = vadd.f32 %v1301, %v2378
    %v2380 = vpop.f32.mrb[0].mxu0
    %v2381 = vadd.f32 %v1303, %v2380
    %v2382 = vpop.f32.mrb[0].mxu0
    %v2383 = vadd.f32 %v1305, %v2382
    %v2384 = vpop.f32.mrb[0].mxu0
    %v2385 = vadd.f32 %v1307, %v2384
    %2386 = vmatprep.mubr.bf16.mxu0 0
    %2387 = vmatmul.mubr.bf16.gmra.mrb[0].mxu0 %v2024
    %v2388 = vpop.f32.mrb[0].mxu0
    %v2389 = vadd.f32 %v1311, %v2388
    %v2390 = vpop.f32.mrb[0].mxu0
    %v2391 = vadd.f32 %v1313, %v2390
    %v2392 = vpop.f32.mrb[0].mxu0
    %v2393 = vadd.f32 %v1315, %v2392
    %v2394 = vpop.f32.mrb[0].mxu0
    %v2395 = vadd.f32 %v1317, %v2394
    %2396 = vmatprep.mubr.bf16.mxu0 0
    %2397 = vmatmul.mubr.bf16.gmra.mrb[0].mxu0 %v2027
    %v2398 = vpop.f32.mrb[0].mxu0
    %v2399 = vadd.f32 %v1321, %v2398
    %v2400 = vpop.f32.mrb[0].mxu0
    %v2401 = vadd.f32 %v1323, %v2400
    %v2402 = vpop.f32.mrb[0].mxu0
    %v2403 = vadd.f32 %v1325, %v2402
    %v2404 = vpop.f32.mrb[0].mxu0
    %v2405 = vadd.f32 %v1327, %v2404
    %2406 = vdwg.mxu0
    %2407 = vmatprep.subr.bf16.mxu0 %v1809
    %2408 = vmatpush1.bf16.msra.mxu0 %v1808
    %2409 = vmatprep.subr.bf16.mxu0 %v1825
    %2410 = vmatpush1.bf16.msra.mxu0 %v1824
    %2411 = vmatprep.subr.bf16.mxu0 %v1841
    %2412 = vmatpush1.bf16.msra.mxu0 %v1840
    %2413 = vmatprep.subr.bf16.mxu0 %v1857
    %2414 = vmatpush1.bf16.msra.mxu0 %v1856
    %2415 = vmatprep.subr.bf16.mxu0 %v1873
    %2416 = vmatpush1.bf16.msra.mxu0 %v1872
    %2417 = vmatprep.subr.bf16.mxu0 %v1889
    %2418 = vmatpush1.bf16.msra.mxu0 %v1888
    %2419 = vmatprep.subr.bf16.mxu0 %v1905
    %2420 = vmatpush1.bf16.msra.mxu0 %v1904
    %2421 = vmatprep.subr.bf16.mxu0 0
    %2422 = vmatpush1.bf16.msra.mxu0 0
    %2423 = vmatprep.subr.bf16.mxu0 0
    %2424 = vmatpush1.bf16.msra.mxu0 0
    %2425 = vmatprep.subr.bf16.mxu0 0
    %2426 = vmatpush1.bf16.msra.mxu0 0
    %2427 = vmatprep.subr.bf16.mxu0 0
    %2428 = vmatpush1.bf16.msra.mxu0 0
    %2429 = vmatprep.subr.bf16.mxu0 0
    %2430 = vmatpush1.bf16.msra.mxu0 0
    %2431 = vmatprep.subr.bf16.mxu0 0
    %2432 = vmatpush1.bf16.msra.mxu0 0
    %2433 = vmatprep.subr.bf16.mxu0 0
    %2434 = vmatpush1.bf16.msra.mxu0 0
    %2435 = vmatprep.subr.bf16.mxu0 0
    %2436 = vmatpush1.bf16.msra.mxu0 0
    %2437 = vmatprep.subr.bf16.mxu0 0
    %2438 = vmatpush1.bf16.msra.mxu0 0
    %2439 = vmatprep.mubr.bf16.mxu0 0
    %2440 = vmatmul.mubr.bf16.gmra.mrb[0].mxu0 %v2021
    %v2441 = vpop.f32.mrb[0].mxu0
    %v2442 = vadd.f32 %v1364, %v2441
    %v2443 = vpop.f32.mrb[0].mxu0
    %v2444 = vadd.f32 %v1366, %v2443
    %v2445 = vpop.f32.mrb[0].mxu0
    %v2446 = vadd.f32 %v1368, %v2445
    %v2447 = vpop.f32.mrb[0].mxu0
    %v2448 = vadd.f32 %v1370, %v2447
    %2449 = vmatprep.mubr.bf16.mxu0 0
    %2450 = vmatmul.mubr.bf16.gmra.mrb[0].mxu0 %v2024
    %v2451 = vpop.f32.mrb[0].mxu0
    %v2452 = vadd.f32 %v1374, %v2451
    %v2453 = vpop.f32.mrb[0].mxu0
    %v2454 = vadd.f32 %v1376, %v2453
    %v2455 = vpop.f32.mrb[0].mxu0
    %v2456 = vadd.f32 %v1378, %v2455
    %v2457 = vpop.f32.mrb[0].mxu0
    %v2458 = vadd.f32 %v1380, %v2457
    %2459 = vmatprep.mubr.bf16.mxu0 0
    %2460 = vmatmul.mubr.bf16.gmra.mrb[0].mxu0 %v2027
    %v2461 = vpop.f32.mrb[0].mxu0
    %v2462 = vadd.f32 %v1384, %v2461
    %v2463 = vpop.f32.mrb[0].mxu0
    %v2464 = vadd.f32 %v1386, %v2463
    %v2465 = vpop.f32.mrb[0].mxu0
    %v2466 = vadd.f32 %v1388, %v2465
    %v2467 = vpop.f32.mrb[0].mxu0
    %v2468 = vadd.f32 %v1390, %v2467
    %2469 = vdwg.mxu0
    %2470 = vmatprep.subr.bf16.mxu0 %v1811
    %2471 = vmatpush1.bf16.msra.mxu0 %v1810
    %2472 = vmatprep.subr.bf16.mxu0 %v1827
    %2473 = vmatpush1.bf16.msra.mxu0 %v1826
    %2474 = vmatprep.subr.bf16.mxu0 %v1843
    %2475 = vmatpush1.bf16.msra.mxu0 %v1842
    %2476 = vmatprep.subr.bf16.mxu0 %v1859
    %2477 = vmatpush1.bf16.msra.mxu0 %v1858
    %2478 = vmatprep.subr.bf16.mxu0 %v1875
    %2479 = vmatpush1.bf16.msra.mxu0 %v1874
    %2480 = vmatprep.subr.bf16.mxu0 %v1891
    %2481 = vmatpush1.bf16.msra.mxu0 %v1890
    %2482 = vmatprep.subr.bf16.mxu0 %v1907
    %2483 = vmatpush1.bf16.msra.mxu0 %v1906
    %2484 = vmatprep.subr.bf16.mxu0 0
    %2485 = vmatpush1.bf16.msra.mxu0 0
    %2486 = vmatprep.subr.bf16.mxu0 0
    %2487 = vmatpush1.bf16.msra.mxu0 0
    %2488 = vmatprep.subr.bf16.mxu0 0
    %2489 = vmatpush1.bf16.msra.mxu0 0
    %2490 = vmatprep.subr.bf16.mxu0 0
    %2491 = vmatpush1.bf16.msra.mxu0 0
    %2492 = vmatprep.subr.bf16.mxu0 0
    %2493 = vmatpush1.bf16.msra.mxu0 0
    %2494 = vmatprep.subr.bf16.mxu0 0
    %2495 = vmatpush1.bf16.msra.mxu0 0
    %2496 = vmatprep.subr.bf16.mxu0 0
    %2497 = vmatpush1.bf16.msra.mxu0 0
    %2498 = vmatprep.subr.bf16.mxu0 0
    %2499 = vmatpush1.bf16.msra.mxu0 0
    %2500 = vmatprep.subr.bf16.mxu0 0
    %2501 = vmatpush1.bf16.msra.mxu0 0
    %2502 = vmatprep.mubr.bf16.mxu0 0
    %2503 = vmatmul.mubr.bf16.gmra.mrb[0].mxu0 %v2021
    %v2504 = vpop.f32.mrb[0].mxu0
    %v2505 = vadd.f32 %v1427, %v2504
    %v2506 = vpop.f32.mrb[0].mxu0
    %v2507 = vadd.f32 %v1429, %v2506
    %v2508 = vpop.f32.mrb[0].mxu0
    %v2509 = vadd.f32 %v1431, %v2508
    %v2510 = vpop.f32.mrb[0].mxu0
    %v2511 = vadd.f32 %v1433, %v2510
    %2512 = vmatprep.mubr.bf16.mxu0 0
    %2513 = vmatmul.mubr.bf16.gmra.mrb[0].mxu0 %v2024
    %v2514 = vpop.f32.mrb[0].mxu0
    %v2515 = vadd.f32 %v1437, %v2514
    %v2516 = vpop.f32.mrb[0].mxu0
    %v2517 = vadd.f32 %v1439, %v2516
    %v2518 = vpop.f32.mrb[0].mxu0
    %v2519 = vadd.f32 %v1441, %v2518
    %v2520 = vpop.f32.mrb[0].mxu0
    %v2521 = vadd.f32 %v1443, %v2520
    %2522 = vmatprep.mubr.bf16.mxu0 0
    %2523 = vmatmul.mubr.bf16.gmra.mrb[0].mxu0 %v2027
    %v2524 = vpop.f32.mrb[0].mxu0
    %v2525 = vadd.f32 %v1447, %v2524
    %v2526 = vpop.f32.mrb[0].mxu0
    %v2527 = vadd.f32 %v1449, %v2526
    %v2528 = vpop.f32.mrb[0].mxu0
    %v2529 = vadd.f32 %v1451, %v2528
    %v2530 = vpop.f32.mrb[0].mxu0
    %v2531 = vadd.f32 %v1453, %v2530
    %2532 = vdwg.mxu0
    %v2533 = vmax.f32 %v2064, %v2127
    %v2534 = vmax.f32 %v2066, %v2129
    %v2535 = vmax.f32 %v2068, %v2131
    %v2536 = vmax.f32 %v2070, %v2133
    %v2537 = vmax.f32 %v2074, %v2137
    %v2538 = vmax.f32 %v2076, %v2139
    %v2539 = vmax.f32 %v2078, %v2141
    %v2540 = vmax.f32 %v2080, %v2143
    %v2541 = vmax.f32 %v2084, %v2147
    %v2542 = vmax.f32 %v2086, %v2149
    %v2543 = vmax.f32 %v2088, %v2151
    %v2544 = vmax.f32 %v2090, %v2153
    %v2545 = vmax.f32 %v2533, %v2190
    %v2546 = vmax.f32 %v2534, %v2192
    %v2547 = vmax.f32 %v2535, %v2194
    %v2548 = vmax.f32 %v2536, %v2196
    %v2549 = vmax.f32 %v2537, %v2200
    %v2550 = vmax.f32 %v2538, %v2202
    %v2551 = vmax.f32 %v2539, %v2204
    %v2552 = vmax.f32 %v2540, %v2206
    %v2553 = vmax.f32 %v2541, %v2210
    %v2554 = vmax.f32 %v2542, %v2212
    %v2555 = vmax.f32 %v2543, %v2214
    %v2556 = vmax.f32 %v2544, %v2216
    %v2557 = vmax.f32 %v2545, %v2253
    %v2558 = vmax.f32 %v2546, %v2255
    %v2559 = vmax.f32 %v2547, %v2257
    %v2560 = vmax.f32 %v2548, %v2259
    %v2561 = vmax.f32 %v2549, %v2263
    %v2562 = vmax.f32 %v2550, %v2265
    %v2563 = vmax.f32 %v2551, %v2267
    %v2564 = vmax.f32 %v2552, %v2269
    %v2565 = vmax.f32 %v2553, %v2273
    %v2566 = vmax.f32 %v2554, %v2275
    %v2567 = vmax.f32 %v2555, %v2277
    %v2568 = vmax.f32 %v2556, %v2279
    %v2569 = vld [vmem:[#allocation4] sm:$0x3]
    %v2571 = vlaneseq
    %v2572 = vshrl.u32 %v2571, 7
    %v2573 = vsub.s32 0, %v2572
    %v2574 = vrot.slane %v2569, %v2573
    %v2575 = vlaneseq
    %v2576 = vshrl.u32 %v2575, 7
    %v2577 = vsub.s32 1, %v2576
    %v2578 = vrot.slane %v2569, %v2577
    %v2581 = vadd.f32 %v2557, %v2574
    %v2582 = vadd.f32 %v2558, %v2578
    %v2583 = vadd.f32 %v2559, %v2574
    %v2584 = vadd.f32 %v2560, %v2578
    %v2585 = vadd.f32 %v2561, %v2574
    %v2586 = vadd.f32 %v2562, %v2578
    %v2587 = vadd.f32 %v2563, %v2574
    %v2588 = vadd.f32 %v2564, %v2578
    %v2589 = vadd.f32 %v2565, %v2574
    %v2590 = vadd.f32 %v2566, %v2578
    %v2591 = vadd.f32 %v2567, %v2574
    %v2592 = vadd.f32 %v2568, %v2578
    %v2593 = vmax.f32 %v2581, 0.0
    %v2594 = vmax.f32 %v2582, 0.0
    %v2595 = vmax.f32 %v2583, 0.0
    %v2596 = vmax.f32 %v2584, 0.0
    %v2597 = vmax.f32 %v2585, 0.0
    %v2598 = vmax.f32 %v2586, 0.0
    %v2599 = vmax.f32 %v2587, 0.0
    %v2600 = vmax.f32 %v2588, 0.0
    %v2601 = vmax.f32 %v2589, 0.0
    %v2602 = vmax.f32 %v2590, 0.0
    %v2603 = vmax.f32 %v2591, 0.0
    %v2604 = vmax.f32 %v2592, 0.0
    %v2605 = vmax.f32 %v2316, %v2379
    %v2606 = vmax.f32 %v2318, %v2381
    %v2607 = vmax.f32 %v2320, %v2383
    %v2608 = vmax.f32 %v2322, %v2385
    %v2609 = vmax.f32 %v2326, %v2389
    %v2610 = vmax.f32 %v2328, %v2391
    %v2611 = vmax.f32 %v2330, %v2393
    %v2612 = vmax.f32 %v2332, %v2395
    %v2613 = vmax.f32 %v2336, %v2399
    %v2614 = vmax.f32 %v2338, %v2401
    %v2615 = vmax.f32 %v2340, %v2403
    %v2616 = vmax.f32 %v2342, %v2405
    %v2617 = vmax.f32 %v2605, %v2442
    %v2618 = vmax.f32 %v2606, %v2444
    %v2619 = vmax.f32 %v2607, %v2446
    %v2620 = vmax.f32 %v2608, %v2448
    %v2621 = vmax.f32 %v2609, %v2452
    %v2622 = vmax.f32 %v2610, %v2454
    %v2623 = vmax.f32 %v2611, %v2456
    %v2624 = vmax.f32 %v2612, %v2458
    %v2625 = vmax.f32 %v2613, %v2462
    %v2626 = vmax.f32 %v2614, %v2464
    %v2627 = vmax.f32 %v2615, %v2466
    %v2628 = vmax.f32 %v2616, %v2468
    %v2629 = vmax.f32 %v2617, %v2505
    %v2630 = vmax.f32 %v2618, %v2507
    %v2631 = vmax.f32 %v2619, %v2509
    %v2632 = vmax.f32 %v2620, %v2511
    %v2633 = vmax.f32 %v2621, %v2515
    %v2634 = vmax.f32 %v2622, %v2517
    %v2635 = vmax.f32 %v2623, %v2519
    %v2636 = vmax.f32 %v2624, %v2521
    %v2637 = vmax.f32 %v2625, %v2525
    %v2638 = vmax.f32 %v2626, %v2527
    %v2639 = vmax.f32 %v2627, %v2529
    %v2640 = vmax.f32 %v2628, %v2531
    %v2641 = vadd.f32 %v2629, %v2574
    %v2642 = vadd.f32 %v2630, %v2578
    %v2643 = vadd.f32 %v2631, %v2574
    %v2644 = vadd.f32 %v2632, %v2578
    %v2645 = vadd.f32 %v2633, %v2574
    %v2646 = vadd.f32 %v2634, %v2578
    %v2647 = vadd.f32 %v2635, %v2574
    %v2648 = vadd.f32 %v2636, %v2578
    %v2649 = vadd.f32 %v2637, %v2574
    %v2650 = vadd.f32 %v2638, %v2578
    %v2651 = vadd.f32 %v2639, %v2574
    %v2652 = vadd.f32 %v2640, %v2578
    %v2653 = vmax.f32 %v2641, 0.0
    %v2654 = vmax.f32 %v2642, 0.0
    %v2655 = vmax.f32 %v2643, 0.0
    %v2656 = vmax.f32 %v2644, 0.0
    %v2657 = vmax.f32 %v2645, 0.0
    %v2658 = vmax.f32 %v2646, 0.0
    %v2659 = vmax.f32 %v2647, 0.0
    %v2660 = vmax.f32 %v2648, 0.0
    %v2661 = vmax.f32 %v2649, 0.0
    %v2662 = vmax.f32 %v2650, 0.0
    %v2663 = vmax.f32 %v2651, 0.0
    %v2664 = vmax.f32 %v2652, 0.0
    %v2665 = vpack.c.bf16 %v2595, %v2593
    %v2666 = vpack.c.bf16 %v2596, %v2594
    %v2667 = vpack.c.bf16 %v2655, %v2653
    %v2668 = vpack.c.bf16 %v2656, %v2654
    %v2669 = vpack.c.bf16 %v2599, %v2597
    %v2670 = vpack.c.bf16 %v2600, %v2598
    %v2671 = vpack.c.bf16 %v2659, %v2657
    %v2672 = vpack.c.bf16 %v2660, %v2658
    %v2673 = vpack.c.bf16 %v2603, %v2601
    %v2674 = vpack.c.bf16 %v2604, %v2602
    %v2675 = vpack.c.bf16 %v2663, %v2661
    %v2676 = vpack.c.bf16 %v2664, %v2662
    %v2677 = vld [vmem:[#allocation6] sm:$0xff]
    %v2678 = vld [vmem:[#allocation6 + $0x8] sm:$0xff]
    %v2679 = vld [vmem:[#allocation6 + $0x10] sm:$0xff]
    %v2680 = vld [vmem:[#allocation6 + $0x18] sm:$0xff]
    %v2681 = vld [vmem:[#allocation6 + $0x20] sm:$0xff]
    %v2682 = vld [vmem:[#allocation6 + $0x28] sm:$0xff]
    %v2683 = vld [vmem:[#allocation6 + $0x30] sm:$0xff]
    %v2684 = vld [vmem:[#allocation6 + $0x38] sm:$0xff]
    %v2685 = vld [vmem:[#allocation6 + $0x40] sm:$0xff]
    %v2686 = vld [vmem:[#allocation6 + $0x48] sm:$0xff]
    %v2687 = vld [vmem:[#allocation6 + $0x50] sm:$0xff]
    %v2688 = vld [vmem:[#allocation6 + $0x58] sm:$0xff]
    %v2689 = vld [vmem:[#allocation6 + $0x60] sm:$0xff]
    %v2690 = vld [vmem:[#allocation6 + $0x68] sm:$0xff]
    %v2691 = vld [vmem:[#allocation6 + $0x70] sm:$0xff]
    %v2692 = vld [vmem:[#allocation6 + $0x78] sm:$0xff]
    %v2693 = vld [vmem:[#allocation6 + $0x80] sm:$0xff]
    %v2694 = vld [vmem:[#allocation6 + $0x88] sm:$0xff]
    %v2695 = vld [vmem:[#allocation6 + $0x90] sm:$0xff]
    %v2696 = vld [vmem:[#allocation6 + $0x98] sm:$0xff]
    %v2697 = vld [vmem:[#allocation6 + $0xa0] sm:$0xff]
    %v2698 = vld [vmem:[#allocation6 + $0xa8] sm:$0xff]
    %v2699 = vld [vmem:[#allocation6 + $0xb0] sm:$0xff]
    %v2700 = vld [vmem:[#allocation6 + $0xb8] sm:$0xff]
    %v2701 = vld [vmem:[#allocation6 + $0xc0] sm:$0xff]
    %v2702 = vld [vmem:[#allocation6 + $0xc8] sm:$0xff]
    %v2703 = vld [vmem:[#allocation6 + $0xd0] sm:$0xff]
    %v2704 = vld [vmem:[#allocation6 + $0xd8] sm:$0xff]
    %v2705 = vld [vmem:[#allocation6 + $0xe0] sm:$0xff]
    %v2706 = vld [vmem:[#allocation6 + $0xe8] sm:$0xff]
    %v2707 = vld [vmem:[#allocation6 + $0xf0] sm:$0xff]
    %v2708 = vld [vmem:[#allocation6 + $0xf8] sm:$0xff]
    %v2709 = vld [vmem:[#allocation6 + $0x100] sm:$0xff]
    %v2710 = vld [vmem:[#allocation6 + $0x108] sm:$0xff]
    %v2711 = vld [vmem:[#allocation6 + $0x110] sm:$0xff]
    %v2712 = vld [vmem:[#allocation6 + $0x118] sm:$0xff]
    %v2713 = vld [vmem:[#allocation6 + $0x120] sm:$0xff]
    %v2714 = vld [vmem:[#allocation6 + $0x128] sm:$0xff]
    %v2715 = vld [vmem:[#allocation6 + $0x130] sm:$0xff]
    %v2716 = vld [vmem:[#allocation6 + $0x138] sm:$0xff]
    %v2717 = vld [vmem:[#allocation6 + $0x140] sm:$0xff]
    %v2718 = vld [vmem:[#allocation6 + $0x148] sm:$0xff]
    %v2719 = vld [vmem:[#allocation6 + $0x150] sm:$0xff]
    %v2720 = vld [vmem:[#allocation6 + $0x158] sm:$0xff]
    %v2721 = vld [vmem:[#allocation6 + $0x160] sm:$0xff]
    %v2722 = vld [vmem:[#allocation6 + $0x168] sm:$0xff]
    %v2723 = vld [vmem:[#allocation6 + $0x170] sm:$0xff]
    %v2724 = vld [vmem:[#allocation6 + $0x178] sm:$0xff]
    %v2725 = vld [vmem:[#allocation6 + $0x180] sm:$0xff]
    %v2726 = vld [vmem:[#allocation6 + $0x188] sm:$0xff]
    %v2727 = vld [vmem:[#allocation6 + $0x190] sm:$0xff]
    %v2728 = vld [vmem:[#allocation6 + $0x198] sm:$0xff]
    %v2729 = vld [vmem:[#allocation6 + $0x1a0] sm:$0xff]
    %v2730 = vld [vmem:[#allocation6 + $0x1a8] sm:$0xff]
    %v2731 = vld [vmem:[#allocation6 + $0x1b0] sm:$0xff]
    %v2732 = vld [vmem:[#allocation6 + $0x1b8] sm:$0xff]
    %v2733 = vld [vmem:[#allocation6 + $0x1c0] sm:$0xff]
    %v2734 = vld [vmem:[#allocation6 + $0x1c8] sm:$0xff]
    %v2735 = vld [vmem:[#allocation6 + $0x1d0] sm:$0xff]
    %v2736 = vld [vmem:[#allocation6 + $0x1d8] sm:$0xff]
    %v2737 = vld [vmem:[#allocation6 + $0x1e0] sm:$0xff]
    %v2738 = vld [vmem:[#allocation6 + $0x1e8] sm:$0xff]
    %v2739 = vld [vmem:[#allocation6 + $0x1f0] sm:$0xff]
    %v2740 = vld [vmem:[#allocation6 + $0x1f8] sm:$0xff]
    %v2741 = vld [vmem:[#allocation6 + $0x200] sm:$0xff]
    %v2742 = vld [vmem:[#allocation6 + $0x208] sm:$0xff]
    %v2743 = vld [vmem:[#allocation6 + $0x210] sm:$0xff]
    %v2744 = vld [vmem:[#allocation6 + $0x218] sm:$0xff]
    %v2745 = vld [vmem:[#allocation6 + $0x220] sm:$0xff]
    %v2746 = vld [vmem:[#allocation6 + $0x228] sm:$0xff]
    %v2747 = vld [vmem:[#allocation6 + $0x230] sm:$0xff]
    %v2748 = vld [vmem:[#allocation6 + $0x238] sm:$0xff]
    %v2749 = vld [vmem:[#allocation6 + $0x240] sm:$0xff]
    %v2750 = vld [vmem:[#allocation6 + $0x248] sm:$0xff]
    %v2751 = vld [vmem:[#allocation6 + $0x250] sm:$0xff]
    %v2752 = vld [vmem:[#allocation6 + $0x258] sm:$0xff]
    %v2753 = vld [vmem:[#allocation6 + $0x260] sm:$0xff]
    %v2754 = vld [vmem:[#allocation6 + $0x268] sm:$0xff]
    %v2755 = vld [vmem:[#allocation6 + $0x270] sm:$0xff]
    %v2756 = vld [vmem:[#allocation6 + $0x278] sm:$0xff]
    %v2757 = vld [vmem:[#allocation6 + $0x280] sm:$0xff]
    %v2758 = vld [vmem:[#allocation6 + $0x288] sm:$0xff]
    %v2759 = vld [vmem:[#allocation6 + $0x290] sm:$0xff]
    %v2760 = vld [vmem:[#allocation6 + $0x298] sm:$0xff]
    %v2761 = vld [vmem:[#allocation6 + $0x2a0] sm:$0xff]
    %v2762 = vld [vmem:[#allocation6 + $0x2a8] sm:$0xff]
    %v2763 = vld [vmem:[#allocation6 + $0x2b0] sm:$0xff]
    %v2764 = vld [vmem:[#allocation6 + $0x2b8] sm:$0xff]
    %v2765 = vld [vmem:[#allocation6 + $0x2c0] sm:$0xff]
    %v2766 = vld [vmem:[#allocation6 + $0x2c8] sm:$0xff]
    %v2767 = vld [vmem:[#allocation6 + $0x2d0] sm:$0xff]
    %v2768 = vld [vmem:[#allocation6 + $0x2d8] sm:$0xff]
    %v2769 = vld [vmem:[#allocation6 + $0x2e0] sm:$0xff]
    %v2770 = vld [vmem:[#allocation6 + $0x2e8] sm:$0xff]
    %v2771 = vld [vmem:[#allocation6 + $0x2f0] sm:$0xff]
    %v2772 = vld [vmem:[#allocation6 + $0x2f8] sm:$0xff]
    %v2773 = vld [vmem:[#allocation6 + $0x300] sm:$0xff]
    %v2774 = vld [vmem:[#allocation6 + $0x308] sm:$0xff]
    %v2775 = vld [vmem:[#allocation6 + $0x310] sm:$0xff]
    %v2776 = vld [vmem:[#allocation6 + $0x318] sm:$0xff]
    %v2777 = vld [vmem:[#allocation6 + $0x320] sm:$0xff]
    %v2778 = vld [vmem:[#allocation6 + $0x328] sm:$0xff]
    %v2779 = vld [vmem:[#allocation6 + $0x330] sm:$0xff]
    %v2780 = vld [vmem:[#allocation6 + $0x338] sm:$0xff]
    %v2781 = vld [vmem:[#allocation6 + $0x340] sm:$0xff]
    %v2782 = vld [vmem:[#allocation6 + $0x348] sm:$0xff]
    %v2783 = vld [vmem:[#allocation6 + $0x350] sm:$0xff]
    %v2784 = vld [vmem:[#allocation6 + $0x358] sm:$0xff]
    %v2785 = vld [vmem:[#allocation6 + $0x360] sm:$0xff]
    %v2786 = vld [vmem:[#allocation6 + $0x368] sm:$0xff]
    %v2787 = vld [vmem:[#allocation6 + $0x370] sm:$0xff]
    %v2788 = vld [vmem:[#allocation6 + $0x378] sm:$0xff]
    %v2789 = vld [vmem:[#allocation6 + $0x380] sm:$0xff]
    %v2790 = vld [vmem:[#allocation6 + $0x388] sm:$0xff]
    %v2791 = vld [vmem:[#allocation6 + $0x390] sm:$0xff]
    %v2792 = vld [vmem:[#allocation6 + $0x398] sm:$0xff]
    %v2793 = vld [vmem:[#allocation6 + $0x3a0] sm:$0xff]
    %v2794 = vld [vmem:[#allocation6 + $0x3a8] sm:$0xff]
    %v2795 = vld [vmem:[#allocation6 + $0x3b0] sm:$0xff]
    %v2796 = vld [vmem:[#allocation6 + $0x3b8] sm:$0xff]
    %v2797 = vld [vmem:[#allocation6 + $0x3c0] sm:$0xff]
    %v2798 = vld [vmem:[#allocation6 + $0x3c8] sm:$0xff]
    %v2799 = vld [vmem:[#allocation6 + $0x3d0] sm:$0xff]
    %v2800 = vld [vmem:[#allocation6 + $0x3d8] sm:$0xff]
    %v2801 = vld [vmem:[#allocation6 + $0x3e0] sm:$0xff]
    %v2802 = vld [vmem:[#allocation6 + $0x3e8] sm:$0xff]
    %v2803 = vld [vmem:[#allocation6 + $0x3f0] sm:$0xff]
    %v2804 = vld [vmem:[#allocation6 + $0x3f8] sm:$0xff]
    %v2805 = vld [vmem:[#allocation6 + $0x400] sm:$0xff]
    %v2806 = vld [vmem:[#allocation6 + $0x408] sm:$0xff]
    %v2807 = vld [vmem:[#allocation6 + $0x410] sm:$0xff]
    %v2808 = vld [vmem:[#allocation6 + $0x418] sm:$0xff]
    %v2809 = vld [vmem:[#allocation6 + $0x420] sm:$0xff]
    %v2810 = vld [vmem:[#allocation6 + $0x428] sm:$0xff]
    %v2811 = vld [vmem:[#allocation6 + $0x430] sm:$0xff]
    %v2812 = vld [vmem:[#allocation6 + $0x438] sm:$0xff]
    %v2813 = vld [vmem:[#allocation6 + $0x440] sm:$0xff]
    %v2814 = vld [vmem:[#allocation6 + $0x448] sm:$0xff]
    %v2815 = vld [vmem:[#allocation6 + $0x450] sm:$0xff]
    %v2816 = vld [vmem:[#allocation6 + $0x458] sm:$0xff]
    %v2817 = vld [vmem:[#allocation6 + $0x460] sm:$0xff]
    %v2818 = vld [vmem:[#allocation6 + $0x468] sm:$0xff]
    %v2819 = vld [vmem:[#allocation6 + $0x470] sm:$0xff]
    %v2820 = vld [vmem:[#allocation6 + $0x478] sm:$0xff]
    %v2821 = vld [vmem:[#allocation6 + $0x480] sm:$0xff]
    %v2822 = vld [vmem:[#allocation6 + $0x488] sm:$0xff]
    %v2823 = vld [vmem:[#allocation6 + $0x490] sm:$0xff]
    %v2824 = vld [vmem:[#allocation6 + $0x498] sm:$0xff]
    %v2825 = vld [vmem:[#allocation6 + $0x4a0] sm:$0xff]
    %v2826 = vld [vmem:[#allocation6 + $0x4a8] sm:$0xff]
    %v2827 = vld [vmem:[#allocation6 + $0x4b0] sm:$0xff]
    %v2828 = vld [vmem:[#allocation6 + $0x4b8] sm:$0xff]
    %v2829 = vld [vmem:[#allocation6 + $0x4c0] sm:$0xff]
    %v2830 = vld [vmem:[#allocation6 + $0x4c8] sm:$0xff]
    %v2831 = vld [vmem:[#allocation6 + $0x4d0] sm:$0xff]
    %v2832 = vld [vmem:[#allocation6 + $0x4d8] sm:$0xff]
    %v2833 = vld [vmem:[#allocation6 + $0x4e0] sm:$0xff]
    %v2834 = vld [vmem:[#allocation6 + $0x4e8] sm:$0xff]
    %v2835 = vld [vmem:[#allocation6 + $0x4f0] sm:$0xff]
    %v2836 = vld [vmem:[#allocation6 + $0x4f8] sm:$0xff]
    %v2837 = vld [vmem:[#allocation6 + $0x500] sm:$0xff]
    %v2838 = vld [vmem:[#allocation6 + $0x508] sm:$0xff]
    %v2839 = vld [vmem:[#allocation6 + $0x510] sm:$0xff]
    %v2840 = vld [vmem:[#allocation6 + $0x518] sm:$0xff]
    %v2841 = vld [vmem:[#allocation6 + $0x520] sm:$0xff]
    %v2842 = vld [vmem:[#allocation6 + $0x528] sm:$0xff]
    %v2843 = vld [vmem:[#allocation6 + $0x530] sm:$0xff]
    %v2844 = vld [vmem:[#allocation6 + $0x538] sm:$0xff]
    %v2845 = vld [vmem:[#allocation6 + $0x540] sm:$0xff]
    %v2846 = vld [vmem:[#allocation6 + $0x548] sm:$0xff]
    %v2847 = vld [vmem:[#allocation6 + $0x550] sm:$0xff]
    %v2848 = vld [vmem:[#allocation6 + $0x558] sm:$0xff]
    %v2849 = vld [vmem:[#allocation6 + $0x560] sm:$0xff]
    %v2850 = vld [vmem:[#allocation6 + $0x568] sm:$0xff]
    %v2851 = vld [vmem:[#allocation6 + $0x570] sm:$0xff]
    %v2852 = vld [vmem:[#allocation6 + $0x578] sm:$0xff]
    %v2853 = vld [vmem:[#allocation6 + $0x580] sm:$0xff]
    %v2854 = vld [vmem:[#allocation6 + $0x588] sm:$0xff]
    %v2855 = vld [vmem:[#allocation6 + $0x590] sm:$0xff]
    %v2856 = vld [vmem:[#allocation6 + $0x598] sm:$0xff]
    %v2857 = vld [vmem:[#allocation6 + $0x5a0] sm:$0xff]
    %v2858 = vld [vmem:[#allocation6 + $0x5a8] sm:$0xff]
    %v2859 = vld [vmem:[#allocation6 + $0x5b0] sm:$0xff]
    %v2860 = vld [vmem:[#allocation6 + $0x5b8] sm:$0xff]
    %v2861 = vld [vmem:[#allocation6 + $0x5c0] sm:$0xff]
    %v2862 = vld [vmem:[#allocation6 + $0x5c8] sm:$0xff]
    %v2863 = vld [vmem:[#allocation6 + $0x5d0] sm:$0xff]
    %v2864 = vld [vmem:[#allocation6 + $0x5d8] sm:$0xff]
    %v2865 = vld [vmem:[#allocation6 + $0x5e0] sm:$0xff]
    %v2866 = vld [vmem:[#allocation6 + $0x5e8] sm:$0xff]
    %v2867 = vld [vmem:[#allocation6 + $0x5f0] sm:$0xff]
    %v2868 = vld [vmem:[#allocation6 + $0x5f8] sm:$0xff]
    %v2869 = vld [vmem:[#allocation6 + $0x600] sm:$0xff]
    %v2870 = vld [vmem:[#allocation6 + $0x608] sm:$0xff]
    %v2871 = vld [vmem:[#allocation6 + $0x610] sm:$0xff]
    %v2872 = vld [vmem:[#allocation6 + $0x618] sm:$0xff]
    %v2873 = vld [vmem:[#allocation6 + $0x620] sm:$0xff]
    %v2874 = vld [vmem:[#allocation6 + $0x628] sm:$0xff]
    %v2875 = vld [vmem:[#allocation6 + $0x630] sm:$0xff]
    %v2876 = vld [vmem:[#allocation6 + $0x638] sm:$0xff]
    %v2877 = vld [vmem:[#allocation6 + $0x640] sm:$0xff]
    %v2878 = vld [vmem:[#allocation6 + $0x648] sm:$0xff]
    %v2879 = vld [vmem:[#allocation6 + $0x650] sm:$0xff]
    %v2880 = vld [vmem:[#allocation6 + $0x658] sm:$0xff]
    %v2881 = vld [vmem:[#allocation6 + $0x660] sm:$0xff]
    %v2882 = vld [vmem:[#allocation6 + $0x668] sm:$0xff]
    %v2883 = vld [vmem:[#allocation6 + $0x670] sm:$0xff]
    %v2884 = vld [vmem:[#allocation6 + $0x678] sm:$0xff]
    %v2885 = vld [vmem:[#allocation6 + $0x680] sm:$0xff]
    %v2886 = vld [vmem:[#allocation6 + $0x688] sm:$0xff]
    %v2887 = vld [vmem:[#allocation6 + $0x690] sm:$0xff]
    %v2888 = vld [vmem:[#allocation6 + $0x698] sm:$0xff]
    %v2889 = vld [vmem:[#allocation6 + $0x6a0] sm:$0xff]
    %v2890 = vld [vmem:[#allocation6 + $0x6a8] sm:$0xff]
    %v2891 = vld [vmem:[#allocation6 + $0x6b0] sm:$0xff]
    %v2892 = vld [vmem:[#allocation6 + $0x6b8] sm:$0xff]
    %v2893 = vld [vmem:[#allocation6 + $0x6c0] sm:$0xff]
    %v2894 = vld [vmem:[#allocation6 + $0x6c8] sm:$0xff]
    %v2895 = vld [vmem:[#allocation6 + $0x6d0] sm:$0xff]
    %v2896 = vld [vmem:[#allocation6 + $0x6d8] sm:$0xff]
    %v2897 = vld [vmem:[#allocation6 + $0x6e0] sm:$0xff]
    %v2898 = vld [vmem:[#allocation6 + $0x6e8] sm:$0xff]
    %v2899 = vld [vmem:[#allocation6 + $0x6f0] sm:$0xff]
    %v2900 = vld [vmem:[#allocation6 + $0x6f8] sm:$0xff]
    %v2901 = vld [vmem:[#allocation6 + $0x700] sm:$0xff]
    %v2902 = vld [vmem:[#allocation6 + $0x708] sm:$0xff]
    %v2903 = vld [vmem:[#allocation6 + $0x710] sm:$0xff]
    %v2904 = vld [vmem:[#allocation6 + $0x718] sm:$0xff]
    %v2905 = vld [vmem:[#allocation6 + $0x720] sm:$0xff]
    %v2906 = vld [vmem:[#allocation6 + $0x728] sm:$0xff]
    %v2907 = vld [vmem:[#allocation6 + $0x730] sm:$0xff]
    %v2908 = vld [vmem:[#allocation6 + $0x738] sm:$0xff]
    %v2909 = vld [vmem:[#allocation6 + $0x740] sm:$0xff]
    %v2910 = vld [vmem:[#allocation6 + $0x748] sm:$0xff]
    %v2911 = vld [vmem:[#allocation6 + $0x750] sm:$0xff]
    %v2912 = vld [vmem:[#allocation6 + $0x758] sm:$0xff]
    %v2913 = vld [vmem:[#allocation6 + $0x760] sm:$0xff]
    %v2914 = vld [vmem:[#allocation6 + $0x768] sm:$0xff]
    %v2915 = vld [vmem:[#allocation6 + $0x770] sm:$0xff]
    %v2916 = vld [vmem:[#allocation6 + $0x778] sm:$0xff]
    %v2917 = vld [vmem:[#allocation6 + $0x780] sm:$0xff]
    %v2918 = vld [vmem:[#allocation6 + $0x788] sm:$0xff]
    %v2919 = vld [vmem:[#allocation6 + $0x790] sm:$0xff]
    %v2920 = vld [vmem:[#allocation6 + $0x798] sm:$0xff]
    %v2921 = vld [vmem:[#allocation6 + $0x7a0] sm:$0xff]
    %v2922 = vld [vmem:[#allocation6 + $0x7a8] sm:$0xff]
    %v2923 = vld [vmem:[#allocation6 + $0x7b0] sm:$0xff]
    %v2924 = vld [vmem:[#allocation6 + $0x7b8] sm:$0xff]
    %v2925 = vld [vmem:[#allocation6 + $0x7c0] sm:$0xff]
    %v2926 = vld [vmem:[#allocation6 + $0x7c8] sm:$0xff]
    %v2927 = vld [vmem:[#allocation6 + $0x7d0] sm:$0xff]
    %v2928 = vld [vmem:[#allocation6 + $0x7d8] sm:$0xff]
    %v2929 = vld [vmem:[#allocation6 + $0x7e0] sm:$0xff]
    %v2930 = vld [vmem:[#allocation6 + $0x7e8] sm:$0xff]
    %v2931 = vld [vmem:[#allocation6 + $0x7f0] sm:$0xff]
    %v2932 = vld [vmem:[#allocation6 + $0x7f8] sm:$0xff]
    %s2933 = scalar_lea.vmem [#allocation6], 2048
    %v2934 = vld [vmem:[%s2933] sm:$0xff]
    %v2935 = vld [vmem:[%s2933 + $0x8] sm:$0xff]
    %v2936 = vld [vmem:[%s2933 + $0x10] sm:$0xff]
    %v2937 = vld [vmem:[%s2933 + $0x18] sm:$0xff]
    %v2938 = vld [vmem:[%s2933 + $0x20] sm:$0xff]
    %v2939 = vld [vmem:[%s2933 + $0x28] sm:$0xff]
    %v2940 = vld [vmem:[%s2933 + $0x30] sm:$0xff]
    %v2941 = vld [vmem:[%s2933 + $0x38] sm:$0xff]
    %v2942 = vld [vmem:[%s2933 + $0x40] sm:$0xff]
    %v2943 = vld [vmem:[%s2933 + $0x48] sm:$0xff]
    %v2944 = vld [vmem:[%s2933 + $0x50] sm:$0xff]
    %v2945 = vld [vmem:[%s2933 + $0x58] sm:$0xff]
    %v2946 = vld [vmem:[%s2933 + $0x60] sm:$0xff]
    %v2947 = vld [vmem:[%s2933 + $0x68] sm:$0xff]
    %v2948 = vld [vmem:[%s2933 + $0x70] sm:$0xff]
    %v2949 = vld [vmem:[%s2933 + $0x78] sm:$0xff]
    %v2950 = vld [vmem:[%s2933 + $0x80] sm:$0xff]
    %v2951 = vld [vmem:[%s2933 + $0x88] sm:$0xff]
    %v2952 = vld [vmem:[%s2933 + $0x90] sm:$0xff]
    %v2953 = vld [vmem:[%s2933 + $0x98] sm:$0xff]
    %v2954 = vld [vmem:[%s2933 + $0xa0] sm:$0xff]
    %v2955 = vld [vmem:[%s2933 + $0xa8] sm:$0xff]
    %v2956 = vld [vmem:[%s2933 + $0xb0] sm:$0xff]
    %v2957 = vld [vmem:[%s2933 + $0xb8] sm:$0xff]
    %v2958 = vld [vmem:[%s2933 + $0xc0] sm:$0xff]
    %v2959 = vld [vmem:[%s2933 + $0xc8] sm:$0xff]
    %v2960 = vld [vmem:[%s2933 + $0xd0] sm:$0xff]
    %v2961 = vld [vmem:[%s2933 + $0xd8] sm:$0xff]
    %v2962 = vld [vmem:[%s2933 + $0xe0] sm:$0xff]
    %v2963 = vld [vmem:[%s2933 + $0xe8] sm:$0xff]
    %v2964 = vld [vmem:[%s2933 + $0xf0] sm:$0xff]
    %v2965 = vld [vmem:[%s2933 + $0xf8] sm:$0xff]
    %v2966 = vld [vmem:[%s2933 + $0x100] sm:$0xff]
    %v2967 = vld [vmem:[%s2933 + $0x108] sm:$0xff]
    %v2968 = vld [vmem:[%s2933 + $0x110] sm:$0xff]
    %v2969 = vld [vmem:[%s2933 + $0x118] sm:$0xff]
    %v2970 = vld [vmem:[%s2933 + $0x120] sm:$0xff]
    %v2971 = vld [vmem:[%s2933 + $0x128] sm:$0xff]
    %v2972 = vld [vmem:[%s2933 + $0x130] sm:$0xff]
    %v2973 = vld [vmem:[%s2933 + $0x138] sm:$0xff]
    %v2974 = vld [vmem:[%s2933 + $0x140] sm:$0xff]
    %v2975 = vld [vmem:[%s2933 + $0x148] sm:$0xff]
    %v2976 = vld [vmem:[%s2933 + $0x150] sm:$0xff]
    %v2977 = vld [vmem:[%s2933 + $0x158] sm:$0xff]
    %v2978 = vld [vmem:[%s2933 + $0x160] sm:$0xff]
    %v2979 = vld [vmem:[%s2933 + $0x168] sm:$0xff]
    %v2980 = vld [vmem:[%s2933 + $0x170] sm:$0xff]
    %v2981 = vld [vmem:[%s2933 + $0x178] sm:$0xff]
    %v2982 = vld [vmem:[%s2933 + $0x180] sm:$0xff]
    %v2983 = vld [vmem:[%s2933 + $0x188] sm:$0xff]
    %v2984 = vld [vmem:[%s2933 + $0x190] sm:$0xff]
    %v2985 = vld [vmem:[%s2933 + $0x198] sm:$0xff]
    %v2986 = vld [vmem:[%s2933 + $0x1a0] sm:$0xff]
    %v2987 = vld [vmem:[%s2933 + $0x1a8] sm:$0xff]
    %v2988 = vld [vmem:[%s2933 + $0x1b0] sm:$0xff]
    %v2989 = vld [vmem:[%s2933 + $0x1b8] sm:$0xff]
    %v2990 = vld [vmem:[%s2933 + $0x1c0] sm:$0xff]
    %v2991 = vld [vmem:[%s2933 + $0x1c8] sm:$0xff]
    %v2992 = vld [vmem:[%s2933 + $0x1d0] sm:$0xff]
    %v2993 = vld [vmem:[%s2933 + $0x1d8] sm:$0xff]
    %v2994 = vld [vmem:[%s2933 + $0x1e0] sm:$0xff]
    %v2995 = vld [vmem:[%s2933 + $0x1e8] sm:$0xff]
    %v2996 = vld [vmem:[%s2933 + $0x1f0] sm:$0xff]
    %v2997 = vld [vmem:[%s2933 + $0x1f8] sm:$0xff]
    %v2998 = vld [vmem:[%s2933 + $0x200] sm:$0xff]
    %v2999 = vld [vmem:[%s2933 + $0x208] sm:$0xff]
    %v3000 = vld [vmem:[%s2933 + $0x210] sm:$0xff]
    %v3001 = vld [vmem:[%s2933 + $0x218] sm:$0xff]
    %v3002 = vld [vmem:[%s2933 + $0x220] sm:$0xff]
    %v3003 = vld [vmem:[%s2933 + $0x228] sm:$0xff]
    %v3004 = vld [vmem:[%s2933 + $0x230] sm:$0xff]
    %v3005 = vld [vmem:[%s2933 + $0x238] sm:$0xff]
    %v3006 = vld [vmem:[%s2933 + $0x240] sm:$0xff]
    %v3007 = vld [vmem:[%s2933 + $0x248] sm:$0xff]
    %v3008 = vld [vmem:[%s2933 + $0x250] sm:$0xff]
    %v3009 = vld [vmem:[%s2933 + $0x258] sm:$0xff]
    %v3010 = vld [vmem:[%s2933 + $0x260] sm:$0xff]
    %v3011 = vld [vmem:[%s2933 + $0x268] sm:$0xff]
    %v3012 = vld [vmem:[%s2933 + $0x270] sm:$0xff]
    %v3013 = vld [vmem:[%s2933 + $0x278] sm:$0xff]
    %v3014 = vld [vmem:[%s2933 + $0x280] sm:$0xff]
    %v3015 = vld [vmem:[%s2933 + $0x288] sm:$0xff]
    %v3016 = vld [vmem:[%s2933 + $0x290] sm:$0xff]
    %v3017 = vld [vmem:[%s2933 + $0x298] sm:$0xff]
    %v3018 = vld [vmem:[%s2933 + $0x2a0] sm:$0xff]
    %v3019 = vld [vmem:[%s2933 + $0x2a8] sm:$0xff]
    %v3020 = vld [vmem:[%s2933 + $0x2b0] sm:$0xff]
    %v3021 = vld [vmem:[%s2933 + $0x2b8] sm:$0xff]
    %v3022 = vld [vmem:[%s2933 + $0x2c0] sm:$0xff]
    %v3023 = vld [vmem:[%s2933 + $0x2c8] sm:$0xff]
    %v3024 = vld [vmem:[%s2933 + $0x2d0] sm:$0xff]
    %v3025 = vld [vmem:[%s2933 + $0x2d8] sm:$0xff]
    %v3026 = vld [vmem:[%s2933 + $0x2e0] sm:$0xff]
    %v3027 = vld [vmem:[%s2933 + $0x2e8] sm:$0xff]
    %v3028 = vld [vmem:[%s2933 + $0x2f0] sm:$0xff]
    %v3029 = vld [vmem:[%s2933 + $0x2f8] sm:$0xff]
    %v3030 = vld [vmem:[%s2933 + $0x300] sm:$0xff]
    %v3031 = vld [vmem:[%s2933 + $0x308] sm:$0xff]
    %v3032 = vld [vmem:[%s2933 + $0x310] sm:$0xff]
    %v3033 = vld [vmem:[%s2933 + $0x318] sm:$0xff]
    %v3034 = vld [vmem:[%s2933 + $0x320] sm:$0xff]
    %v3035 = vld [vmem:[%s2933 + $0x328] sm:$0xff]
    %v3036 = vld [vmem:[%s2933 + $0x330] sm:$0xff]
    %v3037 = vld [vmem:[%s2933 + $0x338] sm:$0xff]
    %v3038 = vld [vmem:[%s2933 + $0x340] sm:$0xff]
    %v3039 = vld [vmem:[%s2933 + $0x348] sm:$0xff]
    %v3040 = vld [vmem:[%s2933 + $0x350] sm:$0xff]
    %v3041 = vld [vmem:[%s2933 + $0x358] sm:$0xff]
    %v3042 = vld [vmem:[%s2933 + $0x360] sm:$0xff]
    %v3043 = vld [vmem:[%s2933 + $0x368] sm:$0xff]
    %v3044 = vld [vmem:[%s2933 + $0x370] sm:$0xff]
    %v3045 = vld [vmem:[%s2933 + $0x378] sm:$0xff]
    %v3046 = vld [vmem:[%s2933 + $0x380] sm:$0xff]
    %v3047 = vld [vmem:[%s2933 + $0x388] sm:$0xff]
    %v3048 = vld [vmem:[%s2933 + $0x390] sm:$0xff]
    %v3049 = vld [vmem:[%s2933 + $0x398] sm:$0xff]
    %v3050 = vld [vmem:[%s2933 + $0x3a0] sm:$0xff]
    %v3051 = vld [vmem:[%s2933 + $0x3a8] sm:$0xff]
    %v3052 = vld [vmem:[%s2933 + $0x3b0] sm:$0xff]
    %v3053 = vld [vmem:[%s2933 + $0x3b8] sm:$0xff]
    %v3054 = vld [vmem:[%s2933 + $0x3c0] sm:$0xff]
    %v3055 = vld [vmem:[%s2933 + $0x3c8] sm:$0xff]
    %v3056 = vld [vmem:[%s2933 + $0x3d0] sm:$0xff]
    %v3057 = vld [vmem:[%s2933 + $0x3d8] sm:$0xff]
    %v3058 = vld [vmem:[%s2933 + $0x3e0] sm:$0xff]
    %v3059 = vld [vmem:[%s2933 + $0x3e8] sm:$0xff]
    %v3060 = vld [vmem:[%s2933 + $0x3f0] sm:$0xff]
    %v3061 = vld [vmem:[%s2933 + $0x3f8] sm:$0xff]
    %v3062 = vld [vmem:[%s2933 + $0x400] sm:$0xff]
    %v3063 = vld [vmem:[%s2933 + $0x408] sm:$0xff]
    %v3064 = vld [vmem:[%s2933 + $0x410] sm:$0xff]
    %v3065 = vld [vmem:[%s2933 + $0x418] sm:$0xff]
    %v3066 = vld [vmem:[%s2933 + $0x420] sm:$0xff]
    %v3067 = vld [vmem:[%s2933 + $0x428] sm:$0xff]
    %v3068 = vld [vmem:[%s2933 + $0x430] sm:$0xff]
    %v3069 = vld [vmem:[%s2933 + $0x438] sm:$0xff]
    %v3070 = vld [vmem:[%s2933 + $0x440] sm:$0xff]
    %v3071 = vld [vmem:[%s2933 + $0x448] sm:$0xff]
    %v3072 = vld [vmem:[%s2933 + $0x450] sm:$0xff]
    %v3073 = vld [vmem:[%s2933 + $0x458] sm:$0xff]
    %v3074 = vld [vmem:[%s2933 + $0x460] sm:$0xff]
    %v3075 = vld [vmem:[%s2933 + $0x468] sm:$0xff]
    %v3076 = vld [vmem:[%s2933 + $0x470] sm:$0xff]
    %v3077 = vld [vmem:[%s2933 + $0x478] sm:$0xff]
    %v3078 = vld [vmem:[%s2933 + $0x480] sm:$0xff]
    %v3079 = vld [vmem:[%s2933 + $0x488] sm:$0xff]
    %v3080 = vld [vmem:[%s2933 + $0x490] sm:$0xff]
    %v3081 = vld [vmem:[%s2933 + $0x498] sm:$0xff]
    %v3082 = vld [vmem:[%s2933 + $0x4a0] sm:$0xff]
    %v3083 = vld [vmem:[%s2933 + $0x4a8] sm:$0xff]
    %v3084 = vld [vmem:[%s2933 + $0x4b0] sm:$0xff]
    %v3085 = vld [vmem:[%s2933 + $0x4b8] sm:$0xff]
    %v3086 = vld [vmem:[%s2933 + $0x4c0] sm:$0xff]
    %v3087 = vld [vmem:[%s2933 + $0x4c8] sm:$0xff]
    %v3088 = vld [vmem:[%s2933 + $0x4d0] sm:$0xff]
    %v3089 = vld [vmem:[%s2933 + $0x4d8] sm:$0xff]
    %v3090 = vld [vmem:[%s2933 + $0x4e0] sm:$0xff]
    %v3091 = vld [vmem:[%s2933 + $0x4e8] sm:$0xff]
    %v3092 = vld [vmem:[%s2933 + $0x4f0] sm:$0xff]
    %v3093 = vld [vmem:[%s2933 + $0x4f8] sm:$0xff]
    %v3094 = vld [vmem:[%s2933 + $0x500] sm:$0xff]
    %v3095 = vld [vmem:[%s2933 + $0x508] sm:$0xff]
    %v3096 = vld [vmem:[%s2933 + $0x510] sm:$0xff]
    %v3097 = vld [vmem:[%s2933 + $0x518] sm:$0xff]
    %v3098 = vld [vmem:[%s2933 + $0x520] sm:$0xff]
    %v3099 = vld [vmem:[%s2933 + $0x528] sm:$0xff]
    %v3100 = vld [vmem:[%s2933 + $0x530] sm:$0xff]
    %v3101 = vld [vmem:[%s2933 + $0x538] sm:$0xff]
    %v3102 = vld [vmem:[%s2933 + $0x540] sm:$0xff]
    %v3103 = vld [vmem:[%s2933 + $0x548] sm:$0xff]
    %v3104 = vld [vmem:[%s2933 + $0x550] sm:$0xff]
    %v3105 = vld [vmem:[%s2933 + $0x558] sm:$0xff]
    %v3106 = vld [vmem:[%s2933 + $0x560] sm:$0xff]
    %v3107 = vld [vmem:[%s2933 + $0x568] sm:$0xff]
    %v3108 = vld [vmem:[%s2933 + $0x570] sm:$0xff]
    %v3109 = vld [vmem:[%s2933 + $0x578] sm:$0xff]
    %v3110 = vld [vmem:[%s2933 + $0x580] sm:$0xff]
    %v3111 = vld [vmem:[%s2933 + $0x588] sm:$0xff]
    %v3112 = vld [vmem:[%s2933 + $0x590] sm:$0xff]
    %v3113 = vld [vmem:[%s2933 + $0x598] sm:$0xff]
    %v3114 = vld [vmem:[%s2933 + $0x5a0] sm:$0xff]
    %v3115 = vld [vmem:[%s2933 + $0x5a8] sm:$0xff]
    %v3116 = vld [vmem:[%s2933 + $0x5b0] sm:$0xff]
    %v3117 = vld [vmem:[%s2933 + $0x5b8] sm:$0xff]
    %v3118 = vld [vmem:[%s2933 + $0x5c0] sm:$0xff]
    %v3119 = vld [vmem:[%s2933 + $0x5c8] sm:$0xff]
    %v3120 = vld [vmem:[%s2933 + $0x5d0] sm:$0xff]
    %v3121 = vld [vmem:[%s2933 + $0x5d8] sm:$0xff]
    %v3122 = vld [vmem:[%s2933 + $0x5e0] sm:$0xff]
    %v3123 = vld [vmem:[%s2933 + $0x5e8] sm:$0xff]
    %v3124 = vld [vmem:[%s2933 + $0x5f0] sm:$0xff]
    %v3125 = vld [vmem:[%s2933 + $0x5f8] sm:$0xff]
    %v3126 = vld [vmem:[%s2933 + $0x600] sm:$0xff]
    %v3127 = vld [vmem:[%s2933 + $0x608] sm:$0xff]
    %v3128 = vld [vmem:[%s2933 + $0x610] sm:$0xff]
    %v3129 = vld [vmem:[%s2933 + $0x618] sm:$0xff]
    %v3130 = vld [vmem:[%s2933 + $0x620] sm:$0xff]
    %v3131 = vld [vmem:[%s2933 + $0x628] sm:$0xff]
    %v3132 = vld [vmem:[%s2933 + $0x630] sm:$0xff]
    %v3133 = vld [vmem:[%s2933 + $0x638] sm:$0xff]
    %v3134 = vld [vmem:[%s2933 + $0x640] sm:$0xff]
    %v3135 = vld [vmem:[%s2933 + $0x648] sm:$0xff]
    %v3136 = vld [vmem:[%s2933 + $0x650] sm:$0xff]
    %v3137 = vld [vmem:[%s2933 + $0x658] sm:$0xff]
    %v3138 = vld [vmem:[%s2933 + $0x660] sm:$0xff]
    %v3139 = vld [vmem:[%s2933 + $0x668] sm:$0xff]
    %v3140 = vld [vmem:[%s2933 + $0x670] sm:$0xff]
    %v3141 = vld [vmem:[%s2933 + $0x678] sm:$0xff]
    %v3142 = vld [vmem:[%s2933 + $0x680] sm:$0xff]
    %v3143 = vld [vmem:[%s2933 + $0x688] sm:$0xff]
    %v3144 = vld [vmem:[%s2933 + $0x690] sm:$0xff]
    %v3145 = vld [vmem:[%s2933 + $0x698] sm:$0xff]
    %v3146 = vld [vmem:[%s2933 + $0x6a0] sm:$0xff]
    %v3147 = vld [vmem:[%s2933 + $0x6a8] sm:$0xff]
    %v3148 = vld [vmem:[%s2933 + $0x6b0] sm:$0xff]
    %v3149 = vld [vmem:[%s2933 + $0x6b8] sm:$0xff]
    %v3150 = vld [vmem:[%s2933 + $0x6c0] sm:$0xff]
    %v3151 = vld [vmem:[%s2933 + $0x6c8] sm:$0xff]
    %v3152 = vld [vmem:[%s2933 + $0x6d0] sm:$0xff]
    %v3153 = vld [vmem:[%s2933 + $0x6d8] sm:$0xff]
    %v3154 = vld [vmem:[%s2933 + $0x6e0] sm:$0xff]
    %v3155 = vld [vmem:[%s2933 + $0x6e8] sm:$0xff]
    %v3156 = vld [vmem:[%s2933 + $0x6f0] sm:$0xff]
    %v3157 = vld [vmem:[%s2933 + $0x6f8] sm:$0xff]
    %v3158 = vld [vmem:[%s2933 + $0x700] sm:$0xff]
    %v3159 = vld [vmem:[%s2933 + $0x708] sm:$0xff]
    %v3160 = vld [vmem:[%s2933 + $0x710] sm:$0xff]
    %v3161 = vld [vmem:[%s2933 + $0x718] sm:$0xff]
    %v3162 = vld [vmem:[%s2933 + $0x720] sm:$0xff]
    %v3163 = vld [vmem:[%s2933 + $0x728] sm:$0xff]
    %v3164 = vld [vmem:[%s2933 + $0x730] sm:$0xff]
    %v3165 = vld [vmem:[%s2933 + $0x738] sm:$0xff]
    %v3166 = vld [vmem:[%s2933 + $0x740] sm:$0xff]
    %v3167 = vld [vmem:[%s2933 + $0x748] sm:$0xff]
    %v3168 = vld [vmem:[%s2933 + $0x750] sm:$0xff]
    %v3169 = vld [vmem:[%s2933 + $0x758] sm:$0xff]
    %v3170 = vld [vmem:[%s2933 + $0x760] sm:$0xff]
    %v3171 = vld [vmem:[%s2933 + $0x768] sm:$0xff]
    %v3172 = vld [vmem:[%s2933 + $0x770] sm:$0xff]
    %v3173 = vld [vmem:[%s2933 + $0x778] sm:$0xff]
    %v3174 = vld [vmem:[%s2933 + $0x780] sm:$0xff]
    %v3175 = vld [vmem:[%s2933 + $0x788] sm:$0xff]
    %v3176 = vld [vmem:[%s2933 + $0x790] sm:$0xff]
    %v3177 = vld [vmem:[%s2933 + $0x798] sm:$0xff]
    %v3178 = vld [vmem:[%s2933 + $0x7a0] sm:$0xff]
    %v3179 = vld [vmem:[%s2933 + $0x7a8] sm:$0xff]
    %v3180 = vld [vmem:[%s2933 + $0x7b0] sm:$0xff]
    %v3181 = vld [vmem:[%s2933 + $0x7b8] sm:$0xff]
    %v3182 = vld [vmem:[%s2933 + $0x7c0] sm:$0xff]
    %v3183 = vld [vmem:[%s2933 + $0x7c8] sm:$0xff]
    %v3184 = vld [vmem:[%s2933 + $0x7d0] sm:$0xff]
    %v3185 = vld [vmem:[%s2933 + $0x7d8] sm:$0xff]
    %v3186 = vld [vmem:[%s2933 + $0x7e0] sm:$0xff]
    %v3187 = vld [vmem:[%s2933 + $0x7e8] sm:$0xff]
    %v3188 = vld [vmem:[%s2933 + $0x7f0] sm:$0xff]
    %v3189 = vld [vmem:[%s2933 + $0x7f8] sm:$0xff]
    %vm3202 = vcmask 1043456
    %v3203 = vrot.slane %v2665, 4
    %v3204 = vrot.slane %v2669, 4
    %v3205 = vsel %vm3202, %v3203, %v3204
    %v3206 = vrot.slane %v2666, 4
    %v3207 = vrot.slane %v2670, 4
    %v3208 = vsel %vm3202, %v3206, %v3207
    %v3209 = vrot.slane %v2667, 4
    %v3210 = vrot.slane %v2671, 4
    %v3211 = vsel %vm3202, %v3209, %v3210
    %v3212 = vrot.slane %v2668, 4
    %v3213 = vrot.slane %v2672, 4
    %v3214 = vsel %vm3202, %v3212, %v3213
    %v3215 = vrot.slane %v2673, 4
    %v3216 = vsel %vm3202, %v3204, %v3215
    %v3217 = vrot.slane %v2674, 4
    %v3218 = vsel %vm3202, %v3207, %v3217
    %v3219 = vrot.slane %v2675, 4
    %v3220 = vsel %vm3202, %v3210, %v3219
    %v3221 = vrot.slane %v2676, 4
    %v3222 = vsel %vm3202, %v3213, %v3221
    %v3487 = vunpack.c.l.b16 %v2934
    %v3488 = vunpack.c.h.b16 %v2934
    %v3489 = vunpack.c.l.b16 %v2935
    %v3490 = vunpack.c.h.b16 %v2935
    %v3491 = vunpack.c.l.b16 %v2936
    %v3492 = vunpack.c.h.b16 %v2936
    %v3493 = vunpack.c.l.b16 %v2937
    %v3494 = vunpack.c.h.b16 %v2937
    %v3495 = vunpack.c.l.b16 %v2938
    %v3496 = vunpack.c.h.b16 %v2938
    %v3497 = vunpack.c.l.b16 %v2939
    %v3498 = vunpack.c.h.b16 %v2939
    %v3499 = vunpack.c.l.b16 %v2940
    %v3500 = vunpack.c.h.b16 %v2940
    %v3501 = vunpack.c.l.b16 %v2941
    %v3502 = vunpack.c.h.b16 %v2941
    %v3503 = vunpack.c.l.b16 %v2942
    %v3504 = vunpack.c.h.b16 %v2942
    %v3505 = vunpack.c.l.b16 %v2943
    %v3506 = vunpack.c.h.b16 %v2943
    %v3507 = vunpack.c.l.b16 %v2944
    %v3508 = vunpack.c.h.b16 %v2944
    %v3509 = vunpack.c.l.b16 %v2945
    %v3510 = vunpack.c.h.b16 %v2945
    %v3511 = vunpack.c.l.b16 %v2946
    %v3512 = vunpack.c.h.b16 %v2946
    %v3513 = vunpack.c.l.b16 %v2947
    %v3514 = vunpack.c.h.b16 %v2947
    %v3515 = vunpack.c.l.b16 %v2948
    %v3516 = vunpack.c.h.b16 %v2948
    %v3517 = vunpack.c.l.b16 %v2949
    %v3518 = vunpack.c.h.b16 %v2949
    %v3519 = vunpack.c.l.b16 %v2950
    %v3520 = vunpack.c.h.b16 %v2950
    %v3521 = vunpack.c.l.b16 %v2951
    %v3522 = vunpack.c.h.b16 %v2951
    %v3523 = vunpack.c.l.b16 %v2952
    %v3524 = vunpack.c.h.b16 %v2952
    %v3525 = vunpack.c.l.b16 %v2953
    %v3526 = vunpack.c.h.b16 %v2953
    %v3527 = vunpack.c.l.b16 %v2954
    %v3528 = vunpack.c.h.b16 %v2954
    %v3529 = vunpack.c.l.b16 %v2955
    %v3530 = vunpack.c.h.b16 %v2955
    %v3531 = vunpack.c.l.b16 %v2956
    %v3532 = vunpack.c.h.b16 %v2956
    %v3533 = vunpack.c.l.b16 %v2957
    %v3534 = vunpack.c.h.b16 %v2957
    %v3535 = vunpack.c.l.b16 %v2958
    %v3536 = vunpack.c.h.b16 %v2958
    %v3537 = vunpack.c.l.b16 %v2959
    %v3538 = vunpack.c.h.b16 %v2959
    %v3539 = vunpack.c.l.b16 %v2960
    %v3540 = vunpack.c.h.b16 %v2960
    %v3541 = vunpack.c.l.b16 %v2961
    %v3542 = vunpack.c.h.b16 %v2961
    %v3543 = vunpack.c.l.b16 %v2962
    %v3544 = vunpack.c.h.b16 %v2962
    %v3545 = vunpack.c.l.b16 %v2963
    %v3546 = vunpack.c.h.b16 %v2963
    %v3547 = vunpack.c.l.b16 %v2964
    %v3548 = vunpack.c.h.b16 %v2964
    %v3549 = vunpack.c.l.b16 %v2965
    %v3550 = vunpack.c.h.b16 %v2965
    %v3551 = vunpack.c.l.b16 %v2966
    %v3552 = vunpack.c.h.b16 %v2966
    %v3553 = vunpack.c.l.b16 %v2967
    %v3554 = vunpack.c.h.b16 %v2967
    %v3555 = vunpack.c.l.b16 %v2968
    %v3556 = vunpack.c.h.b16 %v2968
    %v3557 = vunpack.c.l.b16 %v2969
    %v3558 = vunpack.c.h.b16 %v2969
    %v3559 = vunpack.c.l.b16 %v2970
    %v3560 = vunpack.c.h.b16 %v2970
    %v3561 = vunpack.c.l.b16 %v2971
    %v3562 = vunpack.c.h.b16 %v2971
    %v3563 = vunpack.c.l.b16 %v2972
    %v3564 = vunpack.c.h.b16 %v2972
    %v3565 = vunpack.c.l.b16 %v2973
    %v3566 = vunpack.c.h.b16 %v2973
    %v3567 = vunpack.c.l.b16 %v2974
    %v3568 = vunpack.c.h.b16 %v2974
    %v3569 = vunpack.c.l.b16 %v2975
    %v3570 = vunpack.c.h.b16 %v2975
    %v3571 = vunpack.c.l.b16 %v2976
    %v3572 = vunpack.c.h.b16 %v2976
    %v3573 = vunpack.c.l.b16 %v2977
    %v3574 = vunpack.c.h.b16 %v2977
    %v3575 = vunpack.c.l.b16 %v2978
    %v3576 = vunpack.c.h.b16 %v2978
    %v3577 = vunpack.c.l.b16 %v2979
    %v3578 = vunpack.c.h.b16 %v2979
    %v3579 = vunpack.c.l.b16 %v2980
    %v3580 = vunpack.c.h.b16 %v2980
    %v3581 = vunpack.c.l.b16 %v2981
    %v3582 = vunpack.c.h.b16 %v2981
    %v3583 = vunpack.c.l.b16 %v2982
    %v3584 = vunpack.c.h.b16 %v2982
    %v3585 = vunpack.c.l.b16 %v2983
    %v3586 = vunpack.c.h.b16 %v2983
    %v3587 = vunpack.c.l.b16 %v2984
    %v3588 = vunpack.c.h.b16 %v2984
    %v3589 = vunpack.c.l.b16 %v2985
    %v3590 = vunpack.c.h.b16 %v2985
    %v3591 = vunpack.c.l.b16 %v2986
    %v3592 = vunpack.c.h.b16 %v2986
    %v3593 = vunpack.c.l.b16 %v2987
    %v3594 = vunpack.c.h.b16 %v2987
    %v3595 = vunpack.c.l.b16 %v2988
    %v3596 = vunpack.c.h.b16 %v2988
    %v3597 = vunpack.c.l.b16 %v2989
    %v3598 = vunpack.c.h.b16 %v2989
    %v3599 = vunpack.c.l.b16 %v2990
    %v3600 = vunpack.c.h.b16 %v2990
    %v3601 = vunpack.c.l.b16 %v2991
    %v3602 = vunpack.c.h.b16 %v2991
    %v3603 = vunpack.c.l.b16 %v2992
    %v3604 = vunpack.c.h.b16 %v2992
    %v3605 = vunpack.c.l.b16 %v2993
    %v3606 = vunpack.c.h.b16 %v2993
    %v3607 = vunpack.c.l.b16 %v2994
    %v3608 = vunpack.c.h.b16 %v2994
    %v3609 = vunpack.c.l.b16 %v2995
    %v3610 = vunpack.c.h.b16 %v2995
    %v3611 = vunpack.c.l.b16 %v2996
    %v3612 = vunpack.c.h.b16 %v2996
    %v3613 = vunpack.c.l.b16 %v2997
    %v3614 = vunpack.c.h.b16 %v2997
    %v3615 = vunpack.c.l.b16 %v2998
    %v3616 = vunpack.c.h.b16 %v2998
    %v3617 = vunpack.c.l.b16 %v2999
    %v3618 = vunpack.c.h.b16 %v2999
    %v3619 = vunpack.c.l.b16 %v3000
    %v3620 = vunpack.c.h.b16 %v3000
    %v3621 = vunpack.c.l.b16 %v3001
    %v3622 = vunpack.c.h.b16 %v3001
    %v3623 = vunpack.c.l.b16 %v3002
    %v3624 = vunpack.c.h.b16 %v3002
    %v3625 = vunpack.c.l.b16 %v3003
    %v3626 = vunpack.c.h.b16 %v3003
    %v3627 = vunpack.c.l.b16 %v3004
    %v3628 = vunpack.c.h.b16 %v3004
    %v3629 = vunpack.c.l.b16 %v3005
    %v3630 = vunpack.c.h.b16 %v3005
    %v3631 = vunpack.c.l.b16 %v3006
    %v3632 = vunpack.c.h.b16 %v3006
    %v3633 = vunpack.c.l.b16 %v3007
    %v3634 = vunpack.c.h.b16 %v3007
    %v3635 = vunpack.c.l.b16 %v3008
    %v3636 = vunpack.c.h.b16 %v3008
    %v3637 = vunpack.c.l.b16 %v3009
    %v3638 = vunpack.c.h.b16 %v3009
    %v3639 = vunpack.c.l.b16 %v3010
    %v3640 = vunpack.c.h.b16 %v3010
    %v3641 = vunpack.c.l.b16 %v3011
    %v3642 = vunpack.c.h.b16 %v3011
    %v3643 = vunpack.c.l.b16 %v3012
    %v3644 = vunpack.c.h.b16 %v3012
    %v3645 = vunpack.c.l.b16 %v3013
    %v3646 = vunpack.c.h.b16 %v3013
    %v3647 = vunpack.c.l.b16 %v3014
    %v3648 = vunpack.c.h.b16 %v3014
    %v3649 = vunpack.c.l.b16 %v3015
    %v3650 = vunpack.c.h.b16 %v3015
    %v3651 = vunpack.c.l.b16 %v3016
    %v3652 = vunpack.c.h.b16 %v3016
    %v3653 = vunpack.c.l.b16 %v3017
    %v3654 = vunpack.c.h.b16 %v3017
    %v3655 = vunpack.c.l.b16 %v3018
    %v3656 = vunpack.c.h.b16 %v3018
    %v3657 = vunpack.c.l.b16 %v3019
    %v3658 = vunpack.c.h.b16 %v3019
    %v3659 = vunpack.c.l.b16 %v3020
    %v3660 = vunpack.c.h.b16 %v3020
    %v3661 = vunpack.c.l.b16 %v3021
    %v3662 = vunpack.c.h.b16 %v3021
    %v3663 = vunpack.c.l.b16 %v3022
    %v3664 = vunpack.c.h.b16 %v3022
    %v3665 = vunpack.c.l.b16 %v3023
    %v3666 = vunpack.c.h.b16 %v3023
    %v3667 = vunpack.c.l.b16 %v3024
    %v3668 = vunpack.c.h.b16 %v3024
    %v3669 = vunpack.c.l.b16 %v3025
    %v3670 = vunpack.c.h.b16 %v3025
    %v3671 = vunpack.c.l.b16 %v3026
    %v3672 = vunpack.c.h.b16 %v3026
    %v3673 = vunpack.c.l.b16 %v3027
    %v3674 = vunpack.c.h.b16 %v3027
    %v3675 = vunpack.c.l.b16 %v3028
    %v3676 = vunpack.c.h.b16 %v3028
    %v3677 = vunpack.c.l.b16 %v3029
    %v3678 = vunpack.c.h.b16 %v3029
    %v3679 = vunpack.c.l.b16 %v3030
    %v3680 = vunpack.c.h.b16 %v3030
    %v3681 = vunpack.c.l.b16 %v3031
    %v3682 = vunpack.c.h.b16 %v3031
    %v3683 = vunpack.c.l.b16 %v3032
    %v3684 = vunpack.c.h.b16 %v3032
    %v3685 = vunpack.c.l.b16 %v3033
    %v3686 = vunpack.c.h.b16 %v3033
    %v3687 = vunpack.c.l.b16 %v3034
    %v3688 = vunpack.c.h.b16 %v3034
    %v3689 = vunpack.c.l.b16 %v3035
    %v3690 = vunpack.c.h.b16 %v3035
    %v3691 = vunpack.c.l.b16 %v3036
    %v3692 = vunpack.c.h.b16 %v3036
    %v3693 = vunpack.c.l.b16 %v3037
    %v3694 = vunpack.c.h.b16 %v3037
    %v3695 = vunpack.c.l.b16 %v3038
    %v3696 = vunpack.c.h.b16 %v3038
    %v3697 = vunpack.c.l.b16 %v3039
    %v3698 = vunpack.c.h.b16 %v3039
    %v3699 = vunpack.c.l.b16 %v3040
    %v3700 = vunpack.c.h.b16 %v3040
    %v3701 = vunpack.c.l.b16 %v3041
    %v3702 = vunpack.c.h.b16 %v3041
    %v3703 = vunpack.c.l.b16 %v3042
    %v3704 = vunpack.c.h.b16 %v3042
    %v3705 = vunpack.c.l.b16 %v3043
    %v3706 = vunpack.c.h.b16 %v3043
    %v3707 = vunpack.c.l.b16 %v3044
    %v3708 = vunpack.c.h.b16 %v3044
    %v3709 = vunpack.c.l.b16 %v3045
    %v3710 = vunpack.c.h.b16 %v3045
    %v3711 = vunpack.c.l.b16 %v3046
    %v3712 = vunpack.c.h.b16 %v3046
    %v3713 = vunpack.c.l.b16 %v3047
    %v3714 = vunpack.c.h.b16 %v3047
    %v3715 = vunpack.c.l.b16 %v3048
    %v3716 = vunpack.c.h.b16 %v3048
    %v3717 = vunpack.c.l.b16 %v3049
    %v3718 = vunpack.c.h.b16 %v3049
    %v3719 = vunpack.c.l.b16 %v3050
    %v3720 = vunpack.c.h.b16 %v3050
    %v3721 = vunpack.c.l.b16 %v3051
    %v3722 = vunpack.c.h.b16 %v3051
    %v3723 = vunpack.c.l.b16 %v3052
    %v3724 = vunpack.c.h.b16 %v3052
    %v3725 = vunpack.c.l.b16 %v3053
    %v3726 = vunpack.c.h.b16 %v3053
    %v3727 = vunpack.c.l.b16 %v3054
    %v3728 = vunpack.c.h.b16 %v3054
    %v3729 = vunpack.c.l.b16 %v3055
    %v3730 = vunpack.c.h.b16 %v3055
    %v3731 = vunpack.c.l.b16 %v3056
    %v3732 = vunpack.c.h.b16 %v3056
    %v3733 = vunpack.c.l.b16 %v3057
    %v3734 = vunpack.c.h.b16 %v3057
    %v3735 = vunpack.c.l.b16 %v3058
    %v3736 = vunpack.c.h.b16 %v3058
    %v3737 = vunpack.c.l.b16 %v3059
    %v3738 = vunpack.c.h.b16 %v3059
    %v3739 = vunpack.c.l.b16 %v3060
    %v3740 = vunpack.c.h.b16 %v3060
    %v3741 = vunpack.c.l.b16 %v3061
    %v3742 = vunpack.c.h.b16 %v3061
    %v3743 = vunpack.c.l.b16 %v3062
    %v3744 = vunpack.c.h.b16 %v3062
    %v3745 = vunpack.c.l.b16 %v3063
    %v3746 = vunpack.c.h.b16 %v3063
    %v3747 = vunpack.c.l.b16 %v3064
    %v3748 = vunpack.c.h.b16 %v3064
    %v3749 = vunpack.c.l.b16 %v3065
    %v3750 = vunpack.c.h.b16 %v3065
    %v3751 = vunpack.c.l.b16 %v3066
    %v3752 = vunpack.c.h.b16 %v3066
    %v3753 = vunpack.c.l.b16 %v3067
    %v3754 = vunpack.c.h.b16 %v3067
    %v3755 = vunpack.c.l.b16 %v3068
    %v3756 = vunpack.c.h.b16 %v3068
    %v3757 = vunpack.c.l.b16 %v3069
    %v3758 = vunpack.c.h.b16 %v3069
    %v3759 = vunpack.c.l.b16 %v3070
    %v3760 = vunpack.c.h.b16 %v3070
    %v3761 = vunpack.c.l.b16 %v3071
    %v3762 = vunpack.c.h.b16 %v3071
    %v3763 = vunpack.c.l.b16 %v3072
    %v3764 = vunpack.c.h.b16 %v3072
    %v3765 = vunpack.c.l.b16 %v3073
    %v3766 = vunpack.c.h.b16 %v3073
    %v3767 = vunpack.c.l.b16 %v3074
    %v3768 = vunpack.c.h.b16 %v3074
    %v3769 = vunpack.c.l.b16 %v3075
    %v3770 = vunpack.c.h.b16 %v3075
    %v3771 = vunpack.c.l.b16 %v3076
    %v3772 = vunpack.c.h.b16 %v3076
    %v3773 = vunpack.c.l.b16 %v3077
    %v3774 = vunpack.c.h.b16 %v3077
    %v3775 = vunpack.c.l.b16 %v3078
    %v3776 = vunpack.c.h.b16 %v3078
    %v3777 = vunpack.c.l.b16 %v3079
    %v3778 = vunpack.c.h.b16 %v3079
    %v3779 = vunpack.c.l.b16 %v3080
    %v3780 = vunpack.c.h.b16 %v3080
    %v3781 = vunpack.c.l.b16 %v3081
    %v3782 = vunpack.c.h.b16 %v3081
    %v3783 = vunpack.c.l.b16 %v3082
    %v3784 = vunpack.c.h.b16 %v3082
    %v3785 = vunpack.c.l.b16 %v3083
    %v3786 = vunpack.c.h.b16 %v3083
    %v3787 = vunpack.c.l.b16 %v3084
    %v3788 = vunpack.c.h.b16 %v3084
    %v3789 = vunpack.c.l.b16 %v3085
    %v3790 = vunpack.c.h.b16 %v3085
    %v3791 = vunpack.c.l.b16 %v3086
    %v3792 = vunpack.c.h.b16 %v3086
    %v3793 = vunpack.c.l.b16 %v3087
    %v3794 = vunpack.c.h.b16 %v3087
    %v3795 = vunpack.c.l.b16 %v3088
    %v3796 = vunpack.c.h.b16 %v3088
    %v3797 = vunpack.c.l.b16 %v3089
    %v3798 = vunpack.c.h.b16 %v3089
    %v3799 = vunpack.c.l.b16 %v3090
    %v3800 = vunpack.c.h.b16 %v3090
    %v3801 = vunpack.c.l.b16 %v3091
    %v3802 = vunpack.c.h.b16 %v3091
    %v3803 = vunpack.c.l.b16 %v3092
    %v3804 = vunpack.c.h.b16 %v3092
    %v3805 = vunpack.c.l.b16 %v3093
    %v3806 = vunpack.c.h.b16 %v3093
    %v3807 = vunpack.c.l.b16 %v3094
    %v3808 = vunpack.c.h.b16 %v3094
    %v3809 = vunpack.c.l.b16 %v3095
    %v3810 = vunpack.c.h.b16 %v3095
    %v3811 = vunpack.c.l.b16 %v3096
    %v3812 = vunpack.c.h.b16 %v3096
    %v3813 = vunpack.c.l.b16 %v3097
    %v3814 = vunpack.c.h.b16 %v3097
    %v3815 = vunpack.c.l.b16 %v3098
    %v3816 = vunpack.c.h.b16 %v3098
    %v3817 = vunpack.c.l.b16 %v3099
    %v3818 = vunpack.c.h.b16 %v3099
    %v3819 = vunpack.c.l.b16 %v3100
    %v3820 = vunpack.c.h.b16 %v3100
    %v3821 = vunpack.c.l.b16 %v3101
    %v3822 = vunpack.c.h.b16 %v3101
    %v3823 = vunpack.c.l.b16 %v3102
    %v3824 = vunpack.c.h.b16 %v3102
    %v3825 = vunpack.c.l.b16 %v3103
    %v3826 = vunpack.c.h.b16 %v3103
    %v3827 = vunpack.c.l.b16 %v3104
    %v3828 = vunpack.c.h.b16 %v3104
    %v3829 = vunpack.c.l.b16 %v3105
    %v3830 = vunpack.c.h.b16 %v3105
    %v3831 = vunpack.c.l.b16 %v3106
    %v3832 = vunpack.c.h.b16 %v3106
    %v3833 = vunpack.c.l.b16 %v3107
    %v3834 = vunpack.c.h.b16 %v3107
    %v3835 = vunpack.c.l.b16 %v3108
    %v3836 = vunpack.c.h.b16 %v3108
    %v3837 = vunpack.c.l.b16 %v3109
    %v3838 = vunpack.c.h.b16 %v3109
    %v3839 = vunpack.c.l.b16 %v3110
    %v3840 = vunpack.c.h.b16 %v3110
    %v3841 = vunpack.c.l.b16 %v3111
    %v3842 = vunpack.c.h.b16 %v3111
    %v3843 = vunpack.c.l.b16 %v3112
    %v3844 = vunpack.c.h.b16 %v3112
    %v3845 = vunpack.c.l.b16 %v3113
    %v3846 = vunpack.c.h.b16 %v3113
    %v3847 = vunpack.c.l.b16 %v3114
    %v3848 = vunpack.c.h.b16 %v3114
    %v3849 = vunpack.c.l.b16 %v3115
    %v3850 = vunpack.c.h.b16 %v3115
    %v3851 = vunpack.c.l.b16 %v3116
    %v3852 = vunpack.c.h.b16 %v3116
    %v3853 = vunpack.c.l.b16 %v3117
    %v3854 = vunpack.c.h.b16 %v3117
    %v3855 = vunpack.c.l.b16 %v3118
    %v3856 = vunpack.c.h.b16 %v3118
    %v3857 = vunpack.c.l.b16 %v3119
    %v3858 = vunpack.c.h.b16 %v3119
    %v3859 = vunpack.c.l.b16 %v3120
    %v3860 = vunpack.c.h.b16 %v3120
    %v3861 = vunpack.c.l.b16 %v3121
    %v3862 = vunpack.c.h.b16 %v3121
    %v3863 = vunpack.c.l.b16 %v3122
    %v3864 = vunpack.c.h.b16 %v3122
    %v3865 = vunpack.c.l.b16 %v3123
    %v3866 = vunpack.c.h.b16 %v3123
    %v3867 = vunpack.c.l.b16 %v3124
    %v3868 = vunpack.c.h.b16 %v3124
    %v3869 = vunpack.c.l.b16 %v3125
    %v3870 = vunpack.c.h.b16 %v3125
    %v3871 = vunpack.c.l.b16 %v3126
    %v3872 = vunpack.c.h.b16 %v3126
    %v3873 = vunpack.c.l.b16 %v3127
    %v3874 = vunpack.c.h.b16 %v3127
    %v3875 = vunpack.c.l.b16 %v3128
    %v3876 = vunpack.c.h.b16 %v3128
    %v3877 = vunpack.c.l.b16 %v3129
    %v3878 = vunpack.c.h.b16 %v3129
    %v3879 = vunpack.c.l.b16 %v3130
    %v3880 = vunpack.c.h.b16 %v3130
    %v3881 = vunpack.c.l.b16 %v3131
    %v3882 = vunpack.c.h.b16 %v3131
    %v3883 = vunpack.c.l.b16 %v3132
    %v3884 = vunpack.c.h.b16 %v3132
    %v3885 = vunpack.c.l.b16 %v3133
    %v3886 = vunpack.c.h.b16 %v3133
    %v3887 = vunpack.c.l.b16 %v3134
    %v3888 = vunpack.c.h.b16 %v3134
    %v3889 = vunpack.c.l.b16 %v3135
    %v3890 = vunpack.c.h.b16 %v3135
    %v3891 = vunpack.c.l.b16 %v3136
    %v3892 = vunpack.c.h.b16 %v3136
    %v3893 = vunpack.c.l.b16 %v3137
    %v3894 = vunpack.c.h.b16 %v3137
    %v3895 = vunpack.c.l.b16 %v3138
    %v3896 = vunpack.c.h.b16 %v3138
    %v3897 = vunpack.c.l.b16 %v3139
    %v3898 = vunpack.c.h.b16 %v3139
    %v3899 = vunpack.c.l.b16 %v3140
    %v3900 = vunpack.c.h.b16 %v3140
    %v3901 = vunpack.c.l.b16 %v3141
    %v3902 = vunpack.c.h.b16 %v3141
    %v3903 = vunpack.c.l.b16 %v3142
    %v3904 = vunpack.c.h.b16 %v3142
    %v3905 = vunpack.c.l.b16 %v3143
    %v3906 = vunpack.c.h.b16 %v3143
    %v3907 = vunpack.c.l.b16 %v3144
    %v3908 = vunpack.c.h.b16 %v3144
    %v3909 = vunpack.c.l.b16 %v3145
    %v3910 = vunpack.c.h.b16 %v3145
    %v3911 = vunpack.c.l.b16 %v3146
    %v3912 = vunpack.c.h.b16 %v3146
    %v3913 = vunpack.c.l.b16 %v3147
    %v3914 = vunpack.c.h.b16 %v3147
    %v3915 = vunpack.c.l.b16 %v3148
    %v3916 = vunpack.c.h.b16 %v3148
    %v3917 = vunpack.c.l.b16 %v3149
    %v3918 = vunpack.c.h.b16 %v3149
    %v3919 = vunpack.c.l.b16 %v3150
    %v3920 = vunpack.c.h.b16 %v3150
    %v3921 = vunpack.c.l.b16 %v3151
    %v3922 = vunpack.c.h.b16 %v3151
    %v3923 = vunpack.c.l.b16 %v3152
    %v3924 = vunpack.c.h.b16 %v3152
    %v3925 = vunpack.c.l.b16 %v3153
    %v3926 = vunpack.c.h.b16 %v3153
    %v3927 = vunpack.c.l.b16 %v3154
    %v3928 = vunpack.c.h.b16 %v3154
    %v3929 = vunpack.c.l.b16 %v3155
    %v3930 = vunpack.c.h.b16 %v3155
    %v3931 = vunpack.c.l.b16 %v3156
    %v3932 = vunpack.c.h.b16 %v3156
    %v3933 = vunpack.c.l.b16 %v3157
    %v3934 = vunpack.c.h.b16 %v3157
    %v3935 = vunpack.c.l.b16 %v3158
    %v3936 = vunpack.c.h.b16 %v3158
    %v3937 = vunpack.c.l.b16 %v3159
    %v3938 = vunpack.c.h.b16 %v3159
    %v3939 = vunpack.c.l.b16 %v3160
    %v3940 = vunpack.c.h.b16 %v3160
    %v3941 = vunpack.c.l.b16 %v3161
    %v3942 = vunpack.c.h.b16 %v3161
    %v3943 = vunpack.c.l.b16 %v3162
    %v3944 = vunpack.c.h.b16 %v3162
    %v3945 = vunpack.c.l.b16 %v3163
    %v3946 = vunpack.c.h.b16 %v3163
    %v3947 = vunpack.c.l.b16 %v3164
    %v3948 = vunpack.c.h.b16 %v3164
    %v3949 = vunpack.c.l.b16 %v3165
    %v3950 = vunpack.c.h.b16 %v3165
    %v3951 = vunpack.c.l.b16 %v3166
    %v3952 = vunpack.c.h.b16 %v3166
    %v3953 = vunpack.c.l.b16 %v3167
    %v3954 = vunpack.c.h.b16 %v3167
    %v3955 = vunpack.c.l.b16 %v3168
    %v3956 = vunpack.c.h.b16 %v3168
    %v3957 = vunpack.c.l.b16 %v3169
    %v3958 = vunpack.c.h.b16 %v3169
    %v3959 = vunpack.c.l.b16 %v3170
    %v3960 = vunpack.c.h.b16 %v3170
    %v3961 = vunpack.c.l.b16 %v3171
    %v3962 = vunpack.c.h.b16 %v3171
    %v3963 = vunpack.c.l.b16 %v3172
    %v3964 = vunpack.c.h.b16 %v3172
    %v3965 = vunpack.c.l.b16 %v3173
    %v3966 = vunpack.c.h.b16 %v3173
    %v3967 = vunpack.c.l.b16 %v3174
    %v3968 = vunpack.c.h.b16 %v3174
    %v3969 = vunpack.c.l.b16 %v3175
    %v3970 = vunpack.c.h.b16 %v3175
    %v3971 = vunpack.c.l.b16 %v3176
    %v3972 = vunpack.c.h.b16 %v3176
    %v3973 = vunpack.c.l.b16 %v3177
    %v3974 = vunpack.c.h.b16 %v3177
    %v3975 = vunpack.c.l.b16 %v3178
    %v3976 = vunpack.c.h.b16 %v3178
    %v3977 = vunpack.c.l.b16 %v3179
    %v3978 = vunpack.c.h.b16 %v3179
    %v3979 = vunpack.c.l.b16 %v3180
    %v3980 = vunpack.c.h.b16 %v3180
    %v3981 = vunpack.c.l.b16 %v3181
    %v3982 = vunpack.c.h.b16 %v3181
    %v3983 = vunpack.c.l.b16 %v3182
    %v3984 = vunpack.c.h.b16 %v3182
    %v3985 = vunpack.c.l.b16 %v3183
    %v3986 = vunpack.c.h.b16 %v3183
    %v3987 = vunpack.c.l.b16 %v3184
    %v3988 = vunpack.c.h.b16 %v3184
    %v3989 = vunpack.c.l.b16 %v3185
    %v3990 = vunpack.c.h.b16 %v3185
    %v3991 = vunpack.c.l.b16 %v3186
    %v3992 = vunpack.c.h.b16 %v3186
    %v3993 = vunpack.c.l.b16 %v3187
    %v3994 = vunpack.c.h.b16 %v3187
    %v3995 = vunpack.c.l.b16 %v3188
    %v3996 = vunpack.c.h.b16 %v3188
    %v3997 = vunpack.c.l.b16 %v3189
    %v3998 = vunpack.c.h.b16 %v3189
    %v3999 = vpack.c.b16 %v3495, %v3487
    %v4000 = vpack.c.b16 %v3496, %v3488
    %v4001 = vpack.c.b16 %v3497, %v3489
    %v4002 = vpack.c.b16 %v3498, %v3490
    %v4003 = vpack.c.b16 %v3499, %v3491
    %v4004 = vpack.c.b16 %v3500, %v3492
    %v4005 = vpack.c.b16 %v3501, %v3493
    %v4006 = vpack.c.b16 %v3502, %v3494
    %v4007 = vpack.c.b16 %v3511, %v3503
    %v4008 = vpack.c.b16 %v3512, %v3504
    %v4009 = vpack.c.b16 %v3513, %v3505
    %v4010 = vpack.c.b16 %v3514, %v3506
    %v4011 = vpack.c.b16 %v3515, %v3507
    %v4012 = vpack.c.b16 %v3516, %v3508
    %v4013 = vpack.c.b16 %v3517, %v3509
    %v4014 = vpack.c.b16 %v3518, %v3510
    %v4015 = vpack.c.b16 %v3527, %v3519
    %v4016 = vpack.c.b16 %v3528, %v3520
    %v4017 = vpack.c.b16 %v3529, %v3521
    %v4018 = vpack.c.b16 %v3530, %v3522
    %v4019 = vpack.c.b16 %v3531, %v3523
    %v4020 = vpack.c.b16 %v3532, %v3524
    %v4021 = vpack.c.b16 %v3533, %v3525
    %v4022 = vpack.c.b16 %v3534, %v3526
    %v4023 = vpack.c.b16 %v3543, %v3535
    %v4024 = vpack.c.b16 %v3544, %v3536
    %v4025 = vpack.c.b16 %v3545, %v3537
    %v4026 = vpack.c.b16 %v3546, %v3538
    %v4027 = vpack.c.b16 %v3547, %v3539
    %v4028 = vpack.c.b16 %v3548, %v3540
    %v4029 = vpack.c.b16 %v3549, %v3541
    %v4030 = vpack.c.b16 %v3550, %v3542
    %v4031 = vpack.c.b16 %v3559, %v3551
    %v4032 = vpack.c.b16 %v3560, %v3552
    %v4033 = vpack.c.b16 %v3561, %v3553
    %v4034 = vpack.c.b16 %v3562, %v3554
    %v4035 = vpack.c.b16 %v3563, %v3555
    %v4036 = vpack.c.b16 %v3564, %v3556
    %v4037 = vpack.c.b16 %v3565, %v3557
    %v4038 = vpack.c.b16 %v3566, %v3558
    %v4039 = vpack.c.b16 %v3575, %v3567
    %v4040 = vpack.c.b16 %v3576, %v3568
    %v4041 = vpack.c.b16 %v3577, %v3569
    %v4042 = vpack.c.b16 %v3578, %v3570
    %v4043 = vpack.c.b16 %v3579, %v3571
    %v4044 = vpack.c.b16 %v3580, %v3572
    %v4045 = vpack.c.b16 %v3581, %v3573
    %v4046 = vpack.c.b16 %v3582, %v3574
    %v4047 = vpack.c.b16 %v3591, %v3583
    %v4048 = vpack.c.b16 %v3592, %v3584
    %v4049 = vpack.c.b16 %v3593, %v3585
    %v4050 = vpack.c.b16 %v3594, %v3586
    %v4051 = vpack.c.b16 %v3595, %v3587
    %v4052 = vpack.c.b16 %v3596, %v3588
    %v4053 = vpack.c.b16 %v3597, %v3589
    %v4054 = vpack.c.b16 %v3598, %v3590
    %v4055 = vpack.c.b16 %v3607, %v3599
    %v4056 = vpack.c.b16 %v3608, %v3600
    %v4057 = vpack.c.b16 %v3609, %v3601
    %v4058 = vpack.c.b16 %v3610, %v3602
    %v4059 = vpack.c.b16 %v3611, %v3603
    %v4060 = vpack.c.b16 %v3612, %v3604
    %v4061 = vpack.c.b16 %v3613, %v3605
    %v4062 = vpack.c.b16 %v3614, %v3606
    %v4063 = vpack.c.b16 %v3623, %v3615
    %v4064 = vpack.c.b16 %v3624, %v3616
    %v4065 = vpack.c.b16 %v3625, %v3617
    %v4066 = vpack.c.b16 %v3626, %v3618
    %v4067 = vpack.c.b16 %v3627, %v3619
    %v4068 = vpack.c.b16 %v3628, %v3620
    %v4069 = vpack.c.b16 %v3629, %v3621
    %v4070 = vpack.c.b16 %v3630, %v3622
    %v4071 = vpack.c.b16 %v3639, %v3631
    %v4072 = vpack.c.b16 %v3640, %v3632
    %v4073 = vpack.c.b16 %v3641, %v3633
    %v4074 = vpack.c.b16 %v3642, %v3634
    %v4075 = vpack.c.b16 %v3643, %v3635
    %v4076 = vpack.c.b16 %v3644, %v3636
    %v4077 = vpack.c.b16 %v3645, %v3637
    %v4078 = vpack.c.b16 %v3646, %v3638
    %v4079 = vpack.c.b16 %v3655, %v3647
    %v4080 = vpack.c.b16 %v3656, %v3648
    %v4081 = vpack.c.b16 %v3657, %v3649
    %v4082 = vpack.c.b16 %v3658, %v3650
    %v4083 = vpack.c.b16 %v3659, %v3651
    %v4084 = vpack.c.b16 %v3660, %v3652
    %v4085 = vpack.c.b16 %v3661, %v3653
    %v4086 = vpack.c.b16 %v3662, %v3654
    %v4087 = vpack.c.b16 %v3671, %v3663
    %v4088 = vpack.c.b16 %v3672, %v3664
    %v4089 = vpack.c.b16 %v3673, %v3665
    %v4090 = vpack.c.b16 %v3674, %v3666
    %v4091 = vpack.c.b16 %v3675, %v3667
    %v4092 = vpack.c.b16 %v3676, %v3668
    %v4093 = vpack.c.b16 %v3677, %v3669
    %v4094 = vpack.c.b16 %v3678, %v3670
    %v4095 = vpack.c.b16 %v3687, %v3679
    %v4096 = vpack.c.b16 %v3688, %v3680
    %v4097 = vpack.c.b16 %v3689, %v3681
    %v4098 = vpack.c.b16 %v3690, %v3682
    %v4099 = vpack.c.b16 %v3691, %v3683
    %v4100 = vpack.c.b16 %v3692, %v3684
    %v4101 = vpack.c.b16 %v3693, %v3685
    %v4102 = vpack.c.b16 %v3694, %v3686
    %v4103 = vpack.c.b16 %v3703, %v3695
    %v4104 = vpack.c.b16 %v3704, %v3696
    %v4105 = vpack.c.b16 %v3705, %v3697
    %v4106 = vpack.c.b16 %v3706, %v3698
    %v4107 = vpack.c.b16 %v3707, %v3699
    %v4108 = vpack.c.b16 %v3708, %v3700
    %v4109 = vpack.c.b16 %v3709, %v3701
    %v4110 = vpack.c.b16 %v3710, %v3702
    %v4111 = vpack.c.b16 %v3719, %v3711
    %v4112 = vpack.c.b16 %v3720, %v3712
    %v4113 = vpack.c.b16 %v3721, %v3713
    %v4114 = vpack.c.b16 %v3722, %v3714
    %v4115 = vpack.c.b16 %v3723, %v3715
    %v4116 = vpack.c.b16 %v3724, %v3716
    %v4117 = vpack.c.b16 %v3725, %v3717
    %v4118 = vpack.c.b16 %v3726, %v3718
    %v4119 = vpack.c.b16 %v3735, %v3727
    %v4120 = vpack.c.b16 %v3736, %v3728
    %v4121 = vpack.c.b16 %v3737, %v3729
    %v4122 = vpack.c.b16 %v3738, %v3730
    %v4123 = vpack.c.b16 %v3739, %v3731
    %v4124 = vpack.c.b16 %v3740, %v3732
    %v4125 = vpack.c.b16 %v3741, %v3733
    %v4126 = vpack.c.b16 %v3742, %v3734
    %v4127 = vpack.c.b16 %v3751, %v3743
    %v4128 = vpack.c.b16 %v3752, %v3744
    %v4129 = vpack.c.b16 %v3753, %v3745
    %v4130 = vpack.c.b16 %v3754, %v3746
    %v4131 = vpack.c.b16 %v3755, %v3747
    %v4132 = vpack.c.b16 %v3756, %v3748
    %v4133 = vpack.c.b16 %v3757, %v3749
    %v4134 = vpack.c.b16 %v3758, %v3750
    %v4135 = vpack.c.b16 %v3767, %v3759
    %v4136 = vpack.c.b16 %v3768, %v3760
    %v4137 = vpack.c.b16 %v3769, %v3761
    %v4138 = vpack.c.b16 %v3770, %v3762
    %v4139 = vpack.c.b16 %v3771, %v3763
    %v4140 = vpack.c.b16 %v3772, %v3764
    %v4141 = vpack.c.b16 %v3773, %v3765
    %v4142 = vpack.c.b16 %v3774, %v3766
    %v4143 = vpack.c.b16 %v3783, %v3775
    %v4144 = vpack.c.b16 %v3784, %v3776
    %v4145 = vpack.c.b16 %v3785, %v3777
    %v4146 = vpack.c.b16 %v3786, %v3778
    %v4147 = vpack.c.b16 %v3787, %v3779
    %v4148 = vpack.c.b16 %v3788, %v3780
    %v4149 = vpack.c.b16 %v3789, %v3781
    %v4150 = vpack.c.b16 %v3790, %v3782
    %v4151 = vpack.c.b16 %v3799, %v3791
    %v4152 = vpack.c.b16 %v3800, %v3792
    %v4153 = vpack.c.b16 %v3801, %v3793
    %v4154 = vpack.c.b16 %v3802, %v3794
    %v4155 = vpack.c.b16 %v3803, %v3795
    %v4156 = vpack.c.b16 %v3804, %v3796
    %v4157 = vpack.c.b16 %v3805, %v3797
    %v4158 = vpack.c.b16 %v3806, %v3798
    %v4159 = vpack.c.b16 %v3815, %v3807
    %v4160 = vpack.c.b16 %v3816, %v3808
    %v4161 = vpack.c.b16 %v3817, %v3809
    %v4162 = vpack.c.b16 %v3818, %v3810
    %v4163 = vpack.c.b16 %v3819, %v3811
    %v4164 = vpack.c.b16 %v3820, %v3812
    %v4165 = vpack.c.b16 %v3821, %v3813
    %v4166 = vpack.c.b16 %v3822, %v3814
    %v4167 = vpack.c.b16 %v3831, %v3823
    %v4168 = vpack.c.b16 %v3832, %v3824
    %v4169 = vpack.c.b16 %v3833, %v3825
    %v4170 = vpack.c.b16 %v3834, %v3826
    %v4171 = vpack.c.b16 %v3835, %v3827
    %v4172 = vpack.c.b16 %v3836, %v3828
    %v4173 = vpack.c.b16 %v3837, %v3829
    %v4174 = vpack.c.b16 %v3838, %v3830
    %v4175 = vpack.c.b16 %v3847, %v3839
    %v4176 = vpack.c.b16 %v3848, %v3840
    %v4177 = vpack.c.b16 %v3849, %v3841
    %v4178 = vpack.c.b16 %v3850, %v3842
    %v4179 = vpack.c.b16 %v3851, %v3843
    %v4180 = vpack.c.b16 %v3852, %v3844
    %v4181 = vpack.c.b16 %v3853, %v3845
    %v4182 = vpack.c.b16 %v3854, %v3846
    %v4183 = vpack.c.b16 %v3863, %v3855
    %v4184 = vpack.c.b16 %v3864, %v3856
    %v4185 = vpack.c.b16 %v3865, %v3857
    %v4186 = vpack.c.b16 %v3866, %v3858
    %v4187 = vpack.c.b16 %v3867, %v3859
    %v4188 = vpack.c.b16 %v3868, %v3860
    %v4189 = vpack.c.b16 %v3869, %v3861
    %v4190 = vpack.c.b16 %v3870, %v3862
    %v4191 = vpack.c.b16 %v3879, %v3871
    %v4192 = vpack.c.b16 %v3880, %v3872
    %v4193 = vpack.c.b16 %v3881, %v3873
    %v4194 = vpack.c.b16 %v3882, %v3874
    %v4195 = vpack.c.b16 %v3883, %v3875
    %v4196 = vpack.c.b16 %v3884, %v3876
    %v4197 = vpack.c.b16 %v3885, %v3877
    %v4198 = vpack.c.b16 %v3886, %v3878
    %v4199 = vpack.c.b16 %v3895, %v3887
    %v4200 = vpack.c.b16 %v3896, %v3888
    %v4201 = vpack.c.b16 %v3897, %v3889
    %v4202 = vpack.c.b16 %v3898, %v3890
    %v4203 = vpack.c.b16 %v3899, %v3891
    %v4204 = vpack.c.b16 %v3900, %v3892
    %v4205 = vpack.c.b16 %v3901, %v3893
    %v4206 = vpack.c.b16 %v3902, %v3894
    %v4207 = vpack.c.b16 %v3911, %v3903
    %v4208 = vpack.c.b16 %v3912, %v3904
    %v4209 = vpack.c.b16 %v3913, %v3905
    %v4210 = vpack.c.b16 %v3914, %v3906
    %v4211 = vpack.c.b16 %v3915, %v3907
    %v4212 = vpack.c.b16 %v3916, %v3908
    %v4213 = vpack.c.b16 %v3917, %v3909
    %v4214 = vpack.c.b16 %v3918, %v3910
    %v4215 = vpack.c.b16 %v3927, %v3919
    %v4216 = vpack.c.b16 %v3928, %v3920
    %v4217 = vpack.c.b16 %v3929, %v3921
    %v4218 = vpack.c.b16 %v3930, %v3922
    %v4219 = vpack.c.b16 %v3931, %v3923
    %v4220 = vpack.c.b16 %v3932, %v3924
    %v4221 = vpack.c.b16 %v3933, %v3925
    %v4222 = vpack.c.b16 %v3934, %v3926
    %v4223 = vpack.c.b16 %v3943, %v3935
    %v4224 = vpack.c.b16 %v3944, %v3936
    %v4225 = vpack.c.b16 %v3945, %v3937
    %v4226 = vpack.c.b16 %v3946, %v3938
    %v4227 = vpack.c.b16 %v3947, %v3939
    %v4228 = vpack.c.b16 %v3948, %v3940
    %v4229 = vpack.c.b16 %v3949, %v3941
    %v4230 = vpack.c.b16 %v3950, %v3942
    %v4231 = vpack.c.b16 %v3959, %v3951
    %v4232 = vpack.c.b16 %v3960, %v3952
    %v4233 = vpack.c.b16 %v3961, %v3953
    %v4234 = vpack.c.b16 %v3962, %v3954
    %v4235 = vpack.c.b16 %v3963, %v3955
    %v4236 = vpack.c.b16 %v3964, %v3956
    %v4237 = vpack.c.b16 %v3965, %v3957
    %v4238 = vpack.c.b16 %v3966, %v3958
    %v4239 = vpack.c.b16 %v3975, %v3967
    %v4240 = vpack.c.b16 %v3976, %v3968
    %v4241 = vpack.c.b16 %v3977, %v3969
    %v4242 = vpack.c.b16 %v3978, %v3970
    %v4243 = vpack.c.b16 %v3979, %v3971
    %v4244 = vpack.c.b16 %v3980, %v3972
    %v4245 = vpack.c.b16 %v3981, %v3973
    %v4246 = vpack.c.b16 %v3982, %v3974
    %v4247 = vpack.c.b16 %v3991, %v3983
    %v4248 = vpack.c.b16 %v3992, %v3984
    %v4249 = vpack.c.b16 %v3993, %v3985
    %v4250 = vpack.c.b16 %v3994, %v3986
    %v4251 = vpack.c.b16 %v3995, %v3987
    %v4252 = vpack.c.b16 %v3996, %v3988
    %v4253 = vpack.c.b16 %v3997, %v3989
    %v4254 = vpack.c.b16 %v3998, %v3990
    %4511 = vmatprep.subr.bf16.mxu0 %v4000
    %4512 = vmatpush1.bf16.msra.mxu0 %v3999
    %4513 = vmatprep.subr.bf16.mxu0 %v4008
    %4514 = vmatpush1.bf16.msra.mxu0 %v4007
    %4515 = vmatprep.subr.bf16.mxu0 %v4016
    %4516 = vmatpush1.bf16.msra.mxu0 %v4015
    %4517 = vmatprep.subr.bf16.mxu0 %v4024
    %4518 = vmatpush1.bf16.msra.mxu0 %v4023
    %4519 = vmatprep.subr.bf16.mxu0 %v4032
    %4520 = vmatpush1.bf16.msra.mxu0 %v4031
    %4521 = vmatprep.subr.bf16.mxu0 %v4040
    %4522 = vmatpush1.bf16.msra.mxu0 %v4039
    %4523 = vmatprep.subr.bf16.mxu0 %v4048
    %4524 = vmatpush1.bf16.msra.mxu0 %v4047
    %4525 = vmatprep.subr.bf16.mxu0 %v4056
    %4526 = vmatpush1.bf16.msra.mxu0 %v4055
    %4527 = vmatprep.subr.bf16.mxu0 %v4064
    %4528 = vmatpush1.bf16.msra.mxu0 %v4063
    %4529 = vmatprep.subr.bf16.mxu0 %v4072
    %4530 = vmatpush1.bf16.msra.mxu0 %v4071
    %4531 = vmatprep.subr.bf16.mxu0 %v4080
    %4532 = vmatpush1.bf16.msra.mxu0 %v4079
    %4533 = vmatprep.subr.bf16.mxu0 %v4088
    %4534 = vmatpush1.bf16.msra.mxu0 %v4087
    %4535 = vmatprep.subr.bf16.mxu0 %v4096
    %4536 = vmatpush1.bf16.msra.mxu0 %v4095
    %4537 = vmatprep.subr.bf16.mxu0 %v4104
    %4538 = vmatpush1.bf16.msra.mxu0 %v4103
    %4539 = vmatprep.subr.bf16.mxu0 %v4112
    %4540 = vmatpush1.bf16.msra.mxu0 %v4111
    %4541 = vmatprep.subr.bf16.mxu0 %v4120
    %4542 = vmatpush1.bf16.msra.mxu0 %v4119
    %4543 = vmatprep.mubr.bf16.mxu0 %v3208
    %4544 = vmatmul.mubr.bf16.gmra.mrb[0].mxu0 %v3205
    %v4545 = vpop.f32.mrb[0].mxu0
    %v4546 = vadd.f32 0.0, %v4545
    %v4547 = vpop.f32.mrb[0].mxu0
    %v4548 = vadd.f32 0.0, %v4547
    %v4549 = vpop.f32.mrb[0].mxu0
    %v4550 = vadd.f32 0.0, %v4549
    %v4551 = vpop.f32.mrb[0].mxu0
    %v4552 = vadd.f32 0.0, %v4551
    %4553 = vmatprep.mubr.bf16.mxu0 %v3218
    %4554 = vmatmul.mubr.bf16.gmra.mrb[0].mxu0 %v3216
    %v4555 = vpop.f32.mrb[0].mxu0
    %v4556 = vadd.f32 0.0, %v4555
    %v4557 = vpop.f32.mrb[0].mxu0
    %v4558 = vadd.f32 0.0, %v4557
    %v4559 = vpop.f32.mrb[0].mxu0
    %v4560 = vadd.f32 0.0, %v4559
    %v4561 = vpop.f32.mrb[0].mxu0
    %v4562 = vadd.f32 0.0, %v4561
    %4563 = vdwg.mxu0
    %4564 = vmatprep.subr.bf16.mxu0 %v4128
    %4565 = vmatpush1.bf16.msra.mxu0 %v4127
    %4566 = vmatprep.subr.bf16.mxu0 %v4136
    %4567 = vmatpush1.bf16.msra.mxu0 %v4135
    %4568 = vmatprep.subr.bf16.mxu0 %v4144
    %4569 = vmatpush1.bf16.msra.mxu0 %v4143
    %4570 = vmatprep.subr.bf16.mxu0 %v4152
    %4571 = vmatpush1.bf16.msra.mxu0 %v4151
    %4572 = vmatprep.subr.bf16.mxu0 %v4160
    %4573 = vmatpush1.bf16.msra.mxu0 %v4159
    %4574 = vmatprep.subr.bf16.mxu0 %v4168
    %4575 = vmatpush1.bf16.msra.mxu0 %v4167
    %4576 = vmatprep.subr.bf16.mxu0 %v4176
    %4577 = vmatpush1.bf16.msra.mxu0 %v4175
    %4578 = vmatprep.subr.bf16.mxu0 %v4184
    %4579 = vmatpush1.bf16.msra.mxu0 %v4183
    %4580 = vmatprep.subr.bf16.mxu0 %v4192
    %4581 = vmatpush1.bf16.msra.mxu0 %v4191
    %4582 = vmatprep.subr.bf16.mxu0 %v4200
    %4583 = vmatpush1.bf16.msra.mxu0 %v4199
    %4584 = vmatprep.subr.bf16.mxu0 %v4208
    %4585 = vmatpush1.bf16.msra.mxu0 %v4207
    %4586 = vmatprep.subr.bf16.mxu0 %v4216
    %4587 = vmatpush1.bf16.msra.mxu0 %v4215
    %4588 = vmatprep.subr.bf16.mxu0 %v4224
    %4589 = vmatpush1.bf16.msra.mxu0 %v4223
    %4590 = vmatprep.subr.bf16.mxu0 %v4232
    %4591 = vmatpush1.bf16.msra.mxu0 %v4231
    %4592 = vmatprep.subr.bf16.mxu0 %v4240
    %4593 = vmatpush1.bf16.msra.mxu0 %v4239
    %4594 = vmatprep.subr.bf16.mxu0 %v4248
    %4595 = vmatpush1.bf16.msra.mxu0 %v4247
    %4596 = vmatprep.mubr.bf16.mxu0 %v3214
    %4597 = vmatmul.mubr.bf16.gmra.mrb[0].mxu0 %v3211
    %v4598 = vpop.f32.mrb[0].mxu0
    %v4599 = vadd.f32 %v4546, %v4598
    %v4600 = vpop.f32.mrb[0].mxu0
    %v4601 = vadd.f32 %v4548, %v4600
    %v4602 = vpop.f32.mrb[0].mxu0
    %v4603 = vadd.f32 %v4550, %v4602
    %v4604 = vpop.f32.mrb[0].mxu0
    %v4605 = vadd.f32 %v4552, %v4604
    %4606 = vmatprep.mubr.bf16.mxu0 %v3222
    %4607 = vmatmul.mubr.bf16.gmra.mrb[0].mxu0 %v3220
    %v4608 = vpop.f32.mrb[0].mxu0
    %v4609 = vadd.f32 %v4556, %v4608
    %v4610 = vpop.f32.mrb[0].mxu0
    %v4611 = vadd.f32 %v4558, %v4610
    %v4612 = vpop.f32.mrb[0].mxu0
    %v4613 = vadd.f32 %v4560, %v4612
    %v4614 = vpop.f32.mrb[0].mxu0
    %v4615 = vadd.f32 %v4562, %v4614
    %4616 = vdwg.mxu0
    %4617 = vmatprep.subr.bf16.mxu0 %v4002
    %4618 = vmatpush1.bf16.msra.mxu0 %v4001
    %4619 = vmatprep.subr.bf16.mxu0 %v4010
    %4620 = vmatpush1.bf16.msra.mxu0 %v4009
    %4621 = vmatprep.subr.bf16.mxu0 %v4018
    %4622 = vmatpush1.bf16.msra.mxu0 %v4017
    %4623 = vmatprep.subr.bf16.mxu0 %v4026
    %4624 = vmatpush1.bf16.msra.mxu0 %v4025
    %4625 = vmatprep.subr.bf16.mxu0 %v4034
    %4626 = vmatpush1.bf16.msra.mxu0 %v4033
    %4627 = vmatprep.subr.bf16.mxu0 %v4042
    %4628 = vmatpush1.bf16.msra.mxu0 %v4041
    %4629 = vmatprep.subr.bf16.mxu0 %v4050
    %4630 = vmatpush1.bf16.msra.mxu0 %v4049
    %4631 = vmatprep.subr.bf16.mxu0 %v4058
    %4632 = vmatpush1.bf16.msra.mxu0 %v4057
    %4633 = vmatprep.subr.bf16.mxu0 %v4066
    %4634 = vmatpush1.bf16.msra.mxu0 %v4065
    %4635 = vmatprep.subr.bf16.mxu0 %v4074
    %4636 = vmatpush1.bf16.msra.mxu0 %v4073
    %4637 = vmatprep.subr.bf16.mxu0 %v4082
    %4638 = vmatpush1.bf16.msra.mxu0 %v4081
    %4639 = vmatprep.subr.bf16.mxu0 %v4090
    %4640 = vmatpush1.bf16.msra.mxu0 %v4089
    %4641 = vmatprep.subr.bf16.mxu0 %v4098
    %4642 = vmatpush1.bf16.msra.mxu0 %v4097
    %4643 = vmatprep.subr.bf16.mxu0 %v4106
    %4644 = vmatpush1.bf16.msra.mxu0 %v4105
    %4645 = vmatprep.subr.bf16.mxu0 %v4114
    %4646 = vmatpush1.bf16.msra.mxu0 %v4113
    %4647 = vmatprep.subr.bf16.mxu0 %v4122
    %4648 = vmatpush1.bf16.msra.mxu0 %v4121
    %4649 = vmatprep.mubr.bf16.mxu0 %v3208
    %4650 = vmatmul.mubr.bf16.gmra.mrb[0].mxu0 %v3205
    %v4651 = vpop.f32.mrb[0].mxu0
    %v4652 = vadd.f32 0.0, %v4651
    %v4653 = vpop.f32.mrb[0].mxu0
    %v4654 = vadd.f32 0.0, %v4653
    %v4655 = vpop.f32.mrb[0].mxu0
    %v4656 = vadd.f32 0.0, %v4655
    %v4657 = vpop.f32.mrb[0].mxu0
    %v4658 = vadd.f32 0.0, %v4657
    %4659 = vmatprep.mubr.bf16.mxu0 %v3218
    %4660 = vmatmul.mubr.bf16.gmra.mrb[0].mxu0 %v3216
    %v4661 = vpop.f32.mrb[0].mxu0
    %v4662 = vadd.f32 0.0, %v4661
    %v4663 = vpop.f32.mrb[0].mxu0
    %v4664 = vadd.f32 0.0, %v4663
    %v4665 = vpop.f32.mrb[0].mxu0
    %v4666 = vadd.f32 0.0, %v4665
    %v4667 = vpop.f32.mrb[0].mxu0
    %v4668 = vadd.f32 0.0, %v4667
    %4669 = vdwg.mxu0
    %4670 = vmatprep.subr.bf16.mxu0 %v4130
    %4671 = vmatpush1.bf16.msra.mxu0 %v4129
    %4672 = vmatprep.subr.bf16.mxu0 %v4138
    %4673 = vmatpush1.bf16.msra.mxu0 %v4137
    %4674 = vmatprep.subr.bf16.mxu0 %v4146
    %4675 = vmatpush1.bf16.msra.mxu0 %v4145
    %4676 = vmatprep.subr.bf16.mxu0 %v4154
    %4677 = vmatpush1.bf16.msra.mxu0 %v4153
    %4678 = vmatprep.subr.bf16.mxu0 %v4162
    %4679 = vmatpush1.bf16.msra.mxu0 %v4161
    %4680 = vmatprep.subr.bf16.mxu0 %v4170
    %4681 = vmatpush1.bf16.msra.mxu0 %v4169
    %4682 = vmatprep.subr.bf16.mxu0 %v4178
    %4683 = vmatpush1.bf16.msra.mxu0 %v4177
    %4684 = vmatprep.subr.bf16.mxu0 %v4186
    %4685 = vmatpush1.bf16.msra.mxu0 %v4185
    %4686 = vmatprep.subr.bf16.mxu0 %v4194
    %4687 = vmatpush1.bf16.msra.mxu0 %v4193
    %4688 = vmatprep.subr.bf16.mxu0 %v4202
    %4689 = vmatpush1.bf16.msra.mxu0 %v4201
    %4690 = vmatprep.subr.bf16.mxu0 %v4210
    %4691 = vmatpush1.bf16.msra.mxu0 %v4209
    %4692 = vmatprep.subr.bf16.mxu0 %v4218
    %4693 = vmatpush1.bf16.msra.mxu0 %v4217
    %4694 = vmatprep.subr.bf16.mxu0 %v4226
    %4695 = vmatpush1.bf16.msra.mxu0 %v4225
    %4696 = vmatprep.subr.bf16.mxu0 %v4234
    %4697 = vmatpush1.bf16.msra.mxu0 %v4233
    %4698 = vmatprep.subr.bf16.mxu0 %v4242
    %4699 = vmatpush1.bf16.msra.mxu0 %v4241
    %4700 = vmatprep.subr.bf16.mxu0 %v4250
    %4701 = vmatpush1.bf16.msra.mxu0 %v4249
    %4702 = vmatprep.mubr.bf16.mxu0 %v3214
    %4703 = vmatmul.mubr.bf16.gmra.mrb[0].mxu0 %v3211
    %v4704 = vpop.f32.mrb[0].mxu0
    %v4705 = vadd.f32 %v4652, %v4704
    %v4706 = vpop.f32.mrb[0].mxu0
    %v4707 = vadd.f32 %v4654, %v4706
    %v4708 = vpop.f32.mrb[0].mxu0
    %v4709 = vadd.f32 %v4656, %v4708
    %v4710 = vpop.f32.mrb[0].mxu0
    %v4711 = vadd.f32 %v4658, %v4710
    %4712 = vmatprep.mubr.bf16.mxu0 %v3222
    %4713 = vmatmul.mubr.bf16.gmra.mrb[0].mxu0 %v3220
    %v4714 = vpop.f32.mrb[0].mxu0
    %v4715 = vadd.f32 %v4662, %v4714
    %v4716 = vpop.f32.mrb[0].mxu0
    %v4717 = vadd.f32 %v4664, %v4716
    %v4718 = vpop.f32.mrb[0].mxu0
    %v4719 = vadd.f32 %v4666, %v4718
    %v4720 = vpop.f32.mrb[0].mxu0
    %v4721 = vadd.f32 %v4668, %v4720
    %4722 = vdwg.mxu0
    %4723 = vmatprep.subr.bf16.mxu0 %v4004
    %4724 = vmatpush1.bf16.msra.mxu0 %v4003
    %4725 = vmatprep.subr.bf16.mxu0 %v4012
    %4726 = vmatpush1.bf16.msra.mxu0 %v4011
    %4727 = vmatprep.subr.bf16.mxu0 %v4020
    %4728 = vmatpush1.bf16.msra.mxu0 %v4019
    %4729 = vmatprep.subr.bf16.mxu0 %v4028
    %4730 = vmatpush1.bf16.msra.mxu0 %v4027
    %4731 = vmatprep.subr.bf16.mxu0 %v4036
    %4732 = vmatpush1.bf16.msra.mxu0 %v4035
    %4733 = vmatprep.subr.bf16.mxu0 %v4044
    %4734 = vmatpush1.bf16.msra.mxu0 %v4043
    %4735 = vmatprep.subr.bf16.mxu0 %v4052
    %4736 = vmatpush1.bf16.msra.mxu0 %v4051
    %4737 = vmatprep.subr.bf16.mxu0 %v4060
    %4738 = vmatpush1.bf16.msra.mxu0 %v4059
    %4739 = vmatprep.subr.bf16.mxu0 %v4068
    %4740 = vmatpush1.bf16.msra.mxu0 %v4067
    %4741 = vmatprep.subr.bf16.mxu0 %v4076
    %4742 = vmatpush1.bf16.msra.mxu0 %v4075
    %4743 = vmatprep.subr.bf16.mxu0 %v4084
    %4744 = vmatpush1.bf16.msra.mxu0 %v4083
    %4745 = vmatprep.subr.bf16.mxu0 %v4092
    %4746 = vmatpush1.bf16.msra.mxu0 %v4091
    %4747 = vmatprep.subr.bf16.mxu0 %v4100
    %4748 = vmatpush1.bf16.msra.mxu0 %v4099
    %4749 = vmatprep.subr.bf16.mxu0 %v4108
    %4750 = vmatpush1.bf16.msra.mxu0 %v4107
    %4751 = vmatprep.subr.bf16.mxu0 %v4116
    %4752 = vmatpush1.bf16.msra.mxu0 %v4115
    %4753 = vmatprep.subr.bf16.mxu0 %v4124
    %4754 = vmatpush1.bf16.msra.mxu0 %v4123
    %4755 = vmatprep.mubr.bf16.mxu0 %v3208
    %4756 = vmatmul.mubr.bf16.gmra.mrb[0].mxu0 %v3205
    %v4757 = vpop.f32.mrb[0].mxu0
    %v4758 = vadd.f32 0.0, %v4757
    %v4759 = vpop.f32.mrb[0].mxu0
    %v4760 = vadd.f32 0.0, %v4759
    %v4761 = vpop.f32.mrb[0].mxu0
    %v4762 = vadd.f32 0.0, %v4761
    %v4763 = vpop.f32.mrb[0].mxu0
    %v4764 = vadd.f32 0.0, %v4763
    %4765 = vmatprep.mubr.bf16.mxu0 %v3218
    %4766 = vmatmul.mubr.bf16.gmra.mrb[0].mxu0 %v3216
    %v4767 = vpop.f32.mrb[0].mxu0
    %v4768 = vadd.f32 0.0, %v4767
    %v4769 = vpop.f32.mrb[0].mxu0
    %v4770 = vadd.f32 0.0, %v4769
    %v4771 = vpop.f32.mrb[0].mxu0
    %v4772 = vadd.f32 0.0, %v4771
    %v4773 = vpop.f32.mrb[0].mxu0
    %v4774 = vadd.f32 0.0, %v4773
    %4775 = vdwg.mxu0
    %4776 = vmatprep.subr.bf16.mxu0 %v4132
    %4777 = vmatpush1.bf16.msra.mxu0 %v4131
    %4778 = vmatprep.subr.bf16.mxu0 %v4140
    %4779 = vmatpush1.bf16.msra.mxu0 %v4139
    %4780 = vmatprep.subr.bf16.mxu0 %v4148
    %4781 = vmatpush1.bf16.msra.mxu0 %v4147
    %4782 = vmatprep.subr.bf16.mxu0 %v4156
    %4783 = vmatpush1.bf16.msra.mxu0 %v4155
    %4784 = vmatprep.subr.bf16.mxu0 %v4164
    %4785 = vmatpush1.bf16.msra.mxu0 %v4163
    %4786 = vmatprep.subr.bf16.mxu0 %v4172
    %4787 = vmatpush1.bf16.msra.mxu0 %v4171
    %4788 = vmatprep.subr.bf16.mxu0 %v4180
    %4789 = vmatpush1.bf16.msra.mxu0 %v4179
    %4790 = vmatprep.subr.bf16.mxu0 %v4188
    %4791 = vmatpush1.bf16.msra.mxu0 %v4187
    %4792 = vmatprep.subr.bf16.mxu0 %v4196
    %4793 = vmatpush1.bf16.msra.mxu0 %v4195
    %4794 = vmatprep.subr.bf16.mxu0 %v4204
    %4795 = vmatpush1.bf16.msra.mxu0 %v4203
    %4796 = vmatprep.subr.bf16.mxu0 %v4212
    %4797 = vmatpush1.bf16.msra.mxu0 %v4211
    %4798 = vmatprep.subr.bf16.mxu0 %v4220
    %4799 = vmatpush1.bf16.msra.mxu0 %v4219
    %4800 = vmatprep.subr.bf16.mxu0 %v4228
    %4801 = vmatpush1.bf16.msra.mxu0 %v4227
    %4802 = vmatprep.subr.bf16.mxu0 %v4236
    %4803 = vmatpush1.bf16.msra.mxu0 %v4235
    %4804 = vmatprep.subr.bf16.mxu0 %v4244
    %4805 = vmatpush1.bf16.msra.mxu0 %v4243
    %4806 = vmatprep.subr.bf16.mxu0 %v4252
    %4807 = vmatpush1.bf16.msra.mxu0 %v4251
    %4808 = vmatprep.mubr.bf16.mxu0 %v3214
    %4809 = vmatmul.mubr.bf16.gmra.mrb[0].mxu0 %v3211
    %v4810 = vpop.f32.mrb[0].mxu0
    %v4811 = vadd.f32 %v4758, %v4810
    %v4812 = vpop.f32.mrb[0].mxu0
    %v4813 = vadd.f32 %v4760, %v4812
    %v4814 = vpop.f32.mrb[0].mxu0
    %v4815 = vadd.f32 %v4762, %v4814
    %v4816 = vpop.f32.mrb[0].mxu0
    %v4817 = vadd.f32 %v4764, %v4816
    %4818 = vmatprep.mubr.bf16.mxu0 %v3222
    %4819 = vmatmul.mubr.bf16.gmra.mrb[0].mxu0 %v3220
    %v4820 = vpop.f32.mrb[0].mxu0
    %v4821 = vadd.f32 %v4768, %v4820
    %v4822 = vpop.f32.mrb[0].mxu0
    %v4823 = vadd.f32 %v4770, %v4822
    %v4824 = vpop.f32.mrb[0].mxu0
    %v4825 = vadd.f32 %v4772, %v4824
    %v4826 = vpop.f32.mrb[0].mxu0
    %v4827 = vadd.f32 %v4774, %v4826
    %4828 = vdwg.mxu0
    %4829 = vmatprep.subr.bf16.mxu0 %v4006
    %4830 = vmatpush1.bf16.msra.mxu0 %v4005
    %4831 = vmatprep.subr.bf16.mxu0 %v4014
    %4832 = vmatpush1.bf16.msra.mxu0 %v4013
    %4833 = vmatprep.subr.bf16.mxu0 %v4022
    %4834 = vmatpush1.bf16.msra.mxu0 %v4021
    %4835 = vmatprep.subr.bf16.mxu0 %v4030
    %4836 = vmatpush1.bf16.msra.mxu0 %v4029
    %4837 = vmatprep.subr.bf16.mxu0 %v4038
    %4838 = vmatpush1.bf16.msra.mxu0 %v4037
    %4839 = vmatprep.subr.bf16.mxu0 %v4046
    %4840 = vmatpush1.bf16.msra.mxu0 %v4045
    %4841 = vmatprep.subr.bf16.mxu0 %v4054
    %4842 = vmatpush1.bf16.msra.mxu0 %v4053
    %4843 = vmatprep.subr.bf16.mxu0 %v4062
    %4844 = vmatpush1.bf16.msra.mxu0 %v4061
    %4845 = vmatprep.subr.bf16.mxu0 %v4070
    %4846 = vmatpush1.bf16.msra.mxu0 %v4069
    %4847 = vmatprep.subr.bf16.mxu0 %v4078
    %4848 = vmatpush1.bf16.msra.mxu0 %v4077
    %4849 = vmatprep.subr.bf16.mxu0 %v4086
    %4850 = vmatpush1.bf16.msra.mxu0 %v4085
    %4851 = vmatprep.subr.bf16.mxu0 %v4094
    %4852 = vmatpush1.bf16.msra.mxu0 %v4093
    %4853 = vmatprep.subr.bf16.mxu0 %v4102
    %4854 = vmatpush1.bf16.msra.mxu0 %v4101
    %4855 = vmatprep.subr.bf16.mxu0 %v4110
    %4856 = vmatpush1.bf16.msra.mxu0 %v4109
    %4857 = vmatprep.subr.bf16.mxu0 %v4118
    %4858 = vmatpush1.bf16.msra.mxu0 %v4117
    %4859 = vmatprep.subr.bf16.mxu0 %v4126
    %4860 = vmatpush1.bf16.msra.mxu0 %v4125
    %4861 = vmatprep.mubr.bf16.mxu0 %v3208
    %4862 = vmatmul.mubr.bf16.gmra.mrb[0].mxu0 %v3205
    %v4863 = vpop.f32.mrb[0].mxu0
    %v4864 = vadd.f32 0.0, %v4863
    %v4865 = vpop.f32.mrb[0].mxu0
    %v4866 = vadd.f32 0.0, %v4865
    %v4867 = vpop.f32.mrb[0].mxu0
    %v4868 = vadd.f32 0.0, %v4867
    %v4869 = vpop.f32.mrb[0].mxu0
    %v4870 = vadd.f32 0.0, %v4869
    %4871 = vmatprep.mubr.bf16.mxu0 %v3218
    %4872 = vmatmul.mubr.bf16.gmra.mrb[0].mxu0 %v3216
    %v4873 = vpop.f32.mrb[0].mxu0
    %v4874 = vadd.f32 0.0, %v4873
    %v4875 = vpop.f32.mrb[0].mxu0
    %v4876 = vadd.f32 0.0, %v4875
    %v4877 = vpop.f32.mrb[0].mxu0
    %v4878 = vadd.f32 0.0, %v4877
    %v4879 = vpop.f32.mrb[0].mxu0
    %v4880 = vadd.f32 0.0, %v4879
    %4881 = vdwg.mxu0
    %4882 = vmatprep.subr.bf16.mxu0 %v4134
    %4883 = vmatpush1.bf16.msra.mxu0 %v4133
    %4884 = vmatprep.subr.bf16.mxu0 %v4142
    %4885 = vmatpush1.bf16.msra.mxu0 %v4141
    %4886 = vmatprep.subr.bf16.mxu0 %v4150
    %4887 = vmatpush1.bf16.msra.mxu0 %v4149
    %4888 = vmatprep.subr.bf16.mxu0 %v4158
    %4889 = vmatpush1.bf16.msra.mxu0 %v4157
    %4890 = vmatprep.subr.bf16.mxu0 %v4166
    %4891 = vmatpush1.bf16.msra.mxu0 %v4165
    %4892 = vmatprep.subr.bf16.mxu0 %v4174
    %4893 = vmatpush1.bf16.msra.mxu0 %v4173
    %4894 = vmatprep.subr.bf16.mxu0 %v4182
    %4895 = vmatpush1.bf16.msra.mxu0 %v4181
    %4896 = vmatprep.subr.bf16.mxu0 %v4190
    %4897 = vmatpush1.bf16.msra.mxu0 %v4189
    %4898 = vmatprep.subr.bf16.mxu0 %v4198
    %4899 = vmatpush1.bf16.msra.mxu0 %v4197
    %4900 = vmatprep.subr.bf16.mxu0 %v4206
    %4901 = vmatpush1.bf16.msra.mxu0 %v4205
    %4902 = vmatprep.subr.bf16.mxu0 %v4214
    %4903 = vmatpush1.bf16.msra.mxu0 %v4213
    %4904 = vmatprep.subr.bf16.mxu0 %v4222
    %4905 = vmatpush1.bf16.msra.mxu0 %v4221
    %4906 = vmatprep.subr.bf16.mxu0 %v4230
    %4907 = vmatpush1.bf16.msra.mxu0 %v4229
    %4908 = vmatprep.subr.bf16.mxu0 %v4238
    %4909 = vmatpush1.bf16.msra.mxu0 %v4237
    %4910 = vmatprep.subr.bf16.mxu0 %v4246
    %4911 = vmatpush1.bf16.msra.mxu0 %v4245
    %4912 = vmatprep.subr.bf16.mxu0 %v4254
    %4913 = vmatpush1.bf16.msra.mxu0 %v4253
    %4914 = vmatprep.mubr.bf16.mxu0 %v3214
    %4915 = vmatmul.mubr.bf16.gmra.mrb[0].mxu0 %v3211
    %v4916 = vpop.f32.mrb[0].mxu0
    %v4917 = vadd.f32 %v4864, %v4916
    %v4918 = vpop.f32.mrb[0].mxu0
    %v4919 = vadd.f32 %v4866, %v4918
    %v4920 = vpop.f32.mrb[0].mxu0
    %v4921 = vadd.f32 %v4868, %v4920
    %v4922 = vpop.f32.mrb[0].mxu0
    %v4923 = vadd.f32 %v4870, %v4922
    %4924 = vmatprep.mubr.bf16.mxu0 %v3222
    %4925 = vmatmul.mubr.bf16.gmra.mrb[0].mxu0 %v3220
    %v4926 = vpop.f32.mrb[0].mxu0
    %v4927 = vadd.f32 %v4874, %v4926
    %v4928 = vpop.f32.mrb[0].mxu0
    %v4929 = vadd.f32 %v4876, %v4928
    %v4930 = vpop.f32.mrb[0].mxu0
    %v4931 = vadd.f32 %v4878, %v4930
    %v4932 = vpop.f32.mrb[0].mxu0
    %v4933 = vadd.f32 %v4880, %v4932
    %4934 = vdwg.mxu0
    %v5191 = vunpack.c.l.b16 %v2677
    %v5192 = vunpack.c.h.b16 %v2677
    %v5193 = vunpack.c.l.b16 %v2678
    %v5194 = vunpack.c.h.b16 %v2678
    %v5195 = vunpack.c.l.b16 %v2679
    %v5196 = vunpack.c.h.b16 %v2679
    %v5197 = vunpack.c.l.b16 %v2680
    %v5198 = vunpack.c.h.b16 %v2680
    %v5199 = vunpack.c.l.b16 %v2681
    %v5200 = vunpack.c.h.b16 %v2681
    %v5201 = vunpack.c.l.b16 %v2682
    %v5202 = vunpack.c.h.b16 %v2682
    %v5203 = vunpack.c.l.b16 %v2683
    %v5204 = vunpack.c.h.b16 %v2683
    %v5205 = vunpack.c.l.b16 %v2684
    %v5206 = vunpack.c.h.b16 %v2684
    %v5207 = vunpack.c.l.b16 %v2685
    %v5208 = vunpack.c.h.b16 %v2685
    %v5209 = vunpack.c.l.b16 %v2686
    %v5210 = vunpack.c.h.b16 %v2686
    %v5211 = vunpack.c.l.b16 %v2687
    %v5212 = vunpack.c.h.b16 %v2687
    %v5213 = vunpack.c.l.b16 %v2688
    %v5214 = vunpack.c.h.b16 %v2688
    %v5215 = vunpack.c.l.b16 %v2689
    %v5216 = vunpack.c.h.b16 %v2689
    %v5217 = vunpack.c.l.b16 %v2690
    %v5218 = vunpack.c.h.b16 %v2690
    %v5219 = vunpack.c.l.b16 %v2691
    %v5220 = vunpack.c.h.b16 %v2691
    %v5221 = vunpack.c.l.b16 %v2692
    %v5222 = vunpack.c.h.b16 %v2692
    %v5223 = vunpack.c.l.b16 %v2693
    %v5224 = vunpack.c.h.b16 %v2693
    %v5225 = vunpack.c.l.b16 %v2694
    %v5226 = vunpack.c.h.b16 %v2694
    %v5227 = vunpack.c.l.b16 %v2695
    %v5228 = vunpack.c.h.b16 %v2695
    %v5229 = vunpack.c.l.b16 %v2696
    %v5230 = vunpack.c.h.b16 %v2696
    %v5231 = vunpack.c.l.b16 %v2697
    %v5232 = vunpack.c.h.b16 %v2697
    %v5233 = vunpack.c.l.b16 %v2698
    %v5234 = vunpack.c.h.b16 %v2698
    %v5235 = vunpack.c.l.b16 %v2699
    %v5236 = vunpack.c.h.b16 %v2699
    %v5237 = vunpack.c.l.b16 %v2700
    %v5238 = vunpack.c.h.b16 %v2700
    %v5239 = vunpack.c.l.b16 %v2701
    %v5240 = vunpack.c.h.b16 %v2701
    %v5241 = vunpack.c.l.b16 %v2702
    %v5242 = vunpack.c.h.b16 %v2702
    %v5243 = vunpack.c.l.b16 %v2703
    %v5244 = vunpack.c.h.b16 %v2703
    %v5245 = vunpack.c.l.b16 %v2704
    %v5246 = vunpack.c.h.b16 %v2704
    %v5247 = vunpack.c.l.b16 %v2705
    %v5248 = vunpack.c.h.b16 %v2705
    %v5249 = vunpack.c.l.b16 %v2706
    %v5250 = vunpack.c.h.b16 %v2706
    %v5251 = vunpack.c.l.b16 %v2707
    %v5252 = vunpack.c.h.b16 %v2707
    %v5253 = vunpack.c.l.b16 %v2708
    %v5254 = vunpack.c.h.b16 %v2708
    %v5255 = vunpack.c.l.b16 %v2709
    %v5256 = vunpack.c.h.b16 %v2709
    %v5257 = vunpack.c.l.b16 %v2710
    %v5258 = vunpack.c.h.b16 %v2710
    %v5259 = vunpack.c.l.b16 %v2711
    %v5260 = vunpack.c.h.b16 %v2711
    %v5261 = vunpack.c.l.b16 %v2712
    %v5262 = vunpack.c.h.b16 %v2712
    %v5263 = vunpack.c.l.b16 %v2713
    %v5264 = vunpack.c.h.b16 %v2713
    %v5265 = vunpack.c.l.b16 %v2714
    %v5266 = vunpack.c.h.b16 %v2714
    %v5267 = vunpack.c.l.b16 %v2715
    %v5268 = vunpack.c.h.b16 %v2715
    %v5269 = vunpack.c.l.b16 %v2716
    %v5270 = vunpack.c.h.b16 %v2716
    %v5271 = vunpack.c.l.b16 %v2717
    %v5272 = vunpack.c.h.b16 %v2717
    %v5273 = vunpack.c.l.b16 %v2718
    %v5274 = vunpack.c.h.b16 %v2718
    %v5275 = vunpack.c.l.b16 %v2719
    %v5276 = vunpack.c.h.b16 %v2719
    %v5277 = vunpack.c.l.b16 %v2720
    %v5278 = vunpack.c.h.b16 %v2720
    %v5279 = vunpack.c.l.b16 %v2721
    %v5280 = vunpack.c.h.b16 %v2721
    %v5281 = vunpack.c.l.b16 %v2722
    %v5282 = vunpack.c.h.b16 %v2722
    %v5283 = vunpack.c.l.b16 %v2723
    %v5284 = vunpack.c.h.b16 %v2723
    %v5285 = vunpack.c.l.b16 %v2724
    %v5286 = vunpack.c.h.b16 %v2724
    %v5287 = vunpack.c.l.b16 %v2725
    %v5288 = vunpack.c.h.b16 %v2725
    %v5289 = vunpack.c.l.b16 %v2726
    %v5290 = vunpack.c.h.b16 %v2726
    %v5291 = vunpack.c.l.b16 %v2727
    %v5292 = vunpack.c.h.b16 %v2727
    %v5293 = vunpack.c.l.b16 %v2728
    %v5294 = vunpack.c.h.b16 %v2728
    %v5295 = vunpack.c.l.b16 %v2729
    %v5296 = vunpack.c.h.b16 %v2729
    %v5297 = vunpack.c.l.b16 %v2730
    %v5298 = vunpack.c.h.b16 %v2730
    %v5299 = vunpack.c.l.b16 %v2731
    %v5300 = vunpack.c.h.b16 %v2731
    %v5301 = vunpack.c.l.b16 %v2732
    %v5302 = vunpack.c.h.b16 %v2732
    %v5303 = vunpack.c.l.b16 %v2733
    %v5304 = vunpack.c.h.b16 %v2733
    %v5305 = vunpack.c.l.b16 %v2734
    %v5306 = vunpack.c.h.b16 %v2734
    %v5307 = vunpack.c.l.b16 %v2735
    %v5308 = vunpack.c.h.b16 %v2735
    %v5309 = vunpack.c.l.b16 %v2736
    %v5310 = vunpack.c.h.b16 %v2736
    %v5311 = vunpack.c.l.b16 %v2737
    %v5312 = vunpack.c.h.b16 %v2737
    %v5313 = vunpack.c.l.b16 %v2738
    %v5314 = vunpack.c.h.b16 %v2738
    %v5315 = vunpack.c.l.b16 %v2739
    %v5316 = vunpack.c.h.b16 %v2739
    %v5317 = vunpack.c.l.b16 %v2740
    %v5318 = vunpack.c.h.b16 %v2740
    %v5319 = vunpack.c.l.b16 %v2741
    %v5320 = vunpack.c.h.b16 %v2741
    %v5321 = vunpack.c.l.b16 %v2742
    %v5322 = vunpack.c.h.b16 %v2742
    %v5323 = vunpack.c.l.b16 %v2743
    %v5324 = vunpack.c.h.b16 %v2743
    %v5325 = vunpack.c.l.b16 %v2744
    %v5326 = vunpack.c.h.b16 %v2744
    %v5327 = vunpack.c.l.b16 %v2745
    %v5328 = vunpack.c.h.b16 %v2745
    %v5329 = vunpack.c.l.b16 %v2746
    %v5330 = vunpack.c.h.b16 %v2746
    %v5331 = vunpack.c.l.b16 %v2747
    %v5332 = vunpack.c.h.b16 %v2747
    %v5333 = vunpack.c.l.b16 %v2748
    %v5334 = vunpack.c.h.b16 %v2748
    %v5335 = vunpack.c.l.b16 %v2749
    %v5336 = vunpack.c.h.b16 %v2749
    %v5337 = vunpack.c.l.b16 %v2750
    %v5338 = vunpack.c.h.b16 %v2750
    %v5339 = vunpack.c.l.b16 %v2751
    %v5340 = vunpack.c.h.b16 %v2751
    %v5341 = vunpack.c.l.b16 %v2752
    %v5342 = vunpack.c.h.b16 %v2752
    %v5343 = vunpack.c.l.b16 %v2753
    %v5344 = vunpack.c.h.b16 %v2753
    %v5345 = vunpack.c.l.b16 %v2754
    %v5346 = vunpack.c.h.b16 %v2754
    %v5347 = vunpack.c.l.b16 %v2755
    %v5348 = vunpack.c.h.b16 %v2755
    %v5349 = vunpack.c.l.b16 %v2756
    %v5350 = vunpack.c.h.b16 %v2756
    %v5351 = vunpack.c.l.b16 %v2757
    %v5352 = vunpack.c.h.b16 %v2757
    %v5353 = vunpack.c.l.b16 %v2758
    %v5354 = vunpack.c.h.b16 %v2758
    %v5355 = vunpack.c.l.b16 %v2759
    %v5356 = vunpack.c.h.b16 %v2759
    %v5357 = vunpack.c.l.b16 %v2760
    %v5358 = vunpack.c.h.b16 %v2760
    %v5359 = vunpack.c.l.b16 %v2761
    %v5360 = vunpack.c.h.b16 %v2761
    %v5361 = vunpack.c.l.b16 %v2762
    %v5362 = vunpack.c.h.b16 %v2762
    %v5363 = vunpack.c.l.b16 %v2763
    %v5364 = vunpack.c.h.b16 %v2763
    %v5365 = vunpack.c.l.b16 %v2764
    %v5366 = vunpack.c.h.b16 %v2764
    %v5367 = vunpack.c.l.b16 %v2765
    %v5368 = vunpack.c.h.b16 %v2765
    %v5369 = vunpack.c.l.b16 %v2766
    %v5370 = vunpack.c.h.b16 %v2766
    %v5371 = vunpack.c.l.b16 %v2767
    %v5372 = vunpack.c.h.b16 %v2767
    %v5373 = vunpack.c.l.b16 %v2768
    %v5374 = vunpack.c.h.b16 %v2768
    %v5375 = vunpack.c.l.b16 %v2769
    %v5376 = vunpack.c.h.b16 %v2769
    %v5377 = vunpack.c.l.b16 %v2770
    %v5378 = vunpack.c.h.b16 %v2770
    %v5379 = vunpack.c.l.b16 %v2771
    %v5380 = vunpack.c.h.b16 %v2771
    %v5381 = vunpack.c.l.b16 %v2772
    %v5382 = vunpack.c.h.b16 %v2772
    %v5383 = vunpack.c.l.b16 %v2773
    %v5384 = vunpack.c.h.b16 %v2773
    %v5385 = vunpack.c.l.b16 %v2774
    %v5386 = vunpack.c.h.b16 %v2774
    %v5387 = vunpack.c.l.b16 %v2775
    %v5388 = vunpack.c.h.b16 %v2775
    %v5389 = vunpack.c.l.b16 %v2776
    %v5390 = vunpack.c.h.b16 %v2776
    %v5391 = vunpack.c.l.b16 %v2777
    %v5392 = vunpack.c.h.b16 %v2777
    %v5393 = vunpack.c.l.b16 %v2778
    %v5394 = vunpack.c.h.b16 %v2778
    %v5395 = vunpack.c.l.b16 %v2779
    %v5396 = vunpack.c.h.b16 %v2779
    %v5397 = vunpack.c.l.b16 %v2780
    %v5398 = vunpack.c.h.b16 %v2780
    %v5399 = vunpack.c.l.b16 %v2781
    %v5400 = vunpack.c.h.b16 %v2781
    %v5401 = vunpack.c.l.b16 %v2782
    %v5402 = vunpack.c.h.b16 %v2782
    %v5403 = vunpack.c.l.b16 %v2783
    %v5404 = vunpack.c.h.b16 %v2783
    %v5405 = vunpack.c.l.b16 %v2784
    %v5406 = vunpack.c.h.b16 %v2784
    %v5407 = vunpack.c.l.b16 %v2785
    %v5408 = vunpack.c.h.b16 %v2785
    %v5409 = vunpack.c.l.b16 %v2786
    %v5410 = vunpack.c.h.b16 %v2786
    %v5411 = vunpack.c.l.b16 %v2787
    %v5412 = vunpack.c.h.b16 %v2787
    %v5413 = vunpack.c.l.b16 %v2788
    %v5414 = vunpack.c.h.b16 %v2788
    %v5415 = vunpack.c.l.b16 %v2789
    %v5416 = vunpack.c.h.b16 %v2789
    %v5417 = vunpack.c.l.b16 %v2790
    %v5418 = vunpack.c.h.b16 %v2790
    %v5419 = vunpack.c.l.b16 %v2791
    %v5420 = vunpack.c.h.b16 %v2791
    %v5421 = vunpack.c.l.b16 %v2792
    %v5422 = vunpack.c.h.b16 %v2792
    %v5423 = vunpack.c.l.b16 %v2793
    %v5424 = vunpack.c.h.b16 %v2793
    %v5425 = vunpack.c.l.b16 %v2794
    %v5426 = vunpack.c.h.b16 %v2794
    %v5427 = vunpack.c.l.b16 %v2795
    %v5428 = vunpack.c.h.b16 %v2795
    %v5429 = vunpack.c.l.b16 %v2796
    %v5430 = vunpack.c.h.b16 %v2796
    %v5431 = vunpack.c.l.b16 %v2797
    %v5432 = vunpack.c.h.b16 %v2797
    %v5433 = vunpack.c.l.b16 %v2798
    %v5434 = vunpack.c.h.b16 %v2798
    %v5435 = vunpack.c.l.b16 %v2799
    %v5436 = vunpack.c.h.b16 %v2799
    %v5437 = vunpack.c.l.b16 %v2800
    %v5438 = vunpack.c.h.b16 %v2800
    %v5439 = vunpack.c.l.b16 %v2801
    %v5440 = vunpack.c.h.b16 %v2801
    %v5441 = vunpack.c.l.b16 %v2802
    %v5442 = vunpack.c.h.b16 %v2802
    %v5443 = vunpack.c.l.b16 %v2803
    %v5444 = vunpack.c.h.b16 %v2803
    %v5445 = vunpack.c.l.b16 %v2804
    %v5446 = vunpack.c.h.b16 %v2804
    %v5447 = vunpack.c.l.b16 %v2805
    %v5448 = vunpack.c.h.b16 %v2805
    %v5449 = vunpack.c.l.b16 %v2806
    %v5450 = vunpack.c.h.b16 %v2806
    %v5451 = vunpack.c.l.b16 %v2807
    %v5452 = vunpack.c.h.b16 %v2807
    %v5453 = vunpack.c.l.b16 %v2808
    %v5454 = vunpack.c.h.b16 %v2808
    %v5455 = vunpack.c.l.b16 %v2809
    %v5456 = vunpack.c.h.b16 %v2809
    %v5457 = vunpack.c.l.b16 %v2810
    %v5458 = vunpack.c.h.b16 %v2810
    %v5459 = vunpack.c.l.b16 %v2811
    %v5460 = vunpack.c.h.b16 %v2811
    %v5461 = vunpack.c.l.b16 %v2812
    %v5462 = vunpack.c.h.b16 %v2812
    %v5463 = vunpack.c.l.b16 %v2813
    %v5464 = vunpack.c.h.b16 %v2813
    %v5465 = vunpack.c.l.b16 %v2814
    %v5466 = vunpack.c.h.b16 %v2814
    %v5467 = vunpack.c.l.b16 %v2815
    %v5468 = vunpack.c.h.b16 %v2815
    %v5469 = vunpack.c.l.b16 %v2816
    %v5470 = vunpack.c.h.b16 %v2816
    %v5471 = vunpack.c.l.b16 %v2817
    %v5472 = vunpack.c.h.b16 %v2817
    %v5473 = vunpack.c.l.b16 %v2818
    %v5474 = vunpack.c.h.b16 %v2818
    %v5475 = vunpack.c.l.b16 %v2819
    %v5476 = vunpack.c.h.b16 %v2819
    %v5477 = vunpack.c.l.b16 %v2820
    %v5478 = vunpack.c.h.b16 %v2820
    %v5479 = vunpack.c.l.b16 %v2821
    %v5480 = vunpack.c.h.b16 %v2821
    %v5481 = vunpack.c.l.b16 %v2822
    %v5482 = vunpack.c.h.b16 %v2822
    %v5483 = vunpack.c.l.b16 %v2823
    %v5484 = vunpack.c.h.b16 %v2823
    %v5485 = vunpack.c.l.b16 %v2824
    %v5486 = vunpack.c.h.b16 %v2824
    %v5487 = vunpack.c.l.b16 %v2825
    %v5488 = vunpack.c.h.b16 %v2825
    %v5489 = vunpack.c.l.b16 %v2826
    %v5490 = vunpack.c.h.b16 %v2826
    %v5491 = vunpack.c.l.b16 %v2827
    %v5492 = vunpack.c.h.b16 %v2827
    %v5493 = vunpack.c.l.b16 %v2828
    %v5494 = vunpack.c.h.b16 %v2828
    %v5495 = vunpack.c.l.b16 %v2829
    %v5496 = vunpack.c.h.b16 %v2829
    %v5497 = vunpack.c.l.b16 %v2830
    %v5498 = vunpack.c.h.b16 %v2830
    %v5499 = vunpack.c.l.b16 %v2831
    %v5500 = vunpack.c.h.b16 %v2831
    %v5501 = vunpack.c.l.b16 %v2832
    %v5502 = vunpack.c.h.b16 %v2832
    %v5503 = vunpack.c.l.b16 %v2833
    %v5504 = vunpack.c.h.b16 %v2833
    %v5505 = vunpack.c.l.b16 %v2834
    %v5506 = vunpack.c.h.b16 %v2834
    %v5507 = vunpack.c.l.b16 %v2835
    %v5508 = vunpack.c.h.b16 %v2835
    %v5509 = vunpack.c.l.b16 %v2836
    %v5510 = vunpack.c.h.b16 %v2836
    %v5511 = vunpack.c.l.b16 %v2837
    %v5512 = vunpack.c.h.b16 %v2837
    %v5513 = vunpack.c.l.b16 %v2838
    %v5514 = vunpack.c.h.b16 %v2838
    %v5515 = vunpack.c.l.b16 %v2839
    %v5516 = vunpack.c.h.b16 %v2839
    %v5517 = vunpack.c.l.b16 %v2840
    %v5518 = vunpack.c.h.b16 %v2840
    %v5519 = vunpack.c.l.b16 %v2841
    %v5520 = vunpack.c.h.b16 %v2841
    %v5521 = vunpack.c.l.b16 %v2842
    %v5522 = vunpack.c.h.b16 %v2842
    %v5523 = vunpack.c.l.b16 %v2843
    %v5524 = vunpack.c.h.b16 %v2843
    %v5525 = vunpack.c.l.b16 %v2844
    %v5526 = vunpack.c.h.b16 %v2844
    %v5527 = vunpack.c.l.b16 %v2845
    %v5528 = vunpack.c.h.b16 %v2845
    %v5529 = vunpack.c.l.b16 %v2846
    %v5530 = vunpack.c.h.b16 %v2846
    %v5531 = vunpack.c.l.b16 %v2847
    %v5532 = vunpack.c.h.b16 %v2847
    %v5533 = vunpack.c.l.b16 %v2848
    %v5534 = vunpack.c.h.b16 %v2848
    %v5535 = vunpack.c.l.b16 %v2849
    %v5536 = vunpack.c.h.b16 %v2849
    %v5537 = vunpack.c.l.b16 %v2850
    %v5538 = vunpack.c.h.b16 %v2850
    %v5539 = vunpack.c.l.b16 %v2851
    %v5540 = vunpack.c.h.b16 %v2851
    %v5541 = vunpack.c.l.b16 %v2852
    %v5542 = vunpack.c.h.b16 %v2852
    %v5543 = vunpack.c.l.b16 %v2853
    %v5544 = vunpack.c.h.b16 %v2853
    %v5545 = vunpack.c.l.b16 %v2854
    %v5546 = vunpack.c.h.b16 %v2854
    %v5547 = vunpack.c.l.b16 %v2855
    %v5548 = vunpack.c.h.b16 %v2855
    %v5549 = vunpack.c.l.b16 %v2856
    %v5550 = vunpack.c.h.b16 %v2856
    %v5551 = vunpack.c.l.b16 %v2857
    %v5552 = vunpack.c.h.b16 %v2857
    %v5553 = vunpack.c.l.b16 %v2858
    %v5554 = vunpack.c.h.b16 %v2858
    %v5555 = vunpack.c.l.b16 %v2859
    %v5556 = vunpack.c.h.b16 %v2859
    %v5557 = vunpack.c.l.b16 %v2860
    %v5558 = vunpack.c.h.b16 %v2860
    %v5559 = vunpack.c.l.b16 %v2861
    %v5560 = vunpack.c.h.b16 %v2861
    %v5561 = vunpack.c.l.b16 %v2862
    %v5562 = vunpack.c.h.b16 %v2862
    %v5563 = vunpack.c.l.b16 %v2863
    %v5564 = vunpack.c.h.b16 %v2863
    %v5565 = vunpack.c.l.b16 %v2864
    %v5566 = vunpack.c.h.b16 %v2864
    %v5567 = vunpack.c.l.b16 %v2865
    %v5568 = vunpack.c.h.b16 %v2865
    %v5569 = vunpack.c.l.b16 %v2866
    %v5570 = vunpack.c.h.b16 %v2866
    %v5571 = vunpack.c.l.b16 %v2867
    %v5572 = vunpack.c.h.b16 %v2867
    %v5573 = vunpack.c.l.b16 %v2868
    %v5574 = vunpack.c.h.b16 %v2868
    %v5575 = vunpack.c.l.b16 %v2869
    %v5576 = vunpack.c.h.b16 %v2869
    %v5577 = vunpack.c.l.b16 %v2870
    %v5578 = vunpack.c.h.b16 %v2870
    %v5579 = vunpack.c.l.b16 %v2871
    %v5580 = vunpack.c.h.b16 %v2871
    %v5581 = vunpack.c.l.b16 %v2872
    %v5582 = vunpack.c.h.b16 %v2872
    %v5583 = vunpack.c.l.b16 %v2873
    %v5584 = vunpack.c.h.b16 %v2873
    %v5585 = vunpack.c.l.b16 %v2874
    %v5586 = vunpack.c.h.b16 %v2874
    %v5587 = vunpack.c.l.b16 %v2875
    %v5588 = vunpack.c.h.b16 %v2875
    %v5589 = vunpack.c.l.b16 %v2876
    %v5590 = vunpack.c.h.b16 %v2876
    %v5591 = vunpack.c.l.b16 %v2877
    %v5592 = vunpack.c.h.b16 %v2877
    %v5593 = vunpack.c.l.b16 %v2878
    %v5594 = vunpack.c.h.b16 %v2878
    %v5595 = vunpack.c.l.b16 %v2879
    %v5596 = vunpack.c.h.b16 %v2879
    %v5597 = vunpack.c.l.b16 %v2880
    %v5598 = vunpack.c.h.b16 %v2880
    %v5599 = vunpack.c.l.b16 %v2881
    %v5600 = vunpack.c.h.b16 %v2881
    %v5601 = vunpack.c.l.b16 %v2882
    %v5602 = vunpack.c.h.b16 %v2882
    %v5603 = vunpack.c.l.b16 %v2883
    %v5604 = vunpack.c.h.b16 %v2883
    %v5605 = vunpack.c.l.b16 %v2884
    %v5606 = vunpack.c.h.b16 %v2884
    %v5607 = vunpack.c.l.b16 %v2885
    %v5608 = vunpack.c.h.b16 %v2885
    %v5609 = vunpack.c.l.b16 %v2886
    %v5610 = vunpack.c.h.b16 %v2886
    %v5611 = vunpack.c.l.b16 %v2887
    %v5612 = vunpack.c.h.b16 %v2887
    %v5613 = vunpack.c.l.b16 %v2888
    %v5614 = vunpack.c.h.b16 %v2888
    %v5615 = vunpack.c.l.b16 %v2889
    %v5616 = vunpack.c.h.b16 %v2889
    %v5617 = vunpack.c.l.b16 %v2890
    %v5618 = vunpack.c.h.b16 %v2890
    %v5619 = vunpack.c.l.b16 %v2891
    %v5620 = vunpack.c.h.b16 %v2891
    %v5621 = vunpack.c.l.b16 %v2892
    %v5622 = vunpack.c.h.b16 %v2892
    %v5623 = vunpack.c.l.b16 %v2893
    %v5624 = vunpack.c.h.b16 %v2893
    %v5625 = vunpack.c.l.b16 %v2894
    %v5626 = vunpack.c.h.b16 %v2894
    %v5627 = vunpack.c.l.b16 %v2895
    %v5628 = vunpack.c.h.b16 %v2895
    %v5629 = vunpack.c.l.b16 %v2896
    %v5630 = vunpack.c.h.b16 %v2896
    %v5631 = vunpack.c.l.b16 %v2897
    %v5632 = vunpack.c.h.b16 %v2897
    %v5633 = vunpack.c.l.b16 %v2898
    %v5634 = vunpack.c.h.b16 %v2898
    %v5635 = vunpack.c.l.b16 %v2899
    %v5636 = vunpack.c.h.b16 %v2899
    %v5637 = vunpack.c.l.b16 %v2900
    %v5638 = vunpack.c.h.b16 %v2900
    %v5639 = vunpack.c.l.b16 %v2901
    %v5640 = vunpack.c.h.b16 %v2901
    %v5641 = vunpack.c.l.b16 %v2902
    %v5642 = vunpack.c.h.b16 %v2902
    %v5643 = vunpack.c.l.b16 %v2903
    %v5644 = vunpack.c.h.b16 %v2903
    %v5645 = vunpack.c.l.b16 %v2904
    %v5646 = vunpack.c.h.b16 %v2904
    %v5647 = vunpack.c.l.b16 %v2905
    %v5648 = vunpack.c.h.b16 %v2905
    %v5649 = vunpack.c.l.b16 %v2906
    %v5650 = vunpack.c.h.b16 %v2906
    %v5651 = vunpack.c.l.b16 %v2907
    %v5652 = vunpack.c.h.b16 %v2907
    %v5653 = vunpack.c.l.b16 %v2908
    %v5654 = vunpack.c.h.b16 %v2908
    %v5655 = vunpack.c.l.b16 %v2909
    %v5656 = vunpack.c.h.b16 %v2909
    %v5657 = vunpack.c.l.b16 %v2910
    %v5658 = vunpack.c.h.b16 %v2910
    %v5659 = vunpack.c.l.b16 %v2911
    %v5660 = vunpack.c.h.b16 %v2911
    %v5661 = vunpack.c.l.b16 %v2912
    %v5662 = vunpack.c.h.b16 %v2912
    %v5663 = vunpack.c.l.b16 %v2913
    %v5664 = vunpack.c.h.b16 %v2913
    %v5665 = vunpack.c.l.b16 %v2914
    %v5666 = vunpack.c.h.b16 %v2914
    %v5667 = vunpack.c.l.b16 %v2915
    %v5668 = vunpack.c.h.b16 %v2915
    %v5669 = vunpack.c.l.b16 %v2916
    %v5670 = vunpack.c.h.b16 %v2916
    %v5671 = vunpack.c.l.b16 %v2917
    %v5672 = vunpack.c.h.b16 %v2917
    %v5673 = vunpack.c.l.b16 %v2918
    %v5674 = vunpack.c.h.b16 %v2918
    %v5675 = vunpack.c.l.b16 %v2919
    %v5676 = vunpack.c.h.b16 %v2919
    %v5677 = vunpack.c.l.b16 %v2920
    %v5678 = vunpack.c.h.b16 %v2920
    %v5679 = vunpack.c.l.b16 %v2921
    %v5680 = vunpack.c.h.b16 %v2921
    %v5681 = vunpack.c.l.b16 %v2922
    %v5682 = vunpack.c.h.b16 %v2922
    %v5683 = vunpack.c.l.b16 %v2923
    %v5684 = vunpack.c.h.b16 %v2923
    %v5685 = vunpack.c.l.b16 %v2924
    %v5686 = vunpack.c.h.b16 %v2924
    %v5687 = vunpack.c.l.b16 %v2925
    %v5688 = vunpack.c.h.b16 %v2925
    %v5689 = vunpack.c.l.b16 %v2926
    %v5690 = vunpack.c.h.b16 %v2926
    %v5691 = vunpack.c.l.b16 %v2927
    %v5692 = vunpack.c.h.b16 %v2927
    %v5693 = vunpack.c.l.b16 %v2928
    %v5694 = vunpack.c.h.b16 %v2928
    %v5695 = vunpack.c.l.b16 %v2929
    %v5696 = vunpack.c.h.b16 %v2929
    %v5697 = vunpack.c.l.b16 %v2930
    %v5698 = vunpack.c.h.b16 %v2930
    %v5699 = vunpack.c.l.b16 %v2931
    %v5700 = vunpack.c.h.b16 %v2931
    %v5701 = vunpack.c.l.b16 %v2932
    %v5702 = vunpack.c.h.b16 %v2932
    %v5703 = vpack.c.b16 %v5199, %v5191
    %v5704 = vpack.c.b16 %v5200, %v5192
    %v5705 = vpack.c.b16 %v5201, %v5193
    %v5706 = vpack.c.b16 %v5202, %v5194
    %v5707 = vpack.c.b16 %v5203, %v5195
    %v5708 = vpack.c.b16 %v5204, %v5196
    %v5709 = vpack.c.b16 %v5205, %v5197
    %v5710 = vpack.c.b16 %v5206, %v5198
    %v5711 = vpack.c.b16 %v5215, %v5207
    %v5712 = vpack.c.b16 %v5216, %v5208
    %v5713 = vpack.c.b16 %v5217, %v5209
    %v5714 = vpack.c.b16 %v5218, %v5210
    %v5715 = vpack.c.b16 %v5219, %v5211
    %v5716 = vpack.c.b16 %v5220, %v5212
    %v5717 = vpack.c.b16 %v5221, %v5213
    %v5718 = vpack.c.b16 %v5222, %v5214
    %v5719 = vpack.c.b16 %v5231, %v5223
    %v5720 = vpack.c.b16 %v5232, %v5224
    %v5721 = vpack.c.b16 %v5233, %v5225
    %v5722 = vpack.c.b16 %v5234, %v5226
    %v5723 = vpack.c.b16 %v5235, %v5227
    %v5724 = vpack.c.b16 %v5236, %v5228
    %v5725 = vpack.c.b16 %v5237, %v5229
    %v5726 = vpack.c.b16 %v5238, %v5230
    %v5727 = vpack.c.b16 %v5247, %v5239
    %v5728 = vpack.c.b16 %v5248, %v5240
    %v5729 = vpack.c.b16 %v5249, %v5241
    %v5730 = vpack.c.b16 %v5250, %v5242
    %v5731 = vpack.c.b16 %v5251, %v5243
    %v5732 = vpack.c.b16 %v5252, %v5244
    %v5733 = vpack.c.b16 %v5253, %v5245
    %v5734 = vpack.c.b16 %v5254, %v5246
    %v5735 = vpack.c.b16 %v5263, %v5255
    %v5736 = vpack.c.b16 %v5264, %v5256
    %v5737 = vpack.c.b16 %v5265, %v5257
    %v5738 = vpack.c.b16 %v5266, %v5258
    %v5739 = vpack.c.b16 %v5267, %v5259
    %v5740 = vpack.c.b16 %v5268, %v5260
    %v5741 = vpack.c.b16 %v5269, %v5261
    %v5742 = vpack.c.b16 %v5270, %v5262
    %v5743 = vpack.c.b16 %v5279, %v5271
    %v5744 = vpack.c.b16 %v5280, %v5272
    %v5745 = vpack.c.b16 %v5281, %v5273
    %v5746 = vpack.c.b16 %v5282, %v5274
    %v5747 = vpack.c.b16 %v5283, %v5275
    %v5748 = vpack.c.b16 %v5284, %v5276
    %v5749 = vpack.c.b16 %v5285, %v5277
    %v5750 = vpack.c.b16 %v5286, %v5278
    %v5751 = vpack.c.b16 %v5295, %v5287
    %v5752 = vpack.c.b16 %v5296, %v5288
    %v5753 = vpack.c.b16 %v5297, %v5289
    %v5754 = vpack.c.b16 %v5298, %v5290
    %v5755 = vpack.c.b16 %v5299, %v5291
    %v5756 = vpack.c.b16 %v5300, %v5292
    %v5757 = vpack.c.b16 %v5301, %v5293
    %v5758 = vpack.c.b16 %v5302, %v5294
    %v5759 = vpack.c.b16 %v5311, %v5303
    %v5760 = vpack.c.b16 %v5312, %v5304
    %v5761 = vpack.c.b16 %v5313, %v5305
    %v5762 = vpack.c.b16 %v5314, %v5306
    %v5763 = vpack.c.b16 %v5315, %v5307
    %v5764 = vpack.c.b16 %v5316, %v5308
    %v5765 = vpack.c.b16 %v5317, %v5309
    %v5766 = vpack.c.b16 %v5318, %v5310
    %v5767 = vpack.c.b16 %v5327, %v5319
    %v5768 = vpack.c.b16 %v5328, %v5320
    %v5769 = vpack.c.b16 %v5329, %v5321
    %v5770 = vpack.c.b16 %v5330, %v5322
    %v5771 = vpack.c.b16 %v5331, %v5323
    %v5772 = vpack.c.b16 %v5332, %v5324
    %v5773 = vpack.c.b16 %v5333, %v5325
    %v5774 = vpack.c.b16 %v5334, %v5326
    %v5775 = vpack.c.b16 %v5343, %v5335
    %v5776 = vpack.c.b16 %v5344, %v5336
    %v5777 = vpack.c.b16 %v5345, %v5337
    %v5778 = vpack.c.b16 %v5346, %v5338
    %v5779 = vpack.c.b16 %v5347, %v5339
    %v5780 = vpack.c.b16 %v5348, %v5340
    %v5781 = vpack.c.b16 %v5349, %v5341
    %v5782 = vpack.c.b16 %v5350, %v5342
    %v5783 = vpack.c.b16 %v5359, %v5351
    %v5784 = vpack.c.b16 %v5360, %v5352
    %v5785 = vpack.c.b16 %v5361, %v5353
    %v5786 = vpack.c.b16 %v5362, %v5354
    %v5787 = vpack.c.b16 %v5363, %v5355
    %v5788 = vpack.c.b16 %v5364, %v5356
    %v5789 = vpack.c.b16 %v5365, %v5357
    %v5790 = vpack.c.b16 %v5366, %v5358
    %v5791 = vpack.c.b16 %v5375, %v5367
    %v5792 = vpack.c.b16 %v5376, %v5368
    %v5793 = vpack.c.b16 %v5377, %v5369
    %v5794 = vpack.c.b16 %v5378, %v5370
    %v5795 = vpack.c.b16 %v5379, %v5371
    %v5796 = vpack.c.b16 %v5380, %v5372
    %v5797 = vpack.c.b16 %v5381, %v5373
    %v5798 = vpack.c.b16 %v5382, %v5374
    %v5799 = vpack.c.b16 %v5391, %v5383
    %v5800 = vpack.c.b16 %v5392, %v5384
    %v5801 = vpack.c.b16 %v5393, %v5385
    %v5802 = vpack.c.b16 %v5394, %v5386
    %v5803 = vpack.c.b16 %v5395, %v5387
    %v5804 = vpack.c.b16 %v5396, %v5388
    %v5805 = vpack.c.b16 %v5397, %v5389
    %v5806 = vpack.c.b16 %v5398, %v5390
    %v5807 = vpack.c.b16 %v5407, %v5399
    %v5808 = vpack.c.b16 %v5408, %v5400
    %v5809 = vpack.c.b16 %v5409, %v5401
    %v5810 = vpack.c.b16 %v5410, %v5402
    %v5811 = vpack.c.b16 %v5411, %v5403
    %v5812 = vpack.c.b16 %v5412, %v5404
    %v5813 = vpack.c.b16 %v5413, %v5405
    %v5814 = vpack.c.b16 %v5414, %v5406
    %v5815 = vpack.c.b16 %v5423, %v5415
    %v5816 = vpack.c.b16 %v5424, %v5416
    %v5817 = vpack.c.b16 %v5425, %v5417
    %v5818 = vpack.c.b16 %v5426, %v5418
    %v5819 = vpack.c.b16 %v5427, %v5419
    %v5820 = vpack.c.b16 %v5428, %v5420
    %v5821 = vpack.c.b16 %v5429, %v5421
    %v5822 = vpack.c.b16 %v5430, %v5422
    %v5823 = vpack.c.b16 %v5439, %v5431
    %v5824 = vpack.c.b16 %v5440, %v5432
    %v5825 = vpack.c.b16 %v5441, %v5433
    %v5826 = vpack.c.b16 %v5442, %v5434
    %v5827 = vpack.c.b16 %v5443, %v5435
    %v5828 = vpack.c.b16 %v5444, %v5436
    %v5829 = vpack.c.b16 %v5445, %v5437
    %v5830 = vpack.c.b16 %v5446, %v5438
    %v5831 = vpack.c.b16 %v5455, %v5447
    %v5832 = vpack.c.b16 %v5456, %v5448
    %v5833 = vpack.c.b16 %v5457, %v5449
    %v5834 = vpack.c.b16 %v5458, %v5450
    %v5835 = vpack.c.b16 %v5459, %v5451
    %v5836 = vpack.c.b16 %v5460, %v5452
    %v5837 = vpack.c.b16 %v5461, %v5453
    %v5838 = vpack.c.b16 %v5462, %v5454
    %v5839 = vpack.c.b16 %v5471, %v5463
    %v5840 = vpack.c.b16 %v5472, %v5464
    %v5841 = vpack.c.b16 %v5473, %v5465
    %v5842 = vpack.c.b16 %v5474, %v5466
    %v5843 = vpack.c.b16 %v5475, %v5467
    %v5844 = vpack.c.b16 %v5476, %v5468
    %v5845 = vpack.c.b16 %v5477, %v5469
    %v5846 = vpack.c.b16 %v5478, %v5470
    %v5847 = vpack.c.b16 %v5487, %v5479
    %v5848 = vpack.c.b16 %v5488, %v5480
    %v5849 = vpack.c.b16 %v5489, %v5481
    %v5850 = vpack.c.b16 %v5490, %v5482
    %v5851 = vpack.c.b16 %v5491, %v5483
    %v5852 = vpack.c.b16 %v5492, %v5484
    %v5853 = vpack.c.b16 %v5493, %v5485
    %v5854 = vpack.c.b16 %v5494, %v5486
    %v5855 = vpack.c.b16 %v5503, %v5495
    %v5856 = vpack.c.b16 %v5504, %v5496
    %v5857 = vpack.c.b16 %v5505, %v5497
    %v5858 = vpack.c.b16 %v5506, %v5498
    %v5859 = vpack.c.b16 %v5507, %v5499
    %v5860 = vpack.c.b16 %v5508, %v5500
    %v5861 = vpack.c.b16 %v5509, %v5501
    %v5862 = vpack.c.b16 %v5510, %v5502
    %v5863 = vpack.c.b16 %v5519, %v5511
    %v5864 = vpack.c.b16 %v5520, %v5512
    %v5865 = vpack.c.b16 %v5521, %v5513
    %v5866 = vpack.c.b16 %v5522, %v5514
    %v5867 = vpack.c.b16 %v5523, %v5515
    %v5868 = vpack.c.b16 %v5524, %v5516
    %v5869 = vpack.c.b16 %v5525, %v5517
    %v5870 = vpack.c.b16 %v5526, %v5518
    %v5871 = vpack.c.b16 %v5535, %v5527
    %v5872 = vpack.c.b16 %v5536, %v5528
    %v5873 = vpack.c.b16 %v5537, %v5529
    %v5874 = vpack.c.b16 %v5538, %v5530
    %v5875 = vpack.c.b16 %v5539, %v5531
    %v5876 = vpack.c.b16 %v5540, %v5532
    %v5877 = vpack.c.b16 %v5541, %v5533
    %v5878 = vpack.c.b16 %v5542, %v5534
    %v5879 = vpack.c.b16 %v5551, %v5543
    %v5880 = vpack.c.b16 %v5552, %v5544
    %v5881 = vpack.c.b16 %v5553, %v5545
    %v5882 = vpack.c.b16 %v5554, %v5546
    %v5883 = vpack.c.b16 %v5555, %v5547
    %v5884 = vpack.c.b16 %v5556, %v5548
    %v5885 = vpack.c.b16 %v5557, %v5549
    %v5886 = vpack.c.b16 %v5558, %v5550
    %v5887 = vpack.c.b16 %v5567, %v5559
    %v5888 = vpack.c.b16 %v5568, %v5560
    %v5889 = vpack.c.b16 %v5569, %v5561
    %v5890 = vpack.c.b16 %v5570, %v5562
    %v5891 = vpack.c.b16 %v5571, %v5563
    %v5892 = vpack.c.b16 %v5572, %v5564
    %v5893 = vpack.c.b16 %v5573, %v5565
    %v5894 = vpack.c.b16 %v5574, %v5566
    %v5895 = vpack.c.b16 %v5583, %v5575
    %v5896 = vpack.c.b16 %v5584, %v5576
    %v5897 = vpack.c.b16 %v5585, %v5577
    %v5898 = vpack.c.b16 %v5586, %v5578
    %v5899 = vpack.c.b16 %v5587, %v5579
    %v5900 = vpack.c.b16 %v5588, %v5580
    %v5901 = vpack.c.b16 %v5589, %v5581
    %v5902 = vpack.c.b16 %v5590, %v5582
    %v5903 = vpack.c.b16 %v5599, %v5591
    %v5904 = vpack.c.b16 %v5600, %v5592
    %v5905 = vpack.c.b16 %v5601, %v5593
    %v5906 = vpack.c.b16 %v5602, %v5594
    %v5907 = vpack.c.b16 %v5603, %v5595
    %v5908 = vpack.c.b16 %v5604, %v5596
    %v5909 = vpack.c.b16 %v5605, %v5597
    %v5910 = vpack.c.b16 %v5606, %v5598
    %v5911 = vpack.c.b16 %v5615, %v5607
    %v5912 = vpack.c.b16 %v5616, %v5608
    %v5913 = vpack.c.b16 %v5617, %v5609
    %v5914 = vpack.c.b16 %v5618, %v5610
    %v5915 = vpack.c.b16 %v5619, %v5611
    %v5916 = vpack.c.b16 %v5620, %v5612
    %v5917 = vpack.c.b16 %v5621, %v5613
    %v5918 = vpack.c.b16 %v5622, %v5614
    %v5919 = vpack.c.b16 %v5631, %v5623
    %v5920 = vpack.c.b16 %v5632, %v5624
    %v5921 = vpack.c.b16 %v5633, %v5625
    %v5922 = vpack.c.b16 %v5634, %v5626
    %v5923 = vpack.c.b16 %v5635, %v5627
    %v5924 = vpack.c.b16 %v5636, %v5628
    %v5925 = vpack.c.b16 %v5637, %v5629
    %v5926 = vpack.c.b16 %v5638, %v5630
    %v5927 = vpack.c.b16 %v5647, %v5639
    %v5928 = vpack.c.b16 %v5648, %v5640
    %v5929 = vpack.c.b16 %v5649, %v5641
    %v5930 = vpack.c.b16 %v5650, %v5642
    %v5931 = vpack.c.b16 %v5651, %v5643
    %v5932 = vpack.c.b16 %v5652, %v5644
    %v5933 = vpack.c.b16 %v5653, %v5645
    %v5934 = vpack.c.b16 %v5654, %v5646
    %v5935 = vpack.c.b16 %v5663, %v5655
    %v5936 = vpack.c.b16 %v5664, %v5656
    %v5937 = vpack.c.b16 %v5665, %v5657
    %v5938 = vpack.c.b16 %v5666, %v5658
    %v5939 = vpack.c.b16 %v5667, %v5659
    %v5940 = vpack.c.b16 %v5668, %v5660
    %v5941 = vpack.c.b16 %v5669, %v5661
    %v5942 = vpack.c.b16 %v5670, %v5662
    %v5943 = vpack.c.b16 %v5679, %v5671
    %v5944 = vpack.c.b16 %v5680, %v5672
    %v5945 = vpack.c.b16 %v5681, %v5673
    %v5946 = vpack.c.b16 %v5682, %v5674
    %v5947 = vpack.c.b16 %v5683, %v5675
    %v5948 = vpack.c.b16 %v5684, %v5676
    %v5949 = vpack.c.b16 %v5685, %v5677
    %v5950 = vpack.c.b16 %v5686, %v5678
    %v5951 = vpack.c.b16 %v5695, %v5687
    %v5952 = vpack.c.b16 %v5696, %v5688
    %v5953 = vpack.c.b16 %v5697, %v5689
    %v5954 = vpack.c.b16 %v5698, %v5690
    %v5955 = vpack.c.b16 %v5699, %v5691
    %v5956 = vpack.c.b16 %v5700, %v5692
    %v5957 = vpack.c.b16 %v5701, %v5693
    %v5958 = vpack.c.b16 %v5702, %v5694
    %6215 = vmatprep.subr.bf16.mxu0 %v5704
    %6216 = vmatpush1.bf16.msra.mxu0 %v5703
    %6217 = vmatprep.subr.bf16.mxu0 %v5712
    %6218 = vmatpush1.bf16.msra.mxu0 %v5711
    %6219 = vmatprep.subr.bf16.mxu0 %v5720
    %6220 = vmatpush1.bf16.msra.mxu0 %v5719
    %6221 = vmatprep.subr.bf16.mxu0 %v5728
    %6222 = vmatpush1.bf16.msra.mxu0 %v5727
    %6223 = vmatprep.subr.bf16.mxu0 %v5736
    %6224 = vmatpush1.bf16.msra.mxu0 %v5735
    %6225 = vmatprep.subr.bf16.mxu0 %v5744
    %6226 = vmatpush1.bf16.msra.mxu0 %v5743
    %6227 = vmatprep.subr.bf16.mxu0 %v5752
    %6228 = vmatpush1.bf16.msra.mxu0 %v5751
    %6229 = vmatprep.subr.bf16.mxu0 %v5760
    %6230 = vmatpush1.bf16.msra.mxu0 %v5759
    %6231 = vmatprep.subr.bf16.mxu0 %v5768
    %6232 = vmatpush1.bf16.msra.mxu0 %v5767
    %6233 = vmatprep.subr.bf16.mxu0 %v5776
    %6234 = vmatpush1.bf16.msra.mxu0 %v5775
    %6235 = vmatprep.subr.bf16.mxu0 %v5784
    %6236 = vmatpush1.bf16.msra.mxu0 %v5783
    %6237 = vmatprep.subr.bf16.mxu0 %v5792
    %6238 = vmatpush1.bf16.msra.mxu0 %v5791
    %6239 = vmatprep.subr.bf16.mxu0 %v5800
    %6240 = vmatpush1.bf16.msra.mxu0 %v5799
    %6241 = vmatprep.subr.bf16.mxu0 %v5808
    %6242 = vmatpush1.bf16.msra.mxu0 %v5807
    %6243 = vmatprep.subr.bf16.mxu0 %v5816
    %6244 = vmatpush1.bf16.msra.mxu0 %v5815
    %6245 = vmatprep.subr.bf16.mxu0 %v5824
    %6246 = vmatpush1.bf16.msra.mxu0 %v5823
    %6247 = vmatprep.mubr.bf16.mxu0 %v2666
    %6248 = vmatmul.mubr.bf16.gmra.mrb[0].mxu0 %v2665
    %v6249 = vpop.f32.mrb[0].mxu0
    %v6250 = vadd.f32 %v4599, %v6249
    %v6251 = vpop.f32.mrb[0].mxu0
    %v6252 = vadd.f32 %v4601, %v6251
    %v6253 = vpop.f32.mrb[0].mxu0
    %v6254 = vadd.f32 %v4603, %v6253
    %v6255 = vpop.f32.mrb[0].mxu0
    %v6256 = vadd.f32 %v4605, %v6255
    %6257 = vmatprep.mubr.bf16.mxu0 %v2670
    %6258 = vmatmul.mubr.bf16.gmra.mrb[0].mxu0 %v2669
    %v6259 = vpop.f32.mrb[0].mxu0
    %v6260 = vadd.f32 %v4609, %v6259
    %v6261 = vpop.f32.mrb[0].mxu0
    %v6262 = vadd.f32 %v4611, %v6261
    %v6263 = vpop.f32.mrb[0].mxu0
    %v6264 = vadd.f32 %v4613, %v6263
    %v6265 = vpop.f32.mrb[0].mxu0
    %v6266 = vadd.f32 %v4615, %v6265
    %6267 = vdwg.mxu0
    %6268 = vmatprep.subr.bf16.mxu0 %v5832
    %6269 = vmatpush1.bf16.msra.mxu0 %v5831
    %6270 = vmatprep.subr.bf16.mxu0 %v5840
    %6271 = vmatpush1.bf16.msra.mxu0 %v5839
    %6272 = vmatprep.subr.bf16.mxu0 %v5848
    %6273 = vmatpush1.bf16.msra.mxu0 %v5847
    %6274 = vmatprep.subr.bf16.mxu0 %v5856
    %6275 = vmatpush1.bf16.msra.mxu0 %v5855
    %6276 = vmatprep.subr.bf16.mxu0 %v5864
    %6277 = vmatpush1.bf16.msra.mxu0 %v5863
    %6278 = vmatprep.subr.bf16.mxu0 %v5872
    %6279 = vmatpush1.bf16.msra.mxu0 %v5871
    %6280 = vmatprep.subr.bf16.mxu0 %v5880
    %6281 = vmatpush1.bf16.msra.mxu0 %v5879
    %6282 = vmatprep.subr.bf16.mxu0 %v5888
    %6283 = vmatpush1.bf16.msra.mxu0 %v5887
    %6284 = vmatprep.subr.bf16.mxu0 %v5896
    %6285 = vmatpush1.bf16.msra.mxu0 %v5895
    %6286 = vmatprep.subr.bf16.mxu0 %v5904
    %6287 = vmatpush1.bf16.msra.mxu0 %v5903
    %6288 = vmatprep.subr.bf16.mxu0 %v5912
    %6289 = vmatpush1.bf16.msra.mxu0 %v5911
    %6290 = vmatprep.subr.bf16.mxu0 %v5920
    %6291 = vmatpush1.bf16.msra.mxu0 %v5919
    %6292 = vmatprep.subr.bf16.mxu0 %v5928
    %6293 = vmatpush1.bf16.msra.mxu0 %v5927
    %6294 = vmatprep.subr.bf16.mxu0 %v5936
    %6295 = vmatpush1.bf16.msra.mxu0 %v5935
    %6296 = vmatprep.subr.bf16.mxu0 %v5944
    %6297 = vmatpush1.bf16.msra.mxu0 %v5943
    %6298 = vmatprep.subr.bf16.mxu0 %v5952
    %6299 = vmatpush1.bf16.msra.mxu0 %v5951
    %6300 = vmatprep.mubr.bf16.mxu0 %v2668
    %6301 = vmatmul.mubr.bf16.gmra.mrb[0].mxu0 %v2667
    %v6302 = vpop.f32.mrb[0].mxu0
    %v6303 = vadd.f32 %v6250, %v6302
    %v6304 = vpop.f32.mrb[0].mxu0
    %v6305 = vadd.f32 %v6252, %v6304
    %v6306 = vpop.f32.mrb[0].mxu0
    %v6307 = vadd.f32 %v6254, %v6306
    %v6308 = vpop.f32.mrb[0].mxu0
    %v6309 = vadd.f32 %v6256, %v6308
    %6310 = vmatprep.mubr.bf16.mxu0 %v2672
    %6311 = vmatmul.mubr.bf16.gmra.mrb[0].mxu0 %v2671
    %v6312 = vpop.f32.mrb[0].mxu0
    %v6313 = vadd.f32 %v6260, %v6312
    %v6314 = vpop.f32.mrb[0].mxu0
    %v6315 = vadd.f32 %v6262, %v6314
    %v6316 = vpop.f32.mrb[0].mxu0
    %v6317 = vadd.f32 %v6264, %v6316
    %v6318 = vpop.f32.mrb[0].mxu0
    %v6319 = vadd.f32 %v6266, %v6318
    %6320 = vdwg.mxu0
    %6321 = vmatprep.subr.bf16.mxu0 %v5706
    %6322 = vmatpush1.bf16.msra.mxu0 %v5705
    %6323 = vmatprep.subr.bf16.mxu0 %v5714
    %6324 = vmatpush1.bf16.msra.mxu0 %v5713
    %6325 = vmatprep.subr.bf16.mxu0 %v5722
    %6326 = vmatpush1.bf16.msra.mxu0 %v5721
    %6327 = vmatprep.subr.bf16.mxu0 %v5730
    %6328 = vmatpush1.bf16.msra.mxu0 %v5729
    %6329 = vmatprep.subr.bf16.mxu0 %v5738
    %6330 = vmatpush1.bf16.msra.mxu0 %v5737
    %6331 = vmatprep.subr.bf16.mxu0 %v5746
    %6332 = vmatpush1.bf16.msra.mxu0 %v5745
    %6333 = vmatprep.subr.bf16.mxu0 %v5754
    %6334 = vmatpush1.bf16.msra.mxu0 %v5753
    %6335 = vmatprep.subr.bf16.mxu0 %v5762
    %6336 = vmatpush1.bf16.msra.mxu0 %v5761
    %6337 = vmatprep.subr.bf16.mxu0 %v5770
    %6338 = vmatpush1.bf16.msra.mxu0 %v5769
    %6339 = vmatprep.subr.bf16.mxu0 %v5778
    %6340 = vmatpush1.bf16.msra.mxu0 %v5777
    %6341 = vmatprep.subr.bf16.mxu0 %v5786
    %6342 = vmatpush1.bf16.msra.mxu0 %v5785
    %6343 = vmatprep.subr.bf16.mxu0 %v5794
    %6344 = vmatpush1.bf16.msra.mxu0 %v5793
    %6345 = vmatprep.subr.bf16.mxu0 %v5802
    %6346 = vmatpush1.bf16.msra.mxu0 %v5801
    %6347 = vmatprep.subr.bf16.mxu0 %v5810
    %6348 = vmatpush1.bf16.msra.mxu0 %v5809
    %6349 = vmatprep.subr.bf16.mxu0 %v5818
    %6350 = vmatpush1.bf16.msra.mxu0 %v5817
    %6351 = vmatprep.subr.bf16.mxu0 %v5826
    %6352 = vmatpush1.bf16.msra.mxu0 %v5825
    %6353 = vmatprep.mubr.bf16.mxu0 %v2666
    %6354 = vmatmul.mubr.bf16.gmra.mrb[0].mxu0 %v2665
    %v6355 = vpop.f32.mrb[0].mxu0
    %v6356 = vadd.f32 %v4705, %v6355
    %v6357 = vpop.f32.mrb[0].mxu0
    %v6358 = vadd.f32 %v4707, %v6357
    %v6359 = vpop.f32.mrb[0].mxu0
    %v6360 = vadd.f32 %v4709, %v6359
    %v6361 = vpop.f32.mrb[0].mxu0
    %v6362 = vadd.f32 %v4711, %v6361
    %6363 = vmatprep.mubr.bf16.mxu0 %v2670
    %6364 = vmatmul.mubr.bf16.gmra.mrb[0].mxu0 %v2669
    %v6365 = vpop.f32.mrb[0].mxu0
    %v6366 = vadd.f32 %v4715, %v6365
    %v6367 = vpop.f32.mrb[0].mxu0
    %v6368 = vadd.f32 %v4717, %v6367
    %v6369 = vpop.f32.mrb[0].mxu0
    %v6370 = vadd.f32 %v4719, %v6369
    %v6371 = vpop.f32.mrb[0].mxu0
    %v6372 = vadd.f32 %v4721, %v6371
    %6373 = vdwg.mxu0
    %6374 = vmatprep.subr.bf16.mxu0 %v5834
    %6375 = vmatpush1.bf16.msra.mxu0 %v5833
    %6376 = vmatprep.subr.bf16.mxu0 %v5842
    %6377 = vmatpush1.bf16.msra.mxu0 %v5841
    %6378 = vmatprep.subr.bf16.mxu0 %v5850
    %6379 = vmatpush1.bf16.msra.mxu0 %v5849
    %6380 = vmatprep.subr.bf16.mxu0 %v5858
    %6381 = vmatpush1.bf16.msra.mxu0 %v5857
    %6382 = vmatprep.subr.bf16.mxu0 %v5866
    %6383 = vmatpush1.bf16.msra.mxu0 %v5865
    %6384 = vmatprep.subr.bf16.mxu0 %v5874
    %6385 = vmatpush1.bf16.msra.mxu0 %v5873
    %6386 = vmatprep.subr.bf16.mxu0 %v5882
    %6387 = vmatpush1.bf16.msra.mxu0 %v5881
    %6388 = vmatprep.subr.bf16.mxu0 %v5890
    %6389 = vmatpush1.bf16.msra.mxu0 %v5889
    %6390 = vmatprep.subr.bf16.mxu0 %v5898
    %6391 = vmatpush1.bf16.msra.mxu0 %v5897
    %6392 = vmatprep.subr.bf16.mxu0 %v5906
    %6393 = vmatpush1.bf16.msra.mxu0 %v5905
    %6394 = vmatprep.subr.bf16.mxu0 %v5914
    %6395 = vmatpush1.bf16.msra.mxu0 %v5913
    %6396 = vmatprep.subr.bf16.mxu0 %v5922
    %6397 = vmatpush1.bf16.msra.mxu0 %v5921
    %6398 = vmatprep.subr.bf16.mxu0 %v5930
    %6399 = vmatpush1.bf16.msra.mxu0 %v5929
    %6400 = vmatprep.subr.bf16.mxu0 %v5938
    %6401 = vmatpush1.bf16.msra.mxu0 %v5937
    %6402 = vmatprep.subr.bf16.mxu0 %v5946
    %6403 = vmatpush1.bf16.msra.mxu0 %v5945
    %6404 = vmatprep.subr.bf16.mxu0 %v5954
    %6405 = vmatpush1.bf16.msra.mxu0 %v5953
    %6406 = vmatprep.mubr.bf16.mxu0 %v2668
    %6407 = vmatmul.mubr.bf16.gmra.mrb[0].mxu0 %v2667
    %v6408 = vpop.f32.mrb[0].mxu0
    %v6409 = vadd.f32 %v6356, %v6408
    %v6410 = vpop.f32.mrb[0].mxu0
    %v6411 = vadd.f32 %v6358, %v6410
    %v6412 = vpop.f32.mrb[0].mxu0
    %v6413 = vadd.f32 %v6360, %v6412
    %v6414 = vpop.f32.mrb[0].mxu0
    %v6415 = vadd.f32 %v6362, %v6414
    %6416 = vmatprep.mubr.bf16.mxu0 %v2672
    %6417 = vmatmul.mubr.bf16.gmra.mrb[0].mxu0 %v2671
    %v6418 = vpop.f32.mrb[0].mxu0
    %v6419 = vadd.f32 %v6366, %v6418
    %v6420 = vpop.f32.mrb[0].mxu0
    %v6421 = vadd.f32 %v6368, %v6420
    %v6422 = vpop.f32.mrb[0].mxu0
    %v6423 = vadd.f32 %v6370, %v6422
    %v6424 = vpop.f32.mrb[0].mxu0
    %v6425 = vadd.f32 %v6372, %v6424
    %6426 = vdwg.mxu0
    %6427 = vmatprep.subr.bf16.mxu0 %v5708
    %6428 = vmatpush1.bf16.msra.mxu0 %v5707
    %6429 = vmatprep.subr.bf16.mxu0 %v5716
    %6430 = vmatpush1.bf16.msra.mxu0 %v5715
    %6431 = vmatprep.subr.bf16.mxu0 %v5724
    %6432 = vmatpush1.bf16.msra.mxu0 %v5723
    %6433 = vmatprep.subr.bf16.mxu0 %v5732
    %6434 = vmatpush1.bf16.msra.mxu0 %v5731
    %6435 = vmatprep.subr.bf16.mxu0 %v5740
    %6436 = vmatpush1.bf16.msra.mxu0 %v5739
    %6437 = vmatprep.subr.bf16.mxu0 %v5748
    %6438 = vmatpush1.bf16.msra.mxu0 %v5747
    %6439 = vmatprep.subr.bf16.mxu0 %v5756
    %6440 = vmatpush1.bf16.msra.mxu0 %v5755
    %6441 = vmatprep.subr.bf16.mxu0 %v5764
    %6442 = vmatpush1.bf16.msra.mxu0 %v5763
    %6443 = vmatprep.subr.bf16.mxu0 %v5772
    %6444 = vmatpush1.bf16.msra.mxu0 %v5771
    %6445 = vmatprep.subr.bf16.mxu0 %v5780
    %6446 = vmatpush1.bf16.msra.mxu0 %v5779
    %6447 = vmatprep.subr.bf16.mxu0 %v5788
    %6448 = vmatpush1.bf16.msra.mxu0 %v5787
    %6449 = vmatprep.subr.bf16.mxu0 %v5796
    %6450 = vmatpush1.bf16.msra.mxu0 %v5795
    %6451 = vmatprep.subr.bf16.mxu0 %v5804
    %6452 = vmatpush1.bf16.msra.mxu0 %v5803
    %6453 = vmatprep.subr.bf16.mxu0 %v5812
    %6454 = vmatpush1.bf16.msra.mxu0 %v5811
    %6455 = vmatprep.subr.bf16.mxu0 %v5820
    %6456 = vmatpush1.bf16.msra.mxu0 %v5819
    %6457 = vmatprep.subr.bf16.mxu0 %v5828
    %6458 = vmatpush1.bf16.msra.mxu0 %v5827
    %6459 = vmatprep.mubr.bf16.mxu0 %v2666
    %6460 = vmatmul.mubr.bf16.gmra.mrb[0].mxu0 %v2665
    %v6461 = vpop.f32.mrb[0].mxu0
    %v6462 = vadd.f32 %v4811, %v6461
    %v6463 = vpop.f32.mrb[0].mxu0
    %v6464 = vadd.f32 %v4813, %v6463
    %v6465 = vpop.f32.mrb[0].mxu0
    %v6466 = vadd.f32 %v4815, %v6465
    %v6467 = vpop.f32.mrb[0].mxu0
    %v6468 = vadd.f32 %v4817, %v6467
    %6469 = vmatprep.mubr.bf16.mxu0 %v2670
    %6470 = vmatmul.mubr.bf16.gmra.mrb[0].mxu0 %v2669
    %v6471 = vpop.f32.mrb[0].mxu0
    %v6472 = vadd.f32 %v4821, %v6471
    %v6473 = vpop.f32.mrb[0].mxu0
    %v6474 = vadd.f32 %v4823, %v6473
    %v6475 = vpop.f32.mrb[0].mxu0
    %v6476 = vadd.f32 %v4825, %v6475
    %v6477 = vpop.f32.mrb[0].mxu0
    %v6478 = vadd.f32 %v4827, %v6477
    %6479 = vdwg.mxu0
    %6480 = vmatprep.subr.bf16.mxu0 %v5836
    %6481 = vmatpush1.bf16.msra.mxu0 %v5835
    %6482 = vmatprep.subr.bf16.mxu0 %v5844
    %6483 = vmatpush1.bf16.msra.mxu0 %v5843
    %6484 = vmatprep.subr.bf16.mxu0 %v5852
    %6485 = vmatpush1.bf16.msra.mxu0 %v5851
    %6486 = vmatprep.subr.bf16.mxu0 %v5860
    %6487 = vmatpush1.bf16.msra.mxu0 %v5859
    %6488 = vmatprep.subr.bf16.mxu0 %v5868
    %6489 = vmatpush1.bf16.msra.mxu0 %v5867
    %6490 = vmatprep.subr.bf16.mxu0 %v5876
    %6491 = vmatpush1.bf16.msra.mxu0 %v5875
    %6492 = vmatprep.subr.bf16.mxu0 %v5884
    %6493 = vmatpush1.bf16.msra.mxu0 %v5883
    %6494 = vmatprep.subr.bf16.mxu0 %v5892
    %6495 = vmatpush1.bf16.msra.mxu0 %v5891
    %6496 = vmatprep.subr.bf16.mxu0 %v5900
    %6497 = vmatpush1.bf16.msra.mxu0 %v5899
    %6498 = vmatprep.subr.bf16.mxu0 %v5908
    %6499 = vmatpush1.bf16.msra.mxu0 %v5907
    %6500 = vmatprep.subr.bf16.mxu0 %v5916
    %6501 = vmatpush1.bf16.msra.mxu0 %v5915
    %6502 = vmatprep.subr.bf16.mxu0 %v5924
    %6503 = vmatpush1.bf16.msra.mxu0 %v5923
    %6504 = vmatprep.subr.bf16.mxu0 %v5932
    %6505 = vmatpush1.bf16.msra.mxu0 %v5931
    %6506 = vmatprep.subr.bf16.mxu0 %v5940
    %6507 = vmatpush1.bf16.msra.mxu0 %v5939
    %6508 = vmatprep.subr.bf16.mxu0 %v5948
    %6509 = vmatpush1.bf16.msra.mxu0 %v5947
    %6510 = vmatprep.subr.bf16.mxu0 %v5956
    %6511 = vmatpush1.bf16.msra.mxu0 %v5955
    %6512 = vmatprep.mubr.bf16.mxu0 %v2668
    %6513 = vmatmul.mubr.bf16.gmra.mrb[0].mxu0 %v2667
    %v6514 = vpop.f32.mrb[0].mxu0
    %v6515 = vadd.f32 %v6462, %v6514
    %v6516 = vpop.f32.mrb[0].mxu0
    %v6517 = vadd.f32 %v6464, %v6516
    %v6518 = vpop.f32.mrb[0].mxu0
    %v6519 = vadd.f32 %v6466, %v6518
    %v6520 = vpop.f32.mrb[0].mxu0
    %v6521 = vadd.f32 %v6468, %v6520
    %6522 = vmatprep.mubr.bf16.mxu0 %v2672
    %6523 = vmatmul.mubr.bf16.gmra.mrb[0].mxu0 %v2671
    %v6524 = vpop.f32.mrb[0].mxu0
    %v6525 = vadd.f32 %v6472, %v6524
    %v6526 = vpop.f32.mrb[0].mxu0
    %v6527 = vadd.f32 %v6474, %v6526
    %v6528 = vpop.f32.mrb[0].mxu0
    %v6529 = vadd.f32 %v6476, %v6528
    %v6530 = vpop.f32.mrb[0].mxu0
    %v6531 = vadd.f32 %v6478, %v6530
    %6532 = vdwg.mxu0
    %6533 = vmatprep.subr.bf16.mxu0 %v5710
    %6534 = vmatpush1.bf16.msra.mxu0 %v5709
    %6535 = vmatprep.subr.bf16.mxu0 %v5718
    %6536 = vmatpush1.bf16.msra.mxu0 %v5717
    %6537 = vmatprep.subr.bf16.mxu0 %v5726
    %6538 = vmatpush1.bf16.msra.mxu0 %v5725
    %6539 = vmatprep.subr.bf16.mxu0 %v5734
    %6540 = vmatpush1.bf16.msra.mxu0 %v5733
    %6541 = vmatprep.subr.bf16.mxu0 %v5742
    %6542 = vmatpush1.bf16.msra.mxu0 %v5741
    %6543 = vmatprep.subr.bf16.mxu0 %v5750
    %6544 = vmatpush1.bf16.msra.mxu0 %v5749
    %6545 = vmatprep.subr.bf16.mxu0 %v5758
    %6546 = vmatpush1.bf16.msra.mxu0 %v5757
    %6547 = vmatprep.subr.bf16.mxu0 %v5766
    %6548 = vmatpush1.bf16.msra.mxu0 %v5765
    %6549 = vmatprep.subr.bf16.mxu0 %v5774
    %6550 = vmatpush1.bf16.msra.mxu0 %v5773
    %6551 = vmatprep.subr.bf16.mxu0 %v5782
    %6552 = vmatpush1.bf16.msra.mxu0 %v5781
    %6553 = vmatprep.subr.bf16.mxu0 %v5790
    %6554 = vmatpush1.bf16.msra.mxu0 %v5789
    %6555 = vmatprep.subr.bf16.mxu0 %v5798
    %6556 = vmatpush1.bf16.msra.mxu0 %v5797
    %6557 = vmatprep.subr.bf16.mxu0 %v5806
    %6558 = vmatpush1.bf16.msra.mxu0 %v5805
    %6559 = vmatprep.subr.bf16.mxu0 %v5814
    %6560 = vmatpush1.bf16.msra.mxu0 %v5813
    %6561 = vmatprep.subr.bf16.mxu0 %v5822
    %6562 = vmatpush1.bf16.msra.mxu0 %v5821
    %6563 = vmatprep.subr.bf16.mxu0 %v5830
    %6564 = vmatpush1.bf16.msra.mxu0 %v5829
    %6565 = vmatprep.mubr.bf16.mxu0 %v2666
    %6566 = vmatmul.mubr.bf16.gmra.mrb[0].mxu0 %v2665
    %v6567 = vpop.f32.mrb[0].mxu0
    %v6568 = vadd.f32 %v4917, %v6567
    %v6569 = vpop.f32.mrb[0].mxu0
    %v6570 = vadd.f32 %v4919, %v6569
    %v6571 = vpop.f32.mrb[0].mxu0
    %v6572 = vadd.f32 %v4921, %v6571
    %v6573 = vpop.f32.mrb[0].mxu0
    %v6574 = vadd.f32 %v4923, %v6573
    %6575 = vmatprep.mubr.bf16.mxu0 %v2670
    %6576 = vmatmul.mubr.bf16.gmra.mrb[0].mxu0 %v2669
    %v6577 = vpop.f32.mrb[0].mxu0
    %v6578 = vadd.f32 %v4927, %v6577
    %v6579 = vpop.f32.mrb[0].mxu0
    %v6580 = vadd.f32 %v4929, %v6579
    %v6581 = vpop.f32.mrb[0].mxu0
    %v6582 = vadd.f32 %v4931, %v6581
    %v6583 = vpop.f32.mrb[0].mxu0
    %v6584 = vadd.f32 %v4933, %v6583
    %6585 = vdwg.mxu0
    %6586 = vmatprep.subr.bf16.mxu0 %v5838
    %6587 = vmatpush1.bf16.msra.mxu0 %v5837
    %6588 = vmatprep.subr.bf16.mxu0 %v5846
    %6589 = vmatpush1.bf16.msra.mxu0 %v5845
    %6590 = vmatprep.subr.bf16.mxu0 %v5854
    %6591 = vmatpush1.bf16.msra.mxu0 %v5853
    %6592 = vmatprep.subr.bf16.mxu0 %v5862
    %6593 = vmatpush1.bf16.msra.mxu0 %v5861
    %6594 = vmatprep.subr.bf16.mxu0 %v5870
    %6595 = vmatpush1.bf16.msra.mxu0 %v5869
    %6596 = vmatprep.subr.bf16.mxu0 %v5878
    %6597 = vmatpush1.bf16.msra.mxu0 %v5877
    %6598 = vmatprep.subr.bf16.mxu0 %v5886
    %6599 = vmatpush1.bf16.msra.mxu0 %v5885
    %6600 = vmatprep.subr.bf16.mxu0 %v5894
    %6601 = vmatpush1.bf16.msra.mxu0 %v5893
    %6602 = vmatprep.subr.bf16.mxu0 %v5902
    %6603 = vmatpush1.bf16.msra.mxu0 %v5901
    %6604 = vmatprep.subr.bf16.mxu0 %v5910
    %6605 = vmatpush1.bf16.msra.mxu0 %v5909
    %6606 = vmatprep.subr.bf16.mxu0 %v5918
    %6607 = vmatpush1.bf16.msra.mxu0 %v5917
    %6608 = vmatprep.subr.bf16.mxu0 %v5926
    %6609 = vmatpush1.bf16.msra.mxu0 %v5925
    %6610 = vmatprep.subr.bf16.mxu0 %v5934
    %6611 = vmatpush1.bf16.msra.mxu0 %v5933
    %6612 = vmatprep.subr.bf16.mxu0 %v5942
    %6613 = vmatpush1.bf16.msra.mxu0 %v5941
    %6614 = vmatprep.subr.bf16.mxu0 %v5950
    %6615 = vmatpush1.bf16.msra.mxu0 %v5949
    %6616 = vmatprep.subr.bf16.mxu0 %v5958
    %6617 = vmatpush1.bf16.msra.mxu0 %v5957
    %6618 = vmatprep.mubr.bf16.mxu0 %v2668
    %6619 = vmatmul.mubr.bf16.gmra.mrb[0].mxu0 %v2667
    %v6620 = vpop.f32.mrb[0].mxu0
    %v6621 = vadd.f32 %v6568, %v6620
    %v6622 = vpop.f32.mrb[0].mxu0
    %v6623 = vadd.f32 %v6570, %v6622
    %v6624 = vpop.f32.mrb[0].mxu0
    %v6625 = vadd.f32 %v6572, %v6624
    %v6626 = vpop.f32.mrb[0].mxu0
    %v6627 = vadd.f32 %v6574, %v6626
    %6628 = vmatprep.mubr.bf16.mxu0 %v2672
    %6629 = vmatmul.mubr.bf16.gmra.mrb[0].mxu0 %v2671
    %v6630 = vpop.f32.mrb[0].mxu0
    %v6631 = vadd.f32 %v6578, %v6630
    %v6632 = vpop.f32.mrb[0].mxu0
    %v6633 = vadd.f32 %v6580, %v6632
    %v6634 = vpop.f32.mrb[0].mxu0
    %v6635 = vadd.f32 %v6582, %v6634
    %v6636 = vpop.f32.mrb[0].mxu0
    %v6637 = vadd.f32 %v6584, %v6636
    %6638 = vdwg.mxu0
    %s6639 = scalar_lea.vmem [#allocation6], 4096
    %v6640 = vld [vmem:[%s6639] sm:$0xff]
    %v6641 = vld [vmem:[%s6639 + $0x8] sm:$0xff]
    %v6642 = vld [vmem:[%s6639 + $0x10] sm:$0xff]
    %v6643 = vld [vmem:[%s6639 + $0x18] sm:$0xff]
    %v6644 = vld [vmem:[%s6639 + $0x20] sm:$0xff]
    %v6645 = vld [vmem:[%s6639 + $0x28] sm:$0xff]
    %v6646 = vld [vmem:[%s6639 + $0x30] sm:$0xff]
    %v6647 = vld [vmem:[%s6639 + $0x38] sm:$0xff]
    %v6648 = vld [vmem:[%s6639 + $0x40] sm:$0xff]
    %v6649 = vld [vmem:[%s6639 + $0x48] sm:$0xff]
    %v6650 = vld [vmem:[%s6639 + $0x50] sm:$0xff]
    %v6651 = vld [vmem:[%s6639 + $0x58] sm:$0xff]
    %v6652 = vld [vmem:[%s6639 + $0x60] sm:$0xff]
    %v6653 = vld [vmem:[%s6639 + $0x68] sm:$0xff]
    %v6654 = vld [vmem:[%s6639 + $0x70] sm:$0xff]
    %v6655 = vld [vmem:[%s6639 + $0x78] sm:$0xff]
    %v6656 = vld [vmem:[%s6639 + $0x80] sm:$0xff]
    %v6657 = vld [vmem:[%s6639 + $0x88] sm:$0xff]
    %v6658 = vld [vmem:[%s6639 + $0x90] sm:$0xff]
    %v6659 = vld [vmem:[%s6639 + $0x98] sm:$0xff]
    %v6660 = vld [vmem:[%s6639 + $0xa0] sm:$0xff]
    %v6661 = vld [vmem:[%s6639 + $0xa8] sm:$0xff]
    %v6662 = vld [vmem:[%s6639 + $0xb0] sm:$0xff]
    %v6663 = vld [vmem:[%s6639 + $0xb8] sm:$0xff]
    %v6664 = vld [vmem:[%s6639 + $0xc0] sm:$0xff]
    %v6665 = vld [vmem:[%s6639 + $0xc8] sm:$0xff]
    %v6666 = vld [vmem:[%s6639 + $0xd0] sm:$0xff]
    %v6667 = vld [vmem:[%s6639 + $0xd8] sm:$0xff]
    %v6668 = vld [vmem:[%s6639 + $0xe0] sm:$0xff]
    %v6669 = vld [vmem:[%s6639 + $0xe8] sm:$0xff]
    %v6670 = vld [vmem:[%s6639 + $0xf0] sm:$0xff]
    %v6671 = vld [vmem:[%s6639 + $0xf8] sm:$0xff]
    %v6672 = vld [vmem:[%s6639 + $0x100] sm:$0xff]
    %v6673 = vld [vmem:[%s6639 + $0x108] sm:$0xff]
    %v6674 = vld [vmem:[%s6639 + $0x110] sm:$0xff]
    %v6675 = vld [vmem:[%s6639 + $0x118] sm:$0xff]
    %v6676 = vld [vmem:[%s6639 + $0x120] sm:$0xff]
    %v6677 = vld [vmem:[%s6639 + $0x128] sm:$0xff]
    %v6678 = vld [vmem:[%s6639 + $0x130] sm:$0xff]
    %v6679 = vld [vmem:[%s6639 + $0x138] sm:$0xff]
    %v6680 = vld [vmem:[%s6639 + $0x140] sm:$0xff]
    %v6681 = vld [vmem:[%s6639 + $0x148] sm:$0xff]
    %v6682 = vld [vmem:[%s6639 + $0x150] sm:$0xff]
    %v6683 = vld [vmem:[%s6639 + $0x158] sm:$0xff]
    %v6684 = vld [vmem:[%s6639 + $0x160] sm:$0xff]
    %v6685 = vld [vmem:[%s6639 + $0x168] sm:$0xff]
    %v6686 = vld [vmem:[%s6639 + $0x170] sm:$0xff]
    %v6687 = vld [vmem:[%s6639 + $0x178] sm:$0xff]
    %v6688 = vld [vmem:[%s6639 + $0x180] sm:$0xff]
    %v6689 = vld [vmem:[%s6639 + $0x188] sm:$0xff]
    %v6690 = vld [vmem:[%s6639 + $0x190] sm:$0xff]
    %v6691 = vld [vmem:[%s6639 + $0x198] sm:$0xff]
    %v6692 = vld [vmem:[%s6639 + $0x1a0] sm:$0xff]
    %v6693 = vld [vmem:[%s6639 + $0x1a8] sm:$0xff]
    %v6694 = vld [vmem:[%s6639 + $0x1b0] sm:$0xff]
    %v6695 = vld [vmem:[%s6639 + $0x1b8] sm:$0xff]
    %v6696 = vld [vmem:[%s6639 + $0x1c0] sm:$0xff]
    %v6697 = vld [vmem:[%s6639 + $0x1c8] sm:$0xff]
    %v6698 = vld [vmem:[%s6639 + $0x1d0] sm:$0xff]
    %v6699 = vld [vmem:[%s6639 + $0x1d8] sm:$0xff]
    %v6700 = vld [vmem:[%s6639 + $0x1e0] sm:$0xff]
    %v6701 = vld [vmem:[%s6639 + $0x1e8] sm:$0xff]
    %v6702 = vld [vmem:[%s6639 + $0x1f0] sm:$0xff]
    %v6703 = vld [vmem:[%s6639 + $0x1f8] sm:$0xff]
    %v6704 = vld [vmem:[%s6639 + $0x200] sm:$0xff]
    %v6705 = vld [vmem:[%s6639 + $0x208] sm:$0xff]
    %v6706 = vld [vmem:[%s6639 + $0x210] sm:$0xff]
    %v6707 = vld [vmem:[%s6639 + $0x218] sm:$0xff]
    %v6708 = vld [vmem:[%s6639 + $0x220] sm:$0xff]
    %v6709 = vld [vmem:[%s6639 + $0x228] sm:$0xff]
    %v6710 = vld [vmem:[%s6639 + $0x230] sm:$0xff]
    %v6711 = vld [vmem:[%s6639 + $0x238] sm:$0xff]
    %v6712 = vld [vmem:[%s6639 + $0x240] sm:$0xff]
    %v6713 = vld [vmem:[%s6639 + $0x248] sm:$0xff]
    %v6714 = vld [vmem:[%s6639 + $0x250] sm:$0xff]
    %v6715 = vld [vmem:[%s6639 + $0x258] sm:$0xff]
    %v6716 = vld [vmem:[%s6639 + $0x260] sm:$0xff]
    %v6717 = vld [vmem:[%s6639 + $0x268] sm:$0xff]
    %v6718 = vld [vmem:[%s6639 + $0x270] sm:$0xff]
    %v6719 = vld [vmem:[%s6639 + $0x278] sm:$0xff]
    %v6720 = vld [vmem:[%s6639 + $0x280] sm:$0xff]
    %v6721 = vld [vmem:[%s6639 + $0x288] sm:$0xff]
    %v6722 = vld [vmem:[%s6639 + $0x290] sm:$0xff]
    %v6723 = vld [vmem:[%s6639 + $0x298] sm:$0xff]
    %v6724 = vld [vmem:[%s6639 + $0x2a0] sm:$0xff]
    %v6725 = vld [vmem:[%s6639 + $0x2a8] sm:$0xff]
    %v6726 = vld [vmem:[%s6639 + $0x2b0] sm:$0xff]
    %v6727 = vld [vmem:[%s6639 + $0x2b8] sm:$0xff]
    %v6728 = vld [vmem:[%s6639 + $0x2c0] sm:$0xff]
    %v6729 = vld [vmem:[%s6639 + $0x2c8] sm:$0xff]
    %v6730 = vld [vmem:[%s6639 + $0x2d0] sm:$0xff]
    %v6731 = vld [vmem:[%s6639 + $0x2d8] sm:$0xff]
    %v6732 = vld [vmem:[%s6639 + $0x2e0] sm:$0xff]
    %v6733 = vld [vmem:[%s6639 + $0x2e8] sm:$0xff]
    %v6734 = vld [vmem:[%s6639 + $0x2f0] sm:$0xff]
    %v6735 = vld [vmem:[%s6639 + $0x2f8] sm:$0xff]
    %v6736 = vld [vmem:[%s6639 + $0x300] sm:$0xff]
    %v6737 = vld [vmem:[%s6639 + $0x308] sm:$0xff]
    %v6738 = vld [vmem:[%s6639 + $0x310] sm:$0xff]
    %v6739 = vld [vmem:[%s6639 + $0x318] sm:$0xff]
    %v6740 = vld [vmem:[%s6639 + $0x320] sm:$0xff]
    %v6741 = vld [vmem:[%s6639 + $0x328] sm:$0xff]
    %v6742 = vld [vmem:[%s6639 + $0x330] sm:$0xff]
    %v6743 = vld [vmem:[%s6639 + $0x338] sm:$0xff]
    %v6744 = vld [vmem:[%s6639 + $0x340] sm:$0xff]
    %v6745 = vld [vmem:[%s6639 + $0x348] sm:$0xff]
    %v6746 = vld [vmem:[%s6639 + $0x350] sm:$0xff]
    %v6747 = vld [vmem:[%s6639 + $0x358] sm:$0xff]
    %v6748 = vld [vmem:[%s6639 + $0x360] sm:$0xff]
    %v6749 = vld [vmem:[%s6639 + $0x368] sm:$0xff]
    %v6750 = vld [vmem:[%s6639 + $0x370] sm:$0xff]
    %v6751 = vld [vmem:[%s6639 + $0x378] sm:$0xff]
    %v6752 = vld [vmem:[%s6639 + $0x380] sm:$0xff]
    %v6753 = vld [vmem:[%s6639 + $0x388] sm:$0xff]
    %v6754 = vld [vmem:[%s6639 + $0x390] sm:$0xff]
    %v6755 = vld [vmem:[%s6639 + $0x398] sm:$0xff]
    %v6756 = vld [vmem:[%s6639 + $0x3a0] sm:$0xff]
    %v6757 = vld [vmem:[%s6639 + $0x3a8] sm:$0xff]
    %v6758 = vld [vmem:[%s6639 + $0x3b0] sm:$0xff]
    %v6759 = vld [vmem:[%s6639 + $0x3b8] sm:$0xff]
    %v6760 = vld [vmem:[%s6639 + $0x3c0] sm:$0xff]
    %v6761 = vld [vmem:[%s6639 + $0x3c8] sm:$0xff]
    %v6762 = vld [vmem:[%s6639 + $0x3d0] sm:$0xff]
    %v6763 = vld [vmem:[%s6639 + $0x3d8] sm:$0xff]
    %v6764 = vld [vmem:[%s6639 + $0x3e0] sm:$0xff]
    %v6765 = vld [vmem:[%s6639 + $0x3e8] sm:$0xff]
    %v6766 = vld [vmem:[%s6639 + $0x3f0] sm:$0xff]
    %v6767 = vld [vmem:[%s6639 + $0x3f8] sm:$0xff]
    %v6768 = vld [vmem:[%s6639 + $0x400] sm:$0xff]
    %v6769 = vld [vmem:[%s6639 + $0x408] sm:$0xff]
    %v6770 = vld [vmem:[%s6639 + $0x410] sm:$0xff]
    %v6771 = vld [vmem:[%s6639 + $0x418] sm:$0xff]
    %v6772 = vld [vmem:[%s6639 + $0x420] sm:$0xff]
    %v6773 = vld [vmem:[%s6639 + $0x428] sm:$0xff]
    %v6774 = vld [vmem:[%s6639 + $0x430] sm:$0xff]
    %v6775 = vld [vmem:[%s6639 + $0x438] sm:$0xff]
    %v6776 = vld [vmem:[%s6639 + $0x440] sm:$0xff]
    %v6777 = vld [vmem:[%s6639 + $0x448] sm:$0xff]
    %v6778 = vld [vmem:[%s6639 + $0x450] sm:$0xff]
    %v6779 = vld [vmem:[%s6639 + $0x458] sm:$0xff]
    %v6780 = vld [vmem:[%s6639 + $0x460] sm:$0xff]
    %v6781 = vld [vmem:[%s6639 + $0x468] sm:$0xff]
    %v6782 = vld [vmem:[%s6639 + $0x470] sm:$0xff]
    %v6783 = vld [vmem:[%s6639 + $0x478] sm:$0xff]
    %v6784 = vld [vmem:[%s6639 + $0x480] sm:$0xff]
    %v6785 = vld [vmem:[%s6639 + $0x488] sm:$0xff]
    %v6786 = vld [vmem:[%s6639 + $0x490] sm:$0xff]
    %v6787 = vld [vmem:[%s6639 + $0x498] sm:$0xff]
    %v6788 = vld [vmem:[%s6639 + $0x4a0] sm:$0xff]
    %v6789 = vld [vmem:[%s6639 + $0x4a8] sm:$0xff]
    %v6790 = vld [vmem:[%s6639 + $0x4b0] sm:$0xff]
    %v6791 = vld [vmem:[%s6639 + $0x4b8] sm:$0xff]
    %v6792 = vld [vmem:[%s6639 + $0x4c0] sm:$0xff]
    %v6793 = vld [vmem:[%s6639 + $0x4c8] sm:$0xff]
    %v6794 = vld [vmem:[%s6639 + $0x4d0] sm:$0xff]
    %v6795 = vld [vmem:[%s6639 + $0x4d8] sm:$0xff]
    %v6796 = vld [vmem:[%s6639 + $0x4e0] sm:$0xff]
    %v6797 = vld [vmem:[%s6639 + $0x4e8] sm:$0xff]
    %v6798 = vld [vmem:[%s6639 + $0x4f0] sm:$0xff]
    %v6799 = vld [vmem:[%s6639 + $0x4f8] sm:$0xff]
    %v6800 = vld [vmem:[%s6639 + $0x500] sm:$0xff]
    %v6801 = vld [vmem:[%s6639 + $0x508] sm:$0xff]
    %v6802 = vld [vmem:[%s6639 + $0x510] sm:$0xff]
    %v6803 = vld [vmem:[%s6639 + $0x518] sm:$0xff]
    %v6804 = vld [vmem:[%s6639 + $0x520] sm:$0xff]
    %v6805 = vld [vmem:[%s6639 + $0x528] sm:$0xff]
    %v6806 = vld [vmem:[%s6639 + $0x530] sm:$0xff]
    %v6807 = vld [vmem:[%s6639 + $0x538] sm:$0xff]
    %v6808 = vld [vmem:[%s6639 + $0x540] sm:$0xff]
    %v6809 = vld [vmem:[%s6639 + $0x548] sm:$0xff]
    %v6810 = vld [vmem:[%s6639 + $0x550] sm:$0xff]
    %v6811 = vld [vmem:[%s6639 + $0x558] sm:$0xff]
    %v6812 = vld [vmem:[%s6639 + $0x560] sm:$0xff]
    %v6813 = vld [vmem:[%s6639 + $0x568] sm:$0xff]
    %v6814 = vld [vmem:[%s6639 + $0x570] sm:$0xff]
    %v6815 = vld [vmem:[%s6639 + $0x578] sm:$0xff]
    %v6816 = vld [vmem:[%s6639 + $0x580] sm:$0xff]
    %v6817 = vld [vmem:[%s6639 + $0x588] sm:$0xff]
    %v6818 = vld [vmem:[%s6639 + $0x590] sm:$0xff]
    %v6819 = vld [vmem:[%s6639 + $0x598] sm:$0xff]
    %v6820 = vld [vmem:[%s6639 + $0x5a0] sm:$0xff]
    %v6821 = vld [vmem:[%s6639 + $0x5a8] sm:$0xff]
    %v6822 = vld [vmem:[%s6639 + $0x5b0] sm:$0xff]
    %v6823 = vld [vmem:[%s6639 + $0x5b8] sm:$0xff]
    %v6824 = vld [vmem:[%s6639 + $0x5c0] sm:$0xff]
    %v6825 = vld [vmem:[%s6639 + $0x5c8] sm:$0xff]
    %v6826 = vld [vmem:[%s6639 + $0x5d0] sm:$0xff]
    %v6827 = vld [vmem:[%s6639 + $0x5d8] sm:$0xff]
    %v6828 = vld [vmem:[%s6639 + $0x5e0] sm:$0xff]
    %v6829 = vld [vmem:[%s6639 + $0x5e8] sm:$0xff]
    %v6830 = vld [vmem:[%s6639 + $0x5f0] sm:$0xff]
    %v6831 = vld [vmem:[%s6639 + $0x5f8] sm:$0xff]
    %v6832 = vld [vmem:[%s6639 + $0x600] sm:$0xff]
    %v6833 = vld [vmem:[%s6639 + $0x608] sm:$0xff]
    %v6834 = vld [vmem:[%s6639 + $0x610] sm:$0xff]
    %v6835 = vld [vmem:[%s6639 + $0x618] sm:$0xff]
    %v6836 = vld [vmem:[%s6639 + $0x620] sm:$0xff]
    %v6837 = vld [vmem:[%s6639 + $0x628] sm:$0xff]
    %v6838 = vld [vmem:[%s6639 + $0x630] sm:$0xff]
    %v6839 = vld [vmem:[%s6639 + $0x638] sm:$0xff]
    %v6840 = vld [vmem:[%s6639 + $0x640] sm:$0xff]
    %v6841 = vld [vmem:[%s6639 + $0x648] sm:$0xff]
    %v6842 = vld [vmem:[%s6639 + $0x650] sm:$0xff]
    %v6843 = vld [vmem:[%s6639 + $0x658] sm:$0xff]
    %v6844 = vld [vmem:[%s6639 + $0x660] sm:$0xff]
    %v6845 = vld [vmem:[%s6639 + $0x668] sm:$0xff]
    %v6846 = vld [vmem:[%s6639 + $0x670] sm:$0xff]
    %v6847 = vld [vmem:[%s6639 + $0x678] sm:$0xff]
    %v6848 = vld [vmem:[%s6639 + $0x680] sm:$0xff]
    %v6849 = vld [vmem:[%s6639 + $0x688] sm:$0xff]
    %v6850 = vld [vmem:[%s6639 + $0x690] sm:$0xff]
    %v6851 = vld [vmem:[%s6639 + $0x698] sm:$0xff]
    %v6852 = vld [vmem:[%s6639 + $0x6a0] sm:$0xff]
    %v6853 = vld [vmem:[%s6639 + $0x6a8] sm:$0xff]
    %v6854 = vld [vmem:[%s6639 + $0x6b0] sm:$0xff]
    %v6855 = vld [vmem:[%s6639 + $0x6b8] sm:$0xff]
    %v6856 = vld [vmem:[%s6639 + $0x6c0] sm:$0xff]
    %v6857 = vld [vmem:[%s6639 + $0x6c8] sm:$0xff]
    %v6858 = vld [vmem:[%s6639 + $0x6d0] sm:$0xff]
    %v6859 = vld [vmem:[%s6639 + $0x6d8] sm:$0xff]
    %v6860 = vld [vmem:[%s6639 + $0x6e0] sm:$0xff]
    %v6861 = vld [vmem:[%s6639 + $0x6e8] sm:$0xff]
    %v6862 = vld [vmem:[%s6639 + $0x6f0] sm:$0xff]
    %v6863 = vld [vmem:[%s6639 + $0x6f8] sm:$0xff]
    %v6864 = vld [vmem:[%s6639 + $0x700] sm:$0xff]
    %v6865 = vld [vmem:[%s6639 + $0x708] sm:$0xff]
    %v6866 = vld [vmem:[%s6639 + $0x710] sm:$0xff]
    %v6867 = vld [vmem:[%s6639 + $0x718] sm:$0xff]
    %v6868 = vld [vmem:[%s6639 + $0x720] sm:$0xff]
    %v6869 = vld [vmem:[%s6639 + $0x728] sm:$0xff]
    %v6870 = vld [vmem:[%s6639 + $0x730] sm:$0xff]
    %v6871 = vld [vmem:[%s6639 + $0x738] sm:$0xff]
    %v6872 = vld [vmem:[%s6639 + $0x740] sm:$0xff]
    %v6873 = vld [vmem:[%s6639 + $0x748] sm:$0xff]
    %v6874 = vld [vmem:[%s6639 + $0x750] sm:$0xff]
    %v6875 = vld [vmem:[%s6639 + $0x758] sm:$0xff]
    %v6876 = vld [vmem:[%s6639 + $0x760] sm:$0xff]
    %v6877 = vld [vmem:[%s6639 + $0x768] sm:$0xff]
    %v6878 = vld [vmem:[%s6639 + $0x770] sm:$0xff]
    %v6879 = vld [vmem:[%s6639 + $0x778] sm:$0xff]
    %v6880 = vld [vmem:[%s6639 + $0x780] sm:$0xff]
    %v6881 = vld [vmem:[%s6639 + $0x788] sm:$0xff]
    %v6882 = vld [vmem:[%s6639 + $0x790] sm:$0xff]
    %v6883 = vld [vmem:[%s6639 + $0x798] sm:$0xff]
    %v6884 = vld [vmem:[%s6639 + $0x7a0] sm:$0xff]
    %v6885 = vld [vmem:[%s6639 + $0x7a8] sm:$0xff]
    %v6886 = vld [vmem:[%s6639 + $0x7b0] sm:$0xff]
    %v6887 = vld [vmem:[%s6639 + $0x7b8] sm:$0xff]
    %v6888 = vld [vmem:[%s6639 + $0x7c0] sm:$0xff]
    %v6889 = vld [vmem:[%s6639 + $0x7c8] sm:$0xff]
    %v6890 = vld [vmem:[%s6639 + $0x7d0] sm:$0xff]
    %v6891 = vld [vmem:[%s6639 + $0x7d8] sm:$0xff]
    %v6892 = vld [vmem:[%s6639 + $0x7e0] sm:$0xff]
    %v6893 = vld [vmem:[%s6639 + $0x7e8] sm:$0xff]
    %v6894 = vld [vmem:[%s6639 + $0x7f0] sm:$0xff]
    %v6895 = vld [vmem:[%s6639 + $0x7f8] sm:$0xff]
    %v7152 = vunpack.c.l.b16 %v6640
    %v7153 = vunpack.c.h.b16 %v6640
    %v7154 = vunpack.c.l.b16 %v6641
    %v7155 = vunpack.c.h.b16 %v6641
    %v7156 = vunpack.c.l.b16 %v6642
    %v7157 = vunpack.c.h.b16 %v6642
    %v7158 = vunpack.c.l.b16 %v6643
    %v7159 = vunpack.c.h.b16 %v6643
    %v7160 = vunpack.c.l.b16 %v6644
    %v7161 = vunpack.c.h.b16 %v6644
    %v7162 = vunpack.c.l.b16 %v6645
    %v7163 = vunpack.c.h.b16 %v6645
    %v7164 = vunpack.c.l.b16 %v6646
    %v7165 = vunpack.c.h.b16 %v6646
    %v7166 = vunpack.c.l.b16 %v6647
    %v7167 = vunpack.c.h.b16 %v6647
    %v7168 = vunpack.c.l.b16 %v6648
    %v7169 = vunpack.c.h.b16 %v6648
    %v7170 = vunpack.c.l.b16 %v6649
    %v7171 = vunpack.c.h.b16 %v6649
    %v7172 = vunpack.c.l.b16 %v6650
    %v7173 = vunpack.c.h.b16 %v6650
    %v7174 = vunpack.c.l.b16 %v6651
    %v7175 = vunpack.c.h.b16 %v6651
    %v7176 = vunpack.c.l.b16 %v6652
    %v7177 = vunpack.c.h.b16 %v6652
    %v7178 = vunpack.c.l.b16 %v6653
    %v7179 = vunpack.c.h.b16 %v6653
    %v7180 = vunpack.c.l.b16 %v6654
    %v7181 = vunpack.c.h.b16 %v6654
    %v7182 = vunpack.c.l.b16 %v6655
    %v7183 = vunpack.c.h.b16 %v6655
    %v7184 = vunpack.c.l.b16 %v6656
    %v7185 = vunpack.c.h.b16 %v6656
    %v7186 = vunpack.c.l.b16 %v6657
    %v7187 = vunpack.c.h.b16 %v6657
    %v7188 = vunpack.c.l.b16 %v6658
    %v7189 = vunpack.c.h.b16 %v6658
    %v7190 = vunpack.c.l.b16 %v6659
    %v7191 = vunpack.c.h.b16 %v6659
    %v7192 = vunpack.c.l.b16 %v6660
    %v7193 = vunpack.c.h.b16 %v6660
    %v7194 = vunpack.c.l.b16 %v6661
    %v7195 = vunpack.c.h.b16 %v6661
    %v7196 = vunpack.c.l.b16 %v6662
    %v7197 = vunpack.c.h.b16 %v6662
    %v7198 = vunpack.c.l.b16 %v6663
    %v7199 = vunpack.c.h.b16 %v6663
    %v7200 = vunpack.c.l.b16 %v6664
    %v7201 = vunpack.c.h.b16 %v6664
    %v7202 = vunpack.c.l.b16 %v6665
    %v7203 = vunpack.c.h.b16 %v6665
    %v7204 = vunpack.c.l.b16 %v6666
    %v7205 = vunpack.c.h.b16 %v6666
    %v7206 = vunpack.c.l.b16 %v6667
    %v7207 = vunpack.c.h.b16 %v6667
    %v7208 = vunpack.c.l.b16 %v6668
    %v7209 = vunpack.c.h.b16 %v6668
    %v7210 = vunpack.c.l.b16 %v6669
    %v7211 = vunpack.c.h.b16 %v6669
    %v7212 = vunpack.c.l.b16 %v6670
    %v7213 = vunpack.c.h.b16 %v6670
    %v7214 = vunpack.c.l.b16 %v6671
    %v7215 = vunpack.c.h.b16 %v6671
    %v7216 = vunpack.c.l.b16 %v6672
    %v7217 = vunpack.c.h.b16 %v6672
    %v7218 = vunpack.c.l.b16 %v6673
    %v7219 = vunpack.c.h.b16 %v6673
    %v7220 = vunpack.c.l.b16 %v6674
    %v7221 = vunpack.c.h.b16 %v6674
    %v7222 = vunpack.c.l.b16 %v6675
    %v7223 = vunpack.c.h.b16 %v6675
    %v7224 = vunpack.c.l.b16 %v6676
    %v7225 = vunpack.c.h.b16 %v6676
    %v7226 = vunpack.c.l.b16 %v6677
    %v7227 = vunpack.c.h.b16 %v6677
    %v7228 = vunpack.c.l.b16 %v6678
    %v7229 = vunpack.c.h.b16 %v6678
    %v7230 = vunpack.c.l.b16 %v6679
    %v7231 = vunpack.c.h.b16 %v6679
    %v7232 = vunpack.c.l.b16 %v6680
    %v7233 = vunpack.c.h.b16 %v6680
    %v7234 = vunpack.c.l.b16 %v6681
    %v7235 = vunpack.c.h.b16 %v6681
    %v7236 = vunpack.c.l.b16 %v6682
    %v7237 = vunpack.c.h.b16 %v6682
    %v7238 = vunpack.c.l.b16 %v6683
    %v7239 = vunpack.c.h.b16 %v6683
    %v7240 = vunpack.c.l.b16 %v6684
    %v7241 = vunpack.c.h.b16 %v6684
    %v7242 = vunpack.c.l.b16 %v6685
    %v7243 = vunpack.c.h.b16 %v6685
    %v7244 = vunpack.c.l.b16 %v6686
    %v7245 = vunpack.c.h.b16 %v6686
    %v7246 = vunpack.c.l.b16 %v6687
    %v7247 = vunpack.c.h.b16 %v6687
    %v7248 = vunpack.c.l.b16 %v6688
    %v7249 = vunpack.c.h.b16 %v6688
    %v7250 = vunpack.c.l.b16 %v6689
    %v7251 = vunpack.c.h.b16 %v6689
    %v7252 = vunpack.c.l.b16 %v6690
    %v7253 = vunpack.c.h.b16 %v6690
    %v7254 = vunpack.c.l.b16 %v6691
    %v7255 = vunpack.c.h.b16 %v6691
    %v7256 = vunpack.c.l.b16 %v6692
    %v7257 = vunpack.c.h.b16 %v6692
    %v7258 = vunpack.c.l.b16 %v6693
    %v7259 = vunpack.c.h.b16 %v6693
    %v7260 = vunpack.c.l.b16 %v6694
    %v7261 = vunpack.c.h.b16 %v6694
    %v7262 = vunpack.c.l.b16 %v6695
    %v7263 = vunpack.c.h.b16 %v6695
    %v7264 = vunpack.c.l.b16 %v6696
    %v7265 = vunpack.c.h.b16 %v6696
    %v7266 = vunpack.c.l.b16 %v6697
    %v7267 = vunpack.c.h.b16 %v6697
    %v7268 = vunpack.c.l.b16 %v6698
    %v7269 = vunpack.c.h.b16 %v6698
    %v7270 = vunpack.c.l.b16 %v6699
    %v7271 = vunpack.c.h.b16 %v6699
    %v7272 = vunpack.c.l.b16 %v6700
    %v7273 = vunpack.c.h.b16 %v6700
    %v7274 = vunpack.c.l.b16 %v6701
    %v7275 = vunpack.c.h.b16 %v6701
    %v7276 = vunpack.c.l.b16 %v6702
    %v7277 = vunpack.c.h.b16 %v6702
    %v7278 = vunpack.c.l.b16 %v6703
    %v7279 = vunpack.c.h.b16 %v6703
    %v7280 = vunpack.c.l.b16 %v6704
    %v7281 = vunpack.c.h.b16 %v6704
    %v7282 = vunpack.c.l.b16 %v6705
    %v7283 = vunpack.c.h.b16 %v6705
    %v7284 = vunpack.c.l.b16 %v6706
    %v7285 = vunpack.c.h.b16 %v6706
    %v7286 = vunpack.c.l.b16 %v6707
    %v7287 = vunpack.c.h.b16 %v6707
    %v7288 = vunpack.c.l.b16 %v6708
    %v7289 = vunpack.c.h.b16 %v6708
    %v7290 = vunpack.c.l.b16 %v6709
    %v7291 = vunpack.c.h.b16 %v6709
    %v7292 = vunpack.c.l.b16 %v6710
    %v7293 = vunpack.c.h.b16 %v6710
    %v7294 = vunpack.c.l.b16 %v6711
    %v7295 = vunpack.c.h.b16 %v6711
    %v7296 = vunpack.c.l.b16 %v6712
    %v7297 = vunpack.c.h.b16 %v6712
    %v7298 = vunpack.c.l.b16 %v6713
    %v7299 = vunpack.c.h.b16 %v6713
    %v7300 = vunpack.c.l.b16 %v6714
    %v7301 = vunpack.c.h.b16 %v6714
    %v7302 = vunpack.c.l.b16 %v6715
    %v7303 = vunpack.c.h.b16 %v6715
    %v7304 = vunpack.c.l.b16 %v6716
    %v7305 = vunpack.c.h.b16 %v6716
    %v7306 = vunpack.c.l.b16 %v6717
    %v7307 = vunpack.c.h.b16 %v6717
    %v7308 = vunpack.c.l.b16 %v6718
    %v7309 = vunpack.c.h.b16 %v6718
    %v7310 = vunpack.c.l.b16 %v6719
    %v7311 = vunpack.c.h.b16 %v6719
    %v7312 = vunpack.c.l.b16 %v6720
    %v7313 = vunpack.c.h.b16 %v6720
    %v7314 = vunpack.c.l.b16 %v6721
    %v7315 = vunpack.c.h.b16 %v6721
    %v7316 = vunpack.c.l.b16 %v6722
    %v7317 = vunpack.c.h.b16 %v6722
    %v7318 = vunpack.c.l.b16 %v6723
    %v7319 = vunpack.c.h.b16 %v6723
    %v7320 = vunpack.c.l.b16 %v6724
    %v7321 = vunpack.c.h.b16 %v6724
    %v7322 = vunpack.c.l.b16 %v6725
    %v7323 = vunpack.c.h.b16 %v6725
    %v7324 = vunpack.c.l.b16 %v6726
    %v7325 = vunpack.c.h.b16 %v6726
    %v7326 = vunpack.c.l.b16 %v6727
    %v7327 = vunpack.c.h.b16 %v6727
    %v7328 = vunpack.c.l.b16 %v6728
    %v7329 = vunpack.c.h.b16 %v6728
    %v7330 = vunpack.c.l.b16 %v6729
    %v7331 = vunpack.c.h.b16 %v6729
    %v7332 = vunpack.c.l.b16 %v6730
    %v7333 = vunpack.c.h.b16 %v6730
    %v7334 = vunpack.c.l.b16 %v6731
    %v7335 = vunpack.c.h.b16 %v6731
    %v7336 = vunpack.c.l.b16 %v6732
    %v7337 = vunpack.c.h.b16 %v6732
    %v7338 = vunpack.c.l.b16 %v6733
    %v7339 = vunpack.c.h.b16 %v6733
    %v7340 = vunpack.c.l.b16 %v6734
    %v7341 = vunpack.c.h.b16 %v6734
    %v7342 = vunpack.c.l.b16 %v6735
    %v7343 = vunpack.c.h.b16 %v6735
    %v7344 = vunpack.c.l.b16 %v6736
    %v7345 = vunpack.c.h.b16 %v6736
    %v7346 = vunpack.c.l.b16 %v6737
    %v7347 = vunpack.c.h.b16 %v6737
    %v7348 = vunpack.c.l.b16 %v6738
    %v7349 = vunpack.c.h.b16 %v6738
    %v7350 = vunpack.c.l.b16 %v6739
    %v7351 = vunpack.c.h.b16 %v6739
    %v7352 = vunpack.c.l.b16 %v6740
    %v7353 = vunpack.c.h.b16 %v6740
    %v7354 = vunpack.c.l.b16 %v6741
    %v7355 = vunpack.c.h.b16 %v6741
    %v7356 = vunpack.c.l.b16 %v6742
    %v7357 = vunpack.c.h.b16 %v6742
    %v7358 = vunpack.c.l.b16 %v6743
    %v7359 = vunpack.c.h.b16 %v6743
    %v7360 = vunpack.c.l.b16 %v6744
    %v7361 = vunpack.c.h.b16 %v6744
    %v7362 = vunpack.c.l.b16 %v6745
    %v7363 = vunpack.c.h.b16 %v6745
    %v7364 = vunpack.c.l.b16 %v6746
    %v7365 = vunpack.c.h.b16 %v6746
    %v7366 = vunpack.c.l.b16 %v6747
    %v7367 = vunpack.c.h.b16 %v6747
    %v7368 = vunpack.c.l.b16 %v6748
    %v7369 = vunpack.c.h.b16 %v6748
    %v7370 = vunpack.c.l.b16 %v6749
    %v7371 = vunpack.c.h.b16 %v6749
    %v7372 = vunpack.c.l.b16 %v6750
    %v7373 = vunpack.c.h.b16 %v6750
    %v7374 = vunpack.c.l.b16 %v6751
    %v7375 = vunpack.c.h.b16 %v6751
    %v7376 = vunpack.c.l.b16 %v6752
    %v7377 = vunpack.c.h.b16 %v6752
    %v7378 = vunpack.c.l.b16 %v6753
    %v7379 = vunpack.c.h.b16 %v6753
    %v7380 = vunpack.c.l.b16 %v6754
    %v7381 = vunpack.c.h.b16 %v6754
    %v7382 = vunpack.c.l.b16 %v6755
    %v7383 = vunpack.c.h.b16 %v6755
    %v7384 = vunpack.c.l.b16 %v6756
    %v7385 = vunpack.c.h.b16 %v6756
    %v7386 = vunpack.c.l.b16 %v6757
    %v7387 = vunpack.c.h.b16 %v6757
    %v7388 = vunpack.c.l.b16 %v6758
    %v7389 = vunpack.c.h.b16 %v6758
    %v7390 = vunpack.c.l.b16 %v6759
    %v7391 = vunpack.c.h.b16 %v6759
    %v7392 = vunpack.c.l.b16 %v6760
    %v7393 = vunpack.c.h.b16 %v6760
    %v7394 = vunpack.c.l.b16 %v6761
    %v7395 = vunpack.c.h.b16 %v6761
    %v7396 = vunpack.c.l.b16 %v6762
    %v7397 = vunpack.c.h.b16 %v6762
    %v7398 = vunpack.c.l.b16 %v6763
    %v7399 = vunpack.c.h.b16 %v6763
    %v7400 = vunpack.c.l.b16 %v6764
    %v7401 = vunpack.c.h.b16 %v6764
    %v7402 = vunpack.c.l.b16 %v6765
    %v7403 = vunpack.c.h.b16 %v6765
    %v7404 = vunpack.c.l.b16 %v6766
    %v7405 = vunpack.c.h.b16 %v6766
    %v7406 = vunpack.c.l.b16 %v6767
    %v7407 = vunpack.c.h.b16 %v6767
    %v7408 = vunpack.c.l.b16 %v6768
    %v7409 = vunpack.c.h.b16 %v6768
    %v7410 = vunpack.c.l.b16 %v6769
    %v7411 = vunpack.c.h.b16 %v6769
    %v7412 = vunpack.c.l.b16 %v6770
    %v7413 = vunpack.c.h.b16 %v6770
    %v7414 = vunpack.c.l.b16 %v6771
    %v7415 = vunpack.c.h.b16 %v6771
    %v7416 = vunpack.c.l.b16 %v6772
    %v7417 = vunpack.c.h.b16 %v6772
    %v7418 = vunpack.c.l.b16 %v6773
    %v7419 = vunpack.c.h.b16 %v6773
    %v7420 = vunpack.c.l.b16 %v6774
    %v7421 = vunpack.c.h.b16 %v6774
    %v7422 = vunpack.c.l.b16 %v6775
    %v7423 = vunpack.c.h.b16 %v6775
    %v7424 = vunpack.c.l.b16 %v6776
    %v7425 = vunpack.c.h.b16 %v6776
    %v7426 = vunpack.c.l.b16 %v6777
    %v7427 = vunpack.c.h.b16 %v6777
    %v7428 = vunpack.c.l.b16 %v6778
    %v7429 = vunpack.c.h.b16 %v6778
    %v7430 = vunpack.c.l.b16 %v6779
    %v7431 = vunpack.c.h.b16 %v6779
    %v7432 = vunpack.c.l.b16 %v6780
    %v7433 = vunpack.c.h.b16 %v6780
    %v7434 = vunpack.c.l.b16 %v6781
    %v7435 = vunpack.c.h.b16 %v6781
    %v7436 = vunpack.c.l.b16 %v6782
    %v7437 = vunpack.c.h.b16 %v6782
    %v7438 = vunpack.c.l.b16 %v6783
    %v7439 = vunpack.c.h.b16 %v6783
    %v7440 = vunpack.c.l.b16 %v6784
    %v7441 = vunpack.c.h.b16 %v6784
    %v7442 = vunpack.c.l.b16 %v6785
    %v7443 = vunpack.c.h.b16 %v6785
    %v7444 = vunpack.c.l.b16 %v6786
    %v7445 = vunpack.c.h.b16 %v6786
    %v7446 = vunpack.c.l.b16 %v6787
    %v7447 = vunpack.c.h.b16 %v6787
    %v7448 = vunpack.c.l.b16 %v6788
    %v7449 = vunpack.c.h.b16 %v6788
    %v7450 = vunpack.c.l.b16 %v6789
    %v7451 = vunpack.c.h.b16 %v6789
    %v7452 = vunpack.c.l.b16 %v6790
    %v7453 = vunpack.c.h.b16 %v6790
    %v7454 = vunpack.c.l.b16 %v6791
    %v7455 = vunpack.c.h.b16 %v6791
    %v7456 = vunpack.c.l.b16 %v6792
    %v7457 = vunpack.c.h.b16 %v6792
    %v7458 = vunpack.c.l.b16 %v6793
    %v7459 = vunpack.c.h.b16 %v6793
    %v7460 = vunpack.c.l.b16 %v6794
    %v7461 = vunpack.c.h.b16 %v6794
    %v7462 = vunpack.c.l.b16 %v6795
    %v7463 = vunpack.c.h.b16 %v6795
    %v7464 = vunpack.c.l.b16 %v6796
    %v7465 = vunpack.c.h.b16 %v6796
    %v7466 = vunpack.c.l.b16 %v6797
    %v7467 = vunpack.c.h.b16 %v6797
    %v7468 = vunpack.c.l.b16 %v6798
    %v7469 = vunpack.c.h.b16 %v6798
    %v7470 = vunpack.c.l.b16 %v6799
    %v7471 = vunpack.c.h.b16 %v6799
    %v7472 = vunpack.c.l.b16 %v6800
    %v7473 = vunpack.c.h.b16 %v6800
    %v7474 = vunpack.c.l.b16 %v6801
    %v7475 = vunpack.c.h.b16 %v6801
    %v7476 = vunpack.c.l.b16 %v6802
    %v7477 = vunpack.c.h.b16 %v6802
    %v7478 = vunpack.c.l.b16 %v6803
    %v7479 = vunpack.c.h.b16 %v6803
    %v7480 = vunpack.c.l.b16 %v6804
    %v7481 = vunpack.c.h.b16 %v6804
    %v7482 = vunpack.c.l.b16 %v6805
    %v7483 = vunpack.c.h.b16 %v6805
    %v7484 = vunpack.c.l.b16 %v6806
    %v7485 = vunpack.c.h.b16 %v6806
    %v7486 = vunpack.c.l.b16 %v6807
    %v7487 = vunpack.c.h.b16 %v6807
    %v7488 = vunpack.c.l.b16 %v6808
    %v7489 = vunpack.c.h.b16 %v6808
    %v7490 = vunpack.c.l.b16 %v6809
    %v7491 = vunpack.c.h.b16 %v6809
    %v7492 = vunpack.c.l.b16 %v6810
    %v7493 = vunpack.c.h.b16 %v6810
    %v7494 = vunpack.c.l.b16 %v6811
    %v7495 = vunpack.c.h.b16 %v6811
    %v7496 = vunpack.c.l.b16 %v6812
    %v7497 = vunpack.c.h.b16 %v6812
    %v7498 = vunpack.c.l.b16 %v6813
    %v7499 = vunpack.c.h.b16 %v6813
    %v7500 = vunpack.c.l.b16 %v6814
    %v7501 = vunpack.c.h.b16 %v6814
    %v7502 = vunpack.c.l.b16 %v6815
    %v7503 = vunpack.c.h.b16 %v6815
    %v7504 = vunpack.c.l.b16 %v6816
    %v7505 = vunpack.c.h.b16 %v6816
    %v7506 = vunpack.c.l.b16 %v6817
    %v7507 = vunpack.c.h.b16 %v6817
    %v7508 = vunpack.c.l.b16 %v6818
    %v7509 = vunpack.c.h.b16 %v6818
    %v7510 = vunpack.c.l.b16 %v6819
    %v7511 = vunpack.c.h.b16 %v6819
    %v7512 = vunpack.c.l.b16 %v6820
    %v7513 = vunpack.c.h.b16 %v6820
    %v7514 = vunpack.c.l.b16 %v6821
    %v7515 = vunpack.c.h.b16 %v6821
    %v7516 = vunpack.c.l.b16 %v6822
    %v7517 = vunpack.c.h.b16 %v6822
    %v7518 = vunpack.c.l.b16 %v6823
    %v7519 = vunpack.c.h.b16 %v6823
    %v7520 = vunpack.c.l.b16 %v6824
    %v7521 = vunpack.c.h.b16 %v6824
    %v7522 = vunpack.c.l.b16 %v6825
    %v7523 = vunpack.c.h.b16 %v6825
    %v7524 = vunpack.c.l.b16 %v6826
    %v7525 = vunpack.c.h.b16 %v6826
    %v7526 = vunpack.c.l.b16 %v6827
    %v7527 = vunpack.c.h.b16 %v6827
    %v7528 = vunpack.c.l.b16 %v6828
    %v7529 = vunpack.c.h.b16 %v6828
    %v7530 = vunpack.c.l.b16 %v6829
    %v7531 = vunpack.c.h.b16 %v6829
    %v7532 = vunpack.c.l.b16 %v6830
    %v7533 = vunpack.c.h.b16 %v6830
    %v7534 = vunpack.c.l.b16 %v6831
    %v7535 = vunpack.c.h.b16 %v6831
    %v7536 = vunpack.c.l.b16 %v6832
    %v7537 = vunpack.c.h.b16 %v6832
    %v7538 = vunpack.c.l.b16 %v6833
    %v7539 = vunpack.c.h.b16 %v6833
    %v7540 = vunpack.c.l.b16 %v6834
    %v7541 = vunpack.c.h.b16 %v6834
    %v7542 = vunpack.c.l.b16 %v6835
    %v7543 = vunpack.c.h.b16 %v6835
    %v7544 = vunpack.c.l.b16 %v6836
    %v7545 = vunpack.c.h.b16 %v6836
    %v7546 = vunpack.c.l.b16 %v6837
    %v7547 = vunpack.c.h.b16 %v6837
    %v7548 = vunpack.c.l.b16 %v6838
    %v7549 = vunpack.c.h.b16 %v6838
    %v7550 = vunpack.c.l.b16 %v6839
    %v7551 = vunpack.c.h.b16 %v6839
    %v7552 = vunpack.c.l.b16 %v6840
    %v7553 = vunpack.c.h.b16 %v6840
    %v7554 = vunpack.c.l.b16 %v6841
    %v7555 = vunpack.c.h.b16 %v6841
    %v7556 = vunpack.c.l.b16 %v6842
    %v7557 = vunpack.c.h.b16 %v6842
    %v7558 = vunpack.c.l.b16 %v6843
    %v7559 = vunpack.c.h.b16 %v6843
    %v7560 = vunpack.c.l.b16 %v6844
    %v7561 = vunpack.c.h.b16 %v6844
    %v7562 = vunpack.c.l.b16 %v6845
    %v7563 = vunpack.c.h.b16 %v6845
    %v7564 = vunpack.c.l.b16 %v6846
    %v7565 = vunpack.c.h.b16 %v6846
    %v7566 = vunpack.c.l.b16 %v6847
    %v7567 = vunpack.c.h.b16 %v6847
    %v7568 = vunpack.c.l.b16 %v6848
    %v7569 = vunpack.c.h.b16 %v6848
    %v7570 = vunpack.c.l.b16 %v6849
    %v7571 = vunpack.c.h.b16 %v6849
    %v7572 = vunpack.c.l.b16 %v6850
    %v7573 = vunpack.c.h.b16 %v6850
    %v7574 = vunpack.c.l.b16 %v6851
    %v7575 = vunpack.c.h.b16 %v6851
    %v7576 = vunpack.c.l.b16 %v6852
    %v7577 = vunpack.c.h.b16 %v6852
    %v7578 = vunpack.c.l.b16 %v6853
    %v7579 = vunpack.c.h.b16 %v6853
    %v7580 = vunpack.c.l.b16 %v6854
    %v7581 = vunpack.c.h.b16 %v6854
    %v7582 = vunpack.c.l.b16 %v6855
    %v7583 = vunpack.c.h.b16 %v6855
    %v7584 = vunpack.c.l.b16 %v6856
    %v7585 = vunpack.c.h.b16 %v6856
    %v7586 = vunpack.c.l.b16 %v6857
    %v7587 = vunpack.c.h.b16 %v6857
    %v7588 = vunpack.c.l.b16 %v6858
    %v7589 = vunpack.c.h.b16 %v6858
    %v7590 = vunpack.c.l.b16 %v6859
    %v7591 = vunpack.c.h.b16 %v6859
    %v7592 = vunpack.c.l.b16 %v6860
    %v7593 = vunpack.c.h.b16 %v6860
    %v7594 = vunpack.c.l.b16 %v6861
    %v7595 = vunpack.c.h.b16 %v6861
    %v7596 = vunpack.c.l.b16 %v6862
    %v7597 = vunpack.c.h.b16 %v6862
    %v7598 = vunpack.c.l.b16 %v6863
    %v7599 = vunpack.c.h.b16 %v6863
    %v7600 = vunpack.c.l.b16 %v6864
    %v7601 = vunpack.c.h.b16 %v6864
    %v7602 = vunpack.c.l.b16 %v6865
    %v7603 = vunpack.c.h.b16 %v6865
    %v7604 = vunpack.c.l.b16 %v6866
    %v7605 = vunpack.c.h.b16 %v6866
    %v7606 = vunpack.c.l.b16 %v6867
    %v7607 = vunpack.c.h.b16 %v6867
    %v7608 = vunpack.c.l.b16 %v6868
    %v7609 = vunpack.c.h.b16 %v6868
    %v7610 = vunpack.c.l.b16 %v6869
    %v7611 = vunpack.c.h.b16 %v6869
    %v7612 = vunpack.c.l.b16 %v6870
    %v7613 = vunpack.c.h.b16 %v6870
    %v7614 = vunpack.c.l.b16 %v6871
    %v7615 = vunpack.c.h.b16 %v6871
    %v7616 = vunpack.c.l.b16 %v6872
    %v7617 = vunpack.c.h.b16 %v6872
    %v7618 = vunpack.c.l.b16 %v6873
    %v7619 = vunpack.c.h.b16 %v6873
    %v7620 = vunpack.c.l.b16 %v6874
    %v7621 = vunpack.c.h.b16 %v6874
    %v7622 = vunpack.c.l.b16 %v6875
    %v7623 = vunpack.c.h.b16 %v6875
    %v7624 = vunpack.c.l.b16 %v6876
    %v7625 = vunpack.c.h.b16 %v6876
    %v7626 = vunpack.c.l.b16 %v6877
    %v7627 = vunpack.c.h.b16 %v6877
    %v7628 = vunpack.c.l.b16 %v6878
    %v7629 = vunpack.c.h.b16 %v6878
    %v7630 = vunpack.c.l.b16 %v6879
    %v7631 = vunpack.c.h.b16 %v6879
    %v7632 = vunpack.c.l.b16 %v6880
    %v7633 = vunpack.c.h.b16 %v6880
    %v7634 = vunpack.c.l.b16 %v6881
    %v7635 = vunpack.c.h.b16 %v6881
    %v7636 = vunpack.c.l.b16 %v6882
    %v7637 = vunpack.c.h.b16 %v6882
    %v7638 = vunpack.c.l.b16 %v6883
    %v7639 = vunpack.c.h.b16 %v6883
    %v7640 = vunpack.c.l.b16 %v6884
    %v7641 = vunpack.c.h.b16 %v6884
    %v7642 = vunpack.c.l.b16 %v6885
    %v7643 = vunpack.c.h.b16 %v6885
    %v7644 = vunpack.c.l.b16 %v6886
    %v7645 = vunpack.c.h.b16 %v6886
    %v7646 = vunpack.c.l.b16 %v6887
    %v7647 = vunpack.c.h.b16 %v6887
    %v7648 = vunpack.c.l.b16 %v6888
    %v7649 = vunpack.c.h.b16 %v6888
    %v7650 = vunpack.c.l.b16 %v6889
    %v7651 = vunpack.c.h.b16 %v6889
    %v7652 = vunpack.c.l.b16 %v6890
    %v7653 = vunpack.c.h.b16 %v6890
    %v7654 = vunpack.c.l.b16 %v6891
    %v7655 = vunpack.c.h.b16 %v6891
    %v7656 = vunpack.c.l.b16 %v6892
    %v7657 = vunpack.c.h.b16 %v6892
    %v7658 = vunpack.c.l.b16 %v6893
    %v7659 = vunpack.c.h.b16 %v6893
    %v7660 = vunpack.c.l.b16 %v6894
    %v7661 = vunpack.c.h.b16 %v6894
    %v7662 = vunpack.c.l.b16 %v6895
    %v7663 = vunpack.c.h.b16 %v6895
    %v7664 = vpack.c.b16 %v7160, %v7152
    %v7665 = vpack.c.b16 %v7161, %v7153
    %v7666 = vpack.c.b16 %v7162, %v7154
    %v7667 = vpack.c.b16 %v7163, %v7155
    %v7668 = vpack.c.b16 %v7164, %v7156
    %v7669 = vpack.c.b16 %v7165, %v7157
    %v7670 = vpack.c.b16 %v7166, %v7158
    %v7671 = vpack.c.b16 %v7167, %v7159
    %v7672 = vpack.c.b16 %v7176, %v7168
    %v7673 = vpack.c.b16 %v7177, %v7169
    %v7674 = vpack.c.b16 %v7178, %v7170
    %v7675 = vpack.c.b16 %v7179, %v7171
    %v7676 = vpack.c.b16 %v7180, %v7172
    %v7677 = vpack.c.b16 %v7181, %v7173
    %v7678 = vpack.c.b16 %v7182, %v7174
    %v7679 = vpack.c.b16 %v7183, %v7175
    %v7680 = vpack.c.b16 %v7192, %v7184
    %v7681 = vpack.c.b16 %v7193, %v7185
    %v7682 = vpack.c.b16 %v7194, %v7186
    %v7683 = vpack.c.b16 %v7195, %v7187
    %v7684 = vpack.c.b16 %v7196, %v7188
    %v7685 = vpack.c.b16 %v7197, %v7189
    %v7686 = vpack.c.b16 %v7198, %v7190
    %v7687 = vpack.c.b16 %v7199, %v7191
    %v7688 = vpack.c.b16 %v7208, %v7200
    %v7689 = vpack.c.b16 %v7209, %v7201
    %v7690 = vpack.c.b16 %v7210, %v7202
    %v7691 = vpack.c.b16 %v7211, %v7203
    %v7692 = vpack.c.b16 %v7212, %v7204
    %v7693 = vpack.c.b16 %v7213, %v7205
    %v7694 = vpack.c.b16 %v7214, %v7206
    %v7695 = vpack.c.b16 %v7215, %v7207
    %v7696 = vpack.c.b16 %v7224, %v7216
    %v7697 = vpack.c.b16 %v7225, %v7217
    %v7698 = vpack.c.b16 %v7226, %v7218
    %v7699 = vpack.c.b16 %v7227, %v7219
    %v7700 = vpack.c.b16 %v7228, %v7220
    %v7701 = vpack.c.b16 %v7229, %v7221
    %v7702 = vpack.c.b16 %v7230, %v7222
    %v7703 = vpack.c.b16 %v7231, %v7223
    %v7704 = vpack.c.b16 %v7240, %v7232
    %v7705 = vpack.c.b16 %v7241, %v7233
    %v7706 = vpack.c.b16 %v7242, %v7234
    %v7707 = vpack.c.b16 %v7243, %v7235
    %v7708 = vpack.c.b16 %v7244, %v7236
    %v7709 = vpack.c.b16 %v7245, %v7237
    %v7710 = vpack.c.b16 %v7246, %v7238
    %v7711 = vpack.c.b16 %v7247, %v7239
    %v7712 = vpack.c.b16 %v7256, %v7248
    %v7713 = vpack.c.b16 %v7257, %v7249
    %v7714 = vpack.c.b16 %v7258, %v7250
    %v7715 = vpack.c.b16 %v7259, %v7251
    %v7716 = vpack.c.b16 %v7260, %v7252
    %v7717 = vpack.c.b16 %v7261, %v7253
    %v7718 = vpack.c.b16 %v7262, %v7254
    %v7719 = vpack.c.b16 %v7263, %v7255
    %v7720 = vpack.c.b16 %v7272, %v7264
    %v7721 = vpack.c.b16 %v7273, %v7265
    %v7722 = vpack.c.b16 %v7274, %v7266
    %v7723 = vpack.c.b16 %v7275, %v7267
    %v7724 = vpack.c.b16 %v7276, %v7268
    %v7725 = vpack.c.b16 %v7277, %v7269
    %v7726 = vpack.c.b16 %v7278, %v7270
    %v7727 = vpack.c.b16 %v7279, %v7271
    %v7728 = vpack.c.b16 %v7288, %v7280
    %v7729 = vpack.c.b16 %v7289, %v7281
    %v7730 = vpack.c.b16 %v7290, %v7282
    %v7731 = vpack.c.b16 %v7291, %v7283
    %v7732 = vpack.c.b16 %v7292, %v7284
    %v7733 = vpack.c.b16 %v7293, %v7285
    %v7734 = vpack.c.b16 %v7294, %v7286
    %v7735 = vpack.c.b16 %v7295, %v7287
    %v7736 = vpack.c.b16 %v7304, %v7296
    %v7737 = vpack.c.b16 %v7305, %v7297
    %v7738 = vpack.c.b16 %v7306, %v7298
    %v7739 = vpack.c.b16 %v7307, %v7299
    %v7740 = vpack.c.b16 %v7308, %v7300
    %v7741 = vpack.c.b16 %v7309, %v7301
    %v7742 = vpack.c.b16 %v7310, %v7302
    %v7743 = vpack.c.b16 %v7311, %v7303
    %v7744 = vpack.c.b16 %v7320, %v7312
    %v7745 = vpack.c.b16 %v7321, %v7313
    %v7746 = vpack.c.b16 %v7322, %v7314
    %v7747 = vpack.c.b16 %v7323, %v7315
    %v7748 = vpack.c.b16 %v7324, %v7316
    %v7749 = vpack.c.b16 %v7325, %v7317
    %v7750 = vpack.c.b16 %v7326, %v7318
    %v7751 = vpack.c.b16 %v7327, %v7319
    %v7752 = vpack.c.b16 %v7336, %v7328
    %v7753 = vpack.c.b16 %v7337, %v7329
    %v7754 = vpack.c.b16 %v7338, %v7330
    %v7755 = vpack.c.b16 %v7339, %v7331
    %v7756 = vpack.c.b16 %v7340, %v7332
    %v7757 = vpack.c.b16 %v7341, %v7333
    %v7758 = vpack.c.b16 %v7342, %v7334
    %v7759 = vpack.c.b16 %v7343, %v7335
    %v7760 = vpack.c.b16 %v7352, %v7344
    %v7761 = vpack.c.b16 %v7353, %v7345
    %v7762 = vpack.c.b16 %v7354, %v7346
    %v7763 = vpack.c.b16 %v7355, %v7347
    %v7764 = vpack.c.b16 %v7356, %v7348
    %v7765 = vpack.c.b16 %v7357, %v7349
    %v7766 = vpack.c.b16 %v7358, %v7350
    %v7767 = vpack.c.b16 %v7359, %v7351
    %v7768 = vpack.c.b16 %v7368, %v7360
    %v7769 = vpack.c.b16 %v7369, %v7361
    %v7770 = vpack.c.b16 %v7370, %v7362
    %v7771 = vpack.c.b16 %v7371, %v7363
    %v7772 = vpack.c.b16 %v7372, %v7364
    %v7773 = vpack.c.b16 %v7373, %v7365
    %v7774 = vpack.c.b16 %v7374, %v7366
    %v7775 = vpack.c.b16 %v7375, %v7367
    %v7776 = vpack.c.b16 %v7384, %v7376
    %v7777 = vpack.c.b16 %v7385, %v7377
    %v7778 = vpack.c.b16 %v7386, %v7378
    %v7779 = vpack.c.b16 %v7387, %v7379
    %v7780 = vpack.c.b16 %v7388, %v7380
    %v7781 = vpack.c.b16 %v7389, %v7381
    %v7782 = vpack.c.b16 %v7390, %v7382
    %v7783 = vpack.c.b16 %v7391, %v7383
    %v7784 = vpack.c.b16 %v7400, %v7392
    %v7785 = vpack.c.b16 %v7401, %v7393
    %v7786 = vpack.c.b16 %v7402, %v7394
    %v7787 = vpack.c.b16 %v7403, %v7395
    %v7788 = vpack.c.b16 %v7404, %v7396
    %v7789 = vpack.c.b16 %v7405, %v7397
    %v7790 = vpack.c.b16 %v7406, %v7398
    %v7791 = vpack.c.b16 %v7407, %v7399
    %v7792 = vpack.c.b16 %v7416, %v7408
    %v7793 = vpack.c.b16 %v7417, %v7409
    %v7794 = vpack.c.b16 %v7418, %v7410
    %v7795 = vpack.c.b16 %v7419, %v7411
    %v7796 = vpack.c.b16 %v7420, %v7412
    %v7797 = vpack.c.b16 %v7421, %v7413
    %v7798 = vpack.c.b16 %v7422, %v7414
    %v7799 = vpack.c.b16 %v7423, %v7415
    %v7800 = vpack.c.b16 %v7432, %v7424
    %v7801 = vpack.c.b16 %v7433, %v7425
    %v7802 = vpack.c.b16 %v7434, %v7426
    %v7803 = vpack.c.b16 %v7435, %v7427
    %v7804 = vpack.c.b16 %v7436, %v7428
    %v7805 = vpack.c.b16 %v7437, %v7429
    %v7806 = vpack.c.b16 %v7438, %v7430
    %v7807 = vpack.c.b16 %v7439, %v7431
    %v7808 = vpack.c.b16 %v7448, %v7440
    %v7809 = vpack.c.b16 %v7449, %v7441
    %v7810 = vpack.c.b16 %v7450, %v7442
    %v7811 = vpack.c.b16 %v7451, %v7443
    %v7812 = vpack.c.b16 %v7452, %v7444
    %v7813 = vpack.c.b16 %v7453, %v7445
    %v7814 = vpack.c.b16 %v7454, %v7446
    %v7815 = vpack.c.b16 %v7455, %v7447
    %v7816 = vpack.c.b16 %v7464, %v7456
    %v7817 = vpack.c.b16 %v7465, %v7457
    %v7818 = vpack.c.b16 %v7466, %v7458
    %v7819 = vpack.c.b16 %v7467, %v7459
    %v7820 = vpack.c.b16 %v7468, %v7460
    %v7821 = vpack.c.b16 %v7469, %v7461
    %v7822 = vpack.c.b16 %v7470, %v7462
    %v7823 = vpack.c.b16 %v7471, %v7463
    %v7824 = vpack.c.b16 %v7480, %v7472
    %v7825 = vpack.c.b16 %v7481, %v7473
    %v7826 = vpack.c.b16 %v7482, %v7474
    %v7827 = vpack.c.b16 %v7483, %v7475
    %v7828 = vpack.c.b16 %v7484, %v7476
    %v7829 = vpack.c.b16 %v7485, %v7477
    %v7830 = vpack.c.b16 %v7486, %v7478
    %v7831 = vpack.c.b16 %v7487, %v7479
    %v7832 = vpack.c.b16 %v7496, %v7488
    %v7833 = vpack.c.b16 %v7497, %v7489
    %v7834 = vpack.c.b16 %v7498, %v7490
    %v7835 = vpack.c.b16 %v7499, %v7491
    %v7836 = vpack.c.b16 %v7500, %v7492
    %v7837 = vpack.c.b16 %v7501, %v7493
    %v7838 = vpack.c.b16 %v7502, %v7494
    %v7839 = vpack.c.b16 %v7503, %v7495
    %v7840 = vpack.c.b16 %v7512, %v7504
    %v7841 = vpack.c.b16 %v7513, %v7505
    %v7842 = vpack.c.b16 %v7514, %v7506
    %v7843 = vpack.c.b16 %v7515, %v7507
    %v7844 = vpack.c.b16 %v7516, %v7508
    %v7845 = vpack.c.b16 %v7517, %v7509
    %v7846 = vpack.c.b16 %v7518, %v7510
    %v7847 = vpack.c.b16 %v7519, %v7511
    %v7848 = vpack.c.b16 %v7528, %v7520
    %v7849 = vpack.c.b16 %v7529, %v7521
    %v7850 = vpack.c.b16 %v7530, %v7522
    %v7851 = vpack.c.b16 %v7531, %v7523
    %v7852 = vpack.c.b16 %v7532, %v7524
    %v7853 = vpack.c.b16 %v7533, %v7525
    %v7854 = vpack.c.b16 %v7534, %v7526
    %v7855 = vpack.c.b16 %v7535, %v7527
    %v7856 = vpack.c.b16 %v7544, %v7536
    %v7857 = vpack.c.b16 %v7545, %v7537
    %v7858 = vpack.c.b16 %v7546, %v7538
    %v7859 = vpack.c.b16 %v7547, %v7539
    %v7860 = vpack.c.b16 %v7548, %v7540
    %v7861 = vpack.c.b16 %v7549, %v7541
    %v7862 = vpack.c.b16 %v7550, %v7542
    %v7863 = vpack.c.b16 %v7551, %v7543
    %v7864 = vpack.c.b16 %v7560, %v7552
    %v7865 = vpack.c.b16 %v7561, %v7553
    %v7866 = vpack.c.b16 %v7562, %v7554
    %v7867 = vpack.c.b16 %v7563, %v7555
    %v7868 = vpack.c.b16 %v7564, %v7556
    %v7869 = vpack.c.b16 %v7565, %v7557
    %v7870 = vpack.c.b16 %v7566, %v7558
    %v7871 = vpack.c.b16 %v7567, %v7559
    %v7872 = vpack.c.b16 %v7576, %v7568
    %v7873 = vpack.c.b16 %v7577, %v7569
    %v7874 = vpack.c.b16 %v7578, %v7570
    %v7875 = vpack.c.b16 %v7579, %v7571
    %v7876 = vpack.c.b16 %v7580, %v7572
    %v7877 = vpack.c.b16 %v7581, %v7573
    %v7878 = vpack.c.b16 %v7582, %v7574
    %v7879 = vpack.c.b16 %v7583, %v7575
    %v7880 = vpack.c.b16 %v7592, %v7584
    %v7881 = vpack.c.b16 %v7593, %v7585
    %v7882 = vpack.c.b16 %v7594, %v7586
    %v7883 = vpack.c.b16 %v7595, %v7587
    %v7884 = vpack.c.b16 %v7596, %v7588
    %v7885 = vpack.c.b16 %v7597, %v7589
    %v7886 = vpack.c.b16 %v7598, %v7590
    %v7887 = vpack.c.b16 %v7599, %v7591
    %v7888 = vpack.c.b16 %v7608, %v7600
    %v7889 = vpack.c.b16 %v7609, %v7601
    %v7890 = vpack.c.b16 %v7610, %v7602
    %v7891 = vpack.c.b16 %v7611, %v7603
    %v7892 = vpack.c.b16 %v7612, %v7604
    %v7893 = vpack.c.b16 %v7613, %v7605
    %v7894 = vpack.c.b16 %v7614, %v7606
    %v7895 = vpack.c.b16 %v7615, %v7607
    %v7896 = vpack.c.b16 %v7624, %v7616
    %v7897 = vpack.c.b16 %v7625, %v7617
    %v7898 = vpack.c.b16 %v7626, %v7618
    %v7899 = vpack.c.b16 %v7627, %v7619
    %v7900 = vpack.c.b16 %v7628, %v7620
    %v7901 = vpack.c.b16 %v7629, %v7621
    %v7902 = vpack.c.b16 %v7630, %v7622
    %v7903 = vpack.c.b16 %v7631, %v7623
    %v7904 = vpack.c.b16 %v7640, %v7632
    %v7905 = vpack.c.b16 %v7641, %v7633
    %v7906 = vpack.c.b16 %v7642, %v7634
    %v7907 = vpack.c.b16 %v7643, %v7635
    %v7908 = vpack.c.b16 %v7644, %v7636
    %v7909 = vpack.c.b16 %v7645, %v7637
    %v7910 = vpack.c.b16 %v7646, %v7638
    %v7911 = vpack.c.b16 %v7647, %v7639
    %v7912 = vpack.c.b16 %v7656, %v7648
    %v7913 = vpack.c.b16 %v7657, %v7649
    %v7914 = vpack.c.b16 %v7658, %v7650
    %v7915 = vpack.c.b16 %v7659, %v7651
    %v7916 = vpack.c.b16 %v7660, %v7652
    %v7917 = vpack.c.b16 %v7661, %v7653
    %v7918 = vpack.c.b16 %v7662, %v7654
    %v7919 = vpack.c.b16 %v7663, %v7655
    %8176 = vmatprep.subr.bf16.mxu0 %v7665
    %8177 = vmatpush1.bf16.msra.mxu0 %v7664
    %8178 = vmatprep.subr.bf16.mxu0 %v7673
    %8179 = vmatpush1.bf16.msra.mxu0 %v7672
    %8180 = vmatprep.subr.bf16.mxu0 %v7681
    %8181 = vmatpush1.bf16.msra.mxu0 %v7680
    %8182 = vmatprep.subr.bf16.mxu0 %v7689
    %8183 = vmatpush1.bf16.msra.mxu0 %v7688
    %8184 = vmatprep.subr.bf16.mxu0 %v7697
    %8185 = vmatpush1.bf16.msra.mxu0 %v7696
    %8186 = vmatprep.subr.bf16.mxu0 %v7705
    %8187 = vmatpush1.bf16.msra.mxu0 %v7704
    %8188 = vmatprep.subr.bf16.mxu0 %v7713
    %8189 = vmatpush1.bf16.msra.mxu0 %v7712
    %8190 = vmatprep.subr.bf16.mxu0 %v7721
    %8191 = vmatpush1.bf16.msra.mxu0 %v7720
    %8192 = vmatprep.subr.bf16.mxu0 %v7729
    %8193 = vmatpush1.bf16.msra.mxu0 %v7728
    %8194 = vmatprep.subr.bf16.mxu0 %v7737
    %8195 = vmatpush1.bf16.msra.mxu0 %v7736
    %8196 = vmatprep.subr.bf16.mxu0 %v7745
    %8197 = vmatpush1.bf16.msra.mxu0 %v7744
    %8198 = vmatprep.subr.bf16.mxu0 %v7753
    %8199 = vmatpush1.bf16.msra.mxu0 %v7752
    %8200 = vmatprep.subr.bf16.mxu0 %v7761
    %8201 = vmatpush1.bf16.msra.mxu0 %v7760
    %8202 = vmatprep.subr.bf16.mxu0 %v7769
    %8203 = vmatpush1.bf16.msra.mxu0 %v7768
    %8204 = vmatprep.subr.bf16.mxu0 %v7777
    %8205 = vmatpush1.bf16.msra.mxu0 %v7776
    %8206 = vmatprep.subr.bf16.mxu0 %v7785
    %8207 = vmatpush1.bf16.msra.mxu0 %v7784
    %8208 = vmatprep.mubr.bf16.mxu0 %v2670
    %8209 = vmatmul.mubr.bf16.gmra.mrb[0].mxu0 %v2669
    %v8210 = vpop.f32.mrb[0].mxu0
    %v8211 = vadd.f32 0.0, %v8210
    %v8212 = vpop.f32.mrb[0].mxu0
    %v8213 = vadd.f32 0.0, %v8212
    %v8214 = vpop.f32.mrb[0].mxu0
    %v8215 = vadd.f32 0.0, %v8214
    %v8216 = vpop.f32.mrb[0].mxu0
    %v8217 = vadd.f32 0.0, %v8216
    %8218 = vmatprep.mubr.bf16.mxu0 %v2674
    %8219 = vmatmul.mubr.bf16.gmra.mrb[0].mxu0 %v2673
    %v8220 = vpop.f32.mrb[0].mxu0
    %v8221 = vadd.f32 0.0, %v8220
    %v8222 = vpop.f32.mrb[0].mxu0
    %v8223 = vadd.f32 0.0, %v8222
    %v8224 = vpop.f32.mrb[0].mxu0
    %v8225 = vadd.f32 0.0, %v8224
    %v8226 = vpop.f32.mrb[0].mxu0
    %v8227 = vadd.f32 0.0, %v8226
    %8228 = vdwg.mxu0
    %8229 = vmatprep.subr.bf16.mxu0 %v7793
    %8230 = vmatpush1.bf16.msra.mxu0 %v7792
    %8231 = vmatprep.subr.bf16.mxu0 %v7801
    %8232 = vmatpush1.bf16.msra.mxu0 %v7800
    %8233 = vmatprep.subr.bf16.mxu0 %v7809
    %8234 = vmatpush1.bf16.msra.mxu0 %v7808
    %8235 = vmatprep.subr.bf16.mxu0 %v7817
    %8236 = vmatpush1.bf16.msra.mxu0 %v7816
    %8237 = vmatprep.subr.bf16.mxu0 %v7825
    %8238 = vmatpush1.bf16.msra.mxu0 %v7824
    %8239 = vmatprep.subr.bf16.mxu0 %v7833
    %8240 = vmatpush1.bf16.msra.mxu0 %v7832
    %8241 = vmatprep.subr.bf16.mxu0 %v7841
    %8242 = vmatpush1.bf16.msra.mxu0 %v7840
    %8243 = vmatprep.subr.bf16.mxu0 %v7849
    %8244 = vmatpush1.bf16.msra.mxu0 %v7848
    %8245 = vmatprep.subr.bf16.mxu0 %v7857
    %8246 = vmatpush1.bf16.msra.mxu0 %v7856
    %8247 = vmatprep.subr.bf16.mxu0 %v7865
    %8248 = vmatpush1.bf16.msra.mxu0 %v7864
    %8249 = vmatprep.subr.bf16.mxu0 %v7873
    %8250 = vmatpush1.bf16.msra.mxu0 %v7872
    %8251 = vmatprep.subr.bf16.mxu0 %v7881
    %8252 = vmatpush1.bf16.msra.mxu0 %v7880
    %8253 = vmatprep.subr.bf16.mxu0 %v7889
    %8254 = vmatpush1.bf16.msra.mxu0 %v7888
    %8255 = vmatprep.subr.bf16.mxu0 %v7897
    %8256 = vmatpush1.bf16.msra.mxu0 %v7896
    %8257 = vmatprep.subr.bf16.mxu0 %v7905
    %8258 = vmatpush1.bf16.msra.mxu0 %v7904
    %8259 = vmatprep.subr.bf16.mxu0 %v7913
    %8260 = vmatpush1.bf16.msra.mxu0 %v7912
    %8261 = vmatprep.mubr.bf16.mxu0 %v2672
    %8262 = vmatmul.mubr.bf16.gmra.mrb[0].mxu0 %v2671
    %v8263 = vpop.f32.mrb[0].mxu0
    %v8264 = vadd.f32 %v8211, %v8263
    %v8265 = vpop.f32.mrb[0].mxu0
    %v8266 = vadd.f32 %v8213, %v8265
    %v8267 = vpop.f32.mrb[0].mxu0
    %v8268 = vadd.f32 %v8215, %v8267
    %v8269 = vpop.f32.mrb[0].mxu0
    %v8270 = vadd.f32 %v8217, %v8269
    %8271 = vmatprep.mubr.bf16.mxu0 %v2676
    %8272 = vmatmul.mubr.bf16.gmra.mrb[0].mxu0 %v2675
    %v8273 = vpop.f32.mrb[0].mxu0
    %v8274 = vadd.f32 %v8221, %v8273
    %v8275 = vpop.f32.mrb[0].mxu0
    %v8276 = vadd.f32 %v8223, %v8275
    %v8277 = vpop.f32.mrb[0].mxu0
    %v8278 = vadd.f32 %v8225, %v8277
    %v8279 = vpop.f32.mrb[0].mxu0
    %v8280 = vadd.f32 %v8227, %v8279
    %8281 = vdwg.mxu0
    %8282 = vmatprep.subr.bf16.mxu0 %v7667
    %8283 = vmatpush1.bf16.msra.mxu0 %v7666
    %8284 = vmatprep.subr.bf16.mxu0 %v7675
    %8285 = vmatpush1.bf16.msra.mxu0 %v7674
    %8286 = vmatprep.subr.bf16.mxu0 %v7683
    %8287 = vmatpush1.bf16.msra.mxu0 %v7682
    %8288 = vmatprep.subr.bf16.mxu0 %v7691
    %8289 = vmatpush1.bf16.msra.mxu0 %v7690
    %8290 = vmatprep.subr.bf16.mxu0 %v7699
    %8291 = vmatpush1.bf16.msra.mxu0 %v7698
    %8292 = vmatprep.subr.bf16.mxu0 %v7707
    %8293 = vmatpush1.bf16.msra.mxu0 %v7706
    %8294 = vmatprep.subr.bf16.mxu0 %v7715
    %8295 = vmatpush1.bf16.msra.mxu0 %v7714
    %8296 = vmatprep.subr.bf16.mxu0 %v7723
    %8297 = vmatpush1.bf16.msra.mxu0 %v7722
    %8298 = vmatprep.subr.bf16.mxu0 %v7731
    %8299 = vmatpush1.bf16.msra.mxu0 %v7730
    %8300 = vmatprep.subr.bf16.mxu0 %v7739
    %8301 = vmatpush1.bf16.msra.mxu0 %v7738
    %8302 = vmatprep.subr.bf16.mxu0 %v7747
    %8303 = vmatpush1.bf16.msra.mxu0 %v7746
    %8304 = vmatprep.subr.bf16.mxu0 %v7755
    %8305 = vmatpush1.bf16.msra.mxu0 %v7754
    %8306 = vmatprep.subr.bf16.mxu0 %v7763
    %8307 = vmatpush1.bf16.msra.mxu0 %v7762
    %8308 = vmatprep.subr.bf16.mxu0 %v7771
    %8309 = vmatpush1.bf16.msra.mxu0 %v7770
    %8310 = vmatprep.subr.bf16.mxu0 %v7779
    %8311 = vmatpush1.bf16.msra.mxu0 %v7778
    %8312 = vmatprep.subr.bf16.mxu0 %v7787
    %8313 = vmatpush1.bf16.msra.mxu0 %v7786
    %8314 = vmatprep.mubr.bf16.mxu0 %v2670
    %8315 = vmatmul.mubr.bf16.gmra.mrb[0].mxu0 %v2669
    %v8316 = vpop.f32.mrb[0].mxu0
    %v8317 = vadd.f32 0.0, %v8316
    %v8318 = vpop.f32.mrb[0].mxu0
    %v8319 = vadd.f32 0.0, %v8318
    %v8320 = vpop.f32.mrb[0].mxu0
    %v8321 = vadd.f32 0.0, %v8320
    %v8322 = vpop.f32.mrb[0].mxu0
    %v8323 = vadd.f32 0.0, %v8322
    %8324 = vmatprep.mubr.bf16.mxu0 %v2674
    %8325 = vmatmul.mubr.bf16.gmra.mrb[0].mxu0 %v2673
    %v8326 = vpop.f32.mrb[0].mxu0
    %v8327 = vadd.f32 0.0, %v8326
    %v8328 = vpop.f32.mrb[0].mxu0
    %v8329 = vadd.f32 0.0, %v8328
    %v8330 = vpop.f32.mrb[0].mxu0
    %v8331 = vadd.f32 0.0, %v8330
    %v8332 = vpop.f32.mrb[0].mxu0
    %v8333 = vadd.f32 0.0, %v8332
    %8334 = vdwg.mxu0
    %8335 = vmatprep.subr.bf16.mxu0 %v7795
    %8336 = vmatpush1.bf16.msra.mxu0 %v7794
    %8337 = vmatprep.subr.bf16.mxu0 %v7803
    %8338 = vmatpush1.bf16.msra.mxu0 %v7802
    %8339 = vmatprep.subr.bf16.mxu0 %v7811
    %8340 = vmatpush1.bf16.msra.mxu0 %v7810
    %8341 = vmatprep.subr.bf16.mxu0 %v7819
    %8342 = vmatpush1.bf16.msra.mxu0 %v7818
    %8343 = vmatprep.subr.bf16.mxu0 %v7827
    %8344 = vmatpush1.bf16.msra.mxu0 %v7826
    %8345 = vmatprep.subr.bf16.mxu0 %v7835
    %8346 = vmatpush1.bf16.msra.mxu0 %v7834
    %8347 = vmatprep.subr.bf16.mxu0 %v7843
    %8348 = vmatpush1.bf16.msra.mxu0 %v7842
    %8349 = vmatprep.subr.bf16.mxu0 %v7851
    %8350 = vmatpush1.bf16.msra.mxu0 %v7850
    %8351 = vmatprep.subr.bf16.mxu0 %v7859
    %8352 = vmatpush1.bf16.msra.mxu0 %v7858
    %8353 = vmatprep.subr.bf16.mxu0 %v7867
    %8354 = vmatpush1.bf16.msra.mxu0 %v7866
    %8355 = vmatprep.subr.bf16.mxu0 %v7875
    %8356 = vmatpush1.bf16.msra.mxu0 %v7874
    %8357 = vmatprep.subr.bf16.mxu0 %v7883
    %8358 = vmatpush1.bf16.msra.mxu0 %v7882
    %8359 = vmatprep.subr.bf16.mxu0 %v7891
    %8360 = vmatpush1.bf16.msra.mxu0 %v7890
    %8361 = vmatprep.subr.bf16.mxu0 %v7899
    %8362 = vmatpush1.bf16.msra.mxu0 %v7898
    %8363 = vmatprep.subr.bf16.mxu0 %v7907
    %8364 = vmatpush1.bf16.msra.mxu0 %v7906
    %8365 = vmatprep.subr.bf16.mxu0 %v7915
    %8366 = vmatpush1.bf16.msra.mxu0 %v7914
    %8367 = vmatprep.mubr.bf16.mxu0 %v2672
    %8368 = vmatmul.mubr.bf16.gmra.mrb[0].mxu0 %v2671
    %v8369 = vpop.f32.mrb[0].mxu0
    %v8370 = vadd.f32 %v8317, %v8369
    %v8371 = vpop.f32.mrb[0].mxu0
    %v8372 = vadd.f32 %v8319, %v8371
    %v8373 = vpop.f32.mrb[0].mxu0
    %v8374 = vadd.f32 %v8321, %v8373
    %v8375 = vpop.f32.mrb[0].mxu0
    %v8376 = vadd.f32 %v8323, %v8375
    %8377 = vmatprep.mubr.bf16.mxu0 %v2676
    %8378 = vmatmul.mubr.bf16.gmra.mrb[0].mxu0 %v2675
    %v8379 = vpop.f32.mrb[0].mxu0
    %v8380 = vadd.f32 %v8327, %v8379
    %v8381 = vpop.f32.mrb[0].mxu0
    %v8382 = vadd.f32 %v8329, %v8381
    %v8383 = vpop.f32.mrb[0].mxu0
    %v8384 = vadd.f32 %v8331, %v8383
    %v8385 = vpop.f32.mrb[0].mxu0
    %v8386 = vadd.f32 %v8333, %v8385
    %8387 = vdwg.mxu0
    %8388 = vmatprep.subr.bf16.mxu0 %v7669
    %8389 = vmatpush1.bf16.msra.mxu0 %v7668
    %8390 = vmatprep.subr.bf16.mxu0 %v7677
    %8391 = vmatpush1.bf16.msra.mxu0 %v7676
    %8392 = vmatprep.subr.bf16.mxu0 %v7685
    %8393 = vmatpush1.bf16.msra.mxu0 %v7684
    %8394 = vmatprep.subr.bf16.mxu0 %v7693
    %8395 = vmatpush1.bf16.msra.mxu0 %v7692
    %8396 = vmatprep.subr.bf16.mxu0 %v7701
    %8397 = vmatpush1.bf16.msra.mxu0 %v7700
    %8398 = vmatprep.subr.bf16.mxu0 %v7709
    %8399 = vmatpush1.bf16.msra.mxu0 %v7708
    %8400 = vmatprep.subr.bf16.mxu0 %v7717
    %8401 = vmatpush1.bf16.msra.mxu0 %v7716
    %8402 = vmatprep.subr.bf16.mxu0 %v7725
    %8403 = vmatpush1.bf16.msra.mxu0 %v7724
    %8404 = vmatprep.subr.bf16.mxu0 %v7733
    %8405 = vmatpush1.bf16.msra.mxu0 %v7732
    %8406 = vmatprep.subr.bf16.mxu0 %v7741
    %8407 = vmatpush1.bf16.msra.mxu0 %v7740
    %8408 = vmatprep.subr.bf16.mxu0 %v7749
    %8409 = vmatpush1.bf16.msra.mxu0 %v7748
    %8410 = vmatprep.subr.bf16.mxu0 %v7757
    %8411 = vmatpush1.bf16.msra.mxu0 %v7756
    %8412 = vmatprep.subr.bf16.mxu0 %v7765
    %8413 = vmatpush1.bf16.msra.mxu0 %v7764
    %8414 = vmatprep.subr.bf16.mxu0 %v7773
    %8415 = vmatpush1.bf16.msra.mxu0 %v7772
    %8416 = vmatprep.subr.bf16.mxu0 %v7781
    %8417 = vmatpush1.bf16.msra.mxu0 %v7780
    %8418 = vmatprep.subr.bf16.mxu0 %v7789
    %8419 = vmatpush1.bf16.msra.mxu0 %v7788
    %8420 = vmatprep.mubr.bf16.mxu0 %v2670
    %8421 = vmatmul.mubr.bf16.gmra.mrb[0].mxu0 %v2669
    %v8422 = vpop.f32.mrb[0].mxu0
    %v8423 = vadd.f32 0.0, %v8422
    %v8424 = vpop.f32.mrb[0].mxu0
    %v8425 = vadd.f32 0.0, %v8424
    %v8426 = vpop.f32.mrb[0].mxu0
    %v8427 = vadd.f32 0.0, %v8426
    %v8428 = vpop.f32.mrb[0].mxu0
    %v8429 = vadd.f32 0.0, %v8428
    %8430 = vmatprep.mubr.bf16.mxu0 %v2674
    %8431 = vmatmul.mubr.bf16.gmra.mrb[0].mxu0 %v2673
    %v8432 = vpop.f32.mrb[0].mxu0
    %v8433 = vadd.f32 0.0, %v8432
    %v8434 = vpop.f32.mrb[0].mxu0
    %v8435 = vadd.f32 0.0, %v8434
    %v8436 = vpop.f32.mrb[0].mxu0
    %v8437 = vadd.f32 0.0, %v8436
    %v8438 = vpop.f32.mrb[0].mxu0
    %v8439 = vadd.f32 0.0, %v8438
    %8440 = vdwg.mxu0
    %8441 = vmatprep.subr.bf16.mxu0 %v7797
    %8442 = vmatpush1.bf16.msra.mxu0 %v7796
    %8443 = vmatprep.subr.bf16.mxu0 %v7805
    %8444 = vmatpush1.bf16.msra.mxu0 %v7804
    %8445 = vmatprep.subr.bf16.mxu0 %v7813
    %8446 = vmatpush1.bf16.msra.mxu0 %v7812
    %8447 = vmatprep.subr.bf16.mxu0 %v7821
    %8448 = vmatpush1.bf16.msra.mxu0 %v7820
    %8449 = vmatprep.subr.bf16.mxu0 %v7829
    %8450 = vmatpush1.bf16.msra.mxu0 %v7828
    %8451 = vmatprep.subr.bf16.mxu0 %v7837
    %8452 = vmatpush1.bf16.msra.mxu0 %v7836
    %8453 = vmatprep.subr.bf16.mxu0 %v7845
    %8454 = vmatpush1.bf16.msra.mxu0 %v7844
    %8455 = vmatprep.subr.bf16.mxu0 %v7853
    %8456 = vmatpush1.bf16.msra.mxu0 %v7852
    %8457 = vmatprep.subr.bf16.mxu0 %v7861
    %8458 = vmatpush1.bf16.msra.mxu0 %v7860
    %8459 = vmatprep.subr.bf16.mxu0 %v7869
    %8460 = vmatpush1.bf16.msra.mxu0 %v7868
    %8461 = vmatprep.subr.bf16.mxu0 %v7877
    %8462 = vmatpush1.bf16.msra.mxu0 %v7876
    %8463 = vmatprep.subr.bf16.mxu0 %v7885
    %8464 = vmatpush1.bf16.msra.mxu0 %v7884
    %8465 = vmatprep.subr.bf16.mxu0 %v7893
    %8466 = vmatpush1.bf16.msra.mxu0 %v7892
    %8467 = vmatprep.subr.bf16.mxu0 %v7901
    %8468 = vmatpush1.bf16.msra.mxu0 %v7900
    %8469 = vmatprep.subr.bf16.mxu0 %v7909
    %8470 = vmatpush1.bf16.msra.mxu0 %v7908
    %8471 = vmatprep.subr.bf16.mxu0 %v7917
    %8472 = vmatpush1.bf16.msra.mxu0 %v7916
    %8473 = vmatprep.mubr.bf16.mxu0 %v2672
    %8474 = vmatmul.mubr.bf16.gmra.mrb[0].mxu0 %v2671
    %v8475 = vpop.f32.mrb[0].mxu0
    %v8476 = vadd.f32 %v8423, %v8475
    %v8477 = vpop.f32.mrb[0].mxu0
    %v8478 = vadd.f32 %v8425, %v8477
    %v8479 = vpop.f32.mrb[0].mxu0
    %v8480 = vadd.f32 %v8427, %v8479
    %v8481 = vpop.f32.mrb[0].mxu0
    %v8482 = vadd.f32 %v8429, %v8481
    %8483 = vmatprep.mubr.bf16.mxu0 %v2676
    %8484 = vmatmul.mubr.bf16.gmra.mrb[0].mxu0 %v2675
    %v8485 = vpop.f32.mrb[0].mxu0
    %v8486 = vadd.f32 %v8433, %v8485
    %v8487 = vpop.f32.mrb[0].mxu0
    %v8488 = vadd.f32 %v8435, %v8487
    %v8489 = vpop.f32.mrb[0].mxu0
    %v8490 = vadd.f32 %v8437, %v8489
    %v8491 = vpop.f32.mrb[0].mxu0
    %v8492 = vadd.f32 %v8439, %v8491
    %8493 = vdwg.mxu0
    %8494 = vmatprep.subr.bf16.mxu0 %v7671
    %8495 = vmatpush1.bf16.msra.mxu0 %v7670
    %8496 = vmatprep.subr.bf16.mxu0 %v7679
    %8497 = vmatpush1.bf16.msra.mxu0 %v7678
    %8498 = vmatprep.subr.bf16.mxu0 %v7687
    %8499 = vmatpush1.bf16.msra.mxu0 %v7686
    %8500 = vmatprep.subr.bf16.mxu0 %v7695
    %8501 = vmatpush1.bf16.msra.mxu0 %v7694
    %8502 = vmatprep.subr.bf16.mxu0 %v7703
    %8503 = vmatpush1.bf16.msra.mxu0 %v7702
    %8504 = vmatprep.subr.bf16.mxu0 %v7711
    %8505 = vmatpush1.bf16.msra.mxu0 %v7710
    %8506 = vmatprep.subr.bf16.mxu0 %v7719
    %8507 = vmatpush1.bf16.msra.mxu0 %v7718
    %8508 = vmatprep.subr.bf16.mxu0 %v7727
    %8509 = vmatpush1.bf16.msra.mxu0 %v7726
    %8510 = vmatprep.subr.bf16.mxu0 %v7735
    %8511 = vmatpush1.bf16.msra.mxu0 %v7734
    %8512 = vmatprep.subr.bf16.mxu0 %v7743
    %8513 = vmatpush1.bf16.msra.mxu0 %v7742
    %8514 = vmatprep.subr.bf16.mxu0 %v7751
    %8515 = vmatpush1.bf16.msra.mxu0 %v7750
    %8516 = vmatprep.subr.bf16.mxu0 %v7759
    %8517 = vmatpush1.bf16.msra.mxu0 %v7758
    %8518 = vmatprep.subr.bf16.mxu0 %v7767
    %8519 = vmatpush1.bf16.msra.mxu0 %v7766
    %8520 = vmatprep.subr.bf16.mxu0 %v7775
    %8521 = vmatpush1.bf16.msra.mxu0 %v7774
    %8522 = vmatprep.subr.bf16.mxu0 %v7783
    %8523 = vmatpush1.bf16.msra.mxu0 %v7782
    %8524 = vmatprep.subr.bf16.mxu0 %v7791
    %8525 = vmatpush1.bf16.msra.mxu0 %v7790
    %8526 = vmatprep.mubr.bf16.mxu0 %v2670
    %8527 = vmatmul.mubr.bf16.gmra.mrb[0].mxu0 %v2669
    %v8528 = vpop.f32.mrb[0].mxu0
    %v8529 = vadd.f32 0.0, %v8528
    %v8530 = vpop.f32.mrb[0].mxu0
    %v8531 = vadd.f32 0.0, %v8530
    %v8532 = vpop.f32.mrb[0].mxu0
    %v8533 = vadd.f32 0.0, %v8532
    %v8534 = vpop.f32.mrb[0].mxu0
    %v8535 = vadd.f32 0.0, %v8534
    %8536 = vmatprep.mubr.bf16.mxu0 %v2674
    %8537 = vmatmul.mubr.bf16.gmra.mrb[0].mxu0 %v2673
    %v8538 = vpop.f32.mrb[0].mxu0
    %v8539 = vadd.f32 0.0, %v8538
    %v8540 = vpop.f32.mrb[0].mxu0
    %v8541 = vadd.f32 0.0, %v8540
    %v8542 = vpop.f32.mrb[0].mxu0
    %v8543 = vadd.f32 0.0, %v8542
    %v8544 = vpop.f32.mrb[0].mxu0
    %v8545 = vadd.f32 0.0, %v8544
    %8546 = vdwg.mxu0
    %8547 = vmatprep.subr.bf16.mxu0 %v7799
    %8548 = vmatpush1.bf16.msra.mxu0 %v7798
    %8549 = vmatprep.subr.bf16.mxu0 %v7807
    %8550 = vmatpush1.bf16.msra.mxu0 %v7806
    %8551 = vmatprep.subr.bf16.mxu0 %v7815
    %8552 = vmatpush1.bf16.msra.mxu0 %v7814
    %8553 = vmatprep.subr.bf16.mxu0 %v7823
    %8554 = vmatpush1.bf16.msra.mxu0 %v7822
    %8555 = vmatprep.subr.bf16.mxu0 %v7831
    %8556 = vmatpush1.bf16.msra.mxu0 %v7830
    %8557 = vmatprep.subr.bf16.mxu0 %v7839
    %8558 = vmatpush1.bf16.msra.mxu0 %v7838
    %8559 = vmatprep.subr.bf16.mxu0 %v7847
    %8560 = vmatpush1.bf16.msra.mxu0 %v7846
    %8561 = vmatprep.subr.bf16.mxu0 %v7855
    %8562 = vmatpush1.bf16.msra.mxu0 %v7854
    %8563 = vmatprep.subr.bf16.mxu0 %v7863
    %8564 = vmatpush1.bf16.msra.mxu0 %v7862
    %8565 = vmatprep.subr.bf16.mxu0 %v7871
    %8566 = vmatpush1.bf16.msra.mxu0 %v7870
    %8567 = vmatprep.subr.bf16.mxu0 %v7879
    %8568 = vmatpush1.bf16.msra.mxu0 %v7878
    %8569 = vmatprep.subr.bf16.mxu0 %v7887
    %8570 = vmatpush1.bf16.msra.mxu0 %v7886
    %8571 = vmatprep.subr.bf16.mxu0 %v7895
    %8572 = vmatpush1.bf16.msra.mxu0 %v7894
    %8573 = vmatprep.subr.bf16.mxu0 %v7903
    %8574 = vmatpush1.bf16.msra.mxu0 %v7902
    %8575 = vmatprep.subr.bf16.mxu0 %v7911
    %8576 = vmatpush1.bf16.msra.mxu0 %v7910
    %8577 = vmatprep.subr.bf16.mxu0 %v7919
    %8578 = vmatpush1.bf16.msra.mxu0 %v7918
    %8579 = vmatprep.mubr.bf16.mxu0 %v2672
    %8580 = vmatmul.mubr.bf16.gmra.mrb[0].mxu0 %v2671
    %v8581 = vpop.f32.mrb[0].mxu0
    %v8582 = vadd.f32 %v8529, %v8581
    %v8583 = vpop.f32.mrb[0].mxu0
    %v8584 = vadd.f32 %v8531, %v8583
    %v8585 = vpop.f32.mrb[0].mxu0
    %v8586 = vadd.f32 %v8533, %v8585
    %v8587 = vpop.f32.mrb[0].mxu0
    %v8588 = vadd.f32 %v8535, %v8587
    %8589 = vmatprep.mubr.bf16.mxu0 %v2676
    %8590 = vmatmul.mubr.bf16.gmra.mrb[0].mxu0 %v2675
    %v8591 = vpop.f32.mrb[0].mxu0
    %v8592 = vadd.f32 %v8539, %v8591
    %v8593 = vpop.f32.mrb[0].mxu0
    %v8594 = vadd.f32 %v8541, %v8593
    %v8595 = vpop.f32.mrb[0].mxu0
    %v8596 = vadd.f32 %v8543, %v8595
    %v8597 = vpop.f32.mrb[0].mxu0
    %v8598 = vadd.f32 %v8545, %v8597
    %8599 = vdwg.mxu0
    %v8600 = vadd.f32 %v6303, %v8264
    %v8601 = vadd.f32 %v6305, %v8266
    %v8602 = vadd.f32 %v6409, %v8370
    %v8603 = vadd.f32 %v6411, %v8372
    %v8604 = vadd.f32 %v6515, %v8476
    %v8605 = vadd.f32 %v6517, %v8478
    %v8606 = vadd.f32 %v6621, %v8582
    %v8607 = vadd.f32 %v6623, %v8584
    %v8608 = vadd.f32 %v6307, %v8268
    %v8609 = vadd.f32 %v6309, %v8270
    %v8610 = vadd.f32 %v6413, %v8374
    %v8611 = vadd.f32 %v6415, %v8376
    %v8612 = vadd.f32 %v6519, %v8480
    %v8613 = vadd.f32 %v6521, %v8482
    %v8614 = vadd.f32 %v6625, %v8586
    %v8615 = vadd.f32 %v6627, %v8588
    %v8616 = vadd.f32 %v6313, %v8274
    %v8617 = vadd.f32 %v6315, %v8276
    %v8618 = vadd.f32 %v6419, %v8380
    %v8619 = vadd.f32 %v6421, %v8382
    %v8620 = vadd.f32 %v6525, %v8486
    %v8621 = vadd.f32 %v6527, %v8488
    %v8622 = vadd.f32 %v6631, %v8592
    %v8623 = vadd.f32 %v6633, %v8594
    %v8624 = vadd.f32 %v6317, %v8278
    %v8625 = vadd.f32 %v6319, %v8280
    %v8626 = vadd.f32 %v6423, %v8384
    %v8627 = vadd.f32 %v6425, %v8386
    %v8628 = vadd.f32 %v6529, %v8490
    %v8629 = vadd.f32 %v6531, %v8492
    %v8630 = vadd.f32 %v6635, %v8596
    %v8631 = vadd.f32 %v6637, %v8598
    %v8632 = vmax.f32 %v8600, %v8602
    %v8633 = vmax.f32 %v8601, %v8603
    %v8634 = vmax.f32 %v8608, %v8610
    %v8635 = vmax.f32 %v8609, %v8611
    %v8636 = vmax.f32 %v8616, %v8618
    %v8637 = vmax.f32 %v8617, %v8619
    %v8638 = vmax.f32 %v8624, %v8626
    %v8639 = vmax.f32 %v8625, %v8627
    %v8640 = vmax.f32 %v8632, %v8604
    %v8641 = vmax.f32 %v8633, %v8605
    %v8642 = vmax.f32 %v8634, %v8612
    %v8643 = vmax.f32 %v8635, %v8613
    %v8644 = vmax.f32 %v8636, %v8620
    %v8645 = vmax.f32 %v8637, %v8621
    %v8646 = vmax.f32 %v8638, %v8628
    %v8647 = vmax.f32 %v8639, %v8629
    %v8648 = vmax.f32 %v8640, %v8606
    %v8649 = vmax.f32 %v8641, %v8607
    %v8650 = vmax.f32 %v8642, %v8614
    %v8651 = vmax.f32 %v8643, %v8615
    %v8652 = vmax.f32 %v8644, %v8622
    %v8653 = vmax.f32 %v8645, %v8623
    %v8654 = vmax.f32 %v8646, %v8630
    %v8655 = vmax.f32 %v8647, %v8631
    %v8656 = vld [vmem:[#allocation7] sm:$0x3]
    %v8658 = vlaneseq
    %v8659 = vshrl.u32 %v8658, 7
    %v8660 = vsub.s32 0, %v8659
    %v8661 = vrot.slane %v8656, %v8660
    %v8662 = vlaneseq
    %v8663 = vshrl.u32 %v8662, 7
    %v8664 = vsub.s32 1, %v8663
    %v8665 = vrot.slane %v8656, %v8664
    %v8668 = vadd.f32 %v8648, %v8661
    %v8669 = vadd.f32 %v8649, %v8665
    %v8670 = vadd.f32 %v8650, %v8661
    %v8671 = vadd.f32 %v8651, %v8665
    %v8672 = vadd.f32 %v8652, %v8661
    %v8673 = vadd.f32 %v8653, %v8665
    %v8674 = vadd.f32 %v8654, %v8661
    %v8675 = vadd.f32 %v8655, %v8665
    %v8676 = vmax.f32 %v8668, 0.0
    %v8677 = vmax.f32 %v8669, 0.0
    %v8678 = vmax.f32 %v8670, 0.0
    %v8679 = vmax.f32 %v8671, 0.0
    %v8680 = vmax.f32 %v8672, 0.0
    %v8681 = vmax.f32 %v8673, 0.0
    %v8682 = vmax.f32 %v8674, 0.0
    %v8683 = vmax.f32 %v8675, 0.0
    %v8684 = vpack.c.bf16 %v8678, %v8676
    %v8685 = vpack.c.bf16 %v8679, %v8677
    %v8686 = vpack.c.bf16 %v8682, %v8680
    %v8687 = vpack.c.bf16 %v8683, %v8681
    %v8688 = vld [vmem:[#allocation9] sm:$0xff]
    %v8689 = vld [vmem:[#allocation9 + $0x8] sm:$0xff]
    %v8690 = vld [vmem:[#allocation9 + $0x10] sm:$0xff]
    %v8691 = vld [vmem:[#allocation9 + $0x18] sm:$0xff]
    %v8692 = vld [vmem:[#allocation9 + $0x20] sm:$0xff]
    %v8693 = vld [vmem:[#allocation9 + $0x28] sm:$0xff]
    %v8694 = vld [vmem:[#allocation9 + $0x30] sm:$0xff]
    %v8695 = vld [vmem:[#allocation9 + $0x38] sm:$0xff]
    %v8696 = vld [vmem:[#allocation9 + $0x40] sm:$0xff]
    %v8697 = vld [vmem:[#allocation9 + $0x48] sm:$0xff]
    %v8698 = vld [vmem:[#allocation9 + $0x50] sm:$0xff]
    %v8699 = vld [vmem:[#allocation9 + $0x58] sm:$0xff]
    %v8700 = vld [vmem:[#allocation9 + $0x60] sm:$0xff]
    %v8701 = vld [vmem:[#allocation9 + $0x68] sm:$0xff]
    %v8702 = vld [vmem:[#allocation9 + $0x70] sm:$0xff]
    %v8703 = vld [vmem:[#allocation9 + $0x78] sm:$0xff]
    %v8704 = vld [vmem:[#allocation9 + $0x80] sm:$0xff]
    %v8705 = vld [vmem:[#allocation9 + $0x88] sm:$0xff]
    %v8706 = vld [vmem:[#allocation9 + $0x90] sm:$0xff]
    %v8707 = vld [vmem:[#allocation9 + $0x98] sm:$0xff]
    %v8708 = vld [vmem:[#allocation9 + $0xa0] sm:$0xff]
    %v8709 = vld [vmem:[#allocation9 + $0xa8] sm:$0xff]
    %v8710 = vld [vmem:[#allocation9 + $0xb0] sm:$0xff]
    %v8711 = vld [vmem:[#allocation9 + $0xb8] sm:$0xff]
    %v8712 = vld [vmem:[#allocation9 + $0xc0] sm:$0xff]
    %v8713 = vld [vmem:[#allocation9 + $0xc8] sm:$0xff]
    %v8714 = vld [vmem:[#allocation9 + $0xd0] sm:$0xff]
    %v8715 = vld [vmem:[#allocation9 + $0xd8] sm:$0xff]
    %v8716 = vld [vmem:[#allocation9 + $0xe0] sm:$0xff]
    %v8717 = vld [vmem:[#allocation9 + $0xe8] sm:$0xff]
    %v8718 = vld [vmem:[#allocation9 + $0xf0] sm:$0xff]
    %v8719 = vld [vmem:[#allocation9 + $0xf8] sm:$0xff]
    %v8720 = vld [vmem:[#allocation9 + $0x100] sm:$0xff]
    %v8721 = vld [vmem:[#allocation9 + $0x108] sm:$0xff]
    %v8722 = vld [vmem:[#allocation9 + $0x110] sm:$0xff]
    %v8723 = vld [vmem:[#allocation9 + $0x118] sm:$0xff]
    %v8724 = vld [vmem:[#allocation9 + $0x120] sm:$0xff]
    %v8725 = vld [vmem:[#allocation9 + $0x128] sm:$0xff]
    %v8726 = vld [vmem:[#allocation9 + $0x130] sm:$0xff]
    %v8727 = vld [vmem:[#allocation9 + $0x138] sm:$0xff]
    %v8728 = vld [vmem:[#allocation9 + $0x140] sm:$0xff]
    %v8729 = vld [vmem:[#allocation9 + $0x148] sm:$0xff]
    %v8730 = vld [vmem:[#allocation9 + $0x150] sm:$0xff]
    %v8731 = vld [vmem:[#allocation9 + $0x158] sm:$0xff]
    %v8732 = vld [vmem:[#allocation9 + $0x160] sm:$0xff]
    %v8733 = vld [vmem:[#allocation9 + $0x168] sm:$0xff]
    %v8734 = vld [vmem:[#allocation9 + $0x170] sm:$0xff]
    %v8735 = vld [vmem:[#allocation9 + $0x178] sm:$0xff]
    %v8736 = vld [vmem:[#allocation9 + $0x180] sm:$0xff]
    %v8737 = vld [vmem:[#allocation9 + $0x188] sm:$0xff]
    %v8738 = vld [vmem:[#allocation9 + $0x190] sm:$0xff]
    %v8739 = vld [vmem:[#allocation9 + $0x198] sm:$0xff]
    %v8740 = vld [vmem:[#allocation9 + $0x1a0] sm:$0xff]
    %v8741 = vld [vmem:[#allocation9 + $0x1a8] sm:$0xff]
    %v8742 = vld [vmem:[#allocation9 + $0x1b0] sm:$0xff]
    %v8743 = vld [vmem:[#allocation9 + $0x1b8] sm:$0xff]
    %v8744 = vld [vmem:[#allocation9 + $0x1c0] sm:$0xff]
    %v8745 = vld [vmem:[#allocation9 + $0x1c8] sm:$0xff]
    %v8746 = vld [vmem:[#allocation9 + $0x1d0] sm:$0xff]
    %v8747 = vld [vmem:[#allocation9 + $0x1d8] sm:$0xff]
    %v8748 = vld [vmem:[#allocation9 + $0x1e0] sm:$0xff]
    %v8749 = vld [vmem:[#allocation9 + $0x1e8] sm:$0xff]
    %v8750 = vld [vmem:[#allocation9 + $0x1f0] sm:$0xff]
    %v8751 = vld [vmem:[#allocation9 + $0x1f8] sm:$0xff]
    %s8752 = scalar_lea.vmem [#allocation9], 512
    %v8753 = vld [vmem:[%s8752] sm:$0xff]
    %v8754 = vld [vmem:[%s8752 + $0x8] sm:$0xff]
    %v8755 = vld [vmem:[%s8752 + $0x10] sm:$0xff]
    %v8756 = vld [vmem:[%s8752 + $0x18] sm:$0xff]
    %v8757 = vld [vmem:[%s8752 + $0x20] sm:$0xff]
    %v8758 = vld [vmem:[%s8752 + $0x28] sm:$0xff]
    %v8759 = vld [vmem:[%s8752 + $0x30] sm:$0xff]
    %v8760 = vld [vmem:[%s8752 + $0x38] sm:$0xff]
    %v8761 = vld [vmem:[%s8752 + $0x40] sm:$0xff]
    %v8762 = vld [vmem:[%s8752 + $0x48] sm:$0xff]
    %v8763 = vld [vmem:[%s8752 + $0x50] sm:$0xff]
    %v8764 = vld [vmem:[%s8752 + $0x58] sm:$0xff]
    %v8765 = vld [vmem:[%s8752 + $0x60] sm:$0xff]
    %v8766 = vld [vmem:[%s8752 + $0x68] sm:$0xff]
    %v8767 = vld [vmem:[%s8752 + $0x70] sm:$0xff]
    %v8768 = vld [vmem:[%s8752 + $0x78] sm:$0xff]
    %v8769 = vld [vmem:[%s8752 + $0x80] sm:$0xff]
    %v8770 = vld [vmem:[%s8752 + $0x88] sm:$0xff]
    %v8771 = vld [vmem:[%s8752 + $0x90] sm:$0xff]
    %v8772 = vld [vmem:[%s8752 + $0x98] sm:$0xff]
    %v8773 = vld [vmem:[%s8752 + $0xa0] sm:$0xff]
    %v8774 = vld [vmem:[%s8752 + $0xa8] sm:$0xff]
    %v8775 = vld [vmem:[%s8752 + $0xb0] sm:$0xff]
    %v8776 = vld [vmem:[%s8752 + $0xb8] sm:$0xff]
    %v8777 = vld [vmem:[%s8752 + $0xc0] sm:$0xff]
    %v8778 = vld [vmem:[%s8752 + $0xc8] sm:$0xff]
    %v8779 = vld [vmem:[%s8752 + $0xd0] sm:$0xff]
    %v8780 = vld [vmem:[%s8752 + $0xd8] sm:$0xff]
    %v8781 = vld [vmem:[%s8752 + $0xe0] sm:$0xff]
    %v8782 = vld [vmem:[%s8752 + $0xe8] sm:$0xff]
    %v8783 = vld [vmem:[%s8752 + $0xf0] sm:$0xff]
    %v8784 = vld [vmem:[%s8752 + $0xf8] sm:$0xff]
    %v8785 = vld [vmem:[%s8752 + $0x100] sm:$0xff]
    %v8786 = vld [vmem:[%s8752 + $0x108] sm:$0xff]
    %v8787 = vld [vmem:[%s8752 + $0x110] sm:$0xff]
    %v8788 = vld [vmem:[%s8752 + $0x118] sm:$0xff]
    %v8789 = vld [vmem:[%s8752 + $0x120] sm:$0xff]
    %v8790 = vld [vmem:[%s8752 + $0x128] sm:$0xff]
    %v8791 = vld [vmem:[%s8752 + $0x130] sm:$0xff]
    %v8792 = vld [vmem:[%s8752 + $0x138] sm:$0xff]
    %v8793 = vld [vmem:[%s8752 + $0x140] sm:$0xff]
    %v8794 = vld [vmem:[%s8752 + $0x148] sm:$0xff]
    %v8795 = vld [vmem:[%s8752 + $0x150] sm:$0xff]
    %v8796 = vld [vmem:[%s8752 + $0x158] sm:$0xff]
    %v8797 = vld [vmem:[%s8752 + $0x160] sm:$0xff]
    %v8798 = vld [vmem:[%s8752 + $0x168] sm:$0xff]
    %v8799 = vld [vmem:[%s8752 + $0x170] sm:$0xff]
    %v8800 = vld [vmem:[%s8752 + $0x178] sm:$0xff]
    %v8801 = vld [vmem:[%s8752 + $0x180] sm:$0xff]
    %v8802 = vld [vmem:[%s8752 + $0x188] sm:$0xff]
    %v8803 = vld [vmem:[%s8752 + $0x190] sm:$0xff]
    %v8804 = vld [vmem:[%s8752 + $0x198] sm:$0xff]
    %v8805 = vld [vmem:[%s8752 + $0x1a0] sm:$0xff]
    %v8806 = vld [vmem:[%s8752 + $0x1a8] sm:$0xff]
    %v8807 = vld [vmem:[%s8752 + $0x1b0] sm:$0xff]
    %v8808 = vld [vmem:[%s8752 + $0x1b8] sm:$0xff]
    %v8809 = vld [vmem:[%s8752 + $0x1c0] sm:$0xff]
    %v8810 = vld [vmem:[%s8752 + $0x1c8] sm:$0xff]
    %v8811 = vld [vmem:[%s8752 + $0x1d0] sm:$0xff]
    %v8812 = vld [vmem:[%s8752 + $0x1d8] sm:$0xff]
    %v8813 = vld [vmem:[%s8752 + $0x1e0] sm:$0xff]
    %v8814 = vld [vmem:[%s8752 + $0x1e8] sm:$0xff]
    %v8815 = vld [vmem:[%s8752 + $0x1f0] sm:$0xff]
    %v8816 = vld [vmem:[%s8752 + $0x1f8] sm:$0xff]
    %v8819 = vrot.slane %v8684, 4
    %v8820 = vrot.slane %v8685, 4
    %v8887 = vunpack.c.l.b16 %v8753
    %v8888 = vunpack.c.h.b16 %v8753
    %v8889 = vunpack.c.l.b16 %v8754
    %v8890 = vunpack.c.h.b16 %v8754
    %v8891 = vunpack.c.l.b16 %v8755
    %v8892 = vunpack.c.h.b16 %v8755
    %v8893 = vunpack.c.l.b16 %v8756
    %v8894 = vunpack.c.h.b16 %v8756
    %v8895 = vunpack.c.l.b16 %v8757
    %v8896 = vunpack.c.h.b16 %v8757
    %v8897 = vunpack.c.l.b16 %v8758
    %v8898 = vunpack.c.h.b16 %v8758
    %v8899 = vunpack.c.l.b16 %v8759
    %v8900 = vunpack.c.h.b16 %v8759
    %v8901 = vunpack.c.l.b16 %v8760
    %v8902 = vunpack.c.h.b16 %v8760
    %v8903 = vunpack.c.l.b16 %v8761
    %v8904 = vunpack.c.h.b16 %v8761
    %v8905 = vunpack.c.l.b16 %v8762
    %v8906 = vunpack.c.h.b16 %v8762
    %v8907 = vunpack.c.l.b16 %v8763
    %v8908 = vunpack.c.h.b16 %v8763
    %v8909 = vunpack.c.l.b16 %v8764
    %v8910 = vunpack.c.h.b16 %v8764
    %v8911 = vunpack.c.l.b16 %v8765
    %v8912 = vunpack.c.h.b16 %v8765
    %v8913 = vunpack.c.l.b16 %v8766
    %v8914 = vunpack.c.h.b16 %v8766
    %v8915 = vunpack.c.l.b16 %v8767
    %v8916 = vunpack.c.h.b16 %v8767
    %v8917 = vunpack.c.l.b16 %v8768
    %v8918 = vunpack.c.h.b16 %v8768
    %v8919 = vunpack.c.l.b16 %v8769
    %v8920 = vunpack.c.h.b16 %v8769
    %v8921 = vunpack.c.l.b16 %v8770
    %v8922 = vunpack.c.h.b16 %v8770
    %v8923 = vunpack.c.l.b16 %v8771
    %v8924 = vunpack.c.h.b16 %v8771
    %v8925 = vunpack.c.l.b16 %v8772
    %v8926 = vunpack.c.h.b16 %v8772
    %v8927 = vunpack.c.l.b16 %v8773
    %v8928 = vunpack.c.h.b16 %v8773
    %v8929 = vunpack.c.l.b16 %v8774
    %v8930 = vunpack.c.h.b16 %v8774
    %v8931 = vunpack.c.l.b16 %v8775
    %v8932 = vunpack.c.h.b16 %v8775
    %v8933 = vunpack.c.l.b16 %v8776
    %v8934 = vunpack.c.h.b16 %v8776
    %v8935 = vunpack.c.l.b16 %v8777
    %v8936 = vunpack.c.h.b16 %v8777
    %v8937 = vunpack.c.l.b16 %v8778
    %v8938 = vunpack.c.h.b16 %v8778
    %v8939 = vunpack.c.l.b16 %v8779
    %v8940 = vunpack.c.h.b16 %v8779
    %v8941 = vunpack.c.l.b16 %v8780
    %v8942 = vunpack.c.h.b16 %v8780
    %v8943 = vunpack.c.l.b16 %v8781
    %v8944 = vunpack.c.h.b16 %v8781
    %v8945 = vunpack.c.l.b16 %v8782
    %v8946 = vunpack.c.h.b16 %v8782
    %v8947 = vunpack.c.l.b16 %v8783
    %v8948 = vunpack.c.h.b16 %v8783
    %v8949 = vunpack.c.l.b16 %v8784
    %v8950 = vunpack.c.h.b16 %v8784
    %v8951 = vunpack.c.l.b16 %v8785
    %v8952 = vunpack.c.h.b16 %v8785
    %v8953 = vunpack.c.l.b16 %v8786
    %v8954 = vunpack.c.h.b16 %v8786
    %v8955 = vunpack.c.l.b16 %v8787
    %v8956 = vunpack.c.h.b16 %v8787
    %v8957 = vunpack.c.l.b16 %v8788
    %v8958 = vunpack.c.h.b16 %v8788
    %v8959 = vunpack.c.l.b16 %v8789
    %v8960 = vunpack.c.h.b16 %v8789
    %v8961 = vunpack.c.l.b16 %v8790
    %v8962 = vunpack.c.h.b16 %v8790
    %v8963 = vunpack.c.l.b16 %v8791
    %v8964 = vunpack.c.h.b16 %v8791
    %v8965 = vunpack.c.l.b16 %v8792
    %v8966 = vunpack.c.h.b16 %v8792
    %v8967 = vunpack.c.l.b16 %v8793
    %v8968 = vunpack.c.h.b16 %v8793
    %v8969 = vunpack.c.l.b16 %v8794
    %v8970 = vunpack.c.h.b16 %v8794
    %v8971 = vunpack.c.l.b16 %v8795
    %v8972 = vunpack.c.h.b16 %v8795
    %v8973 = vunpack.c.l.b16 %v8796
    %v8974 = vunpack.c.h.b16 %v8796
    %v8975 = vunpack.c.l.b16 %v8797
    %v8976 = vunpack.c.h.b16 %v8797
    %v8977 = vunpack.c.l.b16 %v8798
    %v8978 = vunpack.c.h.b16 %v8798
    %v8979 = vunpack.c.l.b16 %v8799
    %v8980 = vunpack.c.h.b16 %v8799
    %v8981 = vunpack.c.l.b16 %v8800
    %v8982 = vunpack.c.h.b16 %v8800
    %v8983 = vunpack.c.l.b16 %v8801
    %v8984 = vunpack.c.h.b16 %v8801
    %v8985 = vunpack.c.l.b16 %v8802
    %v8986 = vunpack.c.h.b16 %v8802
    %v8987 = vunpack.c.l.b16 %v8803
    %v8988 = vunpack.c.h.b16 %v8803
    %v8989 = vunpack.c.l.b16 %v8804
    %v8990 = vunpack.c.h.b16 %v8804
    %v8991 = vunpack.c.l.b16 %v8805
    %v8992 = vunpack.c.h.b16 %v8805
    %v8993 = vunpack.c.l.b16 %v8806
    %v8994 = vunpack.c.h.b16 %v8806
    %v8995 = vunpack.c.l.b16 %v8807
    %v8996 = vunpack.c.h.b16 %v8807
    %v8997 = vunpack.c.l.b16 %v8808
    %v8998 = vunpack.c.h.b16 %v8808
    %v8999 = vunpack.c.l.b16 %v8809
    %v9000 = vunpack.c.h.b16 %v8809
    %v9001 = vunpack.c.l.b16 %v8810
    %v9002 = vunpack.c.h.b16 %v8810
    %v9003 = vunpack.c.l.b16 %v8811
    %v9004 = vunpack.c.h.b16 %v8811
    %v9005 = vunpack.c.l.b16 %v8812
    %v9006 = vunpack.c.h.b16 %v8812
    %v9007 = vunpack.c.l.b16 %v8813
    %v9008 = vunpack.c.h.b16 %v8813
    %v9009 = vunpack.c.l.b16 %v8814
    %v9010 = vunpack.c.h.b16 %v8814
    %v9011 = vunpack.c.l.b16 %v8815
    %v9012 = vunpack.c.h.b16 %v8815
    %v9013 = vunpack.c.l.b16 %v8816
    %v9014 = vunpack.c.h.b16 %v8816
    %v9015 = vpack.c.b16 %v8891, %v8887
    %v9016 = vpack.c.b16 %v8892, %v8888
    %v9017 = vpack.c.b16 %v8893, %v8889
    %v9018 = vpack.c.b16 %v8894, %v8890
    %v9019 = vpack.c.b16 %v8899, %v8895
    %v9020 = vpack.c.b16 %v8900, %v8896
    %v9021 = vpack.c.b16 %v8901, %v8897
    %v9022 = vpack.c.b16 %v8902, %v8898
    %v9023 = vpack.c.b16 %v8907, %v8903
    %v9024 = vpack.c.b16 %v8908, %v8904
    %v9025 = vpack.c.b16 %v8909, %v8905
    %v9026 = vpack.c.b16 %v8910, %v8906
    %v9027 = vpack.c.b16 %v8915, %v8911
    %v9028 = vpack.c.b16 %v8916, %v8912
    %v9029 = vpack.c.b16 %v8917, %v8913
    %v9030 = vpack.c.b16 %v8918, %v8914
    %v9031 = vpack.c.b16 %v8923, %v8919
    %v9032 = vpack.c.b16 %v8924, %v8920
    %v9033 = vpack.c.b16 %v8925, %v8921
    %v9034 = vpack.c.b16 %v8926, %v8922
    %v9035 = vpack.c.b16 %v8931, %v8927
    %v9036 = vpack.c.b16 %v8932, %v8928
    %v9037 = vpack.c.b16 %v8933, %v8929
    %v9038 = vpack.c.b16 %v8934, %v8930
    %v9039 = vpack.c.b16 %v8939, %v8935
    %v9040 = vpack.c.b16 %v8940, %v8936
    %v9041 = vpack.c.b16 %v8941, %v8937
    %v9042 = vpack.c.b16 %v8942, %v8938
    %v9043 = vpack.c.b16 %v8947, %v8943
    %v9044 = vpack.c.b16 %v8948, %v8944
    %v9045 = vpack.c.b16 %v8949, %v8945
    %v9046 = vpack.c.b16 %v8950, %v8946
    %v9047 = vpack.c.b16 %v8955, %v8951
    %v9048 = vpack.c.b16 %v8956, %v8952
    %v9049 = vpack.c.b16 %v8957, %v8953
    %v9050 = vpack.c.b16 %v8958, %v8954
    %v9051 = vpack.c.b16 %v8963, %v8959
    %v9052 = vpack.c.b16 %v8964, %v8960
    %v9053 = vpack.c.b16 %v8965, %v8961
    %v9054 = vpack.c.b16 %v8966, %v8962
    %v9055 = vpack.c.b16 %v8971, %v8967
    %v9056 = vpack.c.b16 %v8972, %v8968
    %v9057 = vpack.c.b16 %v8973, %v8969
    %v9058 = vpack.c.b16 %v8974, %v8970
    %v9059 = vpack.c.b16 %v8979, %v8975
    %v9060 = vpack.c.b16 %v8980, %v8976
    %v9061 = vpack.c.b16 %v8981, %v8977
    %v9062 = vpack.c.b16 %v8982, %v8978
    %v9063 = vpack.c.b16 %v8987, %v8983
    %v9064 = vpack.c.b16 %v8988, %v8984
    %v9065 = vpack.c.b16 %v8989, %v8985
    %v9066 = vpack.c.b16 %v8990, %v8986
    %v9067 = vpack.c.b16 %v8995, %v8991
    %v9068 = vpack.c.b16 %v8996, %v8992
    %v9069 = vpack.c.b16 %v8997, %v8993
    %v9070 = vpack.c.b16 %v8998, %v8994
    %v9071 = vpack.c.b16 %v9003, %v8999
    %v9072 = vpack.c.b16 %v9004, %v9000
    %v9073 = vpack.c.b16 %v9005, %v9001
    %v9074 = vpack.c.b16 %v9006, %v9002
    %v9075 = vpack.c.b16 %v9011, %v9007
    %v9076 = vpack.c.b16 %v9012, %v9008
    %v9077 = vpack.c.b16 %v9013, %v9009
    %v9078 = vpack.c.b16 %v9014, %v9010
    %9143 = vmatprep.subr.bf16.mxu0 %v9016
    %9144 = vmatpush1.bf16.msra.mxu0 %v9015
    %9145 = vmatprep.subr.bf16.mxu0 %v9020
    %9146 = vmatpush1.bf16.msra.mxu0 %v9019
    %9147 = vmatprep.subr.bf16.mxu0 %v9024
    %9148 = vmatpush1.bf16.msra.mxu0 %v9023
    %9149 = vmatprep.subr.bf16.mxu0 %v9028
    %9150 = vmatpush1.bf16.msra.mxu0 %v9027
    %9151 = vmatprep.subr.bf16.mxu0 %v9032
    %9152 = vmatpush1.bf16.msra.mxu0 %v9031
    %9153 = vmatprep.subr.bf16.mxu0 %v9036
    %9154 = vmatpush1.bf16.msra.mxu0 %v9035
    %9155 = vmatprep.subr.bf16.mxu0 %v9040
    %9156 = vmatpush1.bf16.msra.mxu0 %v9039
    %9157 = vmatprep.subr.bf16.mxu0 %v9044
    %9158 = vmatpush1.bf16.msra.mxu0 %v9043
    %9159 = vmatprep.subr.bf16.mxu0 %v9048
    %9160 = vmatpush1.bf16.msra.mxu0 %v9047
    %9161 = vmatprep.subr.bf16.mxu0 %v9052
    %9162 = vmatpush1.bf16.msra.mxu0 %v9051
    %9163 = vmatprep.subr.bf16.mxu0 %v9056
    %9164 = vmatpush1.bf16.msra.mxu0 %v9055
    %9165 = vmatprep.subr.bf16.mxu0 %v9060
    %9166 = vmatpush1.bf16.msra.mxu0 %v9059
    %9167 = vmatprep.subr.bf16.mxu0 %v9064
    %9168 = vmatpush1.bf16.msra.mxu0 %v9063
    %9169 = vmatprep.subr.bf16.mxu0 %v9068
    %9170 = vmatpush1.bf16.msra.mxu0 %v9067
    %9171 = vmatprep.subr.bf16.mxu0 %v9072
    %9172 = vmatpush1.bf16.msra.mxu0 %v9071
    %9173 = vmatprep.subr.bf16.mxu0 %v9076
    %9174 = vmatpush1.bf16.msra.mxu0 %v9075
    %9175 = vmatprep.mubr.bf16.mxu0 %v8820
    %9176 = vmatmul.mubr.bf16.gmra.mrb[0].mxu0 %v8819
    %v9177 = vpop.f32.mrb[0].mxu0
    %v9178 = vadd.f32 0.0, %v9177
    %v9179 = vpop.f32.mrb[0].mxu0
    %v9180 = vadd.f32 0.0, %v9179
    %v9181 = vpop.f32.mrb[0].mxu0
    %v9182 = vpop.f32.mrb[0].mxu0
    %9183 = vdwg.mxu0
    %9184 = vmatprep.subr.bf16.mxu0 %v9018
    %9185 = vmatpush1.bf16.msra.mxu0 %v9017
    %9186 = vmatprep.subr.bf16.mxu0 %v9022
    %9187 = vmatpush1.bf16.msra.mxu0 %v9021
    %9188 = vmatprep.subr.bf16.mxu0 %v9026
    %9189 = vmatpush1.bf16.msra.mxu0 %v9025
    %9190 = vmatprep.subr.bf16.mxu0 %v9030
    %9191 = vmatpush1.bf16.msra.mxu0 %v9029
    %9192 = vmatprep.subr.bf16.mxu0 %v9034
    %9193 = vmatpush1.bf16.msra.mxu0 %v9033
    %9194 = vmatprep.subr.bf16.mxu0 %v9038
    %9195 = vmatpush1.bf16.msra.mxu0 %v9037
    %9196 = vmatprep.subr.bf16.mxu0 %v9042
    %9197 = vmatpush1.bf16.msra.mxu0 %v9041
    %9198 = vmatprep.subr.bf16.mxu0 %v9046
    %9199 = vmatpush1.bf16.msra.mxu0 %v9045
    %9200 = vmatprep.subr.bf16.mxu0 %v9050
    %9201 = vmatpush1.bf16.msra.mxu0 %v9049
    %9202 = vmatprep.subr.bf16.mxu0 %v9054
    %9203 = vmatpush1.bf16.msra.mxu0 %v9053
    %9204 = vmatprep.subr.bf16.mxu0 %v9058
    %9205 = vmatpush1.bf16.msra.mxu0 %v9057
    %9206 = vmatprep.subr.bf16.mxu0 %v9062
    %9207 = vmatpush1.bf16.msra.mxu0 %v9061
    %9208 = vmatprep.subr.bf16.mxu0 %v9066
    %9209 = vmatpush1.bf16.msra.mxu0 %v9065
    %9210 = vmatprep.subr.bf16.mxu0 %v9070
    %9211 = vmatpush1.bf16.msra.mxu0 %v9069
    %9212 = vmatprep.subr.bf16.mxu0 %v9074
    %9213 = vmatpush1.bf16.msra.mxu0 %v9073
    %9214 = vmatprep.subr.bf16.mxu0 %v9078
    %9215 = vmatpush1.bf16.msra.mxu0 %v9077
    %9216 = vmatprep.mubr.bf16.mxu0 %v8820
    %9217 = vmatmul.mubr.bf16.gmra.mrb[0].mxu0 %v8819
    %v9218 = vpop.f32.mrb[0].mxu0
    %v9219 = vadd.f32 0.0, %v9218
    %v9220 = vpop.f32.mrb[0].mxu0
    %v9221 = vadd.f32 0.0, %v9220
    %v9222 = vpop.f32.mrb[0].mxu0
    %v9223 = vpop.f32.mrb[0].mxu0
    %9224 = vdwg.mxu0
    %v9289 = vunpack.c.l.b16 %v8688
    %v9290 = vunpack.c.h.b16 %v8688
    %v9291 = vunpack.c.l.b16 %v8689
    %v9292 = vunpack.c.h.b16 %v8689
    %v9293 = vunpack.c.l.b16 %v8690
    %v9294 = vunpack.c.h.b16 %v8690
    %v9295 = vunpack.c.l.b16 %v8691
    %v9296 = vunpack.c.h.b16 %v8691
    %v9297 = vunpack.c.l.b16 %v8692
    %v9298 = vunpack.c.h.b16 %v8692
    %v9299 = vunpack.c.l.b16 %v8693
    %v9300 = vunpack.c.h.b16 %v8693
    %v9301 = vunpack.c.l.b16 %v8694
    %v9302 = vunpack.c.h.b16 %v8694
    %v9303 = vunpack.c.l.b16 %v8695
    %v9304 = vunpack.c.h.b16 %v8695
    %v9305 = vunpack.c.l.b16 %v8696
    %v9306 = vunpack.c.h.b16 %v8696
    %v9307 = vunpack.c.l.b16 %v8697
    %v9308 = vunpack.c.h.b16 %v8697
    %v9309 = vunpack.c.l.b16 %v8698
    %v9310 = vunpack.c.h.b16 %v8698
    %v9311 = vunpack.c.l.b16 %v8699
    %v9312 = vunpack.c.h.b16 %v8699
    %v9313 = vunpack.c.l.b16 %v8700
    %v9314 = vunpack.c.h.b16 %v8700
    %v9315 = vunpack.c.l.b16 %v8701
    %v9316 = vunpack.c.h.b16 %v8701
    %v9317 = vunpack.c.l.b16 %v8702
    %v9318 = vunpack.c.h.b16 %v8702
    %v9319 = vunpack.c.l.b16 %v8703
    %v9320 = vunpack.c.h.b16 %v8703
    %v9321 = vunpack.c.l.b16 %v8704
    %v9322 = vunpack.c.h.b16 %v8704
    %v9323 = vunpack.c.l.b16 %v8705
    %v9324 = vunpack.c.h.b16 %v8705
    %v9325 = vunpack.c.l.b16 %v8706
    %v9326 = vunpack.c.h.b16 %v8706
    %v9327 = vunpack.c.l.b16 %v8707
    %v9328 = vunpack.c.h.b16 %v8707
    %v9329 = vunpack.c.l.b16 %v8708
    %v9330 = vunpack.c.h.b16 %v8708
    %v9331 = vunpack.c.l.b16 %v8709
    %v9332 = vunpack.c.h.b16 %v8709
    %v9333 = vunpack.c.l.b16 %v8710
    %v9334 = vunpack.c.h.b16 %v8710
    %v9335 = vunpack.c.l.b16 %v8711
    %v9336 = vunpack.c.h.b16 %v8711
    %v9337 = vunpack.c.l.b16 %v8712
    %v9338 = vunpack.c.h.b16 %v8712
    %v9339 = vunpack.c.l.b16 %v8713
    %v9340 = vunpack.c.h.b16 %v8713
    %v9341 = vunpack.c.l.b16 %v8714
    %v9342 = vunpack.c.h.b16 %v8714
    %v9343 = vunpack.c.l.b16 %v8715
    %v9344 = vunpack.c.h.b16 %v8715
    %v9345 = vunpack.c.l.b16 %v8716
    %v9346 = vunpack.c.h.b16 %v8716
    %v9347 = vunpack.c.l.b16 %v8717
    %v9348 = vunpack.c.h.b16 %v8717
    %v9349 = vunpack.c.l.b16 %v8718
    %v9350 = vunpack.c.h.b16 %v8718
    %v9351 = vunpack.c.l.b16 %v8719
    %v9352 = vunpack.c.h.b16 %v8719
    %v9353 = vunpack.c.l.b16 %v8720
    %v9354 = vunpack.c.h.b16 %v8720
    %v9355 = vunpack.c.l.b16 %v8721
    %v9356 = vunpack.c.h.b16 %v8721
    %v9357 = vunpack.c.l.b16 %v8722
    %v9358 = vunpack.c.h.b16 %v8722
    %v9359 = vunpack.c.l.b16 %v8723
    %v9360 = vunpack.c.h.b16 %v8723
    %v9361 = vunpack.c.l.b16 %v8724
    %v9362 = vunpack.c.h.b16 %v8724
    %v9363 = vunpack.c.l.b16 %v8725
    %v9364 = vunpack.c.h.b16 %v8725
    %v9365 = vunpack.c.l.b16 %v8726
    %v9366 = vunpack.c.h.b16 %v8726
    %v9367 = vunpack.c.l.b16 %v8727
    %v9368 = vunpack.c.h.b16 %v8727
    %v9369 = vunpack.c.l.b16 %v8728
    %v9370 = vunpack.c.h.b16 %v8728
    %v9371 = vunpack.c.l.b16 %v8729
    %v9372 = vunpack.c.h.b16 %v8729
    %v9373 = vunpack.c.l.b16 %v8730
    %v9374 = vunpack.c.h.b16 %v8730
    %v9375 = vunpack.c.l.b16 %v8731
    %v9376 = vunpack.c.h.b16 %v8731
    %v9377 = vunpack.c.l.b16 %v8732
    %v9378 = vunpack.c.h.b16 %v8732
    %v9379 = vunpack.c.l.b16 %v8733
    %v9380 = vunpack.c.h.b16 %v8733
    %v9381 = vunpack.c.l.b16 %v8734
    %v9382 = vunpack.c.h.b16 %v8734
    %v9383 = vunpack.c.l.b16 %v8735
    %v9384 = vunpack.c.h.b16 %v8735
    %v9385 = vunpack.c.l.b16 %v8736
    %v9386 = vunpack.c.h.b16 %v8736
    %v9387 = vunpack.c.l.b16 %v8737
    %v9388 = vunpack.c.h.b16 %v8737
    %v9389 = vunpack.c.l.b16 %v8738
    %v9390 = vunpack.c.h.b16 %v8738
    %v9391 = vunpack.c.l.b16 %v8739
    %v9392 = vunpack.c.h.b16 %v8739
    %v9393 = vunpack.c.l.b16 %v8740
    %v9394 = vunpack.c.h.b16 %v8740
    %v9395 = vunpack.c.l.b16 %v8741
    %v9396 = vunpack.c.h.b16 %v8741
    %v9397 = vunpack.c.l.b16 %v8742
    %v9398 = vunpack.c.h.b16 %v8742
    %v9399 = vunpack.c.l.b16 %v8743
    %v9400 = vunpack.c.h.b16 %v8743
    %v9401 = vunpack.c.l.b16 %v8744
    %v9402 = vunpack.c.h.b16 %v8744
    %v9403 = vunpack.c.l.b16 %v8745
    %v9404 = vunpack.c.h.b16 %v8745
    %v9405 = vunpack.c.l.b16 %v8746
    %v9406 = vunpack.c.h.b16 %v8746
    %v9407 = vunpack.c.l.b16 %v8747
    %v9408 = vunpack.c.h.b16 %v8747
    %v9409 = vunpack.c.l.b16 %v8748
    %v9410 = vunpack.c.h.b16 %v8748
    %v9411 = vunpack.c.l.b16 %v8749
    %v9412 = vunpack.c.h.b16 %v8749
    %v9413 = vunpack.c.l.b16 %v8750
    %v9414 = vunpack.c.h.b16 %v8750
    %v9415 = vunpack.c.l.b16 %v8751
    %v9416 = vunpack.c.h.b16 %v8751
    %v9417 = vpack.c.b16 %v9293, %v9289
    %v9418 = vpack.c.b16 %v9294, %v9290
    %v9419 = vpack.c.b16 %v9295, %v9291
    %v9420 = vpack.c.b16 %v9296, %v9292
    %v9421 = vpack.c.b16 %v9301, %v9297
    %v9422 = vpack.c.b16 %v9302, %v9298
    %v9423 = vpack.c.b16 %v9303, %v9299
    %v9424 = vpack.c.b16 %v9304, %v9300
    %v9425 = vpack.c.b16 %v9309, %v9305
    %v9426 = vpack.c.b16 %v9310, %v9306
    %v9427 = vpack.c.b16 %v9311, %v9307
    %v9428 = vpack.c.b16 %v9312, %v9308
    %v9429 = vpack.c.b16 %v9317, %v9313
    %v9430 = vpack.c.b16 %v9318, %v9314
    %v9431 = vpack.c.b16 %v9319, %v9315
    %v9432 = vpack.c.b16 %v9320, %v9316
    %v9433 = vpack.c.b16 %v9325, %v9321
    %v9434 = vpack.c.b16 %v9326, %v9322
    %v9435 = vpack.c.b16 %v9327, %v9323
    %v9436 = vpack.c.b16 %v9328, %v9324
    %v9437 = vpack.c.b16 %v9333, %v9329
    %v9438 = vpack.c.b16 %v9334, %v9330
    %v9439 = vpack.c.b16 %v9335, %v9331
    %v9440 = vpack.c.b16 %v9336, %v9332
    %v9441 = vpack.c.b16 %v9341, %v9337
    %v9442 = vpack.c.b16 %v9342, %v9338
    %v9443 = vpack.c.b16 %v9343, %v9339
    %v9444 = vpack.c.b16 %v9344, %v9340
    %v9445 = vpack.c.b16 %v9349, %v9345
    %v9446 = vpack.c.b16 %v9350, %v9346
    %v9447 = vpack.c.b16 %v9351, %v9347
    %v9448 = vpack.c.b16 %v9352, %v9348
    %v9449 = vpack.c.b16 %v9357, %v9353
    %v9450 = vpack.c.b16 %v9358, %v9354
    %v9451 = vpack.c.b16 %v9359, %v9355
    %v9452 = vpack.c.b16 %v9360, %v9356
    %v9453 = vpack.c.b16 %v9365, %v9361
    %v9454 = vpack.c.b16 %v9366, %v9362
    %v9455 = vpack.c.b16 %v9367, %v9363
    %v9456 = vpack.c.b16 %v9368, %v9364
    %v9457 = vpack.c.b16 %v9373, %v9369
    %v9458 = vpack.c.b16 %v9374, %v9370
    %v9459 = vpack.c.b16 %v9375, %v9371
    %v9460 = vpack.c.b16 %v9376, %v9372
    %v9461 = vpack.c.b16 %v9381, %v9377
    %v9462 = vpack.c.b16 %v9382, %v9378
    %v9463 = vpack.c.b16 %v9383, %v9379
    %v9464 = vpack.c.b16 %v9384, %v9380
    %v9465 = vpack.c.b16 %v9389, %v9385
    %v9466 = vpack.c.b16 %v9390, %v9386
    %v9467 = vpack.c.b16 %v9391, %v9387
    %v9468 = vpack.c.b16 %v9392, %v9388
    %v9469 = vpack.c.b16 %v9397, %v9393
    %v9470 = vpack.c.b16 %v9398, %v9394
    %v9471 = vpack.c.b16 %v9399, %v9395
    %v9472 = vpack.c.b16 %v9400, %v9396
    %v9473 = vpack.c.b16 %v9405, %v9401
    %v9474 = vpack.c.b16 %v9406, %v9402
    %v9475 = vpack.c.b16 %v9407, %v9403
    %v9476 = vpack.c.b16 %v9408, %v9404
    %v9477 = vpack.c.b16 %v9413, %v9409
    %v9478 = vpack.c.b16 %v9414, %v9410
    %v9479 = vpack.c.b16 %v9415, %v9411
    %v9480 = vpack.c.b16 %v9416, %v9412
    %9545 = vmatprep.subr.bf16.mxu0 %v9418
    %9546 = vmatpush1.bf16.msra.mxu0 %v9417
    %9547 = vmatprep.subr.bf16.mxu0 %v9422
    %9548 = vmatpush1.bf16.msra.mxu0 %v9421
    %9549 = vmatprep.subr.bf16.mxu0 %v9426
    %9550 = vmatpush1.bf16.msra.mxu0 %v9425
    %9551 = vmatprep.subr.bf16.mxu0 %v9430
    %9552 = vmatpush1.bf16.msra.mxu0 %v9429
    %9553 = vmatprep.subr.bf16.mxu0 %v9434
    %9554 = vmatpush1.bf16.msra.mxu0 %v9433
    %9555 = vmatprep.subr.bf16.mxu0 %v9438
    %9556 = vmatpush1.bf16.msra.mxu0 %v9437
    %9557 = vmatprep.subr.bf16.mxu0 %v9442
    %9558 = vmatpush1.bf16.msra.mxu0 %v9441
    %9559 = vmatprep.subr.bf16.mxu0 %v9446
    %9560 = vmatpush1.bf16.msra.mxu0 %v9445
    %9561 = vmatprep.subr.bf16.mxu0 %v9450
    %9562 = vmatpush1.bf16.msra.mxu0 %v9449
    %9563 = vmatprep.subr.bf16.mxu0 %v9454
    %9564 = vmatpush1.bf16.msra.mxu0 %v9453
    %9565 = vmatprep.subr.bf16.mxu0 %v9458
    %9566 = vmatpush1.bf16.msra.mxu0 %v9457
    %9567 = vmatprep.subr.bf16.mxu0 %v9462
    %9568 = vmatpush1.bf16.msra.mxu0 %v9461
    %9569 = vmatprep.subr.bf16.mxu0 %v9466
    %9570 = vmatpush1.bf16.msra.mxu0 %v9465
    %9571 = vmatprep.subr.bf16.mxu0 %v9470
    %9572 = vmatpush1.bf16.msra.mxu0 %v9469
    %9573 = vmatprep.subr.bf16.mxu0 %v9474
    %9574 = vmatpush1.bf16.msra.mxu0 %v9473
    %9575 = vmatprep.subr.bf16.mxu0 %v9478
    %9576 = vmatpush1.bf16.msra.mxu0 %v9477
    %9577 = vmatprep.mubr.bf16.mxu0 %v8685
    %9578 = vmatmul.mubr.bf16.gmra.mrb[0].mxu0 %v8684
    %v9579 = vpop.f32.mrb[0].mxu0
    %v9580 = vadd.f32 %v9178, %v9579
    %v9581 = vpop.f32.mrb[0].mxu0
    %v9582 = vadd.f32 %v9180, %v9581
    %v9583 = vpop.f32.mrb[0].mxu0
    %v9584 = vpop.f32.mrb[0].mxu0
    %9585 = vdwg.mxu0
    %9586 = vmatprep.subr.bf16.mxu0 %v9420
    %9587 = vmatpush1.bf16.msra.mxu0 %v9419
    %9588 = vmatprep.subr.bf16.mxu0 %v9424
    %9589 = vmatpush1.bf16.msra.mxu0 %v9423
    %9590 = vmatprep.subr.bf16.mxu0 %v9428
    %9591 = vmatpush1.bf16.msra.mxu0 %v9427
    %9592 = vmatprep.subr.bf16.mxu0 %v9432
    %9593 = vmatpush1.bf16.msra.mxu0 %v9431
    %9594 = vmatprep.subr.bf16.mxu0 %v9436
    %9595 = vmatpush1.bf16.msra.mxu0 %v9435
    %9596 = vmatprep.subr.bf16.mxu0 %v9440
    %9597 = vmatpush1.bf16.msra.mxu0 %v9439
    %9598 = vmatprep.subr.bf16.mxu0 %v9444
    %9599 = vmatpush1.bf16.msra.mxu0 %v9443
    %9600 = vmatprep.subr.bf16.mxu0 %v9448
    %9601 = vmatpush1.bf16.msra.mxu0 %v9447
    %9602 = vmatprep.subr.bf16.mxu0 %v9452
    %9603 = vmatpush1.bf16.msra.mxu0 %v9451
    %9604 = vmatprep.subr.bf16.mxu0 %v9456
    %9605 = vmatpush1.bf16.msra.mxu0 %v9455
    %9606 = vmatprep.subr.bf16.mxu0 %v9460
    %9607 = vmatpush1.bf16.msra.mxu0 %v9459
    %9608 = vmatprep.subr.bf16.mxu0 %v9464
    %9609 = vmatpush1.bf16.msra.mxu0 %v9463
    %9610 = vmatprep.subr.bf16.mxu0 %v9468
    %9611 = vmatpush1.bf16.msra.mxu0 %v9467
    %9612 = vmatprep.subr.bf16.mxu0 %v9472
    %9613 = vmatpush1.bf16.msra.mxu0 %v9471
    %9614 = vmatprep.subr.bf16.mxu0 %v9476
    %9615 = vmatpush1.bf16.msra.mxu0 %v9475
    %9616 = vmatprep.subr.bf16.mxu0 %v9480
    %9617 = vmatpush1.bf16.msra.mxu0 %v9479
    %9618 = vmatprep.mubr.bf16.mxu0 %v8685
    %9619 = vmatmul.mubr.bf16.gmra.mrb[0].mxu0 %v8684
    %v9620 = vpop.f32.mrb[0].mxu0
    %v9621 = vadd.f32 %v9219, %v9620
    %v9622 = vpop.f32.mrb[0].mxu0
    %v9623 = vadd.f32 %v9221, %v9622
    %v9624 = vpop.f32.mrb[0].mxu0
    %v9625 = vpop.f32.mrb[0].mxu0
    %9626 = vdwg.mxu0
    %s9627 = scalar_lea.vmem [#allocation9], 1024
    %v9628 = vld [vmem:[%s9627] sm:$0xff]
    %v9629 = vld [vmem:[%s9627 + $0x8] sm:$0xff]
    %v9630 = vld [vmem:[%s9627 + $0x10] sm:$0xff]
    %v9631 = vld [vmem:[%s9627 + $0x18] sm:$0xff]
    %v9632 = vld [vmem:[%s9627 + $0x20] sm:$0xff]
    %v9633 = vld [vmem:[%s9627 + $0x28] sm:$0xff]
    %v9634 = vld [vmem:[%s9627 + $0x30] sm:$0xff]
    %v9635 = vld [vmem:[%s9627 + $0x38] sm:$0xff]
    %v9636 = vld [vmem:[%s9627 + $0x40] sm:$0xff]
    %v9637 = vld [vmem:[%s9627 + $0x48] sm:$0xff]
    %v9638 = vld [vmem:[%s9627 + $0x50] sm:$0xff]
    %v9639 = vld [vmem:[%s9627 + $0x58] sm:$0xff]
    %v9640 = vld [vmem:[%s9627 + $0x60] sm:$0xff]
    %v9641 = vld [vmem:[%s9627 + $0x68] sm:$0xff]
    %v9642 = vld [vmem:[%s9627 + $0x70] sm:$0xff]
    %v9643 = vld [vmem:[%s9627 + $0x78] sm:$0xff]
    %v9644 = vld [vmem:[%s9627 + $0x80] sm:$0xff]
    %v9645 = vld [vmem:[%s9627 + $0x88] sm:$0xff]
    %v9646 = vld [vmem:[%s9627 + $0x90] sm:$0xff]
    %v9647 = vld [vmem:[%s9627 + $0x98] sm:$0xff]
    %v9648 = vld [vmem:[%s9627 + $0xa0] sm:$0xff]
    %v9649 = vld [vmem:[%s9627 + $0xa8] sm:$0xff]
    %v9650 = vld [vmem:[%s9627 + $0xb0] sm:$0xff]
    %v9651 = vld [vmem:[%s9627 + $0xb8] sm:$0xff]
    %v9652 = vld [vmem:[%s9627 + $0xc0] sm:$0xff]
    %v9653 = vld [vmem:[%s9627 + $0xc8] sm:$0xff]
    %v9654 = vld [vmem:[%s9627 + $0xd0] sm:$0xff]
    %v9655 = vld [vmem:[%s9627 + $0xd8] sm:$0xff]
    %v9656 = vld [vmem:[%s9627 + $0xe0] sm:$0xff]
    %v9657 = vld [vmem:[%s9627 + $0xe8] sm:$0xff]
    %v9658 = vld [vmem:[%s9627 + $0xf0] sm:$0xff]
    %v9659 = vld [vmem:[%s9627 + $0xf8] sm:$0xff]
    %v9660 = vld [vmem:[%s9627 + $0x100] sm:$0xff]
    %v9661 = vld [vmem:[%s9627 + $0x108] sm:$0xff]
    %v9662 = vld [vmem:[%s9627 + $0x110] sm:$0xff]
    %v9663 = vld [vmem:[%s9627 + $0x118] sm:$0xff]
    %v9664 = vld [vmem:[%s9627 + $0x120] sm:$0xff]
    %v9665 = vld [vmem:[%s9627 + $0x128] sm:$0xff]
    %v9666 = vld [vmem:[%s9627 + $0x130] sm:$0xff]
    %v9667 = vld [vmem:[%s9627 + $0x138] sm:$0xff]
    %v9668 = vld [vmem:[%s9627 + $0x140] sm:$0xff]
    %v9669 = vld [vmem:[%s9627 + $0x148] sm:$0xff]
    %v9670 = vld [vmem:[%s9627 + $0x150] sm:$0xff]
    %v9671 = vld [vmem:[%s9627 + $0x158] sm:$0xff]
    %v9672 = vld [vmem:[%s9627 + $0x160] sm:$0xff]
    %v9673 = vld [vmem:[%s9627 + $0x168] sm:$0xff]
    %v9674 = vld [vmem:[%s9627 + $0x170] sm:$0xff]
    %v9675 = vld [vmem:[%s9627 + $0x178] sm:$0xff]
    %v9676 = vld [vmem:[%s9627 + $0x180] sm:$0xff]
    %v9677 = vld [vmem:[%s9627 + $0x188] sm:$0xff]
    %v9678 = vld [vmem:[%s9627 + $0x190] sm:$0xff]
    %v9679 = vld [vmem:[%s9627 + $0x198] sm:$0xff]
    %v9680 = vld [vmem:[%s9627 + $0x1a0] sm:$0xff]
    %v9681 = vld [vmem:[%s9627 + $0x1a8] sm:$0xff]
    %v9682 = vld [vmem:[%s9627 + $0x1b0] sm:$0xff]
    %v9683 = vld [vmem:[%s9627 + $0x1b8] sm:$0xff]
    %v9684 = vld [vmem:[%s9627 + $0x1c0] sm:$0xff]
    %v9685 = vld [vmem:[%s9627 + $0x1c8] sm:$0xff]
    %v9686 = vld [vmem:[%s9627 + $0x1d0] sm:$0xff]
    %v9687 = vld [vmem:[%s9627 + $0x1d8] sm:$0xff]
    %v9688 = vld [vmem:[%s9627 + $0x1e0] sm:$0xff]
    %v9689 = vld [vmem:[%s9627 + $0x1e8] sm:$0xff]
    %v9690 = vld [vmem:[%s9627 + $0x1f0] sm:$0xff]
    %v9691 = vld [vmem:[%s9627 + $0x1f8] sm:$0xff]
    %v9756 = vunpack.c.l.b16 %v9628
    %v9757 = vunpack.c.h.b16 %v9628
    %v9758 = vunpack.c.l.b16 %v9629
    %v9759 = vunpack.c.h.b16 %v9629
    %v9760 = vunpack.c.l.b16 %v9630
    %v9761 = vunpack.c.h.b16 %v9630
    %v9762 = vunpack.c.l.b16 %v9631
    %v9763 = vunpack.c.h.b16 %v9631
    %v9764 = vunpack.c.l.b16 %v9632
    %v9765 = vunpack.c.h.b16 %v9632
    %v9766 = vunpack.c.l.b16 %v9633
    %v9767 = vunpack.c.h.b16 %v9633
    %v9768 = vunpack.c.l.b16 %v9634
    %v9769 = vunpack.c.h.b16 %v9634
    %v9770 = vunpack.c.l.b16 %v9635
    %v9771 = vunpack.c.h.b16 %v9635
    %v9772 = vunpack.c.l.b16 %v9636
    %v9773 = vunpack.c.h.b16 %v9636
    %v9774 = vunpack.c.l.b16 %v9637
    %v9775 = vunpack.c.h.b16 %v9637
    %v9776 = vunpack.c.l.b16 %v9638
    %v9777 = vunpack.c.h.b16 %v9638
    %v9778 = vunpack.c.l.b16 %v9639
    %v9779 = vunpack.c.h.b16 %v9639
    %v9780 = vunpack.c.l.b16 %v9640
    %v9781 = vunpack.c.h.b16 %v9640
    %v9782 = vunpack.c.l.b16 %v9641
    %v9783 = vunpack.c.h.b16 %v9641
    %v9784 = vunpack.c.l.b16 %v9642
    %v9785 = vunpack.c.h.b16 %v9642
    %v9786 = vunpack.c.l.b16 %v9643
    %v9787 = vunpack.c.h.b16 %v9643
    %v9788 = vunpack.c.l.b16 %v9644
    %v9789 = vunpack.c.h.b16 %v9644
    %v9790 = vunpack.c.l.b16 %v9645
    %v9791 = vunpack.c.h.b16 %v9645
    %v9792 = vunpack.c.l.b16 %v9646
    %v9793 = vunpack.c.h.b16 %v9646
    %v9794 = vunpack.c.l.b16 %v9647
    %v9795 = vunpack.c.h.b16 %v9647
    %v9796 = vunpack.c.l.b16 %v9648
    %v9797 = vunpack.c.h.b16 %v9648
    %v9798 = vunpack.c.l.b16 %v9649
    %v9799 = vunpack.c.h.b16 %v9649
    %v9800 = vunpack.c.l.b16 %v9650
    %v9801 = vunpack.c.h.b16 %v9650
    %v9802 = vunpack.c.l.b16 %v9651
    %v9803 = vunpack.c.h.b16 %v9651
    %v9804 = vunpack.c.l.b16 %v9652
    %v9805 = vunpack.c.h.b16 %v9652
    %v9806 = vunpack.c.l.b16 %v9653
    %v9807 = vunpack.c.h.b16 %v9653
    %v9808 = vunpack.c.l.b16 %v9654
    %v9809 = vunpack.c.h.b16 %v9654
    %v9810 = vunpack.c.l.b16 %v9655
    %v9811 = vunpack.c.h.b16 %v9655
    %v9812 = vunpack.c.l.b16 %v9656
    %v9813 = vunpack.c.h.b16 %v9656
    %v9814 = vunpack.c.l.b16 %v9657
    %v9815 = vunpack.c.h.b16 %v9657
    %v9816 = vunpack.c.l.b16 %v9658
    %v9817 = vunpack.c.h.b16 %v9658
    %v9818 = vunpack.c.l.b16 %v9659
    %v9819 = vunpack.c.h.b16 %v9659
    %v9820 = vunpack.c.l.b16 %v9660
    %v9821 = vunpack.c.h.b16 %v9660
    %v9822 = vunpack.c.l.b16 %v9661
    %v9823 = vunpack.c.h.b16 %v9661
    %v9824 = vunpack.c.l.b16 %v9662
    %v9825 = vunpack.c.h.b16 %v9662
    %v9826 = vunpack.c.l.b16 %v9663
    %v9827 = vunpack.c.h.b16 %v9663
    %v9828 = vunpack.c.l.b16 %v9664
    %v9829 = vunpack.c.h.b16 %v9664
    %v9830 = vunpack.c.l.b16 %v9665
    %v9831 = vunpack.c.h.b16 %v9665
    %v9832 = vunpack.c.l.b16 %v9666
    %v9833 = vunpack.c.h.b16 %v9666
    %v9834 = vunpack.c.l.b16 %v9667
    %v9835 = vunpack.c.h.b16 %v9667
    %v9836 = vunpack.c.l.b16 %v9668
    %v9837 = vunpack.c.h.b16 %v9668
    %v9838 = vunpack.c.l.b16 %v9669
    %v9839 = vunpack.c.h.b16 %v9669
    %v9840 = vunpack.c.l.b16 %v9670
    %v9841 = vunpack.c.h.b16 %v9670
    %v9842 = vunpack.c.l.b16 %v9671
    %v9843 = vunpack.c.h.b16 %v9671
    %v9844 = vunpack.c.l.b16 %v9672
    %v9845 = vunpack.c.h.b16 %v9672
    %v9846 = vunpack.c.l.b16 %v9673
    %v9847 = vunpack.c.h.b16 %v9673
    %v9848 = vunpack.c.l.b16 %v9674
    %v9849 = vunpack.c.h.b16 %v9674
    %v9850 = vunpack.c.l.b16 %v9675
    %v9851 = vunpack.c.h.b16 %v9675
    %v9852 = vunpack.c.l.b16 %v9676
    %v9853 = vunpack.c.h.b16 %v9676
    %v9854 = vunpack.c.l.b16 %v9677
    %v9855 = vunpack.c.h.b16 %v9677
    %v9856 = vunpack.c.l.b16 %v9678
    %v9857 = vunpack.c.h.b16 %v9678
    %v9858 = vunpack.c.l.b16 %v9679
    %v9859 = vunpack.c.h.b16 %v9679
    %v9860 = vunpack.c.l.b16 %v9680
    %v9861 = vunpack.c.h.b16 %v9680
    %v9862 = vunpack.c.l.b16 %v9681
    %v9863 = vunpack.c.h.b16 %v9681
    %v9864 = vunpack.c.l.b16 %v9682
    %v9865 = vunpack.c.h.b16 %v9682
    %v9866 = vunpack.c.l.b16 %v9683
    %v9867 = vunpack.c.h.b16 %v9683
    %v9868 = vunpack.c.l.b16 %v9684
    %v9869 = vunpack.c.h.b16 %v9684
    %v9870 = vunpack.c.l.b16 %v9685
    %v9871 = vunpack.c.h.b16 %v9685
    %v9872 = vunpack.c.l.b16 %v9686
    %v9873 = vunpack.c.h.b16 %v9686
    %v9874 = vunpack.c.l.b16 %v9687
    %v9875 = vunpack.c.h.b16 %v9687
    %v9876 = vunpack.c.l.b16 %v9688
    %v9877 = vunpack.c.h.b16 %v9688
    %v9878 = vunpack.c.l.b16 %v9689
    %v9879 = vunpack.c.h.b16 %v9689
    %v9880 = vunpack.c.l.b16 %v9690
    %v9881 = vunpack.c.h.b16 %v9690
    %v9882 = vunpack.c.l.b16 %v9691
    %v9883 = vunpack.c.h.b16 %v9691
    %v9884 = vpack.c.b16 %v9760, %v9756
    %v9885 = vpack.c.b16 %v9761, %v9757
    %v9886 = vpack.c.b16 %v9762, %v9758
    %v9887 = vpack.c.b16 %v9763, %v9759
    %v9888 = vpack.c.b16 %v9768, %v9764
    %v9889 = vpack.c.b16 %v9769, %v9765
    %v9890 = vpack.c.b16 %v9770, %v9766
    %v9891 = vpack.c.b16 %v9771, %v9767
    %v9892 = vpack.c.b16 %v9776, %v9772
    %v9893 = vpack.c.b16 %v9777, %v9773
    %v9894 = vpack.c.b16 %v9778, %v9774
    %v9895 = vpack.c.b16 %v9779, %v9775
    %v9896 = vpack.c.b16 %v9784, %v9780
    %v9897 = vpack.c.b16 %v9785, %v9781
    %v9898 = vpack.c.b16 %v9786, %v9782
    %v9899 = vpack.c.b16 %v9787, %v9783
    %v9900 = vpack.c.b16 %v9792, %v9788
    %v9901 = vpack.c.b16 %v9793, %v9789
    %v9902 = vpack.c.b16 %v9794, %v9790
    %v9903 = vpack.c.b16 %v9795, %v9791
    %v9904 = vpack.c.b16 %v9800, %v9796
    %v9905 = vpack.c.b16 %v9801, %v9797
    %v9906 = vpack.c.b16 %v9802, %v9798
    %v9907 = vpack.c.b16 %v9803, %v9799
    %v9908 = vpack.c.b16 %v9808, %v9804
    %v9909 = vpack.c.b16 %v9809, %v9805
    %v9910 = vpack.c.b16 %v9810, %v9806
    %v9911 = vpack.c.b16 %v9811, %v9807
    %v9912 = vpack.c.b16 %v9816, %v9812
    %v9913 = vpack.c.b16 %v9817, %v9813
    %v9914 = vpack.c.b16 %v9818, %v9814
    %v9915 = vpack.c.b16 %v9819, %v9815
    %v9916 = vpack.c.b16 %v9824, %v9820
    %v9917 = vpack.c.b16 %v9825, %v9821
    %v9918 = vpack.c.b16 %v9826, %v9822
    %v9919 = vpack.c.b16 %v9827, %v9823
    %v9920 = vpack.c.b16 %v9832, %v9828
    %v9921 = vpack.c.b16 %v9833, %v9829
    %v9922 = vpack.c.b16 %v9834, %v9830
    %v9923 = vpack.c.b16 %v9835, %v9831
    %v9924 = vpack.c.b16 %v9840, %v9836
    %v9925 = vpack.c.b16 %v9841, %v9837
    %v9926 = vpack.c.b16 %v9842, %v9838
    %v9927 = vpack.c.b16 %v9843, %v9839
    %v9928 = vpack.c.b16 %v9848, %v9844
    %v9929 = vpack.c.b16 %v9849, %v9845
    %v9930 = vpack.c.b16 %v9850, %v9846
    %v9931 = vpack.c.b16 %v9851, %v9847
    %v9932 = vpack.c.b16 %v9856, %v9852
    %v9933 = vpack.c.b16 %v9857, %v9853
    %v9934 = vpack.c.b16 %v9858, %v9854
    %v9935 = vpack.c.b16 %v9859, %v9855
    %v9936 = vpack.c.b16 %v9864, %v9860
    %v9937 = vpack.c.b16 %v9865, %v9861
    %v9938 = vpack.c.b16 %v9866, %v9862
    %v9939 = vpack.c.b16 %v9867, %v9863
    %v9940 = vpack.c.b16 %v9872, %v9868
    %v9941 = vpack.c.b16 %v9873, %v9869
    %v9942 = vpack.c.b16 %v9874, %v9870
    %v9943 = vpack.c.b16 %v9875, %v9871
    %v9944 = vpack.c.b16 %v9880, %v9876
    %v9945 = vpack.c.b16 %v9881, %v9877
    %v9946 = vpack.c.b16 %v9882, %v9878
    %v9947 = vpack.c.b16 %v9883, %v9879
    %10012 = vmatprep.subr.bf16.mxu0 %v9885
    %10013 = vmatpush1.bf16.msra.mxu0 %v9884
    %10014 = vmatprep.subr.bf16.mxu0 %v9889
    %10015 = vmatpush1.bf16.msra.mxu0 %v9888
    %10016 = vmatprep.subr.bf16.mxu0 %v9893
    %10017 = vmatpush1.bf16.msra.mxu0 %v9892
    %10018 = vmatprep.subr.bf16.mxu0 %v9897
    %10019 = vmatpush1.bf16.msra.mxu0 %v9896
    %10020 = vmatprep.subr.bf16.mxu0 %v9901
    %10021 = vmatpush1.bf16.msra.mxu0 %v9900
    %10022 = vmatprep.subr.bf16.mxu0 %v9905
    %10023 = vmatpush1.bf16.msra.mxu0 %v9904
    %10024 = vmatprep.subr.bf16.mxu0 %v9909
    %10025 = vmatpush1.bf16.msra.mxu0 %v9908
    %10026 = vmatprep.subr.bf16.mxu0 %v9913
    %10027 = vmatpush1.bf16.msra.mxu0 %v9912
    %10028 = vmatprep.subr.bf16.mxu0 %v9917
    %10029 = vmatpush1.bf16.msra.mxu0 %v9916
    %10030 = vmatprep.subr.bf16.mxu0 %v9921
    %10031 = vmatpush1.bf16.msra.mxu0 %v9920
    %10032 = vmatprep.subr.bf16.mxu0 %v9925
    %10033 = vmatpush1.bf16.msra.mxu0 %v9924
    %10034 = vmatprep.subr.bf16.mxu0 %v9929
    %10035 = vmatpush1.bf16.msra.mxu0 %v9928
    %10036 = vmatprep.subr.bf16.mxu0 %v9933
    %10037 = vmatpush1.bf16.msra.mxu0 %v9932
    %10038 = vmatprep.subr.bf16.mxu0 %v9937
    %10039 = vmatpush1.bf16.msra.mxu0 %v9936
    %10040 = vmatprep.subr.bf16.mxu0 %v9941
    %10041 = vmatpush1.bf16.msra.mxu0 %v9940
    %10042 = vmatprep.subr.bf16.mxu0 %v9945
    %10043 = vmatpush1.bf16.msra.mxu0 %v9944
    %10044 = vmatprep.mubr.bf16.mxu0 %v8687
    %10045 = vmatmul.mubr.bf16.gmra.mrb[0].mxu0 %v8686
    %v10046 = vpop.f32.mrb[0].mxu0
    %v10047 = vadd.f32 0.0, %v10046
    %v10048 = vpop.f32.mrb[0].mxu0
    %v10049 = vadd.f32 0.0, %v10048
    %v10050 = vpop.f32.mrb[0].mxu0
    %v10051 = vpop.f32.mrb[0].mxu0
    %10052 = vdwg.mxu0
    %10053 = vmatprep.subr.bf16.mxu0 %v9887
    %10054 = vmatpush1.bf16.msra.mxu0 %v9886
    %10055 = vmatprep.subr.bf16.mxu0 %v9891
    %10056 = vmatpush1.bf16.msra.mxu0 %v9890
    %10057 = vmatprep.subr.bf16.mxu0 %v9895
    %10058 = vmatpush1.bf16.msra.mxu0 %v9894
    %10059 = vmatprep.subr.bf16.mxu0 %v9899
    %10060 = vmatpush1.bf16.msra.mxu0 %v9898
    %10061 = vmatprep.subr.bf16.mxu0 %v9903
    %10062 = vmatpush1.bf16.msra.mxu0 %v9902
    %10063 = vmatprep.subr.bf16.mxu0 %v9907
    %10064 = vmatpush1.bf16.msra.mxu0 %v9906
    %10065 = vmatprep.subr.bf16.mxu0 %v9911
    %10066 = vmatpush1.bf16.msra.mxu0 %v9910
    %10067 = vmatprep.subr.bf16.mxu0 %v9915
    %10068 = vmatpush1.bf16.msra.mxu0 %v9914
    %10069 = vmatprep.subr.bf16.mxu0 %v9919
    %10070 = vmatpush1.bf16.msra.mxu0 %v9918
    %10071 = vmatprep.subr.bf16.mxu0 %v9923
    %10072 = vmatpush1.bf16.msra.mxu0 %v9922
    %10073 = vmatprep.subr.bf16.mxu0 %v9927
    %10074 = vmatpush1.bf16.msra.mxu0 %v9926
    %10075 = vmatprep.subr.bf16.mxu0 %v9931
    %10076 = vmatpush1.bf16.msra.mxu0 %v9930
    %10077 = vmatprep.subr.bf16.mxu0 %v9935
    %10078 = vmatpush1.bf16.msra.mxu0 %v9934
    %10079 = vmatprep.subr.bf16.mxu0 %v9939
    %10080 = vmatpush1.bf16.msra.mxu0 %v9938
    %10081 = vmatprep.subr.bf16.mxu0 %v9943
    %10082 = vmatpush1.bf16.msra.mxu0 %v9942
    %10083 = vmatprep.subr.bf16.mxu0 %v9947
    %10084 = vmatpush1.bf16.msra.mxu0 %v9946
    %10085 = vmatprep.mubr.bf16.mxu0 %v8687
    %10086 = vmatmul.mubr.bf16.gmra.mrb[0].mxu0 %v8686
    %v10087 = vpop.f32.mrb[0].mxu0
    %v10088 = vadd.f32 0.0, %v10087
    %v10089 = vpop.f32.mrb[0].mxu0
    %v10090 = vadd.f32 0.0, %v10089
    %v10091 = vpop.f32.mrb[0].mxu0
    %v10092 = vpop.f32.mrb[0].mxu0
    %10093 = vdwg.mxu0
    %v10094 = vadd.f32 %v9580, %v10047
    %v10095 = vadd.f32 %v9582, %v10049
    %v10096 = vadd.f32 %v9621, %v10088
    %v10097 = vadd.f32 %v9623, %v10090
    %s10098 = scalar_lea.vmem [#allocation9], 1536
    %v10099 = vld [vmem:[%s10098] sm:$0xff]
    %v10100 = vld [vmem:[%s10098 + $0x8] sm:$0xff]
    %v10101 = vld [vmem:[%s10098 + $0x10] sm:$0xff]
    %v10102 = vld [vmem:[%s10098 + $0x18] sm:$0xff]
    %v10103 = vld [vmem:[%s10098 + $0x20] sm:$0xff]
    %v10104 = vld [vmem:[%s10098 + $0x28] sm:$0xff]
    %v10105 = vld [vmem:[%s10098 + $0x30] sm:$0xff]
    %v10106 = vld [vmem:[%s10098 + $0x38] sm:$0xff]
    %v10107 = vld [vmem:[%s10098 + $0x40] sm:$0xff]
    %v10108 = vld [vmem:[%s10098 + $0x48] sm:$0xff]
    %v10109 = vld [vmem:[%s10098 + $0x50] sm:$0xff]
    %v10110 = vld [vmem:[%s10098 + $0x58] sm:$0xff]
    %v10111 = vld [vmem:[%s10098 + $0x60] sm:$0xff]
    %v10112 = vld [vmem:[%s10098 + $0x68] sm:$0xff]
    %v10113 = vld [vmem:[%s10098 + $0x70] sm:$0xff]
    %v10114 = vld [vmem:[%s10098 + $0x78] sm:$0xff]
    %v10115 = vld [vmem:[%s10098 + $0x80] sm:$0xff]
    %v10116 = vld [vmem:[%s10098 + $0x88] sm:$0xff]
    %v10117 = vld [vmem:[%s10098 + $0x90] sm:$0xff]
    %v10118 = vld [vmem:[%s10098 + $0x98] sm:$0xff]
    %v10119 = vld [vmem:[%s10098 + $0xa0] sm:$0xff]
    %v10120 = vld [vmem:[%s10098 + $0xa8] sm:$0xff]
    %v10121 = vld [vmem:[%s10098 + $0xb0] sm:$0xff]
    %v10122 = vld [vmem:[%s10098 + $0xb8] sm:$0xff]
    %v10123 = vld [vmem:[%s10098 + $0xc0] sm:$0xff]
    %v10124 = vld [vmem:[%s10098 + $0xc8] sm:$0xff]
    %v10125 = vld [vmem:[%s10098 + $0xd0] sm:$0xff]
    %v10126 = vld [vmem:[%s10098 + $0xd8] sm:$0xff]
    %v10127 = vld [vmem:[%s10098 + $0xe0] sm:$0xff]
    %v10128 = vld [vmem:[%s10098 + $0xe8] sm:$0xff]
    %v10129 = vld [vmem:[%s10098 + $0xf0] sm:$0xff]
    %v10130 = vld [vmem:[%s10098 + $0xf8] sm:$0xff]
    %v10131 = vld [vmem:[%s10098 + $0x100] sm:$0xff]
    %v10132 = vld [vmem:[%s10098 + $0x108] sm:$0xff]
    %v10133 = vld [vmem:[%s10098 + $0x110] sm:$0xff]
    %v10134 = vld [vmem:[%s10098 + $0x118] sm:$0xff]
    %v10135 = vld [vmem:[%s10098 + $0x120] sm:$0xff]
    %v10136 = vld [vmem:[%s10098 + $0x128] sm:$0xff]
    %v10137 = vld [vmem:[%s10098 + $0x130] sm:$0xff]
    %v10138 = vld [vmem:[%s10098 + $0x138] sm:$0xff]
    %v10139 = vld [vmem:[%s10098 + $0x140] sm:$0xff]
    %v10140 = vld [vmem:[%s10098 + $0x148] sm:$0xff]
    %v10141 = vld [vmem:[%s10098 + $0x150] sm:$0xff]
    %v10142 = vld [vmem:[%s10098 + $0x158] sm:$0xff]
    %v10143 = vld [vmem:[%s10098 + $0x160] sm:$0xff]
    %v10144 = vld [vmem:[%s10098 + $0x168] sm:$0xff]
    %v10145 = vld [vmem:[%s10098 + $0x170] sm:$0xff]
    %v10146 = vld [vmem:[%s10098 + $0x178] sm:$0xff]
    %v10147 = vld [vmem:[%s10098 + $0x180] sm:$0xff]
    %v10148 = vld [vmem:[%s10098 + $0x188] sm:$0xff]
    %v10149 = vld [vmem:[%s10098 + $0x190] sm:$0xff]
    %v10150 = vld [vmem:[%s10098 + $0x198] sm:$0xff]
    %v10151 = vld [vmem:[%s10098 + $0x1a0] sm:$0xff]
    %v10152 = vld [vmem:[%s10098 + $0x1a8] sm:$0xff]
    %v10153 = vld [vmem:[%s10098 + $0x1b0] sm:$0xff]
    %v10154 = vld [vmem:[%s10098 + $0x1b8] sm:$0xff]
    %v10155 = vld [vmem:[%s10098 + $0x1c0] sm:$0xff]
    %v10156 = vld [vmem:[%s10098 + $0x1c8] sm:$0xff]
    %v10157 = vld [vmem:[%s10098 + $0x1d0] sm:$0xff]
    %v10158 = vld [vmem:[%s10098 + $0x1d8] sm:$0xff]
    %v10159 = vld [vmem:[%s10098 + $0x1e0] sm:$0xff]
    %v10160 = vld [vmem:[%s10098 + $0x1e8] sm:$0xff]
    %v10161 = vld [vmem:[%s10098 + $0x1f0] sm:$0xff]
    %v10162 = vld [vmem:[%s10098 + $0x1f8] sm:$0xff]
    %v10165 = vrot.slane %v8686, 4
    %v10166 = vrot.slane %v8687, 4
    %v10233 = vunpack.c.l.b16 %v10099
    %v10234 = vunpack.c.h.b16 %v10099
    %v10235 = vunpack.c.l.b16 %v10100
    %v10236 = vunpack.c.h.b16 %v10100
    %v10237 = vunpack.c.l.b16 %v10101
    %v10238 = vunpack.c.h.b16 %v10101
    %v10239 = vunpack.c.l.b16 %v10102
    %v10240 = vunpack.c.h.b16 %v10102
    %v10241 = vunpack.c.l.b16 %v10103
    %v10242 = vunpack.c.h.b16 %v10103
    %v10243 = vunpack.c.l.b16 %v10104
    %v10244 = vunpack.c.h.b16 %v10104
    %v10245 = vunpack.c.l.b16 %v10105
    %v10246 = vunpack.c.h.b16 %v10105
    %v10247 = vunpack.c.l.b16 %v10106
    %v10248 = vunpack.c.h.b16 %v10106
    %v10249 = vunpack.c.l.b16 %v10107
    %v10250 = vunpack.c.h.b16 %v10107
    %v10251 = vunpack.c.l.b16 %v10108
    %v10252 = vunpack.c.h.b16 %v10108
    %v10253 = vunpack.c.l.b16 %v10109
    %v10254 = vunpack.c.h.b16 %v10109
    %v10255 = vunpack.c.l.b16 %v10110
    %v10256 = vunpack.c.h.b16 %v10110
    %v10257 = vunpack.c.l.b16 %v10111
    %v10258 = vunpack.c.h.b16 %v10111
    %v10259 = vunpack.c.l.b16 %v10112
    %v10260 = vunpack.c.h.b16 %v10112
    %v10261 = vunpack.c.l.b16 %v10113
    %v10262 = vunpack.c.h.b16 %v10113
    %v10263 = vunpack.c.l.b16 %v10114
    %v10264 = vunpack.c.h.b16 %v10114
    %v10265 = vunpack.c.l.b16 %v10115
    %v10266 = vunpack.c.h.b16 %v10115
    %v10267 = vunpack.c.l.b16 %v10116
    %v10268 = vunpack.c.h.b16 %v10116
    %v10269 = vunpack.c.l.b16 %v10117
    %v10270 = vunpack.c.h.b16 %v10117
    %v10271 = vunpack.c.l.b16 %v10118
    %v10272 = vunpack.c.h.b16 %v10118
    %v10273 = vunpack.c.l.b16 %v10119
    %v10274 = vunpack.c.h.b16 %v10119
    %v10275 = vunpack.c.l.b16 %v10120
    %v10276 = vunpack.c.h.b16 %v10120
    %v10277 = vunpack.c.l.b16 %v10121
    %v10278 = vunpack.c.h.b16 %v10121
    %v10279 = vunpack.c.l.b16 %v10122
    %v10280 = vunpack.c.h.b16 %v10122
    %v10281 = vunpack.c.l.b16 %v10123
    %v10282 = vunpack.c.h.b16 %v10123
    %v10283 = vunpack.c.l.b16 %v10124
    %v10284 = vunpack.c.h.b16 %v10124
    %v10285 = vunpack.c.l.b16 %v10125
    %v10286 = vunpack.c.h.b16 %v10125
    %v10287 = vunpack.c.l.b16 %v10126
    %v10288 = vunpack.c.h.b16 %v10126
    %v10289 = vunpack.c.l.b16 %v10127
    %v10290 = vunpack.c.h.b16 %v10127
    %v10291 = vunpack.c.l.b16 %v10128
    %v10292 = vunpack.c.h.b16 %v10128
    %v10293 = vunpack.c.l.b16 %v10129
    %v10294 = vunpack.c.h.b16 %v10129
    %v10295 = vunpack.c.l.b16 %v10130
    %v10296 = vunpack.c.h.b16 %v10130
    %v10297 = vunpack.c.l.b16 %v10131
    %v10298 = vunpack.c.h.b16 %v10131
    %v10299 = vunpack.c.l.b16 %v10132
    %v10300 = vunpack.c.h.b16 %v10132
    %v10301 = vunpack.c.l.b16 %v10133
    %v10302 = vunpack.c.h.b16 %v10133
    %v10303 = vunpack.c.l.b16 %v10134
    %v10304 = vunpack.c.h.b16 %v10134
    %v10305 = vunpack.c.l.b16 %v10135
    %v10306 = vunpack.c.h.b16 %v10135
    %v10307 = vunpack.c.l.b16 %v10136
    %v10308 = vunpack.c.h.b16 %v10136
    %v10309 = vunpack.c.l.b16 %v10137
    %v10310 = vunpack.c.h.b16 %v10137
    %v10311 = vunpack.c.l.b16 %v10138
    %v10312 = vunpack.c.h.b16 %v10138
    %v10313 = vunpack.c.l.b16 %v10139
    %v10314 = vunpack.c.h.b16 %v10139
    %v10315 = vunpack.c.l.b16 %v10140
    %v10316 = vunpack.c.h.b16 %v10140
    %v10317 = vunpack.c.l.b16 %v10141
    %v10318 = vunpack.c.h.b16 %v10141
    %v10319 = vunpack.c.l.b16 %v10142
    %v10320 = vunpack.c.h.b16 %v10142
    %v10321 = vunpack.c.l.b16 %v10143
    %v10322 = vunpack.c.h.b16 %v10143
    %v10323 = vunpack.c.l.b16 %v10144
    %v10324 = vunpack.c.h.b16 %v10144
    %v10325 = vunpack.c.l.b16 %v10145
    %v10326 = vunpack.c.h.b16 %v10145
    %v10327 = vunpack.c.l.b16 %v10146
    %v10328 = vunpack.c.h.b16 %v10146
    %v10329 = vunpack.c.l.b16 %v10147
    %v10330 = vunpack.c.h.b16 %v10147
    %v10331 = vunpack.c.l.b16 %v10148
    %v10332 = vunpack.c.h.b16 %v10148
    %v10333 = vunpack.c.l.b16 %v10149
    %v10334 = vunpack.c.h.b16 %v10149
    %v10335 = vunpack.c.l.b16 %v10150
    %v10336 = vunpack.c.h.b16 %v10150
    %v10337 = vunpack.c.l.b16 %v10151
    %v10338 = vunpack.c.h.b16 %v10151
    %v10339 = vunpack.c.l.b16 %v10152
    %v10340 = vunpack.c.h.b16 %v10152
    %v10341 = vunpack.c.l.b16 %v10153
    %v10342 = vunpack.c.h.b16 %v10153
    %v10343 = vunpack.c.l.b16 %v10154
    %v10344 = vunpack.c.h.b16 %v10154
    %v10345 = vunpack.c.l.b16 %v10155
    %v10346 = vunpack.c.h.b16 %v10155
    %v10347 = vunpack.c.l.b16 %v10156
    %v10348 = vunpack.c.h.b16 %v10156
    %v10349 = vunpack.c.l.b16 %v10157
    %v10350 = vunpack.c.h.b16 %v10157
    %v10351 = vunpack.c.l.b16 %v10158
    %v10352 = vunpack.c.h.b16 %v10158
    %v10353 = vunpack.c.l.b16 %v10159
    %v10354 = vunpack.c.h.b16 %v10159
    %v10355 = vunpack.c.l.b16 %v10160
    %v10356 = vunpack.c.h.b16 %v10160
    %v10357 = vunpack.c.l.b16 %v10161
    %v10358 = vunpack.c.h.b16 %v10161
    %v10359 = vunpack.c.l.b16 %v10162
    %v10360 = vunpack.c.h.b16 %v10162
    %v10361 = vpack.c.b16 %v10237, %v10233
    %v10362 = vpack.c.b16 %v10238, %v10234
    %v10363 = vpack.c.b16 %v10239, %v10235
    %v10364 = vpack.c.b16 %v10240, %v10236
    %v10365 = vpack.c.b16 %v10245, %v10241
    %v10366 = vpack.c.b16 %v10246, %v10242
    %v10367 = vpack.c.b16 %v10247, %v10243
    %v10368 = vpack.c.b16 %v10248, %v10244
    %v10369 = vpack.c.b16 %v10253, %v10249
    %v10370 = vpack.c.b16 %v10254, %v10250
    %v10371 = vpack.c.b16 %v10255, %v10251
    %v10372 = vpack.c.b16 %v10256, %v10252
    %v10373 = vpack.c.b16 %v10261, %v10257
    %v10374 = vpack.c.b16 %v10262, %v10258
    %v10375 = vpack.c.b16 %v10263, %v10259
    %v10376 = vpack.c.b16 %v10264, %v10260
    %v10377 = vpack.c.b16 %v10269, %v10265
    %v10378 = vpack.c.b16 %v10270, %v10266
    %v10379 = vpack.c.b16 %v10271, %v10267
    %v10380 = vpack.c.b16 %v10272, %v10268
    %v10381 = vpack.c.b16 %v10277, %v10273
    %v10382 = vpack.c.b16 %v10278, %v10274
    %v10383 = vpack.c.b16 %v10279, %v10275
    %v10384 = vpack.c.b16 %v10280, %v10276
    %v10385 = vpack.c.b16 %v10285, %v10281
    %v10386 = vpack.c.b16 %v10286, %v10282
    %v10387 = vpack.c.b16 %v10287, %v10283
    %v10388 = vpack.c.b16 %v10288, %v10284
    %v10389 = vpack.c.b16 %v10293, %v10289
    %v10390 = vpack.c.b16 %v10294, %v10290
    %v10391 = vpack.c.b16 %v10295, %v10291
    %v10392 = vpack.c.b16 %v10296, %v10292
    %v10393 = vpack.c.b16 %v10301, %v10297
    %v10394 = vpack.c.b16 %v10302, %v10298
    %v10395 = vpack.c.b16 %v10303, %v10299
    %v10396 = vpack.c.b16 %v10304, %v10300
    %v10397 = vpack.c.b16 %v10309, %v10305
    %v10398 = vpack.c.b16 %v10310, %v10306
    %v10399 = vpack.c.b16 %v10311, %v10307
    %v10400 = vpack.c.b16 %v10312, %v10308
    %v10401 = vpack.c.b16 %v10317, %v10313
    %v10402 = vpack.c.b16 %v10318, %v10314
    %v10403 = vpack.c.b16 %v10319, %v10315
    %v10404 = vpack.c.b16 %v10320, %v10316
    %v10405 = vpack.c.b16 %v10325, %v10321
    %v10406 = vpack.c.b16 %v10326, %v10322
    %v10407 = vpack.c.b16 %v10327, %v10323
    %v10408 = vpack.c.b16 %v10328, %v10324
    %v10409 = vpack.c.b16 %v10333, %v10329
    %v10410 = vpack.c.b16 %v10334, %v10330
    %v10411 = vpack.c.b16 %v10335, %v10331
    %v10412 = vpack.c.b16 %v10336, %v10332
    %v10413 = vpack.c.b16 %v10341, %v10337
    %v10414 = vpack.c.b16 %v10342, %v10338
    %v10415 = vpack.c.b16 %v10343, %v10339
    %v10416 = vpack.c.b16 %v10344, %v10340
    %v10417 = vpack.c.b16 %v10349, %v10345
    %v10418 = vpack.c.b16 %v10350, %v10346
    %v10419 = vpack.c.b16 %v10351, %v10347
    %v10420 = vpack.c.b16 %v10352, %v10348
    %v10421 = vpack.c.b16 %v10357, %v10353
    %v10422 = vpack.c.b16 %v10358, %v10354
    %v10423 = vpack.c.b16 %v10359, %v10355
    %v10424 = vpack.c.b16 %v10360, %v10356
    %10489 = vmatprep.subr.bf16.mxu0 %v10362
    %10490 = vmatpush1.bf16.msra.mxu0 %v10361
    %10491 = vmatprep.subr.bf16.mxu0 %v10366
    %10492 = vmatpush1.bf16.msra.mxu0 %v10365
    %10493 = vmatprep.subr.bf16.mxu0 %v10370
    %10494 = vmatpush1.bf16.msra.mxu0 %v10369
    %10495 = vmatprep.subr.bf16.mxu0 %v10374
    %10496 = vmatpush1.bf16.msra.mxu0 %v10373
    %10497 = vmatprep.subr.bf16.mxu0 %v10378
    %10498 = vmatpush1.bf16.msra.mxu0 %v10377
    %10499 = vmatprep.subr.bf16.mxu0 %v10382
    %10500 = vmatpush1.bf16.msra.mxu0 %v10381
    %10501 = vmatprep.subr.bf16.mxu0 %v10386
    %10502 = vmatpush1.bf16.msra.mxu0 %v10385
    %10503 = vmatprep.subr.bf16.mxu0 %v10390
    %10504 = vmatpush1.bf16.msra.mxu0 %v10389
    %10505 = vmatprep.subr.bf16.mxu0 %v10394
    %10506 = vmatpush1.bf16.msra.mxu0 %v10393
    %10507 = vmatprep.subr.bf16.mxu0 %v10398
    %10508 = vmatpush1.bf16.msra.mxu0 %v10397
    %10509 = vmatprep.subr.bf16.mxu0 %v10402
    %10510 = vmatpush1.bf16.msra.mxu0 %v10401
    %10511 = vmatprep.subr.bf16.mxu0 %v10406
    %10512 = vmatpush1.bf16.msra.mxu0 %v10405
    %10513 = vmatprep.subr.bf16.mxu0 %v10410
    %10514 = vmatpush1.bf16.msra.mxu0 %v10409
    %10515 = vmatprep.subr.bf16.mxu0 %v10414
    %10516 = vmatpush1.bf16.msra.mxu0 %v10413
    %10517 = vmatprep.subr.bf16.mxu0 %v10418
    %10518 = vmatpush1.bf16.msra.mxu0 %v10417
    %10519 = vmatprep.subr.bf16.mxu0 %v10422
    %10520 = vmatpush1.bf16.msra.mxu0 %v10421
    %10521 = vmatprep.mubr.bf16.mxu0 %v10166
    %10522 = vmatmul.mubr.bf16.gmra.mrb[0].mxu0 %v10165
    %v10523 = vpop.f32.mrb[0].mxu0
    %v10524 = vadd.f32 0.0, %v10523
    %v10525 = vpop.f32.mrb[0].mxu0
    %v10526 = vadd.f32 0.0, %v10525
    %v10527 = vpop.f32.mrb[0].mxu0
    %v10528 = vpop.f32.mrb[0].mxu0
    %10529 = vdwg.mxu0
    %10530 = vmatprep.subr.bf16.mxu0 %v10364
    %10531 = vmatpush1.bf16.msra.mxu0 %v10363
    %10532 = vmatprep.subr.bf16.mxu0 %v10368
    %10533 = vmatpush1.bf16.msra.mxu0 %v10367
    %10534 = vmatprep.subr.bf16.mxu0 %v10372
    %10535 = vmatpush1.bf16.msra.mxu0 %v10371
    %10536 = vmatprep.subr.bf16.mxu0 %v10376
    %10537 = vmatpush1.bf16.msra.mxu0 %v10375
    %10538 = vmatprep.subr.bf16.mxu0 %v10380
    %10539 = vmatpush1.bf16.msra.mxu0 %v10379
    %10540 = vmatprep.subr.bf16.mxu0 %v10384
    %10541 = vmatpush1.bf16.msra.mxu0 %v10383
    %10542 = vmatprep.subr.bf16.mxu0 %v10388
    %10543 = vmatpush1.bf16.msra.mxu0 %v10387
    %10544 = vmatprep.subr.bf16.mxu0 %v10392
    %10545 = vmatpush1.bf16.msra.mxu0 %v10391
    %10546 = vmatprep.subr.bf16.mxu0 %v10396
    %10547 = vmatpush1.bf16.msra.mxu0 %v10395
    %10548 = vmatprep.subr.bf16.mxu0 %v10400
    %10549 = vmatpush1.bf16.msra.mxu0 %v10399
    %10550 = vmatprep.subr.bf16.mxu0 %v10404
    %10551 = vmatpush1.bf16.msra.mxu0 %v10403
    %10552 = vmatprep.subr.bf16.mxu0 %v10408
    %10553 = vmatpush1.bf16.msra.mxu0 %v10407
    %10554 = vmatprep.subr.bf16.mxu0 %v10412
    %10555 = vmatpush1.bf16.msra.mxu0 %v10411
    %10556 = vmatprep.subr.bf16.mxu0 %v10416
    %10557 = vmatpush1.bf16.msra.mxu0 %v10415
    %10558 = vmatprep.subr.bf16.mxu0 %v10420
    %10559 = vmatpush1.bf16.msra.mxu0 %v10419
    %10560 = vmatprep.subr.bf16.mxu0 %v10424
    %10561 = vmatpush1.bf16.msra.mxu0 %v10423
    %10562 = vmatprep.mubr.bf16.mxu0 %v10166
    %10563 = vmatmul.mubr.bf16.gmra.mrb[0].mxu0 %v10165
    %v10564 = vpop.f32.mrb[0].mxu0
    %v10565 = vadd.f32 0.0, %v10564
    %v10566 = vpop.f32.mrb[0].mxu0
    %v10567 = vadd.f32 0.0, %v10566
    %v10568 = vpop.f32.mrb[0].mxu0
    %v10569 = vpop.f32.mrb[0].mxu0
    %10570 = vdwg.mxu0
    %v10571 = vadd.f32 %v10094, %v10524
    %v10572 = vadd.f32 %v10095, %v10526
    %v10573 = vadd.f32 %v10096, %v10565
    %v10574 = vadd.f32 %v10097, %v10567
    %v10575 = vld [vmem:[#allocation10] sm:$0xf]
    %v10577 = vlaneseq
    %v10578 = vshrl.u32 %v10577, 7
    %v10579 = vsub.s32 0, %v10578
    %v10580 = vrot.slane %v10575, %v10579
    %v10581 = vlaneseq
    %v10582 = vshrl.u32 %v10581, 7
    %v10583 = vsub.s32 1, %v10582
    %v10584 = vrot.slane %v10575, %v10583
    %v10585 = vlaneseq
    %v10586 = vshrl.u32 %v10585, 7
    %v10587 = vsub.s32 2, %v10586
    %v10588 = vrot.slane %v10575, %v10587
    %v10589 = vlaneseq
    %v10590 = vshrl.u32 %v10589, 7
    %v10591 = vsub.s32 3, %v10590
    %v10592 = vrot.slane %v10575, %v10591
    %v10597 = vadd.f32 %v10571, %v10580
    %v10598 = vadd.f32 %v10572, %v10584
    %v10599 = vadd.f32 %v10573, %v10588
    %v10600 = vadd.f32 %v10574, %v10592
    %v10601 = vmax.f32 %v10597, 0.0
    %v10602 = vmax.f32 %v10598, 0.0
    %v10603 = vmax.f32 %v10599, 0.0
    %v10604 = vmax.f32 %v10600, 0.0
    %v10605 = vpack.c.bf16 %v10601, %v10601
    %v10606 = vpack.c.bf16 %v10602, %v10602
    %v10607 = vpack.c.bf16 %v10603, %v10603
    %v10608 = vpack.c.bf16 %v10604, %v10604
    %v10609 = vld [vmem:[#allocation12] sm:$0xf]
    %v10610 = vld [vmem:[#allocation12 + $0x4] sm:$0xf]
    %v10611 = vld [vmem:[#allocation12 + $0x8] sm:$0xf]
    %v10612 = vld [vmem:[#allocation12 + $0xc] sm:$0xf]
    %v10613 = vld [vmem:[#allocation12 + $0x10] sm:$0xf]
    %v10614 = vld [vmem:[#allocation12 + $0x14] sm:$0xf]
    %v10615 = vld [vmem:[#allocation12 + $0x18] sm:$0xf]
    %v10616 = vld [vmem:[#allocation12 + $0x1c] sm:$0xf]
    %v10617 = vld [vmem:[#allocation12 + $0x20] sm:$0xf]
    %v10618 = vld [vmem:[#allocation12 + $0x24] sm:$0xf]
    %v10619 = vld [vmem:[#allocation12 + $0x28] sm:$0xf]
    %v10620 = vld [vmem:[#allocation12 + $0x2c] sm:$0xf]
    %v10621 = vld [vmem:[#allocation12 + $0x30] sm:$0xf]
    %v10622 = vld [vmem:[#allocation12 + $0x34] sm:$0xf]
    %v10623 = vld [vmem:[#allocation12 + $0x38] sm:$0xf]
    %v10624 = vld [vmem:[#allocation12 + $0x3c] sm:$0xf]
    %v10625 = vld [vmem:[#allocation12 + $0x40] sm:$0xf]
    %v10626 = vld [vmem:[#allocation12 + $0x44] sm:$0xf]
    %v10627 = vld [vmem:[#allocation12 + $0x48] sm:$0xf]
    %v10628 = vld [vmem:[#allocation12 + $0x4c] sm:$0xf]
    %v10629 = vld [vmem:[#allocation12 + $0x50] sm:$0xf]
    %v10630 = vld [vmem:[#allocation12 + $0x54] sm:$0xf]
    %v10631 = vld [vmem:[#allocation12 + $0x58] sm:$0xf]
    %v10632 = vld [vmem:[#allocation12 + $0x5c] sm:$0xf]
    %v10633 = vld [vmem:[#allocation12 + $0x60] sm:$0xf]
    %v10634 = vld [vmem:[#allocation12 + $0x64] sm:$0xf]
    %v10635 = vld [vmem:[#allocation12 + $0x68] sm:$0xf]
    %v10636 = vld [vmem:[#allocation12 + $0x6c] sm:$0xf]
    %v10637 = vld [vmem:[#allocation12 + $0x70] sm:$0xf]
    %v10638 = vld [vmem:[#allocation12 + $0x74] sm:$0xf]
    %v10639 = vld [vmem:[#allocation12 + $0x78] sm:$0xf]
    %v10640 = vld [vmem:[#allocation12 + $0x7c] sm:$0xf]
    %v10641 = vld [vmem:[#allocation12 + $0x80] sm:$0xf]
    %v10642 = vld [vmem:[#allocation12 + $0x84] sm:$0xf]
    %v10643 = vld [vmem:[#allocation12 + $0x88] sm:$0xf]
    %v10644 = vld [vmem:[#allocation12 + $0x8c] sm:$0xf]
    %v10645 = vld [vmem:[#allocation12 + $0x90] sm:$0xf]
    %v10646 = vld [vmem:[#allocation12 + $0x94] sm:$0xf]
    %v10647 = vld [vmem:[#allocation12 + $0x98] sm:$0xf]
    %v10648 = vld [vmem:[#allocation12 + $0x9c] sm:$0xf]
    %v10649 = vld [vmem:[#allocation12 + $0xa0] sm:$0xf]
    %v10650 = vld [vmem:[#allocation12 + $0xa4] sm:$0xf]
    %v10651 = vld [vmem:[#allocation12 + $0xa8] sm:$0xf]
    %v10652 = vld [vmem:[#allocation12 + $0xac] sm:$0xf]
    %v10653 = vld [vmem:[#allocation12 + $0xb0] sm:$0xf]
    %v10654 = vld [vmem:[#allocation12 + $0xb4] sm:$0xf]
    %v10655 = vld [vmem:[#allocation12 + $0xb8] sm:$0xf]
    %v10656 = vld [vmem:[#allocation12 + $0xbc] sm:$0xf]
    %v10657 = vld [vmem:[#allocation12 + $0xc0] sm:$0xf]
    %v10658 = vld [vmem:[#allocation12 + $0xc4] sm:$0xf]
    %v10659 = vld [vmem:[#allocation12 + $0xc8] sm:$0xf]
    %v10660 = vld [vmem:[#allocation12 + $0xcc] sm:$0xf]
    %v10661 = vld [vmem:[#allocation12 + $0xd0] sm:$0xf]
    %v10662 = vld [vmem:[#allocation12 + $0xd4] sm:$0xf]
    %v10663 = vld [vmem:[#allocation12 + $0xd8] sm:$0xf]
    %v10664 = vld [vmem:[#allocation12 + $0xdc] sm:$0xf]
    %v10665 = vld [vmem:[#allocation12 + $0xe0] sm:$0xf]
    %v10666 = vld [vmem:[#allocation12 + $0xe4] sm:$0xf]
    %v10667 = vld [vmem:[#allocation12 + $0xe8] sm:$0xf]
    %v10668 = vld [vmem:[#allocation12 + $0xec] sm:$0xf]
    %v10669 = vld [vmem:[#allocation12 + $0xf0] sm:$0xf]
    %v10670 = vld [vmem:[#allocation12 + $0xf4] sm:$0xf]
    %v10671 = vld [vmem:[#allocation12 + $0xf8] sm:$0xf]
    %v10672 = vld [vmem:[#allocation12 + $0xfc] sm:$0xf]
    %v10673 = vld [vmem:[#allocation13] sm:$0x1]
    %v10675 = vlaneseq
    %v10676 = vshrl.u32 %v10675, 7
    %v10677 = vsub.s32 0, %v10676
    %v10678 = vrot.slane %v10673, %v10677
    %v10744 = vunpack.c.l.b16 %v10609
    %v10745 = vunpack.c.l.b16 %v10610
    %v10746 = vunpack.c.l.b16 %v10611
    %v10747 = vunpack.c.l.b16 %v10612
    %v10748 = vunpack.c.l.b16 %v10613
    %v10749 = vunpack.c.l.b16 %v10614
    %v10750 = vunpack.c.l.b16 %v10615
    %v10751 = vunpack.c.l.b16 %v10616
    %v10752 = vunpack.c.l.b16 %v10617
    %v10753 = vunpack.c.l.b16 %v10618
    %v10754 = vunpack.c.l.b16 %v10619
    %v10755 = vunpack.c.l.b16 %v10620
    %v10756 = vunpack.c.l.b16 %v10621
    %v10757 = vunpack.c.l.b16 %v10622
    %v10758 = vunpack.c.l.b16 %v10623
    %v10759 = vunpack.c.l.b16 %v10624
    %v10760 = vunpack.c.l.b16 %v10625
    %v10761 = vunpack.c.l.b16 %v10626
    %v10762 = vunpack.c.l.b16 %v10627
    %v10763 = vunpack.c.l.b16 %v10628
    %v10764 = vunpack.c.l.b16 %v10629
    %v10765 = vunpack.c.l.b16 %v10630
    %v10766 = vunpack.c.l.b16 %v10631
    %v10767 = vunpack.c.l.b16 %v10632
    %v10768 = vunpack.c.l.b16 %v10633
    %v10769 = vunpack.c.l.b16 %v10634
    %v10770 = vunpack.c.l.b16 %v10635
    %v10771 = vunpack.c.l.b16 %v10636
    %v10772 = vunpack.c.l.b16 %v10637
    %v10773 = vunpack.c.l.b16 %v10638
    %v10774 = vunpack.c.l.b16 %v10639
    %v10775 = vunpack.c.l.b16 %v10640
    %v10776 = vunpack.c.l.b16 %v10641
    %v10777 = vunpack.c.l.b16 %v10642
    %v10778 = vunpack.c.l.b16 %v10643
    %v10779 = vunpack.c.l.b16 %v10644
    %v10780 = vunpack.c.l.b16 %v10645
    %v10781 = vunpack.c.l.b16 %v10646
    %v10782 = vunpack.c.l.b16 %v10647
    %v10783 = vunpack.c.l.b16 %v10648
    %v10784 = vunpack.c.l.b16 %v10649
    %v10785 = vunpack.c.l.b16 %v10650
    %v10786 = vunpack.c.l.b16 %v10651
    %v10787 = vunpack.c.l.b16 %v10652
    %v10788 = vunpack.c.l.b16 %v10653
    %v10789 = vunpack.c.l.b16 %v10654
    %v10790 = vunpack.c.l.b16 %v10655
    %v10791 = vunpack.c.l.b16 %v10656
    %v10792 = vunpack.c.l.b16 %v10657
    %v10793 = vunpack.c.l.b16 %v10658
    %v10794 = vunpack.c.l.b16 %v10659
    %v10795 = vunpack.c.l.b16 %v10660
    %v10796 = vunpack.c.l.b16 %v10661
    %v10797 = vunpack.c.l.b16 %v10662
    %v10798 = vunpack.c.l.b16 %v10663
    %v10799 = vunpack.c.l.b16 %v10664
    %v10800 = vunpack.c.l.b16 %v10665
    %v10801 = vunpack.c.l.b16 %v10666
    %v10802 = vunpack.c.l.b16 %v10667
    %v10803 = vunpack.c.l.b16 %v10668
    %v10804 = vunpack.c.l.b16 %v10669
    %v10805 = vunpack.c.l.b16 %v10670
    %v10806 = vunpack.c.l.b16 %v10671
    %v10807 = vunpack.c.l.b16 %v10672
    %v10808 = vpack.c.b16 %v10745, %v10744
    %v10809 = vpack.c.b16 %v10747, %v10746
    %v10810 = vpack.c.b16 %v10749, %v10748
    %v10811 = vpack.c.b16 %v10751, %v10750
    %v10812 = vpack.c.b16 %v10753, %v10752
    %v10813 = vpack.c.b16 %v10755, %v10754
    %v10814 = vpack.c.b16 %v10757, %v10756
    %v10815 = vpack.c.b16 %v10759, %v10758
    %v10816 = vpack.c.b16 %v10761, %v10760
    %v10817 = vpack.c.b16 %v10763, %v10762
    %v10818 = vpack.c.b16 %v10765, %v10764
    %v10819 = vpack.c.b16 %v10767, %v10766
    %v10820 = vpack.c.b16 %v10769, %v10768
    %v10821 = vpack.c.b16 %v10771, %v10770
    %v10822 = vpack.c.b16 %v10773, %v10772
    %v10823 = vpack.c.b16 %v10775, %v10774
    %v10824 = vpack.c.b16 %v10777, %v10776
    %v10825 = vpack.c.b16 %v10779, %v10778
    %v10826 = vpack.c.b16 %v10781, %v10780
    %v10827 = vpack.c.b16 %v10783, %v10782
    %v10828 = vpack.c.b16 %v10785, %v10784
    %v10829 = vpack.c.b16 %v10787, %v10786
    %v10830 = vpack.c.b16 %v10789, %v10788
    %v10831 = vpack.c.b16 %v10791, %v10790
    %v10832 = vpack.c.b16 %v10793, %v10792
    %v10833 = vpack.c.b16 %v10795, %v10794
    %v10834 = vpack.c.b16 %v10797, %v10796
    %v10835 = vpack.c.b16 %v10799, %v10798
    %v10836 = vpack.c.b16 %v10801, %v10800
    %v10837 = vpack.c.b16 %v10803, %v10802
    %v10838 = vpack.c.b16 %v10805, %v10804
    %v10839 = vpack.c.b16 %v10807, %v10806
    %10872 = vmatprep.subr.bf16.mxu0 0
    %10873 = vmatpush1.bf16.msra.mxu0 %v10808
    %10874 = vmatprep.subr.bf16.mxu0 0
    %10875 = vmatpush1.bf16.msra.mxu0 %v10809
    %10876 = vmatprep.subr.bf16.mxu0 0
    %10877 = vmatpush1.bf16.msra.mxu0 %v10810
    %10878 = vmatprep.subr.bf16.mxu0 0
    %10879 = vmatpush1.bf16.msra.mxu0 %v10811
    %10880 = vmatprep.subr.bf16.mxu0 0
    %10881 = vmatpush1.bf16.msra.mxu0 %v10812
    %10882 = vmatprep.subr.bf16.mxu0 0
    %10883 = vmatpush1.bf16.msra.mxu0 %v10813
    %10884 = vmatprep.subr.bf16.mxu0 0
    %10885 = vmatpush1.bf16.msra.mxu0 %v10814
    %10886 = vmatprep.subr.bf16.mxu0 0
    %10887 = vmatpush1.bf16.msra.mxu0 %v10815
    %10888 = vmatprep.subr.bf16.mxu0 0
    %10889 = vmatpush1.bf16.msra.mxu0 %v10816
    %10890 = vmatprep.subr.bf16.mxu0 0
    %10891 = vmatpush1.bf16.msra.mxu0 %v10817
    %10892 = vmatprep.subr.bf16.mxu0 0
    %10893 = vmatpush1.bf16.msra.mxu0 %v10818
    %10894 = vmatprep.subr.bf16.mxu0 0
    %10895 = vmatpush1.bf16.msra.mxu0 %v10819
    %10896 = vmatprep.subr.bf16.mxu0 0
    %10897 = vmatpush1.bf16.msra.mxu0 %v10820
    %10898 = vmatprep.subr.bf16.mxu0 0
    %10899 = vmatpush1.bf16.msra.mxu0 %v10821
    %10900 = vmatprep.subr.bf16.mxu0 0
    %10901 = vmatpush1.bf16.msra.mxu0 %v10822
    %10902 = vmatprep.subr.bf16.mxu0 0
    %10903 = vmatpush1.bf16.msra.mxu0 %v10823
    %10904 = vmatprep.mubr.bf16.mxu0 %v10606
    %10905 = vmatmul.mubr.bf16.gmra.mrb[0].mxu0 %v10605
    %v10906 = vpop.f32.mrb[0].mxu0
    %v10907 = vadd.f32 %v10678, %v10906
    %v10908 = vpop.f32.mrb[0].mxu0
    %v10909 = vpop.f32.mrb[0].mxu0
    %v10910 = vpop.f32.mrb[0].mxu0
    %10911 = vdwg.mxu0
    %10912 = vmatprep.subr.bf16.mxu0 0
    %10913 = vmatpush1.bf16.msra.mxu0 %v10824
    %10914 = vmatprep.subr.bf16.mxu0 0
    %10915 = vmatpush1.bf16.msra.mxu0 %v10825
    %10916 = vmatprep.subr.bf16.mxu0 0
    %10917 = vmatpush1.bf16.msra.mxu0 %v10826
    %10918 = vmatprep.subr.bf16.mxu0 0
    %10919 = vmatpush1.bf16.msra.mxu0 %v10827
    %10920 = vmatprep.subr.bf16.mxu0 0
    %10921 = vmatpush1.bf16.msra.mxu0 %v10828
    %10922 = vmatprep.subr.bf16.mxu0 0
    %10923 = vmatpush1.bf16.msra.mxu0 %v10829
    %10924 = vmatprep.subr.bf16.mxu0 0
    %10925 = vmatpush1.bf16.msra.mxu0 %v10830
    %10926 = vmatprep.subr.bf16.mxu0 0
    %10927 = vmatpush1.bf16.msra.mxu0 %v10831
    %10928 = vmatprep.subr.bf16.mxu0 0
    %10929 = vmatpush1.bf16.msra.mxu0 %v10832
    %10930 = vmatprep.subr.bf16.mxu0 0
    %10931 = vmatpush1.bf16.msra.mxu0 %v10833
    %10932 = vmatprep.subr.bf16.mxu0 0
    %10933 = vmatpush1.bf16.msra.mxu0 %v10834
    %10934 = vmatprep.subr.bf16.mxu0 0
    %10935 = vmatpush1.bf16.msra.mxu0 %v10835
    %10936 = vmatprep.subr.bf16.mxu0 0
    %10937 = vmatpush1.bf16.msra.mxu0 %v10836
    %10938 = vmatprep.subr.bf16.mxu0 0
    %10939 = vmatpush1.bf16.msra.mxu0 %v10837
    %10940 = vmatprep.subr.bf16.mxu0 0
    %10941 = vmatpush1.bf16.msra.mxu0 %v10838
    %10942 = vmatprep.subr.bf16.mxu0 0
    %10943 = vmatpush1.bf16.msra.mxu0 %v10839
    %10944 = vmatprep.mubr.bf16.mxu0 %v10608
    %10945 = vmatmul.mubr.bf16.gmra.mrb[0].mxu0 %v10607
    %v10946 = vpop.f32.mrb[0].mxu0
    %v10947 = vadd.f32 %v10907, %v10946
    %v10948 = vpop.f32.mrb[0].mxu0
    %v10949 = vpop.f32.mrb[0].mxu0
    %v10950 = vpop.f32.mrb[0].mxu0
    %10951 = vdwg.mxu0
    %10952 = vmax.xlane.f32.xlu0 %v10947
    %v10953 = vpop.xlane.xlu0 %10952
    %v10954 = vsub.f32 %v10947, %v10953
    %v10955 = vmul.f32 %v10954, 1.442695
    %v10956 = vpow.pop %v10955
    %10957 = vadd.xlane.f32.xlu0 %v10956
    %v10958 = vpop.xlane.xlu0 %10957
    %v10959 = vlog2.pop %v10958
    %v10960 = vmul.f32 %v10959, 0.6931472
    %v10961 = vsub.f32 %v10954, %v10960
    %10962 = vst [vmem:[%s9] sm:$0xff] %v10961
    // Predicated region
    $region70: #{net_forward.1} parent=1 // pred_check
      _
    $region71: #{net_forward.1} parent=1 // pred_check_branch
      %10964 = sbr.rel (0) target = $region73
    $region72: #{net_forward.1} parent=1 // pred_region
      _
    $region73: #{net_forward.1} parent=1 // pred_fallthru
      _
    // Predicated region
    $region74: #{net_forward.1} parent=1 // pred_check
      _
    $region75: #{net_forward.1} parent=1 // pred_check_branch
      %10966 = sbr.rel (0) target = $region77
    $region76: #{net_forward.1} parent=1 // pred_region
      _
    $region77: #{net_forward.1} parent=1 // pred_fallthru
      _
    %10967 = vsyncpa [#allocation3], 1
    %10968 = vsyncpa [#allocation5], 1
    %10969 = vsyncpa [#allocation8], 1
    %10970 = vsyncpa [#allocation11], 1
    %10971 = vsyncpa [#allocation14], 1

</llo_original>
